<compile_context>
chip_gen: v7x
topology: tpu7x:2x2x1
jax: 0.10.0
libtpu: 0.0.40
codegen_flags: <defaults>
</compile_context>

<pallas_src>
import jax
import jax.numpy as jnp
from jax import lax
from jax.experimental import pallas as pl
from jax.experimental.pallas import tpu as pltpu


_HALO = 128  # lane-aligned halo on each side of the padded activation scratch


def _round_up(v, m):
    return (v + m - 1) // m * m


# -----------------------------------------------------------------------------
# Host-side slab packing: many tiny (rows, cols) matrices -> one padded slab
# -----------------------------------------------------------------------------
class _Slab:
    """Packs small 2-D matrices into one (R_total, width) slab, returning the
    static row offset of each.  Row offsets are aligned to `row_align` so the
    in-kernel slices are clean sublane-tile loads."""

    def __init__(self, width, dtype, row_align):
        self.width, self.dtype, self.row_align = width, dtype, row_align
        self.chunks, self.rows = [], 0

    def add(self, mat):
        r, c = mat.shape
        assert c <= self.width
        off = self.rows
        buf = jnp.zeros((_round_up(r, self.row_align), self.width), jnp.float32)
        buf = buf.at[:r, :c].set(mat.astype(jnp.float32))
        self.chunks.append(buf)
        self.rows += buf.shape[0]
        return off

    def finalize(self):
        return jnp.concatenate(self.chunks, axis=0).astype(self.dtype)


# -----------------------------------------------------------------------------
# Fused Pallas kernel: all TemporalBlocks + final 1x1 conv
# -----------------------------------------------------------------------------
def _build_tcn_kernel(block_cfgs, final_cfg, *, kernel_size, seq_len,
                      batch_per_step):
    K, L, HALO, BS = kernel_size, seq_len, _HALO, batch_per_step
    n_blocks = len(block_cfgs)

    def kernel(x_ref, w_ref, b_ref, o_ref, pad_ref, res_ref):
        rows, lp = pad_ref.shape

        # Zero the halo columns once per grid step.  The lane-aligned core
        # stores below never touch them, so any conv tap reaching into
        # [HALO-pad, HALO) or [HALO+L, HALO+L+pad) reads zeros ("same" padding).
        # (Per-step, not program_id==0-gated: safe under megacore sharding.)
        pad_ref[:, :HALO] = jnp.zeros((rows, HALO), jnp.bfloat16)
        pad_ref[:, HALO + L:lp] = jnp.zeros((rows, lp - HALO - L), jnp.bfloat16)

        def conv_relu(w_offs, b_off, c_in, c_out, dilation, pad):
            # K accumulating MXU matmuls reading shifted bf16 tap views
            # directly (no concatenate / sublane repack), f32 accumulation,
            # f32 bias broadcast-add, ReLU (dropout == identity at inference).
            acc = None
            for k, w_off in enumerate(w_offs):
                w_k = w_ref[w_off:w_off + c_out, 0:c_in]          # bf16
                lo = HALO - pad + k * dilation                    # static int
                tap = pad_ref[0:c_in, lo:lo + L]                  # bf16 view
                part = jnp.dot(w_k, tap, preferred_element_type=jnp.float32)
                acc = part if acc is None else acc + part
            bias = b_ref[b_off:b_off + c_out, :]                  # (c_out,1) f32
            return jnp.maximum(acc + bias, 0.0)

        for bb in range(BS):
            # Block-0 input (already bf16 at the pallas_call boundary): stash
            # it in the residual scratch and in the padded-conv scratch core.
            x0 = x_ref[bb]
            c0 = x0.shape[0]
            res_ref[0:c0, :] = x0
            pad_ref[0:c0, HALO:HALO + L] = x0

            for bi, cfg in enumerate(block_cfgs):
                c_in, c_out = cfg["c_in"], cfg["c_out"]
                d, pad = cfg["dilation"], cfg["pad"]

                # conv1 -> relu1 -> (dropout1 = id); re-pad for conv2 in bf16
                h = conv_relu(cfg["w1_offs"], cfg["b1_off"], c_in, c_out, d, pad)
                pad_ref[0:c_out, HALO:HALO + L] = h.astype(jnp.bfloat16)

                # conv2 -> relu2 -> (dropout2 = id)
                h2 = conv_relu(cfg["w2_offs"], cfg["b2_off"], c_out, c_out, d, pad)

                # residual (optional 1x1 downsample) from the bf16 stash + relu
                x_in = res_ref[0:c_in, :]
                if cfg["has_down"]:
                    wd = w_ref[cfg["wd_off"]:cfg["wd_off"] + c_out, 0:c_in]
                    res = jnp.dot(wd, x_in, preferred_element_type=jnp.float32)
                    res = res + b_ref[cfg["bd_off"]:cfg["bd_off"] + c_out, :]
                else:
                    res = x_in.astype(jnp.float32)
                x_next = jnp.maximum(h2 + res, 0.0).astype(jnp.bfloat16)

                res_ref[0:c_out, :] = x_next
                if bi + 1 < n_blocks:  # next block's conv1 input
                    pad_ref[0:c_out, HALO:HALO + L] = x_next

            # final_layer: Conv1d(C_last, 257, kernel_size=1) == channel matmul
            cf_in, cf_out = final_cfg["c_in"], final_cfg["c_out"]
            wf = w_ref[final_cfg["w_off"]:final_cfg["w_off"] + cf_out, 0:cf_in]
            out = jnp.dot(wf, res_ref[0:cf_in, :],
                          preferred_element_type=jnp.float32)
            out = out + b_ref[final_cfg["b_off"]:final_cfg["b_off"] + cf_out, :]
            o_ref[bb] = out.astype(o_ref.dtype)

    return kernel


# -----------------------------------------------------------------------------
# Wrapper: slab packing, BlockSpecs, grid over batch groups
# -----------------------------------------------------------------------------
def _block_padding(kernel_size, dilation, input_size):
    return min((kernel_size - 1) * dilation // 2, input_size // 2, 125)


def tcn_forward(x, params, *, kernel_size, input_size, batch_per_step=None):
    N, c_in0, L = x.shape
    K = kernel_size
    if batch_per_step is None:
        # 2 elements/step: halves per-step overhead on single-TC v5e/v6e while
        # keeping >=2 parallel steps so both v7x TensorCores stay busy.
        # TODO(synk): on v5e/v6e batch_per_step=N (grid=(1,)) removes the rest.
        batch_per_step = 2 if N % 2 == 0 else 1
    assert N % batch_per_step == 0

    chans = [c_in0] + [p["w1"].shape[0] for p in params["blocks"]]
    c_scr = _round_up(max(chans), 16)            # scratch rows (bf16 tile = 16)
    w_width = _round_up(max(chans), 128)         # max matmul contraction width

    wslab = _Slab(w_width, jnp.bfloat16, 16)     # all conv/downsample/final weights
    bslab = _Slab(1, jnp.float32, 8)             # all biases, kept in f32

    block_cfgs = []
    c_prev = c_in0
    for i, p in enumerate(params["blocks"]):
        dilation = 2 ** i
        pad = _block_padding(K, dilation, input_size)
        if 2 * pad != (K - 1) * dilation:
            raise ValueError(
                f"Block {i}: padding {pad} does not preserve the sequence length "
                f"(needs (kernel_size-1)*dilation/2 = {(K - 1) * dilation / 2}); the "
                "original PyTorch module's residual add would fail for this config.")
        assert pad < _HALO  # guaranteed by the module's min(..., 125) cap

        c_out = p["w1"].shape[0]
        cfg = dict(c_in=c_prev, c_out=c_out, dilation=dilation, pad=pad,
                   has_down="wd" in p)
        # PyTorch Conv1d weight (C_out, C_in, K): store each tap as its own
        # 16-row-aligned row block so in-kernel slices start at column 0.
        cfg["w1_offs"] = [wslab.add(p["w1"][:, :, k]) for k in range(K)]
        cfg["w2_offs"] = [wslab.add(p["w2"][:, :, k]) for k in range(K)]
        cfg["b1_off"] = bslab.add(p["b1"])
        cfg["b2_off"] = bslab.add(p["b2"])
        if cfg["has_down"]:
            cfg["wd_off"] = wslab.add(p["wd"])
            cfg["bd_off"] = bslab.add(p["bd"])
        block_cfgs.append(cfg)
        c_prev = c_out

    c_final = params["final"]["w"].shape[0]
    final_cfg = dict(c_in=c_prev, c_out=c_final,
                     w_off=wslab.add(params["final"]["w"]),
                     b_off=bslab.add(params["final"]["b"]))

    w_slab = wslab.finalize()    # (R_w, 128) bf16 — single DMA
    b_slab = bslab.finalize()    # (R_b, 1)  f32  — single DMA

    kernel = _build_tcn_kernel(block_cfgs, final_cfg, kernel_size=K, seq_len=L,
                               batch_per_step=batch_per_step)

    grid = (N // batch_per_step,)
    return pl.pallas_call(
        kernel,
        out_shape=jax.ShapeDtypeStruct((N, c_final, L), jnp.float32),
        grid=grid,
        in_specs=[pl.BlockSpec((batch_per_step, c_in0, L), lambda g: (g, 0, 0)),
                  pl.BlockSpec(w_slab.shape, lambda g: (0, 0)),
                  pl.BlockSpec(b_slab.shape, lambda g: (0, 0))],
        out_specs=pl.BlockSpec((batch_per_step, c_final, L), lambda g: (g, 0, 0)),
        scratch_shapes=[
            pltpu.VMEM((c_scr, L + 2 * _HALO), jnp.bfloat16),  # padded activations
            pltpu.VMEM((c_scr, L), jnp.bfloat16),              # residual stash
        ],
        compiler_params=pltpu.CompilerParams(
            dimension_semantics=("parallel",),
            vmem_limit_bytes=32 * 1024 * 1024),
    )(x.astype(jnp.bfloat16), w_slab, b_slab)


# -----------------------------------------------------------------------------
# Deterministic parameter initialization (mirrors the module's shapes / init)
# -----------------------------------------------------------------------------
def _uniform(key, shape, bound):
    return jax.random.uniform(key, shape, jnp.float32, -bound, bound)


def init_tcn_params(key, num_inputs, num_channels, kernel_size, num_final=257):
    params = {"blocks": []}
    c_prev = num_inputs
    for c_out in num_channels:
        key, k1, k2, k3, k4, k5, k6 = jax.random.split(key, 7)
        blk = {
            # PyTorch Conv1d weight layout (C_out, C_in, K); weights ~ N(0, 0.01),
            # biases keep the default U(-1/sqrt(fan_in), 1/sqrt(fan_in)).
            "w1": 0.01 * jax.random.normal(k1, (c_out, c_prev, kernel_size), jnp.float32),
            "b1": _uniform(k2, (c_out, 1), 1.0 / (c_prev * kernel_size) ** 0.5),
            "w2": 0.01 * jax.random.normal(k3, (c_out, c_out, kernel_size), jnp.float32),
            "b2": _uniform(k4, (c_out, 1), 1.0 / (c_out * kernel_size) ** 0.5),
        }
        if c_prev != c_out:  # downsample = Conv1d(n_inputs, n_outputs, 1)
            blk["wd"] = 0.01 * jax.random.normal(k5, (c_out, c_prev), jnp.float32)
            blk["bd"] = _uniform(k6, (c_out, 1), 1.0 / c_prev ** 0.5)
        params["blocks"].append(blk)
        c_prev = c_out
    key, kf1, kf2 = jax.random.split(key, 3)
    bound = 1.0 / c_prev ** 0.5
    params["final"] = {"w": _uniform(kf1, (num_final, c_prev), bound),
                       "b": _uniform(kf2, (num_final, 1), bound)}
    return params


# -----------------------------------------------------------------------------
# Pure-JAX reference (mirrors the kernel's bf16-operand / f32-accumulate math,
# including the bf16 activation scratch at block boundaries)
# -----------------------------------------------------------------------------
def _conv1d_ref(x, w_oik, b, dilation, pad):
    y = lax.conv_general_dilated(
        x.astype(jnp.bfloat16), w_oik.astype(jnp.bfloat16),
        window_strides=(1,), padding=[(pad, pad)], rhs_dilation=(dilation,),
        dimension_numbers=("NCH", "OIH", "NCH"),
        preferred_element_type=jnp.float32)
    return y + b[None, :, :]


def tcn_reference(x, params, kernel_size, input_size):
    bf16 = jnp.bfloat16
    out = x.astype(bf16).astype(jnp.float32)   # mirror the bf16 kernel boundary
    for i, p in enumerate(params["blocks"]):
        dilation = 2 ** i
        pad = _block_padding(kernel_size, dilation, input_size)
        h = jax.nn.relu(_conv1d_ref(out, p["w1"], p["b1"], dilation, pad))
        h = jax.nn.relu(_conv1d_ref(h, p["w2"], p["b2"], dilation, pad))
        if "wd" in p:
            res = jnp.einsum("oi,nil->nol", p["wd"].astype(bf16), out.astype(bf16),
                             preferred_element_type=jnp.float32) + p["bd"][None]
        else:
            res = out
        out = jax.nn.relu(h + res)
        out = out.astype(bf16).astype(jnp.float32)   # bf16 activation scratch
    out = jnp.einsum("oi,nil->nol", params["final"]["w"].astype(bf16),
                     out.astype(bf16),
                     preferred_element_type=jnp.float32) + params["final"]["b"][None]
    return out


# -----------------------------------------------------------------------------
if __name__ == "__main__":
    key = jax.random.PRNGKey(0)
    N, num_inputs, L = 4, 8, 256        # batch, input channels, sequence length
    input_size = L                      # train_dataset[0][0].shape[1]
    num_channels = (32, 32, 64)         # three TemporalBlocks (dilations 1, 2, 4)
    kernel_size = 3                     # see fidelity note at top of file

    key, kp, kx = jax.random.split(key, 3)
    params = init_tcn_params(kp, num_inputs, num_channels, kernel_size)
    x = jax.random.normal(kx, (N, num_inputs, L), jnp.float32)

    out = tcn_forward(x, params, kernel_size=kernel_size, input_size=input_size)
    out = jax.block_until_ready(out)
    assert out.shape == (N, 257, L), out.shape

    ref = tcn_reference(x, params, kernel_size, input_size)
    max_err = float(jnp.max(jnp.abs(out - ref)))
    assert jnp.allclose(out, ref, atol=2e-3, rtol=2e-3), f"max_err={max_err}"

    print("KERNEL_OK")
</pallas_src>

<mosaic_0001>
module attributes {stable_mosaic.version = 11 : i64} {
  func.func @kernel(%arg0: i32, %arg1: memref<2x8x256xbf16, #tpu.memory_space<vmem>>, %arg2: memref<1136x128xbf16, #tpu.memory_space<vmem>>, %arg3: memref<616x1xf32, #tpu.memory_space<vmem>>, %arg4: memref<2x257x256xf32, #tpu.memory_space<vmem>>, %arg5: memref<64x512xbf16, #tpu.memory_space<vmem>>, %arg6: memref<64x256xbf16, #tpu.memory_space<vmem>>) attributes {dimension_semantics = [#tpu.dimension_semantics<parallel>], iteration_bounds = array<i64: 2>, scalar_prefetch = 0 : i64, scratch_operands = 2 : i64, tpu.core_type = #tpu.core_type<tc>, window_params = [{transform_indices = @transform_0, window_bounds = array<i64: 2, 8, 256>}, {pipeline_mode = #tpu.pipeline_mode<synchronous>, transform_indices = @transform_1, window_bounds = array<i64: 1136, 128>}, {pipeline_mode = #tpu.pipeline_mode<synchronous>, transform_indices = @transform_2, window_bounds = array<i64: 616, 1>}, {transform_indices = @transform_3, window_bounds = array<i64: 2, 257, 256>}]} {
    %cst = arith.constant 0.000000e+00 : bf16
    %0 = vector.broadcast %cst : bf16 to vector<64x128xbf16>
    %c0 = arith.constant 0 : index
    %c0_0 = arith.constant 0 : index
    %1 = vector.load %arg5[%c0, %c0_0] : memref<64x512xbf16, #tpu.memory_space<vmem>>, vector<64x128xbf16>
    tpu.vector_store %arg5[%c0, %c0_0], %0 {strides = array<i32>} : memref<64x512xbf16, #tpu.memory_space<vmem>>, vector<64x128xbf16>,
    %cst_1 = arith.constant 0.000000e+00 : bf16
    %2 = vector.broadcast %cst_1 : bf16 to vector<64x128xbf16>
    %c0_2 = arith.constant 0 : index
    %c384 = arith.constant 384 : index
    %3 = vector.load %arg5[%c0_2, %c384] : memref<64x512xbf16, #tpu.memory_space<vmem>>, vector<64x128xbf16>
    tpu.vector_store %arg5[%c0_2, %c384], %2 {strides = array<i32>} : memref<64x512xbf16, #tpu.memory_space<vmem>>, vector<64x128xbf16>,
    %c0_3 = arith.constant 0 : index
    %c0_4 = arith.constant 0 : index
    %c0_5 = arith.constant 0 : index
    %4 = vector.load %arg1[%c0_3, %c0_4, %c0_5] : memref<2x8x256xbf16, #tpu.memory_space<vmem>>, vector<1x8x256xbf16>
    %5 = vector.shape_cast %4 : vector<1x8x256xbf16> to vector<8x256xbf16>
    %c0_6 = arith.constant 0 : index
    %c0_7 = arith.constant 0 : index
    %6 = vector.load %arg6[%c0_6, %c0_7] : memref<64x256xbf16, #tpu.memory_space<vmem>>, vector<8x256xbf16>
    tpu.vector_store %arg6[%c0_6, %c0_7], %5 {strides = array<i32>} : memref<64x256xbf16, #tpu.memory_space<vmem>>, vector<8x256xbf16>,
    %c0_8 = arith.constant 0 : index
    %c128 = arith.constant 128 : index
    %7 = vector.load %arg5[%c0_8, %c128] : memref<64x512xbf16, #tpu.memory_space<vmem>>, vector<8x256xbf16>
    tpu.vector_store %arg5[%c0_8, %c128], %5 {strides = array<i32>} : memref<64x512xbf16, #tpu.memory_space<vmem>>, vector<8x256xbf16>,
    %c0_9 = arith.constant 0 : index
    %c0_10 = arith.constant 0 : index
    %8 = vector.load %arg2[%c0_9, %c0_10] : memref<1136x128xbf16, #tpu.memory_space<vmem>>, vector<32x8xbf16>
    %c0_11 = arith.constant 0 : index
    %c127 = arith.constant 127 : index
    %9 = vector.load %arg5[%c0_11, %c127] : memref<64x512xbf16, #tpu.memory_space<vmem>>, vector<8x256xbf16>
    %cst_12 = arith.constant dense<0.000000e+00> : vector<32x256xf32>
    %10 = tpu.matmul %8, %9, %cst_12 {dimension_numbers = #tpu.dot_dimension_numbers<[1], [0], [0], [1], [0, 0, 1, 1], [], []>} : vector<32x8xbf16>, vector<8x256xbf16>, vector<32x256xf32> -> vector<32x256xf32>
    %c32 = arith.constant 32 : index
    %c0_13 = arith.constant 0 : index
    %11 = vector.load %arg2[%c32, %c0_13] : memref<1136x128xbf16, #tpu.memory_space<vmem>>, vector<32x8xbf16>
    %c0_14 = arith.constant 0 : index
    %c128_15 = arith.constant 128 : index
    %12 = vector.load %arg5[%c0_14, %c128_15] : memref<64x512xbf16, #tpu.memory_space<vmem>>, vector<8x256xbf16>
    %cst_16 = arith.constant dense<0.000000e+00> : vector<32x256xf32>
    %13 = tpu.matmul %11, %12, %cst_16 {dimension_numbers = #tpu.dot_dimension_numbers<[1], [0], [0], [1], [0, 0, 1, 1], [], []>} : vector<32x8xbf16>, vector<8x256xbf16>, vector<32x256xf32> -> vector<32x256xf32>
    %14 = arith.addf %10, %13 : vector<32x256xf32>
    %c64 = arith.constant 64 : index
    %c0_17 = arith.constant 0 : index
    %15 = vector.load %arg2[%c64, %c0_17] : memref<1136x128xbf16, #tpu.memory_space<vmem>>, vector<32x8xbf16>
    %c0_18 = arith.constant 0 : index
    %c129 = arith.constant 129 : index
    %16 = vector.load %arg5[%c0_18, %c129] : memref<64x512xbf16, #tpu.memory_space<vmem>>, vector<8x256xbf16>
    %cst_19 = arith.constant dense<0.000000e+00> : vector<32x256xf32>
    %17 = tpu.matmul %15, %16, %cst_19 {dimension_numbers = #tpu.dot_dimension_numbers<[1], [0], [0], [1], [0, 0, 1, 1], [], []>} : vector<32x8xbf16>, vector<8x256xbf16>, vector<32x256xf32> -> vector<32x256xf32>
    %18 = arith.addf %14, %17 : vector<32x256xf32>
    %c0_20 = arith.constant 0 : index
    %c0_21 = arith.constant 0 : index
    %19 = vector.load %arg3[%c0_20, %c0_21] : memref<616x1xf32, #tpu.memory_space<vmem>>, vector<32x1xf32>
    %20 = vector.broadcast %19 : vector<32x1xf32> to vector<32x256xf32>
    %21 = arith.addf %18, %20 : vector<32x256xf32>
    %cst_22 = arith.constant 0.000000e+00 : f32
    %22 = vector.broadcast %cst_22 : f32 to vector<32x256xf32>
    %23 = arith.maximumf %21, %22 : vector<32x256xf32>
    %24 = arith.truncf %23 : vector<32x256xf32> to vector<32x256xbf16>
    %c0_23 = arith.constant 0 : index
    %c128_24 = arith.constant 128 : index
    %25 = vector.load %arg5[%c0_23, %c128_24] : memref<64x512xbf16, #tpu.memory_space<vmem>>, vector<32x256xbf16>
    tpu.vector_store %arg5[%c0_23, %c128_24], %24 {strides = array<i32>} : memref<64x512xbf16, #tpu.memory_space<vmem>>, vector<32x256xbf16>,
    %c96 = arith.constant 96 : index
    %c0_25 = arith.constant 0 : index
    %26 = vector.load %arg2[%c96, %c0_25] : memref<1136x128xbf16, #tpu.memory_space<vmem>>, vector<32x32xbf16>
    %c0_26 = arith.constant 0 : index
    %c127_27 = arith.constant 127 : index
    %27 = vector.load %arg5[%c0_26, %c127_27] : memref<64x512xbf16, #tpu.memory_space<vmem>>, vector<32x256xbf16>
    %cst_28 = arith.constant dense<0.000000e+00> : vector<32x256xf32>
    %28 = tpu.matmul %26, %27, %cst_28 {dimension_numbers = #tpu.dot_dimension_numbers<[1], [0], [0], [1], [0, 0, 1, 1], [], []>} : vector<32x32xbf16>, vector<32x256xbf16>, vector<32x256xf32> -> vector<32x256xf32>
    %c128_29 = arith.constant 128 : index
    %c0_30 = arith.constant 0 : index
    %29 = vector.load %arg2[%c128_29, %c0_30] : memref<1136x128xbf16, #tpu.memory_space<vmem>>, vector<32x32xbf16>
    %c0_31 = arith.constant 0 : index
    %c128_32 = arith.constant 128 : index
    %30 = vector.load %arg5[%c0_31, %c128_32] : memref<64x512xbf16, #tpu.memory_space<vmem>>, vector<32x256xbf16>
    %cst_33 = arith.constant dense<0.000000e+00> : vector<32x256xf32>
    %31 = tpu.matmul %29, %30, %cst_33 {dimension_numbers = #tpu.dot_dimension_numbers<[1], [0], [0], [1], [0, 0, 1, 1], [], []>} : vector<32x32xbf16>, vector<32x256xbf16>, vector<32x256xf32> -> vector<32x256xf32>
    %32 = arith.addf %28, %31 : vector<32x256xf32>
    %c160 = arith.constant 160 : index
    %c0_34 = arith.constant 0 : index
    %33 = vector.load %arg2[%c160, %c0_34] : memref<1136x128xbf16, #tpu.memory_space<vmem>>, vector<32x32xbf16>
    %c0_35 = arith.constant 0 : index
    %c129_36 = arith.constant 129 : index
    %34 = vector.load %arg5[%c0_35, %c129_36] : memref<64x512xbf16, #tpu.memory_space<vmem>>, vector<32x256xbf16>
    %cst_37 = arith.constant dense<0.000000e+00> : vector<32x256xf32>
    %35 = tpu.matmul %33, %34, %cst_37 {dimension_numbers = #tpu.dot_dimension_numbers<[1], [0], [0], [1], [0, 0, 1, 1], [], []>} : vector<32x32xbf16>, vector<32x256xbf16>, vector<32x256xf32> -> vector<32x256xf32>
    %36 = arith.addf %32, %35 : vector<32x256xf32>
    %c32_38 = arith.constant 32 : index
    %c0_39 = arith.constant 0 : index
    %37 = vector.load %arg3[%c32_38, %c0_39] : memref<616x1xf32, #tpu.memory_space<vmem>>, vector<32x1xf32>
    %38 = vector.broadcast %37 : vector<32x1xf32> to vector<32x256xf32>
    %39 = arith.addf %36, %38 : vector<32x256xf32>
    %cst_40 = arith.constant 0.000000e+00 : f32
    %40 = vector.broadcast %cst_40 : f32 to vector<32x256xf32>
    %41 = arith.maximumf %39, %40 : vector<32x256xf32>
    %c0_41 = arith.constant 0 : index
    %c0_42 = arith.constant 0 : index
    %42 = vector.load %arg6[%c0_41, %c0_42] : memref<64x256xbf16, #tpu.memory_space<vmem>>, vector<8x256xbf16>
    %c192 = arith.constant 192 : index
    %c0_43 = arith.constant 0 : index
    %43 = vector.load %arg2[%c192, %c0_43] : memref<1136x128xbf16, #tpu.memory_space<vmem>>, vector<32x8xbf16>
    %cst_44 = arith.constant dense<0.000000e+00> : vector<32x256xf32>
    %44 = tpu.matmul %43, %42, %cst_44 {dimension_numbers = #tpu.dot_dimension_numbers<[1], [0], [0], [1], [0, 0, 1, 1], [], []>} : vector<32x8xbf16>, vector<8x256xbf16>, vector<32x256xf32> -> vector<32x256xf32>
    %c64_45 = arith.constant 64 : index
    %c0_46 = arith.constant 0 : index
    %45 = vector.load %arg3[%c64_45, %c0_46] : memref<616x1xf32, #tpu.memory_space<vmem>>, vector<32x1xf32>
    %46 = vector.broadcast %45 : vector<32x1xf32> to vector<32x256xf32>
    %47 = arith.addf %44, %46 : vector<32x256xf32>
    %48 = arith.addf %41, %47 : vector<32x256xf32>
    %cst_47 = arith.constant 0.000000e+00 : f32
    %49 = vector.broadcast %cst_47 : f32 to vector<32x256xf32>
    %50 = arith.maximumf %48, %49 : vector<32x256xf32>
    %51 = arith.truncf %50 : vector<32x256xf32> to vector<32x256xbf16>
    %c0_48 = arith.constant 0 : index
    %c0_49 = arith.constant 0 : index
    %52 = vector.load %arg6[%c0_48, %c0_49] : memref<64x256xbf16, #tpu.memory_space<vmem>>, vector<32x256xbf16>
    tpu.vector_store %arg6[%c0_48, %c0_49], %51 {strides = array<i32>} : memref<64x256xbf16, #tpu.memory_space<vmem>>, vector<32x256xbf16>,
    %c0_50 = arith.constant 0 : index
    %c128_51 = arith.constant 128 : index
    %53 = vector.load %arg5[%c0_50, %c128_51] : memref<64x512xbf16, #tpu.memory_space<vmem>>, vector<32x256xbf16>
    tpu.vector_store %arg5[%c0_50, %c128_51], %51 {strides = array<i32>} : memref<64x512xbf16, #tpu.memory_space<vmem>>, vector<32x256xbf16>,
    %c224 = arith.constant 224 : index
    %c0_52 = arith.constant 0 : index
    %54 = vector.load %arg2[%c224, %c0_52] : memref<1136x128xbf16, #tpu.memory_space<vmem>>, vector<32x32xbf16>
    %c0_53 = arith.constant 0 : index
    %c126 = arith.constant 126 : index
    %55 = vector.load %arg5[%c0_53, %c126] : memref<64x512xbf16, #tpu.memory_space<vmem>>, vector<32x256xbf16>
    %cst_54 = arith.constant dense<0.000000e+00> : vector<32x256xf32>
    %56 = tpu.matmul %54, %55, %cst_54 {dimension_numbers = #tpu.dot_dimension_numbers<[1], [0], [0], [1], [0, 0, 1, 1], [], []>} : vector<32x32xbf16>, vector<32x256xbf16>, vector<32x256xf32> -> vector<32x256xf32>
    %c256 = arith.constant 256 : index
    %c0_55 = arith.constant 0 : index
    %57 = vector.load %arg2[%c256, %c0_55] : memref<1136x128xbf16, #tpu.memory_space<vmem>>, vector<32x32xbf16>
    %c0_56 = arith.constant 0 : index
    %c128_57 = arith.constant 128 : index
    %58 = vector.load %arg5[%c0_56, %c128_57] : memref<64x512xbf16, #tpu.memory_space<vmem>>, vector<32x256xbf16>
    %cst_58 = arith.constant dense<0.000000e+00> : vector<32x256xf32>
    %59 = tpu.matmul %57, %58, %cst_58 {dimension_numbers = #tpu.dot_dimension_numbers<[1], [0], [0], [1], [0, 0, 1, 1], [], []>} : vector<32x32xbf16>, vector<32x256xbf16>, vector<32x256xf32> -> vector<32x256xf32>
    %60 = arith.addf %56, %59 : vector<32x256xf32>
    %c288 = arith.constant 288 : index
    %c0_59 = arith.constant 0 : index
    %61 = vector.load %arg2[%c288, %c0_59] : memref<1136x128xbf16, #tpu.memory_space<vmem>>, vector<32x32xbf16>
    %c0_60 = arith.constant 0 : index
    %c130 = arith.constant 130 : index
    %62 = vector.load %arg5[%c0_60, %c130] : memref<64x512xbf16, #tpu.memory_space<vmem>>, vector<32x256xbf16>
    %cst_61 = arith.constant dense<0.000000e+00> : vector<32x256xf32>
    %63 = tpu.matmul %61, %62, %cst_61 {dimension_numbers = #tpu.dot_dimension_numbers<[1], [0], [0], [1], [0, 0, 1, 1], [], []>} : vector<32x32xbf16>, vector<32x256xbf16>, vector<32x256xf32> -> vector<32x256xf32>
    %64 = arith.addf %60, %63 : vector<32x256xf32>
    %c96_62 = arith.constant 96 : index
    %c0_63 = arith.constant 0 : index
    %65 = vector.load %arg3[%c96_62, %c0_63] : memref<616x1xf32, #tpu.memory_space<vmem>>, vector<32x1xf32>
    %66 = vector.broadcast %65 : vector<32x1xf32> to vector<32x256xf32>
    %67 = arith.addf %64, %66 : vector<32x256xf32>
    %cst_64 = arith.constant 0.000000e+00 : f32
    %68 = vector.broadcast %cst_64 : f32 to vector<32x256xf32>
    %69 = arith.maximumf %67, %68 : vector<32x256xf32>
    %70 = arith.truncf %69 : vector<32x256xf32> to vector<32x256xbf16>
    %c0_65 = arith.constant 0 : index
    %c128_66 = arith.constant 128 : index
    %71 = vector.load %arg5[%c0_65, %c128_66] : memref<64x512xbf16, #tpu.memory_space<vmem>>, vector<32x256xbf16>
    tpu.vector_store %arg5[%c0_65, %c128_66], %70 {strides = array<i32>} : memref<64x512xbf16, #tpu.memory_space<vmem>>, vector<32x256xbf16>,
    %c320 = arith.constant 320 : index
    %c0_67 = arith.constant 0 : index
    %72 = vector.load %arg2[%c320, %c0_67] : memref<1136x128xbf16, #tpu.memory_space<vmem>>, vector<32x32xbf16>
    %c0_68 = arith.constant 0 : index
    %c126_69 = arith.constant 126 : index
    %73 = vector.load %arg5[%c0_68, %c126_69] : memref<64x512xbf16, #tpu.memory_space<vmem>>, vector<32x256xbf16>
    %cst_70 = arith.constant dense<0.000000e+00> : vector<32x256xf32>
    %74 = tpu.matmul %72, %73, %cst_70 {dimension_numbers = #tpu.dot_dimension_numbers<[1], [0], [0], [1], [0, 0, 1, 1], [], []>} : vector<32x32xbf16>, vector<32x256xbf16>, vector<32x256xf32> -> vector<32x256xf32>
    %c352 = arith.constant 352 : index
    %c0_71 = arith.constant 0 : index
    %75 = vector.load %arg2[%c352, %c0_71] : memref<1136x128xbf16, #tpu.memory_space<vmem>>, vector<32x32xbf16>
    %c0_72 = arith.constant 0 : index
    %c128_73 = arith.constant 128 : index
    %76 = vector.load %arg5[%c0_72, %c128_73] : memref<64x512xbf16, #tpu.memory_space<vmem>>, vector<32x256xbf16>
    %cst_74 = arith.constant dense<0.000000e+00> : vector<32x256xf32>
    %77 = tpu.matmul %75, %76, %cst_74 {dimension_numbers = #tpu.dot_dimension_numbers<[1], [0], [0], [1], [0, 0, 1, 1], [], []>} : vector<32x32xbf16>, vector<32x256xbf16>, vector<32x256xf32> -> vector<32x256xf32>
    %78 = arith.addf %74, %77 : vector<32x256xf32>
    %c384_75 = arith.constant 384 : index
    %c0_76 = arith.constant 0 : index
    %79 = vector.load %arg2[%c384_75, %c0_76] : memref<1136x128xbf16, #tpu.memory_space<vmem>>, vector<32x32xbf16>
    %c0_77 = arith.constant 0 : index
    %c130_78 = arith.constant 130 : index
    %80 = vector.load %arg5[%c0_77, %c130_78] : memref<64x512xbf16, #tpu.memory_space<vmem>>, vector<32x256xbf16>
    %cst_79 = arith.constant dense<0.000000e+00> : vector<32x256xf32>
    %81 = tpu.matmul %79, %80, %cst_79 {dimension_numbers = #tpu.dot_dimension_numbers<[1], [0], [0], [1], [0, 0, 1, 1], [], []>} : vector<32x32xbf16>, vector<32x256xbf16>, vector<32x256xf32> -> vector<32x256xf32>
    %82 = arith.addf %78, %81 : vector<32x256xf32>
    %c128_80 = arith.constant 128 : index
    %c0_81 = arith.constant 0 : index
    %83 = vector.load %arg3[%c128_80, %c0_81] : memref<616x1xf32, #tpu.memory_space<vmem>>, vector<32x1xf32>
    %84 = vector.broadcast %83 : vector<32x1xf32> to vector<32x256xf32>
    %85 = arith.addf %82, %84 : vector<32x256xf32>
    %cst_82 = arith.constant 0.000000e+00 : f32
    %86 = vector.broadcast %cst_82 : f32 to vector<32x256xf32>
    %87 = arith.maximumf %85, %86 : vector<32x256xf32>
    %c0_83 = arith.constant 0 : index
    %c0_84 = arith.constant 0 : index
    %88 = vector.load %arg6[%c0_83, %c0_84] : memref<64x256xbf16, #tpu.memory_space<vmem>>, vector<32x256xbf16>
    %89 = arith.extf %88 : vector<32x256xbf16> to vector<32x256xf32>
    %90 = arith.addf %87, %89 : vector<32x256xf32>
    %cst_85 = arith.constant 0.000000e+00 : f32
    %91 = vector.broadcast %cst_85 : f32 to vector<32x256xf32>
    %92 = arith.maximumf %90, %91 : vector<32x256xf32>
    %93 = arith.truncf %92 : vector<32x256xf32> to vector<32x256xbf16>
    %c0_86 = arith.constant 0 : index
    %c0_87 = arith.constant 0 : index
    %94 = vector.load %arg6[%c0_86, %c0_87] : memref<64x256xbf16, #tpu.memory_space<vmem>>, vector<32x256xbf16>
    tpu.vector_store %arg6[%c0_86, %c0_87], %93 {strides = array<i32>} : memref<64x256xbf16, #tpu.memory_space<vmem>>, vector<32x256xbf16>,
    %c0_88 = arith.constant 0 : index
    %c128_89 = arith.constant 128 : index
    %95 = vector.load %arg5[%c0_88, %c128_89] : memref<64x512xbf16, #tpu.memory_space<vmem>>, vector<32x256xbf16>
    tpu.vector_store %arg5[%c0_88, %c128_89], %93 {strides = array<i32>} : memref<64x512xbf16, #tpu.memory_space<vmem>>, vector<32x256xbf16>,
    %c416 = arith.constant 416 : index
    %c0_90 = arith.constant 0 : index
    %96 = vector.load %arg2[%c416, %c0_90] : memref<1136x128xbf16, #tpu.memory_space<vmem>>, vector<64x32xbf16>
    %c0_91 = arith.constant 0 : index
    %c124 = arith.constant 124 : index
    %97 = vector.load %arg5[%c0_91, %c124] : memref<64x512xbf16, #tpu.memory_space<vmem>>, vector<32x256xbf16>
    %cst_92 = arith.constant dense<0.000000e+00> : vector<64x256xf32>
    %98 = tpu.matmul %96, %97, %cst_92 {dimension_numbers = #tpu.dot_dimension_numbers<[1], [0], [0], [1], [0, 0, 1, 1], [], []>} : vector<64x32xbf16>, vector<32x256xbf16>, vector<64x256xf32> -> vector<64x256xf32>
    %c480 = arith.constant 480 : index
    %c0_93 = arith.constant 0 : index
    %99 = vector.load %arg2[%c480, %c0_93] : memref<1136x128xbf16, #tpu.memory_space<vmem>>, vector<64x32xbf16>
    %c0_94 = arith.constant 0 : index
    %c128_95 = arith.constant 128 : index
    %100 = vector.load %arg5[%c0_94, %c128_95] : memref<64x512xbf16, #tpu.memory_space<vmem>>, vector<32x256xbf16>
    %cst_96 = arith.constant dense<0.000000e+00> : vector<64x256xf32>
    %101 = tpu.matmul %99, %100, %cst_96 {dimension_numbers = #tpu.dot_dimension_numbers<[1], [0], [0], [1], [0, 0, 1, 1], [], []>} : vector<64x32xbf16>, vector<32x256xbf16>, vector<64x256xf32> -> vector<64x256xf32>
    %102 = arith.addf %98, %101 : vector<64x256xf32>
    %c544 = arith.constant 544 : index
    %c0_97 = arith.constant 0 : index
    %103 = vector.load %arg2[%c544, %c0_97] : memref<1136x128xbf16, #tpu.memory_space<vmem>>, vector<64x32xbf16>
    %c0_98 = arith.constant 0 : index
    %c132 = arith.constant 132 : index
    %104 = vector.load %arg5[%c0_98, %c132] : memref<64x512xbf16, #tpu.memory_space<vmem>>, vector<32x256xbf16>
    %cst_99 = arith.constant dense<0.000000e+00> : vector<64x256xf32>
    %105 = tpu.matmul %103, %104, %cst_99 {dimension_numbers = #tpu.dot_dimension_numbers<[1], [0], [0], [1], [0, 0, 1, 1], [], []>} : vector<64x32xbf16>, vector<32x256xbf16>, vector<64x256xf32> -> vector<64x256xf32>
    %106 = arith.addf %102, %105 : vector<64x256xf32>
    %c160_100 = arith.constant 160 : index
    %c0_101 = arith.constant 0 : index
    %107 = vector.load %arg3[%c160_100, %c0_101] : memref<616x1xf32, #tpu.memory_space<vmem>>, vector<64x1xf32>
    %108 = vector.broadcast %107 : vector<64x1xf32> to vector<64x256xf32>
    %109 = arith.addf %106, %108 : vector<64x256xf32>
    %cst_102 = arith.constant 0.000000e+00 : f32
    %110 = vector.broadcast %cst_102 : f32 to vector<64x256xf32>
    %111 = arith.maximumf %109, %110 : vector<64x256xf32>
    %112 = arith.truncf %111 : vector<64x256xf32> to vector<64x256xbf16>
    %c0_103 = arith.constant 0 : index
    %c128_104 = arith.constant 128 : index
    %113 = vector.load %arg5[%c0_103, %c128_104] : memref<64x512xbf16, #tpu.memory_space<vmem>>, vector<64x256xbf16>
    tpu.vector_store %arg5[%c0_103, %c128_104], %112 {strides = array<i32>} : memref<64x512xbf16, #tpu.memory_space<vmem>>, vector<64x256xbf16>,
    %c608 = arith.constant 608 : index
    %c0_105 = arith.constant 0 : index
    %114 = vector.load %arg2[%c608, %c0_105] : memref<1136x128xbf16, #tpu.memory_space<vmem>>, vector<64x64xbf16>
    %c0_106 = arith.constant 0 : index
    %c124_107 = arith.constant 124 : index
    %115 = vector.load %arg5[%c0_106, %c124_107] : memref<64x512xbf16, #tpu.memory_space<vmem>>, vector<64x256xbf16>
    %cst_108 = arith.constant dense<0.000000e+00> : vector<64x256xf32>
    %116 = tpu.matmul %114, %115, %cst_108 {dimension_numbers = #tpu.dot_dimension_numbers<[1], [0], [0], [1], [0, 0, 1, 1], [], []>} : vector<64x64xbf16>, vector<64x256xbf16>, vector<64x256xf32> -> vector<64x256xf32>
    %c672 = arith.constant 672 : index
    %c0_109 = arith.constant 0 : index
    %117 = vector.load %arg2[%c672, %c0_109] : memref<1136x128xbf16, #tpu.memory_space<vmem>>, vector<64x64xbf16>
    %c0_110 = arith.constant 0 : index
    %c128_111 = arith.constant 128 : index
    %118 = vector.load %arg5[%c0_110, %c128_111] : memref<64x512xbf16, #tpu.memory_space<vmem>>, vector<64x256xbf16>
    %cst_112 = arith.constant dense<0.000000e+00> : vector<64x256xf32>
    %119 = tpu.matmul %117, %118, %cst_112 {dimension_numbers = #tpu.dot_dimension_numbers<[1], [0], [0], [1], [0, 0, 1, 1], [], []>} : vector<64x64xbf16>, vector<64x256xbf16>, vector<64x256xf32> -> vector<64x256xf32>
    %120 = arith.addf %116, %119 : vector<64x256xf32>
    %c736 = arith.constant 736 : index
    %c0_113 = arith.constant 0 : index
    %121 = vector.load %arg2[%c736, %c0_113] : memref<1136x128xbf16, #tpu.memory_space<vmem>>, vector<64x64xbf16>
    %c0_114 = arith.constant 0 : index
    %c132_115 = arith.constant 132 : index
    %122 = vector.load %arg5[%c0_114, %c132_115] : memref<64x512xbf16, #tpu.memory_space<vmem>>, vector<64x256xbf16>
    %cst_116 = arith.constant dense<0.000000e+00> : vector<64x256xf32>
    %123 = tpu.matmul %121, %122, %cst_116 {dimension_numbers = #tpu.dot_dimension_numbers<[1], [0], [0], [1], [0, 0, 1, 1], [], []>} : vector<64x64xbf16>, vector<64x256xbf16>, vector<64x256xf32> -> vector<64x256xf32>
    %124 = arith.addf %120, %123 : vector<64x256xf32>
    %c224_117 = arith.constant 224 : index
    %c0_118 = arith.constant 0 : index
    %125 = vector.load %arg3[%c224_117, %c0_118] : memref<616x1xf32, #tpu.memory_space<vmem>>, vector<64x1xf32>
    %126 = vector.broadcast %125 : vector<64x1xf32> to vector<64x256xf32>
    %127 = arith.addf %124, %126 : vector<64x256xf32>
    %cst_119 = arith.constant 0.000000e+00 : f32
    %128 = vector.broadcast %cst_119 : f32 to vector<64x256xf32>
    %129 = arith.maximumf %127, %128 : vector<64x256xf32>
    %c0_120 = arith.constant 0 : index
    %c0_121 = arith.constant 0 : index
    %130 = vector.load %arg6[%c0_120, %c0_121] : memref<64x256xbf16, #tpu.memory_space<vmem>>, vector<32x256xbf16>
    %c800 = arith.constant 800 : index
    %c0_122 = arith.constant 0 : index
    %131 = vector.load %arg2[%c800, %c0_122] : memref<1136x128xbf16, #tpu.memory_space<vmem>>, vector<64x32xbf16>
    %cst_123 = arith.constant dense<0.000000e+00> : vector<64x256xf32>
    %132 = tpu.matmul %131, %130, %cst_123 {dimension_numbers = #tpu.dot_dimension_numbers<[1], [0], [0], [1], [0, 0, 1, 1], [], []>} : vector<64x32xbf16>, vector<32x256xbf16>, vector<64x256xf32> -> vector<64x256xf32>
    %c288_124 = arith.constant 288 : index
    %c0_125 = arith.constant 0 : index
    %133 = vector.load %arg3[%c288_124, %c0_125] : memref<616x1xf32, #tpu.memory_space<vmem>>, vector<64x1xf32>
    %134 = vector.broadcast %133 : vector<64x1xf32> to vector<64x256xf32>
    %135 = arith.addf %132, %134 : vector<64x256xf32>
    %136 = arith.addf %129, %135 : vector<64x256xf32>
    %cst_126 = arith.constant 0.000000e+00 : f32
    %137 = vector.broadcast %cst_126 : f32 to vector<64x256xf32>
    %138 = arith.maximumf %136, %137 : vector<64x256xf32>
    %139 = arith.truncf %138 : vector<64x256xf32> to vector<64x256xbf16>
    %c0_127 = arith.constant 0 : index
    %c0_128 = arith.constant 0 : index
    %140 = vector.load %arg6[%c0_127, %c0_128] : memref<64x256xbf16, #tpu.memory_space<vmem>>, vector<64x256xbf16>
    tpu.vector_store %arg6[%c0_127, %c0_128], %139 {strides = array<i32>} : memref<64x256xbf16, #tpu.memory_space<vmem>>, vector<64x256xbf16>,
    %c864 = arith.constant 864 : index
    %c0_129 = arith.constant 0 : index
    %141 = vector.load %arg2[%c864, %c0_129] : memref<1136x128xbf16, #tpu.memory_space<vmem>>, vector<257x64xbf16>
    %c0_130 = arith.constant 0 : index
    %c0_131 = arith.constant 0 : index
    %142 = vector.load %arg6[%c0_130, %c0_131] : memref<64x256xbf16, #tpu.memory_space<vmem>>, vector<64x256xbf16>
    %cst_132 = arith.constant dense<0.000000e+00> : vector<257x256xf32>
    %143 = tpu.matmul %141, %142, %cst_132 {dimension_numbers = #tpu.dot_dimension_numbers<[1], [0], [0], [1], [0, 0, 1, 1], [], []>} : vector<257x64xbf16>, vector<64x256xbf16>, vector<257x256xf32> -> vector<257x256xf32>
    %c352_133 = arith.constant 352 : index
    %c0_134 = arith.constant 0 : index
    %144 = vector.load %arg3[%c352_133, %c0_134] : memref<616x1xf32, #tpu.memory_space<vmem>>, vector<257x1xf32>
    %145 = vector.broadcast %144 : vector<257x1xf32> to vector<257x256xf32>
    %146 = arith.addf %143, %145 : vector<257x256xf32>
    %c0_135 = arith.constant 0 : index
    %c0_136 = arith.constant 0 : index
    %c0_137 = arith.constant 0 : index
    %147 = vector.load %arg4[%c0_135, %c0_136, %c0_137] : memref<2x257x256xf32, #tpu.memory_space<vmem>>, vector<1x257x256xf32>
    %148 = vector.shape_cast %147 : vector<1x257x256xf32> to vector<257x256xf32>
    %149 = vector.shape_cast %146 : vector<257x256xf32> to vector<1x257x256xf32>
    tpu.vector_store %arg4[%c0_135, %c0_136, %c0_137], %149 {strides = array<i32>} : memref<2x257x256xf32, #tpu.memory_space<vmem>>, vector<1x257x256xf32>,
    %c1 = arith.constant 1 : index
    %c0_138 = arith.constant 0 : index
    %c0_139 = arith.constant 0 : index
    %150 = vector.load %arg1[%c1, %c0_138, %c0_139] : memref<2x8x256xbf16, #tpu.memory_space<vmem>>, vector<1x8x256xbf16>
    %151 = vector.shape_cast %150 : vector<1x8x256xbf16> to vector<8x256xbf16>
    %c0_140 = arith.constant 0 : index
    %c0_141 = arith.constant 0 : index
    %152 = vector.load %arg6[%c0_140, %c0_141] : memref<64x256xbf16, #tpu.memory_space<vmem>>, vector<8x256xbf16>
    tpu.vector_store %arg6[%c0_140, %c0_141], %151 {strides = array<i32>} : memref<64x256xbf16, #tpu.memory_space<vmem>>, vector<8x256xbf16>,
    %c0_142 = arith.constant 0 : index
    %c128_143 = arith.constant 128 : index
    %153 = vector.load %arg5[%c0_142, %c128_143] : memref<64x512xbf16, #tpu.memory_space<vmem>>, vector<8x256xbf16>
    tpu.vector_store %arg5[%c0_142, %c128_143], %151 {strides = array<i32>} : memref<64x512xbf16, #tpu.memory_space<vmem>>, vector<8x256xbf16>,
    %c0_144 = arith.constant 0 : index
    %c0_145 = arith.constant 0 : index
    %154 = vector.load %arg2[%c0_144, %c0_145] : memref<1136x128xbf16, #tpu.memory_space<vmem>>, vector<32x8xbf16>
    %c0_146 = arith.constant 0 : index
    %c127_147 = arith.constant 127 : index
    %155 = vector.load %arg5[%c0_146, %c127_147] : memref<64x512xbf16, #tpu.memory_space<vmem>>, vector<8x256xbf16>
    %cst_148 = arith.constant dense<0.000000e+00> : vector<32x256xf32>
    %156 = tpu.matmul %154, %155, %cst_148 {dimension_numbers = #tpu.dot_dimension_numbers<[1], [0], [0], [1], [0, 0, 1, 1], [], []>} : vector<32x8xbf16>, vector<8x256xbf16>, vector<32x256xf32> -> vector<32x256xf32>
    %c32_149 = arith.constant 32 : index
    %c0_150 = arith.constant 0 : index
    %157 = vector.load %arg2[%c32_149, %c0_150] : memref<1136x128xbf16, #tpu.memory_space<vmem>>, vector<32x8xbf16>
    %c0_151 = arith.constant 0 : index
    %c128_152 = arith.constant 128 : index
    %158 = vector.load %arg5[%c0_151, %c128_152] : memref<64x512xbf16, #tpu.memory_space<vmem>>, vector<8x256xbf16>
    %cst_153 = arith.constant dense<0.000000e+00> : vector<32x256xf32>
    %159 = tpu.matmul %157, %158, %cst_153 {dimension_numbers = #tpu.dot_dimension_numbers<[1], [0], [0], [1], [0, 0, 1, 1], [], []>} : vector<32x8xbf16>, vector<8x256xbf16>, vector<32x256xf32> -> vector<32x256xf32>
    %160 = arith.addf %156, %159 : vector<32x256xf32>
    %c64_154 = arith.constant 64 : index
    %c0_155 = arith.constant 0 : index
    %161 = vector.load %arg2[%c64_154, %c0_155] : memref<1136x128xbf16, #tpu.memory_space<vmem>>, vector<32x8xbf16>
    %c0_156 = arith.constant 0 : index
    %c129_157 = arith.constant 129 : index
    %162 = vector.load %arg5[%c0_156, %c129_157] : memref<64x512xbf16, #tpu.memory_space<vmem>>, vector<8x256xbf16>
    %cst_158 = arith.constant dense<0.000000e+00> : vector<32x256xf32>
    %163 = tpu.matmul %161, %162, %cst_158 {dimension_numbers = #tpu.dot_dimension_numbers<[1], [0], [0], [1], [0, 0, 1, 1], [], []>} : vector<32x8xbf16>, vector<8x256xbf16>, vector<32x256xf32> -> vector<32x256xf32>
    %164 = arith.addf %160, %163 : vector<32x256xf32>
    %c0_159 = arith.constant 0 : index
    %c0_160 = arith.constant 0 : index
    %165 = vector.load %arg3[%c0_159, %c0_160] : memref<616x1xf32, #tpu.memory_space<vmem>>, vector<32x1xf32>
    %166 = vector.broadcast %165 : vector<32x1xf32> to vector<32x256xf32>
    %167 = arith.addf %164, %166 : vector<32x256xf32>
    %cst_161 = arith.constant 0.000000e+00 : f32
    %168 = vector.broadcast %cst_161 : f32 to vector<32x256xf32>
    %169 = arith.maximumf %167, %168 : vector<32x256xf32>
    %170 = arith.truncf %169 : vector<32x256xf32> to vector<32x256xbf16>
    %c0_162 = arith.constant 0 : index
    %c128_163 = arith.constant 128 : index
    %171 = vector.load %arg5[%c0_162, %c128_163] : memref<64x512xbf16, #tpu.memory_space<vmem>>, vector<32x256xbf16>
    tpu.vector_store %arg5[%c0_162, %c128_163], %170 {strides = array<i32>} : memref<64x512xbf16, #tpu.memory_space<vmem>>, vector<32x256xbf16>,
    %c96_164 = arith.constant 96 : index
    %c0_165 = arith.constant 0 : index
    %172 = vector.load %arg2[%c96_164, %c0_165] : memref<1136x128xbf16, #tpu.memory_space<vmem>>, vector<32x32xbf16>
    %c0_166 = arith.constant 0 : index
    %c127_167 = arith.constant 127 : index
    %173 = vector.load %arg5[%c0_166, %c127_167] : memref<64x512xbf16, #tpu.memory_space<vmem>>, vector<32x256xbf16>
    %cst_168 = arith.constant dense<0.000000e+00> : vector<32x256xf32>
    %174 = tpu.matmul %172, %173, %cst_168 {dimension_numbers = #tpu.dot_dimension_numbers<[1], [0], [0], [1], [0, 0, 1, 1], [], []>} : vector<32x32xbf16>, vector<32x256xbf16>, vector<32x256xf32> -> vector<32x256xf32>
    %c128_169 = arith.constant 128 : index
    %c0_170 = arith.constant 0 : index
    %175 = vector.load %arg2[%c128_169, %c0_170] : memref<1136x128xbf16, #tpu.memory_space<vmem>>, vector<32x32xbf16>
    %c0_171 = arith.constant 0 : index
    %c128_172 = arith.constant 128 : index
    %176 = vector.load %arg5[%c0_171, %c128_172] : memref<64x512xbf16, #tpu.memory_space<vmem>>, vector<32x256xbf16>
    %cst_173 = arith.constant dense<0.000000e+00> : vector<32x256xf32>
    %177 = tpu.matmul %175, %176, %cst_173 {dimension_numbers = #tpu.dot_dimension_numbers<[1], [0], [0], [1], [0, 0, 1, 1], [], []>} : vector<32x32xbf16>, vector<32x256xbf16>, vector<32x256xf32> -> vector<32x256xf32>
    %178 = arith.addf %174, %177 : vector<32x256xf32>
    %c160_174 = arith.constant 160 : index
    %c0_175 = arith.constant 0 : index
    %179 = vector.load %arg2[%c160_174, %c0_175] : memref<1136x128xbf16, #tpu.memory_space<vmem>>, vector<32x32xbf16>
    %c0_176 = arith.constant 0 : index
    %c129_177 = arith.constant 129 : index
    %180 = vector.load %arg5[%c0_176, %c129_177] : memref<64x512xbf16, #tpu.memory_space<vmem>>, vector<32x256xbf16>
    %cst_178 = arith.constant dense<0.000000e+00> : vector<32x256xf32>
    %181 = tpu.matmul %179, %180, %cst_178 {dimension_numbers = #tpu.dot_dimension_numbers<[1], [0], [0], [1], [0, 0, 1, 1], [], []>} : vector<32x32xbf16>, vector<32x256xbf16>, vector<32x256xf32> -> vector<32x256xf32>
    %182 = arith.addf %178, %181 : vector<32x256xf32>
    %c32_179 = arith.constant 32 : index
    %c0_180 = arith.constant 0 : index
    %183 = vector.load %arg3[%c32_179, %c0_180] : memref<616x1xf32, #tpu.memory_space<vmem>>, vector<32x1xf32>
    %184 = vector.broadcast %183 : vector<32x1xf32> to vector<32x256xf32>
    %185 = arith.addf %182, %184 : vector<32x256xf32>
    %cst_181 = arith.constant 0.000000e+00 : f32
    %186 = vector.broadcast %cst_181 : f32 to vector<32x256xf32>
    %187 = arith.maximumf %185, %186 : vector<32x256xf32>
    %c0_182 = arith.constant 0 : index
    %c0_183 = arith.constant 0 : index
    %188 = vector.load %arg6[%c0_182, %c0_183] : memref<64x256xbf16, #tpu.memory_space<vmem>>, vector<8x256xbf16>
    %c192_184 = arith.constant 192 : index
    %c0_185 = arith.constant 0 : index
    %189 = vector.load %arg2[%c192_184, %c0_185] : memref<1136x128xbf16, #tpu.memory_space<vmem>>, vector<32x8xbf16>
    %cst_186 = arith.constant dense<0.000000e+00> : vector<32x256xf32>
    %190 = tpu.matmul %189, %188, %cst_186 {dimension_numbers = #tpu.dot_dimension_numbers<[1], [0], [0], [1], [0, 0, 1, 1], [], []>} : vector<32x8xbf16>, vector<8x256xbf16>, vector<32x256xf32> -> vector<32x256xf32>
    %c64_187 = arith.constant 64 : index
    %c0_188 = arith.constant 0 : index
    %191 = vector.load %arg3[%c64_187, %c0_188] : memref<616x1xf32, #tpu.memory_space<vmem>>, vector<32x1xf32>
    %192 = vector.broadcast %191 : vector<32x1xf32> to vector<32x256xf32>
    %193 = arith.addf %190, %192 : vector<32x256xf32>
    %194 = arith.addf %187, %193 : vector<32x256xf32>
    %cst_189 = arith.constant 0.000000e+00 : f32
    %195 = vector.broadcast %cst_189 : f32 to vector<32x256xf32>
    %196 = arith.maximumf %194, %195 : vector<32x256xf32>
    %197 = arith.truncf %196 : vector<32x256xf32> to vector<32x256xbf16>
    %c0_190 = arith.constant 0 : index
    %c0_191 = arith.constant 0 : index
    %198 = vector.load %arg6[%c0_190, %c0_191] : memref<64x256xbf16, #tpu.memory_space<vmem>>, vector<32x256xbf16>
    tpu.vector_store %arg6[%c0_190, %c0_191], %197 {strides = array<i32>} : memref<64x256xbf16, #tpu.memory_space<vmem>>, vector<32x256xbf16>,
    %c0_192 = arith.constant 0 : index
    %c128_193 = arith.constant 128 : index
    %199 = vector.load %arg5[%c0_192, %c128_193] : memref<64x512xbf16, #tpu.memory_space<vmem>>, vector<32x256xbf16>
    tpu.vector_store %arg5[%c0_192, %c128_193], %197 {strides = array<i32>} : memref<64x512xbf16, #tpu.memory_space<vmem>>, vector<32x256xbf16>,
    %c224_194 = arith.constant 224 : index
    %c0_195 = arith.constant 0 : index
    %200 = vector.load %arg2[%c224_194, %c0_195] : memref<1136x128xbf16, #tpu.memory_space<vmem>>, vector<32x32xbf16>
    %c0_196 = arith.constant 0 : index
    %c126_197 = arith.constant 126 : index
    %201 = vector.load %arg5[%c0_196, %c126_197] : memref<64x512xbf16, #tpu.memory_space<vmem>>, vector<32x256xbf16>
    %cst_198 = arith.constant dense<0.000000e+00> : vector<32x256xf32>
    %202 = tpu.matmul %200, %201, %cst_198 {dimension_numbers = #tpu.dot_dimension_numbers<[1], [0], [0], [1], [0, 0, 1, 1], [], []>} : vector<32x32xbf16>, vector<32x256xbf16>, vector<32x256xf32> -> vector<32x256xf32>
    %c256_199 = arith.constant 256 : index
    %c0_200 = arith.constant 0 : index
    %203 = vector.load %arg2[%c256_199, %c0_200] : memref<1136x128xbf16, #tpu.memory_space<vmem>>, vector<32x32xbf16>
    %c0_201 = arith.constant 0 : index
    %c128_202 = arith.constant 128 : index
    %204 = vector.load %arg5[%c0_201, %c128_202] : memref<64x512xbf16, #tpu.memory_space<vmem>>, vector<32x256xbf16>
    %cst_203 = arith.constant dense<0.000000e+00> : vector<32x256xf32>
    %205 = tpu.matmul %203, %204, %cst_203 {dimension_numbers = #tpu.dot_dimension_numbers<[1], [0], [0], [1], [0, 0, 1, 1], [], []>} : vector<32x32xbf16>, vector<32x256xbf16>, vector<32x256xf32> -> vector<32x256xf32>
    %206 = arith.addf %202, %205 : vector<32x256xf32>
    %c288_204 = arith.constant 288 : index
    %c0_205 = arith.constant 0 : index
    %207 = vector.load %arg2[%c288_204, %c0_205] : memref<1136x128xbf16, #tpu.memory_space<vmem>>, vector<32x32xbf16>
    %c0_206 = arith.constant 0 : index
    %c130_207 = arith.constant 130 : index
    %208 = vector.load %arg5[%c0_206, %c130_207] : memref<64x512xbf16, #tpu.memory_space<vmem>>, vector<32x256xbf16>
    %cst_208 = arith.constant dense<0.000000e+00> : vector<32x256xf32>
    %209 = tpu.matmul %207, %208, %cst_208 {dimension_numbers = #tpu.dot_dimension_numbers<[1], [0], [0], [1], [0, 0, 1, 1], [], []>} : vector<32x32xbf16>, vector<32x256xbf16>, vector<32x256xf32> -> vector<32x256xf32>
    %210 = arith.addf %206, %209 : vector<32x256xf32>
    %c96_209 = arith.constant 96 : index
    %c0_210 = arith.constant 0 : index
    %211 = vector.load %arg3[%c96_209, %c0_210] : memref<616x1xf32, #tpu.memory_space<vmem>>, vector<32x1xf32>
    %212 = vector.broadcast %211 : vector<32x1xf32> to vector<32x256xf32>
    %213 = arith.addf %210, %212 : vector<32x256xf32>
    %cst_211 = arith.constant 0.000000e+00 : f32
    %214 = vector.broadcast %cst_211 : f32 to vector<32x256xf32>
    %215 = arith.maximumf %213, %214 : vector<32x256xf32>
    %216 = arith.truncf %215 : vector<32x256xf32> to vector<32x256xbf16>
    %c0_212 = arith.constant 0 : index
    %c128_213 = arith.constant 128 : index
    %217 = vector.load %arg5[%c0_212, %c128_213] : memref<64x512xbf16, #tpu.memory_space<vmem>>, vector<32x256xbf16>
    tpu.vector_store %arg5[%c0_212, %c128_213], %216 {strides = array<i32>} : memref<64x512xbf16, #tpu.memory_space<vmem>>, vector<32x256xbf16>,
    %c320_214 = arith.constant 320 : index
    %c0_215 = arith.constant 0 : index
    %218 = vector.load %arg2[%c320_214, %c0_215] : memref<1136x128xbf16, #tpu.memory_space<vmem>>, vector<32x32xbf16>
    %c0_216 = arith.constant 0 : index
    %c126_217 = arith.constant 126 : index
    %219 = vector.load %arg5[%c0_216, %c126_217] : memref<64x512xbf16, #tpu.memory_space<vmem>>, vector<32x256xbf16>
    %cst_218 = arith.constant dense<0.000000e+00> : vector<32x256xf32>
    %220 = tpu.matmul %218, %219, %cst_218 {dimension_numbers = #tpu.dot_dimension_numbers<[1], [0], [0], [1], [0, 0, 1, 1], [], []>} : vector<32x32xbf16>, vector<32x256xbf16>, vector<32x256xf32> -> vector<32x256xf32>
    %c352_219 = arith.constant 352 : index
    %c0_220 = arith.constant 0 : index
    %221 = vector.load %arg2[%c352_219, %c0_220] : memref<1136x128xbf16, #tpu.memory_space<vmem>>, vector<32x32xbf16>
    %c0_221 = arith.constant 0 : index
    %c128_222 = arith.constant 128 : index
    %222 = vector.load %arg5[%c0_221, %c128_222] : memref<64x512xbf16, #tpu.memory_space<vmem>>, vector<32x256xbf16>
    %cst_223 = arith.constant dense<0.000000e+00> : vector<32x256xf32>
    %223 = tpu.matmul %221, %222, %cst_223 {dimension_numbers = #tpu.dot_dimension_numbers<[1], [0], [0], [1], [0, 0, 1, 1], [], []>} : vector<32x32xbf16>, vector<32x256xbf16>, vector<32x256xf32> -> vector<32x256xf32>
    %224 = arith.addf %220, %223 : vector<32x256xf32>
    %c384_224 = arith.constant 384 : index
    %c0_225 = arith.constant 0 : index
    %225 = vector.load %arg2[%c384_224, %c0_225] : memref<1136x128xbf16, #tpu.memory_space<vmem>>, vector<32x32xbf16>
    %c0_226 = arith.constant 0 : index
    %c130_227 = arith.constant 130 : index
    %226 = vector.load %arg5[%c0_226, %c130_227] : memref<64x512xbf16, #tpu.memory_space<vmem>>, vector<32x256xbf16>
    %cst_228 = arith.constant dense<0.000000e+00> : vector<32x256xf32>
    %227 = tpu.matmul %225, %226, %cst_228 {dimension_numbers = #tpu.dot_dimension_numbers<[1], [0], [0], [1], [0, 0, 1, 1], [], []>} : vector<32x32xbf16>, vector<32x256xbf16>, vector<32x256xf32> -> vector<32x256xf32>
    %228 = arith.addf %224, %227 : vector<32x256xf32>
    %c128_229 = arith.constant 128 : index
    %c0_230 = arith.constant 0 : index
    %229 = vector.load %arg3[%c128_229, %c0_230] : memref<616x1xf32, #tpu.memory_space<vmem>>, vector<32x1xf32>
    %230 = vector.broadcast %229 : vector<32x1xf32> to vector<32x256xf32>
    %231 = arith.addf %228, %230 : vector<32x256xf32>
    %cst_231 = arith.constant 0.000000e+00 : f32
    %232 = vector.broadcast %cst_231 : f32 to vector<32x256xf32>
    %233 = arith.maximumf %231, %232 : vector<32x256xf32>
    %c0_232 = arith.constant 0 : index
    %c0_233 = arith.constant 0 : index
    %234 = vector.load %arg6[%c0_232, %c0_233] : memref<64x256xbf16, #tpu.memory_space<vmem>>, vector<32x256xbf16>
    %235 = arith.extf %234 : vector<32x256xbf16> to vector<32x256xf32>
    %236 = arith.addf %233, %235 : vector<32x256xf32>
    %cst_234 = arith.constant 0.000000e+00 : f32
    %237 = vector.broadcast %cst_234 : f32 to vector<32x256xf32>
    %238 = arith.maximumf %236, %237 : vector<32x256xf32>
    %239 = arith.truncf %238 : vector<32x256xf32> to vector<32x256xbf16>
    %c0_235 = arith.constant 0 : index
    %c0_236 = arith.constant 0 : index
    %240 = vector.load %arg6[%c0_235, %c0_236] : memref<64x256xbf16, #tpu.memory_space<vmem>>, vector<32x256xbf16>
    tpu.vector_store %arg6[%c0_235, %c0_236], %239 {strides = array<i32>} : memref<64x256xbf16, #tpu.memory_space<vmem>>, vector<32x256xbf16>,
    %c0_237 = arith.constant 0 : index
    %c128_238 = arith.constant 128 : index
    %241 = vector.load %arg5[%c0_237, %c128_238] : memref<64x512xbf16, #tpu.memory_space<vmem>>, vector<32x256xbf16>
    tpu.vector_store %arg5[%c0_237, %c128_238], %239 {strides = array<i32>} : memref<64x512xbf16, #tpu.memory_space<vmem>>, vector<32x256xbf16>,
    %c416_239 = arith.constant 416 : index
    %c0_240 = arith.constant 0 : index
    %242 = vector.load %arg2[%c416_239, %c0_240] : memref<1136x128xbf16, #tpu.memory_space<vmem>>, vector<64x32xbf16>
    %c0_241 = arith.constant 0 : index
    %c124_242 = arith.constant 124 : index
    %243 = vector.load %arg5[%c0_241, %c124_242] : memref<64x512xbf16, #tpu.memory_space<vmem>>, vector<32x256xbf16>
    %cst_243 = arith.constant dense<0.000000e+00> : vector<64x256xf32>
    %244 = tpu.matmul %242, %243, %cst_243 {dimension_numbers = #tpu.dot_dimension_numbers<[1], [0], [0], [1], [0, 0, 1, 1], [], []>} : vector<64x32xbf16>, vector<32x256xbf16>, vector<64x256xf32> -> vector<64x256xf32>
    %c480_244 = arith.constant 480 : index
    %c0_245 = arith.constant 0 : index
    %245 = vector.load %arg2[%c480_244, %c0_245] : memref<1136x128xbf16, #tpu.memory_space<vmem>>, vector<64x32xbf16>
    %c0_246 = arith.constant 0 : index
    %c128_247 = arith.constant 128 : index
    %246 = vector.load %arg5[%c0_246, %c128_247] : memref<64x512xbf16, #tpu.memory_space<vmem>>, vector<32x256xbf16>
    %cst_248 = arith.constant dense<0.000000e+00> : vector<64x256xf32>
    %247 = tpu.matmul %245, %246, %cst_248 {dimension_numbers = #tpu.dot_dimension_numbers<[1], [0], [0], [1], [0, 0, 1, 1], [], []>} : vector<64x32xbf16>, vector<32x256xbf16>, vector<64x256xf32> -> vector<64x256xf32>
    %248 = arith.addf %244, %247 : vector<64x256xf32>
    %c544_249 = arith.constant 544 : index
    %c0_250 = arith.constant 0 : index
    %249 = vector.load %arg2[%c544_249, %c0_250] : memref<1136x128xbf16, #tpu.memory_space<vmem>>, vector<64x32xbf16>
    %c0_251 = arith.constant 0 : index
    %c132_252 = arith.constant 132 : index
    %250 = vector.load %arg5[%c0_251, %c132_252] : memref<64x512xbf16, #tpu.memory_space<vmem>>, vector<32x256xbf16>
    %cst_253 = arith.constant dense<0.000000e+00> : vector<64x256xf32>
    %251 = tpu.matmul %249, %250, %cst_253 {dimension_numbers = #tpu.dot_dimension_numbers<[1], [0], [0], [1], [0, 0, 1, 1], [], []>} : vector<64x32xbf16>, vector<32x256xbf16>, vector<64x256xf32> -> vector<64x256xf32>
    %252 = arith.addf %248, %251 : vector<64x256xf32>
    %c160_254 = arith.constant 160 : index
    %c0_255 = arith.constant 0 : index
    %253 = vector.load %arg3[%c160_254, %c0_255] : memref<616x1xf32, #tpu.memory_space<vmem>>, vector<64x1xf32>
    %254 = vector.broadcast %253 : vector<64x1xf32> to vector<64x256xf32>
    %255 = arith.addf %252, %254 : vector<64x256xf32>
    %cst_256 = arith.constant 0.000000e+00 : f32
    %256 = vector.broadcast %cst_256 : f32 to vector<64x256xf32>
    %257 = arith.maximumf %255, %256 : vector<64x256xf32>
    %258 = arith.truncf %257 : vector<64x256xf32> to vector<64x256xbf16>
    %c0_257 = arith.constant 0 : index
    %c128_258 = arith.constant 128 : index
    %259 = vector.load %arg5[%c0_257, %c128_258] : memref<64x512xbf16, #tpu.memory_space<vmem>>, vector<64x256xbf16>
    tpu.vector_store %arg5[%c0_257, %c128_258], %258 {strides = array<i32>} : memref<64x512xbf16, #tpu.memory_space<vmem>>, vector<64x256xbf16>,
    %c608_259 = arith.constant 608 : index
    %c0_260 = arith.constant 0 : index
    %260 = vector.load %arg2[%c608_259, %c0_260] : memref<1136x128xbf16, #tpu.memory_space<vmem>>, vector<64x64xbf16>
    %c0_261 = arith.constant 0 : index
    %c124_262 = arith.constant 124 : index
    %261 = vector.load %arg5[%c0_261, %c124_262] : memref<64x512xbf16, #tpu.memory_space<vmem>>, vector<64x256xbf16>
    %cst_263 = arith.constant dense<0.000000e+00> : vector<64x256xf32>
    %262 = tpu.matmul %260, %261, %cst_263 {dimension_numbers = #tpu.dot_dimension_numbers<[1], [0], [0], [1], [0, 0, 1, 1], [], []>} : vector<64x64xbf16>, vector<64x256xbf16>, vector<64x256xf32> -> vector<64x256xf32>
    %c672_264 = arith.constant 672 : index
    %c0_265 = arith.constant 0 : index
    %263 = vector.load %arg2[%c672_264, %c0_265] : memref<1136x128xbf16, #tpu.memory_space<vmem>>, vector<64x64xbf16>
    %c0_266 = arith.constant 0 : index
    %c128_267 = arith.constant 128 : index
    %264 = vector.load %arg5[%c0_266, %c128_267] : memref<64x512xbf16, #tpu.memory_space<vmem>>, vector<64x256xbf16>
    %cst_268 = arith.constant dense<0.000000e+00> : vector<64x256xf32>
    %265 = tpu.matmul %263, %264, %cst_268 {dimension_numbers = #tpu.dot_dimension_numbers<[1], [0], [0], [1], [0, 0, 1, 1], [], []>} : vector<64x64xbf16>, vector<64x256xbf16>, vector<64x256xf32> -> vector<64x256xf32>
    %266 = arith.addf %262, %265 : vector<64x256xf32>
    %c736_269 = arith.constant 736 : index
    %c0_270 = arith.constant 0 : index
    %267 = vector.load %arg2[%c736_269, %c0_270] : memref<1136x128xbf16, #tpu.memory_space<vmem>>, vector<64x64xbf16>
    %c0_271 = arith.constant 0 : index
    %c132_272 = arith.constant 132 : index
    %268 = vector.load %arg5[%c0_271, %c132_272] : memref<64x512xbf16, #tpu.memory_space<vmem>>, vector<64x256xbf16>
    %cst_273 = arith.constant dense<0.000000e+00> : vector<64x256xf32>
    %269 = tpu.matmul %267, %268, %cst_273 {dimension_numbers = #tpu.dot_dimension_numbers<[1], [0], [0], [1], [0, 0, 1, 1], [], []>} : vector<64x64xbf16>, vector<64x256xbf16>, vector<64x256xf32> -> vector<64x256xf32>
    %270 = arith.addf %266, %269 : vector<64x256xf32>
    %c224_274 = arith.constant 224 : index
    %c0_275 = arith.constant 0 : index
    %271 = vector.load %arg3[%c224_274, %c0_275] : memref<616x1xf32, #tpu.memory_space<vmem>>, vector<64x1xf32>
    %272 = vector.broadcast %271 : vector<64x1xf32> to vector<64x256xf32>
    %273 = arith.addf %270, %272 : vector<64x256xf32>
    %cst_276 = arith.constant 0.000000e+00 : f32
    %274 = vector.broadcast %cst_276 : f32 to vector<64x256xf32>
    %275 = arith.maximumf %273, %274 : vector<64x256xf32>
    %c0_277 = arith.constant 0 : index
    %c0_278 = arith.constant 0 : index
    %276 = vector.load %arg6[%c0_277, %c0_278] : memref<64x256xbf16, #tpu.memory_space<vmem>>, vector<32x256xbf16>
    %c800_279 = arith.constant 800 : index
    %c0_280 = arith.constant 0 : index
    %277 = vector.load %arg2[%c800_279, %c0_280] : memref<1136x128xbf16, #tpu.memory_space<vmem>>, vector<64x32xbf16>
    %cst_281 = arith.constant dense<0.000000e+00> : vector<64x256xf32>
    %278 = tpu.matmul %277, %276, %cst_281 {dimension_numbers = #tpu.dot_dimension_numbers<[1], [0], [0], [1], [0, 0, 1, 1], [], []>} : vector<64x32xbf16>, vector<32x256xbf16>, vector<64x256xf32> -> vector<64x256xf32>
    %c288_282 = arith.constant 288 : index
    %c0_283 = arith.constant 0 : index
    %279 = vector.load %arg3[%c288_282, %c0_283] : memref<616x1xf32, #tpu.memory_space<vmem>>, vector<64x1xf32>
    %280 = vector.broadcast %279 : vector<64x1xf32> to vector<64x256xf32>
    %281 = arith.addf %278, %280 : vector<64x256xf32>
    %282 = arith.addf %275, %281 : vector<64x256xf32>
    %cst_284 = arith.constant 0.000000e+00 : f32
    %283 = vector.broadcast %cst_284 : f32 to vector<64x256xf32>
    %284 = arith.maximumf %282, %283 : vector<64x256xf32>
    %285 = arith.truncf %284 : vector<64x256xf32> to vector<64x256xbf16>
    %c0_285 = arith.constant 0 : index
    %c0_286 = arith.constant 0 : index
    %286 = vector.load %arg6[%c0_285, %c0_286] : memref<64x256xbf16, #tpu.memory_space<vmem>>, vector<64x256xbf16>
    tpu.vector_store %arg6[%c0_285, %c0_286], %285 {strides = array<i32>} : memref<64x256xbf16, #tpu.memory_space<vmem>>, vector<64x256xbf16>,
    %c864_287 = arith.constant 864 : index
    %c0_288 = arith.constant 0 : index
    %287 = vector.load %arg2[%c864_287, %c0_288] : memref<1136x128xbf16, #tpu.memory_space<vmem>>, vector<257x64xbf16>
    %c0_289 = arith.constant 0 : index
    %c0_290 = arith.constant 0 : index
    %288 = vector.load %arg6[%c0_289, %c0_290] : memref<64x256xbf16, #tpu.memory_space<vmem>>, vector<64x256xbf16>
    %cst_291 = arith.constant dense<0.000000e+00> : vector<257x256xf32>
    %289 = tpu.matmul %287, %288, %cst_291 {dimension_numbers = #tpu.dot_dimension_numbers<[1], [0], [0], [1], [0, 0, 1, 1], [], []>} : vector<257x64xbf16>, vector<64x256xbf16>, vector<257x256xf32> -> vector<257x256xf32>
    %c352_292 = arith.constant 352 : index
    %c0_293 = arith.constant 0 : index
    %290 = vector.load %arg3[%c352_292, %c0_293] : memref<616x1xf32, #tpu.memory_space<vmem>>, vector<257x1xf32>
    %291 = vector.broadcast %290 : vector<257x1xf32> to vector<257x256xf32>
    %292 = arith.addf %289, %291 : vector<257x256xf32>
    %c1_294 = arith.constant 1 : index
    %c0_295 = arith.constant 0 : index
    %c0_296 = arith.constant 0 : index
    %293 = vector.load %arg4[%c1_294, %c0_295, %c0_296] : memref<2x257x256xf32, #tpu.memory_space<vmem>>, vector<1x257x256xf32>
    %294 = vector.shape_cast %293 : vector<1x257x256xf32> to vector<257x256xf32>
    %295 = vector.shape_cast %292 : vector<257x256xf32> to vector<1x257x256xf32>
    tpu.vector_store %arg4[%c1_294, %c0_295, %c0_296], %295 {strides = array<i32>} : memref<2x257x256xf32, #tpu.memory_space<vmem>>, vector<1x257x256xf32>,
    return
  }
  func.func @transform_0(%arg0: i32) -> (i32, i32, i32) {
    %c0_i32 = arith.constant 0 : i32
    %c0_i32_0 = arith.constant 0 : i32
    %c0_i32_1 = arith.constant 0 : i32
    return %arg0, %c0_i32, %c0_i32_0 : i32, i32, i32
  }
  func.func @transform_1(%arg0: i32) -> (i32, i32) {
    %c0_i32 = arith.constant 0 : i32
    %c0_i32_0 = arith.constant 0 : i32
    %c0_i32_1 = arith.constant 0 : i32
    return %c0_i32, %c0_i32_0 : i32, i32
  }
  func.func @transform_2(%arg0: i32) -> (i32, i32) {
    %c0_i32 = arith.constant 0 : i32
    %c0_i32_0 = arith.constant 0 : i32
    %c0_i32_1 = arith.constant 0 : i32
    return %c0_i32, %c0_i32_0 : i32, i32
  }
  func.func @transform_3(%arg0: i32) -> (i32, i32, i32) {
    %c0_i32 = arith.constant 0 : i32
    %c0_i32_0 = arith.constant 0 : i32
    %c0_i32_1 = arith.constant 0 : i32
    return %arg0, %c0_i32, %c0_i32_0 : i32, i32, i32
  }
}

</mosaic_0001>

<llo_original>
// kernel: tpu_custom_call.1
$region0: #{tpu_custom_call.1}
  #allocation0 [shape = 'u32[]', space=smem, size = 0x4, offset = 0x4, fixed_abs, tag = 'smem constant byte address 0x4 - core index']
  #allocation1 [shape = 'u32[144,128]{1,0:T(1,128)}', space=vmem, size = 0x12000, scoped, tag = 'internal scratch']
  #allocation2 [shape = 'bf16[64,512]{1,0:T(16,128)(2,1)}', space=vmem, size = 0x10000, scoped, tag = 'scratch operand']
  #allocation3 [shape = 'bf16[64,256]{1,0:T(16,128)(2,1)}', space=vmem, size = 0x8000, scoped, tag = 'scratch operand']
  %s0 = inlined_call_operand.hbm [shape: bf16[4,8,256], index: 0, kind: input, shape index: {}]
  %s1 = inlined_call_operand.hbm [shape: bf16[1136,128], index: 1, kind: input, shape index: {}]
  %s2 = inlined_call_operand.vmem [shape: f32[616,1], index: 2, kind: input, shape index: {}]
  %s3 = inlined_call_operand.vmem [shape: f32[4,257,256], index: 3, kind: output, shape index: {}]
  %s4 = sld [smem:[#allocation0]]
  $region53: #{tpu_custom_call.1} parent=0
    _
  %s6 = ssub.s32 1, %s4
  %s7 = scalar_select 0, %s6, %s4
  $region1: #{tpu_custom_call.1} parent=0
    #allocation4 [shape = 'u8[16384]{0}', space=vmem, size = 0x4000, scoped, tag = 'input window, operand 0']
    #allocation5 [shape = 's32[2]{0}', space=sflag, size = 0x8, scoped, tag = 'scoped memory for tpu_custom_call.1']
    #allocation6 [shape = 'u8[290816]{0}', space=vmem, size = 0x47000, scoped, tag = 'input window, operand 1, single buffered']
    #allocation7 [shape = 's32[1]{0}', space=sflag, size = 0x4, scoped, tag = 'scoped memory for tpu_custom_call.1']
    %8 = vsyncpa [#allocation5], 0
    %s9 = scalar_lea.sflag [#allocation5], 1
    %10 = vsyncpa %s9, 0
    %11 = vsyncpa [#allocation7], 0
    loop: start=0, step=1, limit=4
    $region2: #{tpu_custom_call.1} parent=1 // loop_pre_header
      _
    $region3: #{tpu_custom_call.1} parent=1 // loop_header
      %s13 = sphi 0, %s17
      %p14 = scmp.ge.s32.totalorder %s13, 4
      %s23 = sphi 0, %s25
      %s26 = sphi 0, %s23
      %s27 = sphi 0, %s26
      %s43 = sphi 0, %s27
      %s47 = sphi 0, %s47
      %s49 = sphi 0, %s47
      %s50 = sphi 0, %s49
      %s64 = sphi 0, %s50
      %s68 = sphi 0, %s68
      %s70 = sphi 0, %s68
      %s71 = sphi 0, %s70
      %s85 = sphi 0, %s71
      %s91 = sphi 0, %s93
      %s94 = sphi 0, %s91
      %s95 = sphi 0, %s94
      %s111 = sphi 0, %s95
    $region4: #{tpu_custom_call.1} parent=1 // loop_header_branch
      %16 = sbr.rel (%p14) target = $region8
    $region5: #{tpu_custom_call.1} parent=1 // loop_body
      %s18 = ssub.s32 %s13, 1
      %s19 = ssub.s32 %s13, 2
      %s20 = sadd.s32 %s13, 1
      %s21 = ssub.s32 %s13, %s20
      %p22 = scmp.eq.s32.totalorder %s21, 0
      %s24 = sadd.s32 %s23, 1
      %s25 = scalar_select %p22, %s23, %s24
      %p28 = pneg %p22
      %p29 = scmp.eq.s32.totalorder %s13, 1
      %p30 = por %p28, %p29
      %p31 = scmp.ne.s32.totalorder %s23, %s26
      %p32 = scmp.eq.s32.totalorder %s13, 0
      %p33 = por %p31, %p32
      %p34 = scmp.ne.s32.totalorder %s23, %s26
      %p35 = scmp.eq.s32.totalorder %s18, 1
      %p36 = por %p34, %p35
      %p37 = scmp.ne.s32.totalorder %s26, %s27
      %p38 = scmp.eq.s32.totalorder %s18, 0
      %p39 = por %p37, %p38
      %p40 = scmp.ne.s32.totalorder %s26, %s27
      %p41 = scmp.eq.s32.totalorder %s19, 1
      %p42 = por %p40, %p41
      %p44 = scmp.ne.s32.totalorder %s27, %s43
      %p45 = scmp.eq.s32.totalorder %s19, 0
      %p46 = por %p44, %p45
      %s48 = sadd.s32 %s47, 1
      %p51 = scmp.eq.s32.totalorder %s13, 1
      %p52 = scmp.ne.s32.totalorder %s47, %s49
      %p53 = scmp.eq.s32.totalorder %s13, 0
      %p54 = por %p52, %p53
      %p55 = scmp.ne.s32.totalorder %s47, %s49
      %p56 = scmp.eq.s32.totalorder %s18, 1
      %p57 = por %p55, %p56
      %p58 = scmp.ne.s32.totalorder %s49, %s50
      %p59 = scmp.eq.s32.totalorder %s18, 0
      %p60 = por %p58, %p59
      %p61 = scmp.ne.s32.totalorder %s49, %s50
      %p62 = scmp.eq.s32.totalorder %s19, 1
      %p63 = por %p61, %p62
      %p65 = scmp.ne.s32.totalorder %s50, %s64
      %p66 = scmp.eq.s32.totalorder %s19, 0
      %p67 = por %p65, %p66
      %s69 = sadd.s32 %s68, 1
      %p72 = scmp.eq.s32.totalorder %s13, 1
      %p73 = scmp.ne.s32.totalorder %s68, %s70
      %p74 = scmp.eq.s32.totalorder %s13, 0
      %p75 = por %p73, %p74
      %p76 = scmp.ne.s32.totalorder %s68, %s70
      %p77 = scmp.eq.s32.totalorder %s18, 1
      %p78 = por %p76, %p77
      %p79 = scmp.ne.s32.totalorder %s70, %s71
      %p80 = scmp.eq.s32.totalorder %s18, 0
      %p81 = por %p79, %p80
      %p82 = scmp.ne.s32.totalorder %s70, %s71
      %p83 = scmp.eq.s32.totalorder %s19, 1
      %p84 = por %p82, %p83
      %p86 = scmp.ne.s32.totalorder %s71, %s85
      %p87 = scmp.eq.s32.totalorder %s19, 0
      %p88 = por %p86, %p87
      %s89 = ssub.s32 %s13, %s20
      %p90 = scmp.eq.s32.totalorder %s89, 0
      %s92 = sadd.s32 %s91, 1
      %s93 = scalar_select %p90, %s91, %s92
      %p96 = pneg %p90
      %p97 = scmp.eq.s32.totalorder %s13, 1
      %p98 = por %p96, %p97
      %p99 = scmp.ne.s32.totalorder %s91, %s94
      %p100 = scmp.eq.s32.totalorder %s13, 0
      %p101 = por %p99, %p100
      %p102 = scmp.ne.s32.totalorder %s91, %s94
      %p103 = scmp.eq.s32.totalorder %s18, 1
      %p104 = por %p102, %p103
      %p105 = scmp.ne.s32.totalorder %s94, %s95
      %p106 = scmp.eq.s32.totalorder %s18, 0
      %p107 = por %p105, %p106
      %p108 = scmp.ne.s32.totalorder %s94, %s95
      %p109 = scmp.eq.s32.totalorder %s19, 1
      %p110 = por %p108, %p109
      %p112 = scmp.ne.s32.totalorder %s95, %s111
      %p113 = scmp.eq.s32.totalorder %s19, 0
      %p114 = por %p112, %p113
      %p115 = scmp.le.s32.totalorder 1, %s13
      %p116 = scmp.lt.s32.totalorder %s13, 3
      %p117 = pnand %p115, %p116
      %p118 = pneg %p117
      // Predicated region
      $region9: #{tpu_custom_call.1} parent=5 // pred_check
        _
      $region10: #{tpu_custom_call.1} parent=5 // pred_check_branch
        %120 = sbr.rel (%p117) target = $region12
      $region11: #{tpu_custom_call.1} parent=5 // pred_region
        %s121 = ssub.s32 %s13, 1
        // Predicated region
        $region13: #{tpu_custom_call.1} parent=11 // pred_check
          %p122 = pneg %p60
        $region14: #{tpu_custom_call.1} parent=11 // pred_check_branch
          %124 = sbr.rel (%p122) target = $region16
        $region15: #{tpu_custom_call.1} parent=11 // pred_region
          %s126 = ssub.s32 9088, 9088
          %127 = vsyncadd [#allocation7], %s126
          %s128 = sshll.u32 [#allocation6], 4
          %s129 = int_to_ptr.vmem [resolvable:$true] %s128
          %134 = dma.hbm_to_vmem [thread:$0]  %s1, 9088, %s129, [#allocation7], 64, 64, 4
        $region16: #{tpu_custom_call.1} parent=11 // pred_fallthru
          _
        // Predicated region
        $region17: #{tpu_custom_call.1} parent=11 // pred_check
          %p135 = pneg %p81
        $region18: #{tpu_custom_call.1} parent=11 // pred_check_branch
          %137 = sbr.rel (%p135) target = $region20
        $region19: #{tpu_custom_call.1} parent=11 // pred_region
          _
        $region20: #{tpu_custom_call.1} parent=11 // pred_fallthru
          _
      $region12: #{tpu_custom_call.1} parent=5 // pred_fallthru
        _
      %p138 = scmp.lt.s32.totalorder %s13, 2
      // Predicated region
      $region21: #{tpu_custom_call.1} parent=5 // pred_check
        %p139 = pneg %p138
      $region22: #{tpu_custom_call.1} parent=5 // pred_check_branch
        %141 = sbr.rel (%p139) target = $region24
      $region23: #{tpu_custom_call.1} parent=5 // pred_region
        // Predicated region
        $region25: #{tpu_custom_call.1} parent=23 // pred_check
          %p142 = pneg %p33
        $region26: #{tpu_custom_call.1} parent=23 // pred_check_branch
          %144 = sbr.rel (%p142) target = $region28
        $region27: #{tpu_custom_call.1} parent=23 // pred_region
          %s145 = sand.u32 %s23, 1
          %s146 = scalar_lea.sflag [#allocation5], %s145
          %s147 = sand.u32 %s23, 1
          %s148 = smul.addr %s147, 16
          %s149 = scalar_lea.vmem [#allocation4], %s148
          %s150 = smul.u32 2, %s13
          %s152 = ssub.s32 256, 256
          %153 = vsyncadd %s146, %s152
          %s154 = smul.addr %s150, 2
          %s155 = smul.addr %s154, 64
          %s156 = scalar_lea.hbm %s0, %s155
          %s157 = sshll.u32 %s149, 4
          %s158 = int_to_ptr.vmem [resolvable:$true] %s157
          %163 = dma.hbm_to_vmem [thread:$0]  %s156, 256, %s158, %s146, 128, 128, 8
        $region28: #{tpu_custom_call.1} parent=23 // pred_fallthru
          _
      $region24: #{tpu_custom_call.1} parent=5 // pred_fallthru
        _
      %p164 = scmp.le.s32.totalorder 1, %s13
      %p165 = scmp.lt.s32.totalorder %s13, 3
      %p166 = pnand %p164, %p165
      %p167 = pneg %p166
      // Predicated region
      $region29: #{tpu_custom_call.1} parent=5 // pred_check
        _
      $region30: #{tpu_custom_call.1} parent=5 // pred_check_branch
        %169 = sbr.rel (%p166) target = $region32
      $region31: #{tpu_custom_call.1} parent=5 // pred_region
        %s170 = ssub.s32 %s13, 1
        %s171 = sand.u32 %s26, 1
        %s172 = scalar_lea.sflag [#allocation5], %s171
        %s173 = sand.u32 %s26, 1
        %s174 = smul.addr %s173, 16
        %s175 = scalar_lea.vmem [#allocation4], %s174
        // Predicated region
        $region33: #{tpu_custom_call.1} parent=31 // pred_check
          %p176 = pneg %p39
        $region34: #{tpu_custom_call.1} parent=31 // pred_check_branch
          %178 = sbr.rel (%p176) target = $region36
        $region35: #{tpu_custom_call.1} parent=31 // pred_region
          %179 = dma.done %s172, 256
        $region36: #{tpu_custom_call.1} parent=31 // pred_fallthru
          _
        // Predicated region
        $region37: #{tpu_custom_call.1} parent=31 // pred_check
          %p180 = pneg %p60
        $region38: #{tpu_custom_call.1} parent=31 // pred_check_branch
          %182 = sbr.rel (%p180) target = $region40
        $region39: #{tpu_custom_call.1} parent=31 // pred_region
          %183 = dma.done [#allocation7], 9088
        $region40: #{tpu_custom_call.1} parent=31 // pred_fallthru
          _
        %s184 = sand.u32 %s26, 1
        %s185 = scalar_lea.sflag [#allocation5], %s184
        %s186 = sand.u32 %s26, 1
        %s187 = smul.addr %s186, 16
        %s188 = scalar_lea.vmem [#allocation4], %s187
        %p189 = pneg %p39
        %p190 = pneg %p36
        %p191 = pneg %p60
        %p192 = pneg %p57
        %p193 = pneg %p81
        %p194 = pneg %p78
        %p195 = pneg %p107
        %p196 = pneg %p104
        %s197 = smul.u32 2, %s18
        %p198 = scmp.lt.s32.totalorder %s197, 3
        %s199 = scalar_select %p198, %s197, 3
        %s200 = smul.addr %s199, 66
        %s201 = smul.addr %s200, 8
        %s202 = scalar_lea.vmem %s3, %s201
        %s203 = smul.u32 2, %s18
        %s204 = smul.u32 2, %s18
        %p205 = scmp.lt.s32.totalorder %s204, 3
        %s206 = scalar_select %p205, %s204, 3
        %s207 = smul.addr %s206, 66
        %s208 = smul.addr %s207, 8
        %s209 = scalar_lea.vmem %s3, %s208
        %s210 = smul.u32 2, %s18
        %212 = vst [vmem:[#allocation2] sm:$0xff] 0
        %213 = vst [vmem:[#allocation2 + $0x20] sm:$0xff] 0
        %214 = vst [vmem:[#allocation2 + $0x40] sm:$0xff] 0
        %215 = vst [vmem:[#allocation2 + $0x60] sm:$0xff] 0
        %216 = vst [vmem:[#allocation2 + $0x18] sm:$0xff] 0
        %217 = vst [vmem:[#allocation2 + $0x38] sm:$0xff] 0
        %218 = vst [vmem:[#allocation2 + $0x58] sm:$0xff] 0
        %219 = vst [vmem:[#allocation2 + $0x78] sm:$0xff] 0
        %v220 = vld [vmem:[%s175] sm:$0xff]
        %v222 = vunpack.c.l.b16 %v220
        %v223 = vunpack.c.h.b16 %v220
        %v224 = vpack.c.b16 %v222, %v222
        %v225 = vpack.c.b16 %v223, %v223
        %228 = vst [vmem:[#allocation3] sm:$0xf] %v224
        %229 = vst [vmem:[#allocation3 + $0x8] sm:$0xf] %v225
        %230 = vst [vmem:[#allocation2 + $0x8] sm:$0xf] %v224
        %231 = vst [vmem:[#allocation2 + $0x10] sm:$0xf] %v225
        %v232 = vld [vmem:[#allocation6] sm:$0xf]
        %v233 = vld [vmem:[#allocation6 + $0x4] sm:$0xf]
        %v234 = vld [vmem:[#allocation6 + $0x8] sm:$0xf]
        %v235 = vld [vmem:[#allocation6 + $0xc] sm:$0xf]
        %v236 = vld [vmem:[#allocation2] sm:$0xf]
        %v237 = vld [vmem:[#allocation2 + $0x8] sm:$0xf]
        %v238 = vld [vmem:[#allocation2 + $0x10] sm:$0xf]
        %v239 = vld [vmem:[#allocation6 + $0x10] sm:$0xf]
        %v240 = vld [vmem:[#allocation6 + $0x14] sm:$0xf]
        %v241 = vld [vmem:[#allocation6 + $0x18] sm:$0xf]
        %v242 = vld [vmem:[#allocation6 + $0x1c] sm:$0xf]
        %v247 = vunpack.c.l.b16 %v239
        %v248 = vunpack.c.l.b16 %v240
        %v249 = vunpack.c.l.b16 %v241
        %v250 = vunpack.c.l.b16 %v242
        %v251 = vpack.c.b16 %v248, %v247
        %v252 = vpack.c.b16 %v250, %v249
        %vm253 = vcmask 64512
        %v255 = vsel %vm253, %v251, 0
        %v258 = vsel %vm253, %v252, 0
        %vm260 = vcmask 1043456
        %v262 = vsel %vm260, %v237, 0
        %v265 = vsel %vm260, %v238, 0
        %267 = vmatprep.subr.bf16.mxu0 %v265
        %268 = vmatpush1.bf16.msra.mxu0 %v262
        %269 = vmatprep.subr.bf16.mxu0 0
        %270 = vmatpush1.bf16.msra.mxu0 0
        %271 = vmatprep.subr.bf16.mxu0 0
        %272 = vmatpush1.bf16.msra.mxu0 0
        %273 = vmatprep.subr.bf16.mxu0 0
        %274 = vmatpush1.bf16.msra.mxu0 0
        %275 = vmatprep.subr.bf16.mxu0 0
        %276 = vmatpush1.bf16.msra.mxu0 0
        %277 = vmatprep.subr.bf16.mxu0 0
        %278 = vmatpush1.bf16.msra.mxu0 0
        %279 = vmatprep.subr.bf16.mxu0 0
        %280 = vmatpush1.bf16.msra.mxu0 0
        %281 = vmatprep.subr.bf16.mxu0 0
        %282 = vmatpush1.bf16.msra.mxu0 0
        %283 = vmatprep.subr.bf16.mxu0 0
        %284 = vmatpush1.bf16.msra.mxu0 0
        %285 = vmatprep.subr.bf16.mxu0 0
        %286 = vmatpush1.bf16.msra.mxu0 0
        %287 = vmatprep.subr.bf16.mxu0 0
        %288 = vmatpush1.bf16.msra.mxu0 0
        %289 = vmatprep.subr.bf16.mxu0 0
        %290 = vmatpush1.bf16.msra.mxu0 0
        %291 = vmatprep.subr.bf16.mxu0 0
        %292 = vmatpush1.bf16.msra.mxu0 0
        %293 = vmatprep.subr.bf16.mxu0 0
        %294 = vmatpush1.bf16.msra.mxu0 0
        %295 = vmatprep.subr.bf16.mxu0 0
        %296 = vmatpush1.bf16.msra.mxu0 0
        %297 = vmatprep.subr.bf16.mxu0 0
        %298 = vmatpush1.bf16.msra.mxu0 0
        %299 = vmatprep.mubr.bf16.mxu0 0
        %300 = vmatmul.mubr.bf16.gmra.mrb[0].mxu0 %v255
        %v301 = vpop.f32.mrb[0].mxu0
        %v302 = vadd.f32 0.0, %v301
        %v303 = vpop.f32.mrb[0].mxu0
        %v304 = vadd.f32 0.0, %v303
        %v305 = vpop.f32.mrb[0].mxu0
        %v306 = vadd.f32 0.0, %v305
        %v307 = vpop.f32.mrb[0].mxu0
        %v308 = vadd.f32 0.0, %v307
        %309 = vmatprep.mubr.bf16.mxu0 0
        %310 = vmatmul.mubr.bf16.gmra.mrb[0].mxu0 %v258
        %v311 = vpop.f32.mrb[0].mxu0
        %v312 = vadd.f32 0.0, %v311
        %v313 = vpop.f32.mrb[0].mxu0
        %v314 = vadd.f32 0.0, %v313
        %v315 = vpop.f32.mrb[0].mxu0
        %v316 = vadd.f32 0.0, %v315
        %v317 = vpop.f32.mrb[0].mxu0
        %v318 = vadd.f32 0.0, %v317
        %319 = vdwg.mxu0
        %v324 = vunpack.c.l.b16 %v232
        %v325 = vunpack.c.l.b16 %v233
        %v326 = vunpack.c.l.b16 %v234
        %v327 = vunpack.c.l.b16 %v235
        %v328 = vpack.c.b16 %v325, %v324
        %v329 = vpack.c.b16 %v327, %v326
        %333 = vrot.lane.b32.xlu0 %v236, 1
        %v334 = vpop.permute.xlu0 %333
        %335 = vrot.lane.b32.xlu0 %v237, 1
        %v336 = vpop.permute.xlu0 %335
        %337 = vrot.lane.b32.xlu0 %v238, 1
        %v338 = vpop.permute.xlu0 %337
        %vm339 = vcmask 7168
        %v340 = vsel %vm339, %v334, %v336
        %v341 = vsel %vm339, %v336, %v338
        %v343 = vsel %vm253, %v328, 0
        %v346 = vsel %vm253, %v329, 0
        %v349 = vsel %vm260, %v340, 0
        %v352 = vsel %vm260, %v341, 0
        %354 = vmatprep.subr.bf16.mxu0 %v352
        %355 = vmatpush1.bf16.msra.mxu0 %v349
        %356 = vmatprep.subr.bf16.mxu0 0
        %357 = vmatpush1.bf16.msra.mxu0 0
        %358 = vmatprep.subr.bf16.mxu0 0
        %359 = vmatpush1.bf16.msra.mxu0 0
        %360 = vmatprep.subr.bf16.mxu0 0
        %361 = vmatpush1.bf16.msra.mxu0 0
        %362 = vmatprep.subr.bf16.mxu0 0
        %363 = vmatpush1.bf16.msra.mxu0 0
        %364 = vmatprep.subr.bf16.mxu0 0
        %365 = vmatpush1.bf16.msra.mxu0 0
        %366 = vmatprep.subr.bf16.mxu0 0
        %367 = vmatpush1.bf16.msra.mxu0 0
        %368 = vmatprep.subr.bf16.mxu0 0
        %369 = vmatpush1.bf16.msra.mxu0 0
        %370 = vmatprep.subr.bf16.mxu0 0
        %371 = vmatpush1.bf16.msra.mxu0 0
        %372 = vmatprep.subr.bf16.mxu0 0
        %373 = vmatpush1.bf16.msra.mxu0 0
        %374 = vmatprep.subr.bf16.mxu0 0
        %375 = vmatpush1.bf16.msra.mxu0 0
        %376 = vmatprep.subr.bf16.mxu0 0
        %377 = vmatpush1.bf16.msra.mxu0 0
        %378 = vmatprep.subr.bf16.mxu0 0
        %379 = vmatpush1.bf16.msra.mxu0 0
        %380 = vmatprep.subr.bf16.mxu0 0
        %381 = vmatpush1.bf16.msra.mxu0 0
        %382 = vmatprep.subr.bf16.mxu0 0
        %383 = vmatpush1.bf16.msra.mxu0 0
        %384 = vmatprep.subr.bf16.mxu0 0
        %385 = vmatpush1.bf16.msra.mxu0 0
        %386 = vmatprep.mubr.bf16.mxu0 0
        %387 = vmatmul.mubr.bf16.gmra.mrb[0].mxu0 %v343
        %v388 = vpop.f32.mrb[0].mxu0
        %v389 = vadd.f32 %v302, %v388
        %v390 = vpop.f32.mrb[0].mxu0
        %v391 = vadd.f32 %v304, %v390
        %v392 = vpop.f32.mrb[0].mxu0
        %v393 = vadd.f32 %v306, %v392
        %v394 = vpop.f32.mrb[0].mxu0
        %v395 = vadd.f32 %v308, %v394
        %396 = vmatprep.mubr.bf16.mxu0 0
        %397 = vmatmul.mubr.bf16.gmra.mrb[0].mxu0 %v346
        %v398 = vpop.f32.mrb[0].mxu0
        %v399 = vadd.f32 %v312, %v398
        %v400 = vpop.f32.mrb[0].mxu0
        %v401 = vadd.f32 %v314, %v400
        %v402 = vpop.f32.mrb[0].mxu0
        %v403 = vadd.f32 %v316, %v402
        %v404 = vpop.f32.mrb[0].mxu0
        %v405 = vadd.f32 %v318, %v404
        %406 = vdwg.mxu0
        %v407 = vld [vmem:[#allocation6 + $0x20] sm:$0xf]
        %v408 = vld [vmem:[#allocation6 + $0x24] sm:$0xf]
        %v409 = vld [vmem:[#allocation6 + $0x28] sm:$0xf]
        %v410 = vld [vmem:[#allocation6 + $0x2c] sm:$0xf]
        %v411 = vld [vmem:[#allocation2 + $0x8] sm:$0xf]
        %v412 = vld [vmem:[#allocation2 + $0x10] sm:$0xf]
        %v413 = vld [vmem:[#allocation2 + $0x18] sm:$0xf]
        %v418 = vunpack.c.l.b16 %v407
        %v419 = vunpack.c.l.b16 %v408
        %v420 = vunpack.c.l.b16 %v409
        %v421 = vunpack.c.l.b16 %v410
        %v422 = vpack.c.b16 %v419, %v418
        %v423 = vpack.c.b16 %v421, %v420
        %427 = vrot.lane.b32.xlu0 %v411, 127
        %v428 = vpop.permute.xlu0 %427
        %429 = vrot.lane.b32.xlu0 %v412, 127
        %v430 = vpop.permute.xlu0 %429
        %431 = vrot.lane.b32.xlu0 %v413, 127
        %v432 = vpop.permute.xlu0 %431
        %vm433 = vcmask 1039360
        %v434 = vsel %vm433, %v428, %v430
        %v435 = vsel %vm433, %v430, %v432
        %v437 = vsel %vm253, %v422, 0
        %v440 = vsel %vm253, %v423, 0
        %v443 = vsel %vm260, %v434, 0
        %v446 = vsel %vm260, %v435, 0
        %448 = vmatprep.subr.bf16.mxu0 %v446
        %449 = vmatpush1.bf16.msra.mxu0 %v443
        %450 = vmatprep.subr.bf16.mxu0 0
        %451 = vmatpush1.bf16.msra.mxu0 0
        %452 = vmatprep.subr.bf16.mxu0 0
        %453 = vmatpush1.bf16.msra.mxu0 0
        %454 = vmatprep.subr.bf16.mxu0 0
        %455 = vmatpush1.bf16.msra.mxu0 0
        %456 = vmatprep.subr.bf16.mxu0 0
        %457 = vmatpush1.bf16.msra.mxu0 0
        %458 = vmatprep.subr.bf16.mxu0 0
        %459 = vmatpush1.bf16.msra.mxu0 0
        %460 = vmatprep.subr.bf16.mxu0 0
        %461 = vmatpush1.bf16.msra.mxu0 0
        %462 = vmatprep.subr.bf16.mxu0 0
        %463 = vmatpush1.bf16.msra.mxu0 0
        %464 = vmatprep.subr.bf16.mxu0 0
        %465 = vmatpush1.bf16.msra.mxu0 0
        %466 = vmatprep.subr.bf16.mxu0 0
        %467 = vmatpush1.bf16.msra.mxu0 0
        %468 = vmatprep.subr.bf16.mxu0 0
        %469 = vmatpush1.bf16.msra.mxu0 0
        %470 = vmatprep.subr.bf16.mxu0 0
        %471 = vmatpush1.bf16.msra.mxu0 0
        %472 = vmatprep.subr.bf16.mxu0 0
        %473 = vmatpush1.bf16.msra.mxu0 0
        %474 = vmatprep.subr.bf16.mxu0 0
        %475 = vmatpush1.bf16.msra.mxu0 0
        %476 = vmatprep.subr.bf16.mxu0 0
        %477 = vmatpush1.bf16.msra.mxu0 0
        %478 = vmatprep.subr.bf16.mxu0 0
        %479 = vmatpush1.bf16.msra.mxu0 0
        %480 = vmatprep.mubr.bf16.mxu0 0
        %481 = vmatmul.mubr.bf16.gmra.mrb[0].mxu0 %v437
        %v482 = vpop.f32.mrb[0].mxu0
        %v483 = vadd.f32 0.0, %v482
        %v484 = vpop.f32.mrb[0].mxu0
        %v485 = vadd.f32 0.0, %v484
        %v486 = vpop.f32.mrb[0].mxu0
        %v487 = vadd.f32 0.0, %v486
        %v488 = vpop.f32.mrb[0].mxu0
        %v489 = vadd.f32 0.0, %v488
        %490 = vmatprep.mubr.bf16.mxu0 0
        %491 = vmatmul.mubr.bf16.gmra.mrb[0].mxu0 %v440
        %v492 = vpop.f32.mrb[0].mxu0
        %v493 = vadd.f32 0.0, %v492
        %v494 = vpop.f32.mrb[0].mxu0
        %v495 = vadd.f32 0.0, %v494
        %v496 = vpop.f32.mrb[0].mxu0
        %v497 = vadd.f32 0.0, %v496
        %v498 = vpop.f32.mrb[0].mxu0
        %v499 = vadd.f32 0.0, %v498
        %500 = vdwg.mxu0
        %v501 = vadd.f32 %v389, %v483
        %v502 = vadd.f32 %v391, %v485
        %v503 = vadd.f32 %v393, %v487
        %v504 = vadd.f32 %v395, %v489
        %v505 = vadd.f32 %v399, %v493
        %v506 = vadd.f32 %v401, %v495
        %v507 = vadd.f32 %v403, %v497
        %v508 = vadd.f32 %v405, %v499
        %v509 = vld [vmem:[%s2] sm:$0xff]
        %v510 = vld [vmem:[%s2 + $0x8] sm:$0xff]
        %v511 = vld [vmem:[%s2 + $0x10] sm:$0xff]
        %v512 = vld [vmem:[%s2 + $0x18] sm:$0xff]
        %514 = vset.pattern.permute.xlu0 0
        %515 = vperm.xlu0 %514, %v509
        %v516 = vpop.permute.xlu0 %515
        %519 = vset.pattern.permute.xlu0 0
        %520 = vperm.xlu0 %519, %v510
        %v521 = vpop.permute.xlu0 %520
        %524 = vset.pattern.permute.xlu0 0
        %525 = vperm.xlu0 %524, %v511
        %v526 = vpop.permute.xlu0 %525
        %529 = vset.pattern.permute.xlu0 0
        %530 = vperm.xlu0 %529, %v512
        %v531 = vpop.permute.xlu0 %530
        %v533 = vadd.f32 %v501, %v516
        %v534 = vadd.f32 %v502, %v516
        %v535 = vadd.f32 %v503, %v521
        %v536 = vadd.f32 %v504, %v521
        %v537 = vadd.f32 %v505, %v526
        %v538 = vadd.f32 %v506, %v526
        %v539 = vadd.f32 %v507, %v531
        %v540 = vadd.f32 %v508, %v531
        %v541 = vmax.f32 %v533, 0.0
        %v542 = vmax.f32 %v534, 0.0
        %v543 = vmax.f32 %v535, 0.0
        %v544 = vmax.f32 %v536, 0.0
        %v545 = vmax.f32 %v537, 0.0
        %v546 = vmax.f32 %v538, 0.0
        %v547 = vmax.f32 %v539, 0.0
        %v548 = vmax.f32 %v540, 0.0
        %v549 = vpack.c.bf16 %v543, %v541
        %v550 = vpack.c.bf16 %v544, %v542
        %v551 = vpack.c.bf16 %v547, %v545
        %v552 = vpack.c.bf16 %v548, %v546
        %553 = vst [vmem:[#allocation2 + $0x8] sm:$0xff] %v549
        %554 = vst [vmem:[#allocation2 + $0x10] sm:$0xff] %v550
        %555 = vst [vmem:[#allocation2 + $0x28] sm:$0xff] %v551
        %556 = vst [vmem:[#allocation2 + $0x30] sm:$0xff] %v552
        %v557 = vld [vmem:[#allocation6 + $0x30] sm:$0xf]
        %v558 = vld [vmem:[#allocation6 + $0x34] sm:$0xf]
        %v559 = vld [vmem:[#allocation6 + $0x38] sm:$0xf]
        %v560 = vld [vmem:[#allocation6 + $0x3c] sm:$0xf]
        %v561 = vld [vmem:[#allocation2] sm:$0xff]
        %v562 = vld [vmem:[#allocation2 + $0x8] sm:$0xff]
        %v563 = vld [vmem:[#allocation2 + $0x10] sm:$0xff]
        %v564 = vld [vmem:[#allocation2 + $0x20] sm:$0xff]
        %v565 = vld [vmem:[#allocation2 + $0x28] sm:$0xff]
        %v566 = vld [vmem:[#allocation2 + $0x30] sm:$0xff]
        %v567 = vld [vmem:[#allocation6 + $0x40] sm:$0xf]
        %v568 = vld [vmem:[#allocation6 + $0x44] sm:$0xf]
        %v569 = vld [vmem:[#allocation6 + $0x48] sm:$0xf]
        %v570 = vld [vmem:[#allocation6 + $0x4c] sm:$0xf]
        %v575 = vunpack.c.l.b16 %v567
        %v576 = vunpack.c.l.b16 %v568
        %v577 = vunpack.c.l.b16 %v569
        %v578 = vunpack.c.l.b16 %v570
        %v579 = vpack.c.b16 %v576, %v575
        %v580 = vpack.c.b16 %v578, %v577
        %vm581 = vcmask 261120
        %v583 = vsel %vm581, %v579, 0
        %v586 = vsel %vm581, %v580, 0
        %588 = vmatprep.subr.bf16.mxu0 %v563
        %589 = vmatpush1.bf16.msra.mxu0 %v562
        %590 = vmatprep.subr.bf16.mxu0 %v566
        %591 = vmatpush1.bf16.msra.mxu0 %v565
        %592 = vmatprep.subr.bf16.mxu0 0
        %593 = vmatpush1.bf16.msra.mxu0 0
        %594 = vmatprep.subr.bf16.mxu0 0
        %595 = vmatpush1.bf16.msra.mxu0 0
        %596 = vmatprep.subr.bf16.mxu0 0
        %597 = vmatpush1.bf16.msra.mxu0 0
        %598 = vmatprep.subr.bf16.mxu0 0
        %599 = vmatpush1.bf16.msra.mxu0 0
        %600 = vmatprep.subr.bf16.mxu0 0
        %601 = vmatpush1.bf16.msra.mxu0 0
        %602 = vmatprep.subr.bf16.mxu0 0
        %603 = vmatpush1.bf16.msra.mxu0 0
        %604 = vmatprep.subr.bf16.mxu0 0
        %605 = vmatpush1.bf16.msra.mxu0 0
        %606 = vmatprep.subr.bf16.mxu0 0
        %607 = vmatpush1.bf16.msra.mxu0 0
        %608 = vmatprep.subr.bf16.mxu0 0
        %609 = vmatpush1.bf16.msra.mxu0 0
        %610 = vmatprep.subr.bf16.mxu0 0
        %611 = vmatpush1.bf16.msra.mxu0 0
        %612 = vmatprep.subr.bf16.mxu0 0
        %613 = vmatpush1.bf16.msra.mxu0 0
        %614 = vmatprep.subr.bf16.mxu0 0
        %615 = vmatpush1.bf16.msra.mxu0 0
        %616 = vmatprep.subr.bf16.mxu0 0
        %617 = vmatpush1.bf16.msra.mxu0 0
        %618 = vmatprep.subr.bf16.mxu0 0
        %619 = vmatpush1.bf16.msra.mxu0 0
        %620 = vmatprep.mubr.bf16.mxu0 0
        %621 = vmatmul.mubr.bf16.gmra.mrb[0].mxu0 %v583
        %v622 = vpop.f32.mrb[0].mxu0
        %v623 = vadd.f32 0.0, %v622
        %v624 = vpop.f32.mrb[0].mxu0
        %v625 = vadd.f32 0.0, %v624
        %v626 = vpop.f32.mrb[0].mxu0
        %v627 = vadd.f32 0.0, %v626
        %v628 = vpop.f32.mrb[0].mxu0
        %v629 = vadd.f32 0.0, %v628
        %630 = vmatprep.mubr.bf16.mxu0 0
        %631 = vmatmul.mubr.bf16.gmra.mrb[0].mxu0 %v586
        %v632 = vpop.f32.mrb[0].mxu0
        %v633 = vadd.f32 0.0, %v632
        %v634 = vpop.f32.mrb[0].mxu0
        %v635 = vadd.f32 0.0, %v634
        %v636 = vpop.f32.mrb[0].mxu0
        %v637 = vadd.f32 0.0, %v636
        %v638 = vpop.f32.mrb[0].mxu0
        %v639 = vadd.f32 0.0, %v638
        %640 = vdwg.mxu0
        %v645 = vunpack.c.l.b16 %v557
        %v646 = vunpack.c.l.b16 %v558
        %v647 = vunpack.c.l.b16 %v559
        %v648 = vunpack.c.l.b16 %v560
        %v649 = vpack.c.b16 %v646, %v645
        %v650 = vpack.c.b16 %v648, %v647
        %657 = vrot.lane.b32.xlu0 %v561, 1
        %v658 = vpop.permute.xlu0 %657
        %659 = vrot.lane.b32.xlu0 %v562, 1
        %v660 = vpop.permute.xlu0 %659
        %661 = vrot.lane.b32.xlu0 %v563, 1
        %v662 = vpop.permute.xlu0 %661
        %663 = vrot.lane.b32.xlu0 %v564, 1
        %v664 = vpop.permute.xlu0 %663
        %665 = vrot.lane.b32.xlu0 %v565, 1
        %v666 = vpop.permute.xlu0 %665
        %667 = vrot.lane.b32.xlu0 %v566, 1
        %v668 = vpop.permute.xlu0 %667
        %v669 = vsel %vm339, %v658, %v660
        %v670 = vsel %vm339, %v660, %v662
        %v671 = vsel %vm339, %v664, %v666
        %v672 = vsel %vm339, %v666, %v668
        %v678 = vsel %vm581, %v649, 0
        %v681 = vsel %vm581, %v650, 0
        %683 = vmatprep.subr.bf16.mxu0 %v670
        %684 = vmatpush1.bf16.msra.mxu0 %v669
        %685 = vmatprep.subr.bf16.mxu0 %v672
        %686 = vmatpush1.bf16.msra.mxu0 %v671
        %687 = vmatprep.subr.bf16.mxu0 0
        %688 = vmatpush1.bf16.msra.mxu0 0
        %689 = vmatprep.subr.bf16.mxu0 0
        %690 = vmatpush1.bf16.msra.mxu0 0
        %691 = vmatprep.subr.bf16.mxu0 0
        %692 = vmatpush1.bf16.msra.mxu0 0
        %693 = vmatprep.subr.bf16.mxu0 0
        %694 = vmatpush1.bf16.msra.mxu0 0
        %695 = vmatprep.subr.bf16.mxu0 0
        %696 = vmatpush1.bf16.msra.mxu0 0
        %697 = vmatprep.subr.bf16.mxu0 0
        %698 = vmatpush1.bf16.msra.mxu0 0
        %699 = vmatprep.subr.bf16.mxu0 0
        %700 = vmatpush1.bf16.msra.mxu0 0
        %701 = vmatprep.subr.bf16.mxu0 0
        %702 = vmatpush1.bf16.msra.mxu0 0
        %703 = vmatprep.subr.bf16.mxu0 0
        %704 = vmatpush1.bf16.msra.mxu0 0
        %705 = vmatprep.subr.bf16.mxu0 0
        %706 = vmatpush1.bf16.msra.mxu0 0
        %707 = vmatprep.subr.bf16.mxu0 0
        %708 = vmatpush1.bf16.msra.mxu0 0
        %709 = vmatprep.subr.bf16.mxu0 0
        %710 = vmatpush1.bf16.msra.mxu0 0
        %711 = vmatprep.subr.bf16.mxu0 0
        %712 = vmatpush1.bf16.msra.mxu0 0
        %713 = vmatprep.subr.bf16.mxu0 0
        %714 = vmatpush1.bf16.msra.mxu0 0
        %715 = vmatprep.mubr.bf16.mxu0 0
        %716 = vmatmul.mubr.bf16.gmra.mrb[0].mxu0 %v678
        %v717 = vpop.f32.mrb[0].mxu0
        %v718 = vadd.f32 %v623, %v717
        %v719 = vpop.f32.mrb[0].mxu0
        %v720 = vadd.f32 %v625, %v719
        %v721 = vpop.f32.mrb[0].mxu0
        %v722 = vadd.f32 %v627, %v721
        %v723 = vpop.f32.mrb[0].mxu0
        %v724 = vadd.f32 %v629, %v723
        %725 = vmatprep.mubr.bf16.mxu0 0
        %726 = vmatmul.mubr.bf16.gmra.mrb[0].mxu0 %v681
        %v727 = vpop.f32.mrb[0].mxu0
        %v728 = vadd.f32 %v633, %v727
        %v729 = vpop.f32.mrb[0].mxu0
        %v730 = vadd.f32 %v635, %v729
        %v731 = vpop.f32.mrb[0].mxu0
        %v732 = vadd.f32 %v637, %v731
        %v733 = vpop.f32.mrb[0].mxu0
        %v734 = vadd.f32 %v639, %v733
        %735 = vdwg.mxu0
        %v736 = vld [vmem:[#allocation6 + $0x50] sm:$0xf]
        %v737 = vld [vmem:[#allocation6 + $0x54] sm:$0xf]
        %v738 = vld [vmem:[#allocation6 + $0x58] sm:$0xf]
        %v739 = vld [vmem:[#allocation6 + $0x5c] sm:$0xf]
        %v740 = vld [vmem:[#allocation2 + $0x8] sm:$0xff]
        %v741 = vld [vmem:[#allocation2 + $0x10] sm:$0xff]
        %v742 = vld [vmem:[#allocation2 + $0x18] sm:$0xff]
        %v743 = vld [vmem:[#allocation2 + $0x28] sm:$0xff]
        %v744 = vld [vmem:[#allocation2 + $0x30] sm:$0xff]
        %v745 = vld [vmem:[#allocation2 + $0x38] sm:$0xff]
        %v750 = vunpack.c.l.b16 %v736
        %v751 = vunpack.c.l.b16 %v737
        %v752 = vunpack.c.l.b16 %v738
        %v753 = vunpack.c.l.b16 %v739
        %v754 = vpack.c.b16 %v751, %v750
        %v755 = vpack.c.b16 %v753, %v752
        %762 = vrot.lane.b32.xlu0 %v740, 127
        %v763 = vpop.permute.xlu0 %762
        %764 = vrot.lane.b32.xlu0 %v741, 127
        %v765 = vpop.permute.xlu0 %764
        %766 = vrot.lane.b32.xlu0 %v742, 127
        %v767 = vpop.permute.xlu0 %766
        %768 = vrot.lane.b32.xlu0 %v743, 127
        %v769 = vpop.permute.xlu0 %768
        %770 = vrot.lane.b32.xlu0 %v744, 127
        %v771 = vpop.permute.xlu0 %770
        %772 = vrot.lane.b32.xlu0 %v745, 127
        %v773 = vpop.permute.xlu0 %772
        %v774 = vsel %vm433, %v763, %v765
        %v775 = vsel %vm433, %v765, %v767
        %v776 = vsel %vm433, %v769, %v771
        %v777 = vsel %vm433, %v771, %v773
        %v783 = vsel %vm581, %v754, 0
        %v786 = vsel %vm581, %v755, 0
        %788 = vmatprep.subr.bf16.mxu0 %v775
        %789 = vmatpush1.bf16.msra.mxu0 %v774
        %790 = vmatprep.subr.bf16.mxu0 %v777
        %791 = vmatpush1.bf16.msra.mxu0 %v776
        %792 = vmatprep.subr.bf16.mxu0 0
        %793 = vmatpush1.bf16.msra.mxu0 0
        %794 = vmatprep.subr.bf16.mxu0 0
        %795 = vmatpush1.bf16.msra.mxu0 0
        %796 = vmatprep.subr.bf16.mxu0 0
        %797 = vmatpush1.bf16.msra.mxu0 0
        %798 = vmatprep.subr.bf16.mxu0 0
        %799 = vmatpush1.bf16.msra.mxu0 0
        %800 = vmatprep.subr.bf16.mxu0 0
        %801 = vmatpush1.bf16.msra.mxu0 0
        %802 = vmatprep.subr.bf16.mxu0 0
        %803 = vmatpush1.bf16.msra.mxu0 0
        %804 = vmatprep.subr.bf16.mxu0 0
        %805 = vmatpush1.bf16.msra.mxu0 0
        %806 = vmatprep.subr.bf16.mxu0 0
        %807 = vmatpush1.bf16.msra.mxu0 0
        %808 = vmatprep.subr.bf16.mxu0 0
        %809 = vmatpush1.bf16.msra.mxu0 0
        %810 = vmatprep.subr.bf16.mxu0 0
        %811 = vmatpush1.bf16.msra.mxu0 0
        %812 = vmatprep.subr.bf16.mxu0 0
        %813 = vmatpush1.bf16.msra.mxu0 0
        %814 = vmatprep.subr.bf16.mxu0 0
        %815 = vmatpush1.bf16.msra.mxu0 0
        %816 = vmatprep.subr.bf16.mxu0 0
        %817 = vmatpush1.bf16.msra.mxu0 0
        %818 = vmatprep.subr.bf16.mxu0 0
        %819 = vmatpush1.bf16.msra.mxu0 0
        %820 = vmatprep.mubr.bf16.mxu0 0
        %821 = vmatmul.mubr.bf16.gmra.mrb[0].mxu0 %v783
        %v822 = vpop.f32.mrb[0].mxu0
        %v823 = vadd.f32 0.0, %v822
        %v824 = vpop.f32.mrb[0].mxu0
        %v825 = vadd.f32 0.0, %v824
        %v826 = vpop.f32.mrb[0].mxu0
        %v827 = vadd.f32 0.0, %v826
        %v828 = vpop.f32.mrb[0].mxu0
        %v829 = vadd.f32 0.0, %v828
        %830 = vmatprep.mubr.bf16.mxu0 0
        %831 = vmatmul.mubr.bf16.gmra.mrb[0].mxu0 %v786
        %v832 = vpop.f32.mrb[0].mxu0
        %v833 = vadd.f32 0.0, %v832
        %v834 = vpop.f32.mrb[0].mxu0
        %v835 = vadd.f32 0.0, %v834
        %v836 = vpop.f32.mrb[0].mxu0
        %v837 = vadd.f32 0.0, %v836
        %v838 = vpop.f32.mrb[0].mxu0
        %v839 = vadd.f32 0.0, %v838
        %840 = vdwg.mxu0
        %v841 = vadd.f32 %v718, %v823
        %v842 = vadd.f32 %v720, %v825
        %v843 = vadd.f32 %v722, %v827
        %v844 = vadd.f32 %v724, %v829
        %v845 = vadd.f32 %v728, %v833
        %v846 = vadd.f32 %v730, %v835
        %v847 = vadd.f32 %v732, %v837
        %v848 = vadd.f32 %v734, %v839
        %v849 = vld [vmem:[%s2 + $0x20] sm:$0xff]
        %v850 = vld [vmem:[%s2 + $0x28] sm:$0xff]
        %v851 = vld [vmem:[%s2 + $0x30] sm:$0xff]
        %v852 = vld [vmem:[%s2 + $0x38] sm:$0xff]
        %854 = vset.pattern.permute.xlu0 0
        %855 = vperm.xlu0 %854, %v849
        %v856 = vpop.permute.xlu0 %855
        %859 = vset.pattern.permute.xlu0 0
        %860 = vperm.xlu0 %859, %v850
        %v861 = vpop.permute.xlu0 %860
        %864 = vset.pattern.permute.xlu0 0
        %865 = vperm.xlu0 %864, %v851
        %v866 = vpop.permute.xlu0 %865
        %869 = vset.pattern.permute.xlu0 0
        %870 = vperm.xlu0 %869, %v852
        %v871 = vpop.permute.xlu0 %870
        %v873 = vadd.f32 %v841, %v856
        %v874 = vadd.f32 %v842, %v856
        %v875 = vadd.f32 %v843, %v861
        %v876 = vadd.f32 %v844, %v861
        %v877 = vadd.f32 %v845, %v866
        %v878 = vadd.f32 %v846, %v866
        %v879 = vadd.f32 %v847, %v871
        %v880 = vadd.f32 %v848, %v871
        %v881 = vmax.f32 %v873, 0.0
        %v882 = vmax.f32 %v874, 0.0
        %v883 = vmax.f32 %v875, 0.0
        %v884 = vmax.f32 %v876, 0.0
        %v885 = vmax.f32 %v877, 0.0
        %v886 = vmax.f32 %v878, 0.0
        %v887 = vmax.f32 %v879, 0.0
        %v888 = vmax.f32 %v880, 0.0
        %v889 = vld [vmem:[#allocation3] sm:$0xf]
        %v890 = vld [vmem:[#allocation3 + $0x8] sm:$0xf]
        %v891 = vld [vmem:[#allocation6 + $0x60] sm:$0xf]
        %v892 = vld [vmem:[#allocation6 + $0x64] sm:$0xf]
        %v893 = vld [vmem:[#allocation6 + $0x68] sm:$0xf]
        %v894 = vld [vmem:[#allocation6 + $0x6c] sm:$0xf]
        %v895 = vld [vmem:[%s2 + $0x40] sm:$0xff]
        %v896 = vld [vmem:[%s2 + $0x48] sm:$0xff]
        %v897 = vld [vmem:[%s2 + $0x50] sm:$0xff]
        %v898 = vld [vmem:[%s2 + $0x58] sm:$0xff]
        %900 = vset.pattern.permute.xlu0 0
        %901 = vperm.xlu0 %900, %v895
        %v902 = vpop.permute.xlu0 %901
        %905 = vset.pattern.permute.xlu0 0
        %906 = vperm.xlu0 %905, %v896
        %v907 = vpop.permute.xlu0 %906
        %910 = vset.pattern.permute.xlu0 0
        %911 = vperm.xlu0 %910, %v897
        %v912 = vpop.permute.xlu0 %911
        %915 = vset.pattern.permute.xlu0 0
        %916 = vperm.xlu0 %915, %v898
        %v917 = vpop.permute.xlu0 %916
        %v923 = vunpack.c.l.b16 %v891
        %v924 = vunpack.c.l.b16 %v892
        %v925 = vunpack.c.l.b16 %v893
        %v926 = vunpack.c.l.b16 %v894
        %v927 = vpack.c.b16 %v924, %v923
        %v928 = vpack.c.b16 %v926, %v925
        %v930 = vsel %vm253, %v927, 0
        %v933 = vsel %vm253, %v928, 0
        %v936 = vsel %vm260, %v889, 0
        %v939 = vsel %vm260, %v890, 0
        %941 = vmatprep.subr.bf16.mxu0 %v939
        %942 = vmatpush1.bf16.msra.mxu0 %v936
        %943 = vmatprep.subr.bf16.mxu0 0
        %944 = vmatpush1.bf16.msra.mxu0 0
        %945 = vmatprep.subr.bf16.mxu0 0
        %946 = vmatpush1.bf16.msra.mxu0 0
        %947 = vmatprep.subr.bf16.mxu0 0
        %948 = vmatpush1.bf16.msra.mxu0 0
        %949 = vmatprep.subr.bf16.mxu0 0
        %950 = vmatpush1.bf16.msra.mxu0 0
        %951 = vmatprep.subr.bf16.mxu0 0
        %952 = vmatpush1.bf16.msra.mxu0 0
        %953 = vmatprep.subr.bf16.mxu0 0
        %954 = vmatpush1.bf16.msra.mxu0 0
        %955 = vmatprep.subr.bf16.mxu0 0
        %956 = vmatpush1.bf16.msra.mxu0 0
        %957 = vmatprep.subr.bf16.mxu0 0
        %958 = vmatpush1.bf16.msra.mxu0 0
        %959 = vmatprep.subr.bf16.mxu0 0
        %960 = vmatpush1.bf16.msra.mxu0 0
        %961 = vmatprep.subr.bf16.mxu0 0
        %962 = vmatpush1.bf16.msra.mxu0 0
        %963 = vmatprep.subr.bf16.mxu0 0
        %964 = vmatpush1.bf16.msra.mxu0 0
        %965 = vmatprep.subr.bf16.mxu0 0
        %966 = vmatpush1.bf16.msra.mxu0 0
        %967 = vmatprep.subr.bf16.mxu0 0
        %968 = vmatpush1.bf16.msra.mxu0 0
        %969 = vmatprep.subr.bf16.mxu0 0
        %970 = vmatpush1.bf16.msra.mxu0 0
        %971 = vmatprep.subr.bf16.mxu0 0
        %972 = vmatpush1.bf16.msra.mxu0 0
        %973 = vmatprep.mubr.bf16.mxu0 0
        %974 = vmatmul.mubr.bf16.gmra.mrb[0].mxu0 %v930
        %v975 = vpop.f32.mrb[0].mxu0
        %v976 = vadd.f32 %v902, %v975
        %v977 = vpop.f32.mrb[0].mxu0
        %v978 = vadd.f32 %v902, %v977
        %v979 = vpop.f32.mrb[0].mxu0
        %v980 = vadd.f32 %v907, %v979
        %v981 = vpop.f32.mrb[0].mxu0
        %v982 = vadd.f32 %v907, %v981
        %983 = vmatprep.mubr.bf16.mxu0 0
        %984 = vmatmul.mubr.bf16.gmra.mrb[0].mxu0 %v933
        %v985 = vpop.f32.mrb[0].mxu0
        %v986 = vadd.f32 %v912, %v985
        %v987 = vpop.f32.mrb[0].mxu0
        %v988 = vadd.f32 %v912, %v987
        %v989 = vpop.f32.mrb[0].mxu0
        %v990 = vadd.f32 %v917, %v989
        %v991 = vpop.f32.mrb[0].mxu0
        %v992 = vadd.f32 %v917, %v991
        %993 = vdwg.mxu0
        %v994 = vadd.f32 %v881, %v976
        %v995 = vadd.f32 %v882, %v978
        %v996 = vadd.f32 %v883, %v980
        %v997 = vadd.f32 %v884, %v982
        %v998 = vadd.f32 %v885, %v986
        %v999 = vadd.f32 %v886, %v988
        %v1000 = vadd.f32 %v887, %v990
        %v1001 = vadd.f32 %v888, %v992
        %v1002 = vmax.f32 %v994, 0.0
        %v1003 = vmax.f32 %v995, 0.0
        %v1004 = vmax.f32 %v996, 0.0
        %v1005 = vmax.f32 %v997, 0.0
        %v1006 = vmax.f32 %v998, 0.0
        %v1007 = vmax.f32 %v999, 0.0
        %v1008 = vmax.f32 %v1000, 0.0
        %v1009 = vmax.f32 %v1001, 0.0
        %v1010 = vpack.c.bf16 %v1004, %v1002
        %v1011 = vpack.c.bf16 %v1005, %v1003
        %v1012 = vpack.c.bf16 %v1008, %v1006
        %v1013 = vpack.c.bf16 %v1009, %v1007
        %1014 = vst [vmem:[#allocation3] sm:$0xff] %v1010
        %1015 = vst [vmem:[#allocation3 + $0x8] sm:$0xff] %v1011
        %1016 = vst [vmem:[#allocation3 + $0x10] sm:$0xff] %v1012
        %1017 = vst [vmem:[#allocation3 + $0x18] sm:$0xff] %v1013
        %1018 = vst [vmem:[#allocation2 + $0x8] sm:$0xff] %v1010
        %1019 = vst [vmem:[#allocation2 + $0x10] sm:$0xff] %v1011
        %1020 = vst [vmem:[#allocation2 + $0x28] sm:$0xff] %v1012
        %1021 = vst [vmem:[#allocation2 + $0x30] sm:$0xff] %v1013
        %v1022 = vld [vmem:[#allocation6 + $0x70] sm:$0xf]
        %v1023 = vld [vmem:[#allocation6 + $0x74] sm:$0xf]
        %v1024 = vld [vmem:[#allocation6 + $0x78] sm:$0xf]
        %v1025 = vld [vmem:[#allocation6 + $0x7c] sm:$0xf]
        %v1026 = vld [vmem:[#allocation2] sm:$0xff]
        %v1027 = vld [vmem:[#allocation2 + $0x8] sm:$0xff]
        %v1028 = vld [vmem:[#allocation2 + $0x10] sm:$0xff]
        %v1029 = vld [vmem:[#allocation2 + $0x20] sm:$0xff]
        %v1030 = vld [vmem:[#allocation2 + $0x28] sm:$0xff]
        %v1031 = vld [vmem:[#allocation2 + $0x30] sm:$0xff]
        %v1032 = vld [vmem:[#allocation6 + $0x80] sm:$0xf]
        %v1033 = vld [vmem:[#allocation6 + $0x84] sm:$0xf]
        %v1034 = vld [vmem:[#allocation6 + $0x88] sm:$0xf]
        %v1035 = vld [vmem:[#allocation6 + $0x8c] sm:$0xf]
        %v1040 = vunpack.c.l.b16 %v1032
        %v1041 = vunpack.c.l.b16 %v1033
        %v1042 = vunpack.c.l.b16 %v1034
        %v1043 = vunpack.c.l.b16 %v1035
        %v1044 = vpack.c.b16 %v1041, %v1040
        %v1045 = vpack.c.b16 %v1043, %v1042
        %v1047 = vsel %vm581, %v1044, 0
        %v1050 = vsel %vm581, %v1045, 0
        %1052 = vmatprep.subr.bf16.mxu0 %v1028
        %1053 = vmatpush1.bf16.msra.mxu0 %v1027
        %1054 = vmatprep.subr.bf16.mxu0 %v1031
        %1055 = vmatpush1.bf16.msra.mxu0 %v1030
        %1056 = vmatprep.subr.bf16.mxu0 0
        %1057 = vmatpush1.bf16.msra.mxu0 0
        %1058 = vmatprep.subr.bf16.mxu0 0
        %1059 = vmatpush1.bf16.msra.mxu0 0
        %1060 = vmatprep.subr.bf16.mxu0 0
        %1061 = vmatpush1.bf16.msra.mxu0 0
        %1062 = vmatprep.subr.bf16.mxu0 0
        %1063 = vmatpush1.bf16.msra.mxu0 0
        %1064 = vmatprep.subr.bf16.mxu0 0
        %1065 = vmatpush1.bf16.msra.mxu0 0
        %1066 = vmatprep.subr.bf16.mxu0 0
        %1067 = vmatpush1.bf16.msra.mxu0 0
        %1068 = vmatprep.subr.bf16.mxu0 0
        %1069 = vmatpush1.bf16.msra.mxu0 0
        %1070 = vmatprep.subr.bf16.mxu0 0
        %1071 = vmatpush1.bf16.msra.mxu0 0
        %1072 = vmatprep.subr.bf16.mxu0 0
        %1073 = vmatpush1.bf16.msra.mxu0 0
        %1074 = vmatprep.subr.bf16.mxu0 0
        %1075 = vmatpush1.bf16.msra.mxu0 0
        %1076 = vmatprep.subr.bf16.mxu0 0
        %1077 = vmatpush1.bf16.msra.mxu0 0
        %1078 = vmatprep.subr.bf16.mxu0 0
        %1079 = vmatpush1.bf16.msra.mxu0 0
        %1080 = vmatprep.subr.bf16.mxu0 0
        %1081 = vmatpush1.bf16.msra.mxu0 0
        %1082 = vmatprep.subr.bf16.mxu0 0
        %1083 = vmatpush1.bf16.msra.mxu0 0
        %1084 = vmatprep.mubr.bf16.mxu0 0
        %1085 = vmatmul.mubr.bf16.gmra.mrb[0].mxu0 %v1047
        %v1086 = vpop.f32.mrb[0].mxu0
        %v1087 = vadd.f32 0.0, %v1086
        %v1088 = vpop.f32.mrb[0].mxu0
        %v1089 = vadd.f32 0.0, %v1088
        %v1090 = vpop.f32.mrb[0].mxu0
        %v1091 = vadd.f32 0.0, %v1090
        %v1092 = vpop.f32.mrb[0].mxu0
        %v1093 = vadd.f32 0.0, %v1092
        %1094 = vmatprep.mubr.bf16.mxu0 0
        %1095 = vmatmul.mubr.bf16.gmra.mrb[0].mxu0 %v1050
        %v1096 = vpop.f32.mrb[0].mxu0
        %v1097 = vadd.f32 0.0, %v1096
        %v1098 = vpop.f32.mrb[0].mxu0
        %v1099 = vadd.f32 0.0, %v1098
        %v1100 = vpop.f32.mrb[0].mxu0
        %v1101 = vadd.f32 0.0, %v1100
        %v1102 = vpop.f32.mrb[0].mxu0
        %v1103 = vadd.f32 0.0, %v1102
        %1104 = vdwg.mxu0
        %v1109 = vunpack.c.l.b16 %v1022
        %v1110 = vunpack.c.l.b16 %v1023
        %v1111 = vunpack.c.l.b16 %v1024
        %v1112 = vunpack.c.l.b16 %v1025
        %v1113 = vpack.c.b16 %v1110, %v1109
        %v1114 = vpack.c.b16 %v1112, %v1111
        %1121 = vrot.lane.b32.xlu0 %v1026, 2
        %v1122 = vpop.permute.xlu0 %1121
        %1123 = vrot.lane.b32.xlu0 %v1027, 2
        %v1124 = vpop.permute.xlu0 %1123
        %1125 = vrot.lane.b32.xlu0 %v1028, 2
        %v1126 = vpop.permute.xlu0 %1125
        %1127 = vrot.lane.b32.xlu0 %v1029, 2
        %v1128 = vpop.permute.xlu0 %1127
        %1129 = vrot.lane.b32.xlu0 %v1030, 2
        %v1130 = vpop.permute.xlu0 %1129
        %1131 = vrot.lane.b32.xlu0 %v1031, 2
        %v1132 = vpop.permute.xlu0 %1131
        %vm1133 = vcmask 15360
        %v1134 = vsel %vm1133, %v1122, %v1124
        %v1135 = vsel %vm1133, %v1124, %v1126
        %v1136 = vsel %vm1133, %v1128, %v1130
        %v1137 = vsel %vm1133, %v1130, %v1132
        %v1143 = vsel %vm581, %v1113, 0
        %v1146 = vsel %vm581, %v1114, 0
        %1148 = vmatprep.subr.bf16.mxu0 %v1135
        %1149 = vmatpush1.bf16.msra.mxu0 %v1134
        %1150 = vmatprep.subr.bf16.mxu0 %v1137
        %1151 = vmatpush1.bf16.msra.mxu0 %v1136
        %1152 = vmatprep.subr.bf16.mxu0 0
        %1153 = vmatpush1.bf16.msra.mxu0 0
        %1154 = vmatprep.subr.bf16.mxu0 0
        %1155 = vmatpush1.bf16.msra.mxu0 0
        %1156 = vmatprep.subr.bf16.mxu0 0
        %1157 = vmatpush1.bf16.msra.mxu0 0
        %1158 = vmatprep.subr.bf16.mxu0 0
        %1159 = vmatpush1.bf16.msra.mxu0 0
        %1160 = vmatprep.subr.bf16.mxu0 0
        %1161 = vmatpush1.bf16.msra.mxu0 0
        %1162 = vmatprep.subr.bf16.mxu0 0
        %1163 = vmatpush1.bf16.msra.mxu0 0
        %1164 = vmatprep.subr.bf16.mxu0 0
        %1165 = vmatpush1.bf16.msra.mxu0 0
        %1166 = vmatprep.subr.bf16.mxu0 0
        %1167 = vmatpush1.bf16.msra.mxu0 0
        %1168 = vmatprep.subr.bf16.mxu0 0
        %1169 = vmatpush1.bf16.msra.mxu0 0
        %1170 = vmatprep.subr.bf16.mxu0 0
        %1171 = vmatpush1.bf16.msra.mxu0 0
        %1172 = vmatprep.subr.bf16.mxu0 0
        %1173 = vmatpush1.bf16.msra.mxu0 0
        %1174 = vmatprep.subr.bf16.mxu0 0
        %1175 = vmatpush1.bf16.msra.mxu0 0
        %1176 = vmatprep.subr.bf16.mxu0 0
        %1177 = vmatpush1.bf16.msra.mxu0 0
        %1178 = vmatprep.subr.bf16.mxu0 0
        %1179 = vmatpush1.bf16.msra.mxu0 0
        %1180 = vmatprep.mubr.bf16.mxu0 0
        %1181 = vmatmul.mubr.bf16.gmra.mrb[0].mxu0 %v1143
        %v1182 = vpop.f32.mrb[0].mxu0
        %v1183 = vadd.f32 %v1087, %v1182
        %v1184 = vpop.f32.mrb[0].mxu0
        %v1185 = vadd.f32 %v1089, %v1184
        %v1186 = vpop.f32.mrb[0].mxu0
        %v1187 = vadd.f32 %v1091, %v1186
        %v1188 = vpop.f32.mrb[0].mxu0
        %v1189 = vadd.f32 %v1093, %v1188
        %1190 = vmatprep.mubr.bf16.mxu0 0
        %1191 = vmatmul.mubr.bf16.gmra.mrb[0].mxu0 %v1146
        %v1192 = vpop.f32.mrb[0].mxu0
        %v1193 = vadd.f32 %v1097, %v1192
        %v1194 = vpop.f32.mrb[0].mxu0
        %v1195 = vadd.f32 %v1099, %v1194
        %v1196 = vpop.f32.mrb[0].mxu0
        %v1197 = vadd.f32 %v1101, %v1196
        %v1198 = vpop.f32.mrb[0].mxu0
        %v1199 = vadd.f32 %v1103, %v1198
        %1200 = vdwg.mxu0
        %v1201 = vld [vmem:[#allocation6 + $0x90] sm:$0xf]
        %v1202 = vld [vmem:[#allocation6 + $0x94] sm:$0xf]
        %v1203 = vld [vmem:[#allocation6 + $0x98] sm:$0xf]
        %v1204 = vld [vmem:[#allocation6 + $0x9c] sm:$0xf]
        %v1205 = vld [vmem:[#allocation2 + $0x8] sm:$0xff]
        %v1206 = vld [vmem:[#allocation2 + $0x10] sm:$0xff]
        %v1207 = vld [vmem:[#allocation2 + $0x18] sm:$0xff]
        %v1208 = vld [vmem:[#allocation2 + $0x28] sm:$0xff]
        %v1209 = vld [vmem:[#allocation2 + $0x30] sm:$0xff]
        %v1210 = vld [vmem:[#allocation2 + $0x38] sm:$0xff]
        %v1215 = vunpack.c.l.b16 %v1201
        %v1216 = vunpack.c.l.b16 %v1202
        %v1217 = vunpack.c.l.b16 %v1203
        %v1218 = vunpack.c.l.b16 %v1204
        %v1219 = vpack.c.b16 %v1216, %v1215
        %v1220 = vpack.c.b16 %v1218, %v1217
        %1227 = vrot.lane.b32.xlu0 %v1205, 126
        %v1228 = vpop.permute.xlu0 %1227
        %1229 = vrot.lane.b32.xlu0 %v1206, 126
        %v1230 = vpop.permute.xlu0 %1229
        %1231 = vrot.lane.b32.xlu0 %v1207, 126
        %v1232 = vpop.permute.xlu0 %1231
        %1233 = vrot.lane.b32.xlu0 %v1208, 126
        %v1234 = vpop.permute.xlu0 %1233
        %1235 = vrot.lane.b32.xlu0 %v1209, 126
        %v1236 = vpop.permute.xlu0 %1235
        %1237 = vrot.lane.b32.xlu0 %v1210, 126
        %v1238 = vpop.permute.xlu0 %1237
        %vm1239 = vcmask 1031168
        %v1240 = vsel %vm1239, %v1228, %v1230
        %v1241 = vsel %vm1239, %v1230, %v1232
        %v1242 = vsel %vm1239, %v1234, %v1236
        %v1243 = vsel %vm1239, %v1236, %v1238
        %v1249 = vsel %vm581, %v1219, 0
        %v1252 = vsel %vm581, %v1220, 0
        %1254 = vmatprep.subr.bf16.mxu0 %v1241
        %1255 = vmatpush1.bf16.msra.mxu0 %v1240
        %1256 = vmatprep.subr.bf16.mxu0 %v1243
        %1257 = vmatpush1.bf16.msra.mxu0 %v1242
        %1258 = vmatprep.subr.bf16.mxu0 0
        %1259 = vmatpush1.bf16.msra.mxu0 0
        %1260 = vmatprep.subr.bf16.mxu0 0
        %1261 = vmatpush1.bf16.msra.mxu0 0
        %1262 = vmatprep.subr.bf16.mxu0 0
        %1263 = vmatpush1.bf16.msra.mxu0 0
        %1264 = vmatprep.subr.bf16.mxu0 0
        %1265 = vmatpush1.bf16.msra.mxu0 0
        %1266 = vmatprep.subr.bf16.mxu0 0
        %1267 = vmatpush1.bf16.msra.mxu0 0
        %1268 = vmatprep.subr.bf16.mxu0 0
        %1269 = vmatpush1.bf16.msra.mxu0 0
        %1270 = vmatprep.subr.bf16.mxu0 0
        %1271 = vmatpush1.bf16.msra.mxu0 0
        %1272 = vmatprep.subr.bf16.mxu0 0
        %1273 = vmatpush1.bf16.msra.mxu0 0
        %1274 = vmatprep.subr.bf16.mxu0 0
        %1275 = vmatpush1.bf16.msra.mxu0 0
        %1276 = vmatprep.subr.bf16.mxu0 0
        %1277 = vmatpush1.bf16.msra.mxu0 0
        %1278 = vmatprep.subr.bf16.mxu0 0
        %1279 = vmatpush1.bf16.msra.mxu0 0
        %1280 = vmatprep.subr.bf16.mxu0 0
        %1281 = vmatpush1.bf16.msra.mxu0 0
        %1282 = vmatprep.subr.bf16.mxu0 0
        %1283 = vmatpush1.bf16.msra.mxu0 0
        %1284 = vmatprep.subr.bf16.mxu0 0
        %1285 = vmatpush1.bf16.msra.mxu0 0
        %1286 = vmatprep.mubr.bf16.mxu0 0
        %1287 = vmatmul.mubr.bf16.gmra.mrb[0].mxu0 %v1249
        %v1288 = vpop.f32.mrb[0].mxu0
        %v1289 = vadd.f32 0.0, %v1288
        %v1290 = vpop.f32.mrb[0].mxu0
        %v1291 = vadd.f32 0.0, %v1290
        %v1292 = vpop.f32.mrb[0].mxu0
        %v1293 = vadd.f32 0.0, %v1292
        %v1294 = vpop.f32.mrb[0].mxu0
        %v1295 = vadd.f32 0.0, %v1294
        %1296 = vmatprep.mubr.bf16.mxu0 0
        %1297 = vmatmul.mubr.bf16.gmra.mrb[0].mxu0 %v1252
        %v1298 = vpop.f32.mrb[0].mxu0
        %v1299 = vadd.f32 0.0, %v1298
        %v1300 = vpop.f32.mrb[0].mxu0
        %v1301 = vadd.f32 0.0, %v1300
        %v1302 = vpop.f32.mrb[0].mxu0
        %v1303 = vadd.f32 0.0, %v1302
        %v1304 = vpop.f32.mrb[0].mxu0
        %v1305 = vadd.f32 0.0, %v1304
        %1306 = vdwg.mxu0
        %v1307 = vadd.f32 %v1183, %v1289
        %v1308 = vadd.f32 %v1185, %v1291
        %v1309 = vadd.f32 %v1187, %v1293
        %v1310 = vadd.f32 %v1189, %v1295
        %v1311 = vadd.f32 %v1193, %v1299
        %v1312 = vadd.f32 %v1195, %v1301
        %v1313 = vadd.f32 %v1197, %v1303
        %v1314 = vadd.f32 %v1199, %v1305
        %v1315 = vld [vmem:[%s2 + $0x60] sm:$0xff]
        %v1316 = vld [vmem:[%s2 + $0x68] sm:$0xff]
        %v1317 = vld [vmem:[%s2 + $0x70] sm:$0xff]
        %v1318 = vld [vmem:[%s2 + $0x78] sm:$0xff]
        %1320 = vset.pattern.permute.xlu0 0
        %1321 = vperm.xlu0 %1320, %v1315
        %v1322 = vpop.permute.xlu0 %1321
        %1325 = vset.pattern.permute.xlu0 0
        %1326 = vperm.xlu0 %1325, %v1316
        %v1327 = vpop.permute.xlu0 %1326
        %1330 = vset.pattern.permute.xlu0 0
        %1331 = vperm.xlu0 %1330, %v1317
        %v1332 = vpop.permute.xlu0 %1331
        %1335 = vset.pattern.permute.xlu0 0
        %1336 = vperm.xlu0 %1335, %v1318
        %v1337 = vpop.permute.xlu0 %1336
        %v1339 = vadd.f32 %v1307, %v1322
        %v1340 = vadd.f32 %v1308, %v1322
        %v1341 = vadd.f32 %v1309, %v1327
        %v1342 = vadd.f32 %v1310, %v1327
        %v1343 = vadd.f32 %v1311, %v1332
        %v1344 = vadd.f32 %v1312, %v1332
        %v1345 = vadd.f32 %v1313, %v1337
        %v1346 = vadd.f32 %v1314, %v1337
        %v1347 = vmax.f32 %v1339, 0.0
        %v1348 = vmax.f32 %v1340, 0.0
        %v1349 = vmax.f32 %v1341, 0.0
        %v1350 = vmax.f32 %v1342, 0.0
        %v1351 = vmax.f32 %v1343, 0.0
        %v1352 = vmax.f32 %v1344, 0.0
        %v1353 = vmax.f32 %v1345, 0.0
        %v1354 = vmax.f32 %v1346, 0.0
        %v1355 = vpack.c.bf16 %v1349, %v1347
        %v1356 = vpack.c.bf16 %v1350, %v1348
        %v1357 = vpack.c.bf16 %v1353, %v1351
        %v1358 = vpack.c.bf16 %v1354, %v1352
        %1359 = vst [vmem:[#allocation2 + $0x8] sm:$0xff] %v1355
        %1360 = vst [vmem:[#allocation2 + $0x10] sm:$0xff] %v1356
        %1361 = vst [vmem:[#allocation2 + $0x28] sm:$0xff] %v1357
        %1362 = vst [vmem:[#allocation2 + $0x30] sm:$0xff] %v1358
        %v1363 = vld [vmem:[#allocation6 + $0xa0] sm:$0xf]
        %v1364 = vld [vmem:[#allocation6 + $0xa4] sm:$0xf]
        %v1365 = vld [vmem:[#allocation6 + $0xa8] sm:$0xf]
        %v1366 = vld [vmem:[#allocation6 + $0xac] sm:$0xf]
        %v1367 = vld [vmem:[#allocation2] sm:$0xff]
        %v1368 = vld [vmem:[#allocation2 + $0x8] sm:$0xff]
        %v1369 = vld [vmem:[#allocation2 + $0x10] sm:$0xff]
        %v1370 = vld [vmem:[#allocation2 + $0x20] sm:$0xff]
        %v1371 = vld [vmem:[#allocation2 + $0x28] sm:$0xff]
        %v1372 = vld [vmem:[#allocation2 + $0x30] sm:$0xff]
        %v1373 = vld [vmem:[#allocation6 + $0xb0] sm:$0xf]
        %v1374 = vld [vmem:[#allocation6 + $0xb4] sm:$0xf]
        %v1375 = vld [vmem:[#allocation6 + $0xb8] sm:$0xf]
        %v1376 = vld [vmem:[#allocation6 + $0xbc] sm:$0xf]
        %v1381 = vunpack.c.l.b16 %v1373
        %v1382 = vunpack.c.l.b16 %v1374
        %v1383 = vunpack.c.l.b16 %v1375
        %v1384 = vunpack.c.l.b16 %v1376
        %v1385 = vpack.c.b16 %v1382, %v1381
        %v1386 = vpack.c.b16 %v1384, %v1383
        %v1388 = vsel %vm581, %v1385, 0
        %v1391 = vsel %vm581, %v1386, 0
        %1393 = vmatprep.subr.bf16.mxu0 %v1369
        %1394 = vmatpush1.bf16.msra.mxu0 %v1368
        %1395 = vmatprep.subr.bf16.mxu0 %v1372
        %1396 = vmatpush1.bf16.msra.mxu0 %v1371
        %1397 = vmatprep.subr.bf16.mxu0 0
        %1398 = vmatpush1.bf16.msra.mxu0 0
        %1399 = vmatprep.subr.bf16.mxu0 0
        %1400 = vmatpush1.bf16.msra.mxu0 0
        %1401 = vmatprep.subr.bf16.mxu0 0
        %1402 = vmatpush1.bf16.msra.mxu0 0
        %1403 = vmatprep.subr.bf16.mxu0 0
        %1404 = vmatpush1.bf16.msra.mxu0 0
        %1405 = vmatprep.subr.bf16.mxu0 0
        %1406 = vmatpush1.bf16.msra.mxu0 0
        %1407 = vmatprep.subr.bf16.mxu0 0
        %1408 = vmatpush1.bf16.msra.mxu0 0
        %1409 = vmatprep.subr.bf16.mxu0 0
        %1410 = vmatpush1.bf16.msra.mxu0 0
        %1411 = vmatprep.subr.bf16.mxu0 0
        %1412 = vmatpush1.bf16.msra.mxu0 0
        %1413 = vmatprep.subr.bf16.mxu0 0
        %1414 = vmatpush1.bf16.msra.mxu0 0
        %1415 = vmatprep.subr.bf16.mxu0 0
        %1416 = vmatpush1.bf16.msra.mxu0 0
        %1417 = vmatprep.subr.bf16.mxu0 0
        %1418 = vmatpush1.bf16.msra.mxu0 0
        %1419 = vmatprep.subr.bf16.mxu0 0
        %1420 = vmatpush1.bf16.msra.mxu0 0
        %1421 = vmatprep.subr.bf16.mxu0 0
        %1422 = vmatpush1.bf16.msra.mxu0 0
        %1423 = vmatprep.subr.bf16.mxu0 0
        %1424 = vmatpush1.bf16.msra.mxu0 0
        %1425 = vmatprep.mubr.bf16.mxu0 0
        %1426 = vmatmul.mubr.bf16.gmra.mrb[0].mxu0 %v1388
        %v1427 = vpop.f32.mrb[0].mxu0
        %v1428 = vadd.f32 0.0, %v1427
        %v1429 = vpop.f32.mrb[0].mxu0
        %v1430 = vadd.f32 0.0, %v1429
        %v1431 = vpop.f32.mrb[0].mxu0
        %v1432 = vadd.f32 0.0, %v1431
        %v1433 = vpop.f32.mrb[0].mxu0
        %v1434 = vadd.f32 0.0, %v1433
        %1435 = vmatprep.mubr.bf16.mxu0 0
        %1436 = vmatmul.mubr.bf16.gmra.mrb[0].mxu0 %v1391
        %v1437 = vpop.f32.mrb[0].mxu0
        %v1438 = vadd.f32 0.0, %v1437
        %v1439 = vpop.f32.mrb[0].mxu0
        %v1440 = vadd.f32 0.0, %v1439
        %v1441 = vpop.f32.mrb[0].mxu0
        %v1442 = vadd.f32 0.0, %v1441
        %v1443 = vpop.f32.mrb[0].mxu0
        %v1444 = vadd.f32 0.0, %v1443
        %1445 = vdwg.mxu0
        %v1450 = vunpack.c.l.b16 %v1363
        %v1451 = vunpack.c.l.b16 %v1364
        %v1452 = vunpack.c.l.b16 %v1365
        %v1453 = vunpack.c.l.b16 %v1366
        %v1454 = vpack.c.b16 %v1451, %v1450
        %v1455 = vpack.c.b16 %v1453, %v1452
        %1462 = vrot.lane.b32.xlu0 %v1367, 2
        %v1463 = vpop.permute.xlu0 %1462
        %1464 = vrot.lane.b32.xlu0 %v1368, 2
        %v1465 = vpop.permute.xlu0 %1464
        %1466 = vrot.lane.b32.xlu0 %v1369, 2
        %v1467 = vpop.permute.xlu0 %1466
        %1468 = vrot.lane.b32.xlu0 %v1370, 2
        %v1469 = vpop.permute.xlu0 %1468
        %1470 = vrot.lane.b32.xlu0 %v1371, 2
        %v1471 = vpop.permute.xlu0 %1470
        %1472 = vrot.lane.b32.xlu0 %v1372, 2
        %v1473 = vpop.permute.xlu0 %1472
        %v1474 = vsel %vm1133, %v1463, %v1465
        %v1475 = vsel %vm1133, %v1465, %v1467
        %v1476 = vsel %vm1133, %v1469, %v1471
        %v1477 = vsel %vm1133, %v1471, %v1473
        %v1483 = vsel %vm581, %v1454, 0
        %v1486 = vsel %vm581, %v1455, 0
        %1488 = vmatprep.subr.bf16.mxu0 %v1475
        %1489 = vmatpush1.bf16.msra.mxu0 %v1474
        %1490 = vmatprep.subr.bf16.mxu0 %v1477
        %1491 = vmatpush1.bf16.msra.mxu0 %v1476
        %1492 = vmatprep.subr.bf16.mxu0 0
        %1493 = vmatpush1.bf16.msra.mxu0 0
        %1494 = vmatprep.subr.bf16.mxu0 0
        %1495 = vmatpush1.bf16.msra.mxu0 0
        %1496 = vmatprep.subr.bf16.mxu0 0
        %1497 = vmatpush1.bf16.msra.mxu0 0
        %1498 = vmatprep.subr.bf16.mxu0 0
        %1499 = vmatpush1.bf16.msra.mxu0 0
        %1500 = vmatprep.subr.bf16.mxu0 0
        %1501 = vmatpush1.bf16.msra.mxu0 0
        %1502 = vmatprep.subr.bf16.mxu0 0
        %1503 = vmatpush1.bf16.msra.mxu0 0
        %1504 = vmatprep.subr.bf16.mxu0 0
        %1505 = vmatpush1.bf16.msra.mxu0 0
        %1506 = vmatprep.subr.bf16.mxu0 0
        %1507 = vmatpush1.bf16.msra.mxu0 0
        %1508 = vmatprep.subr.bf16.mxu0 0
        %1509 = vmatpush1.bf16.msra.mxu0 0
        %1510 = vmatprep.subr.bf16.mxu0 0
        %1511 = vmatpush1.bf16.msra.mxu0 0
        %1512 = vmatprep.subr.bf16.mxu0 0
        %1513 = vmatpush1.bf16.msra.mxu0 0
        %1514 = vmatprep.subr.bf16.mxu0 0
        %1515 = vmatpush1.bf16.msra.mxu0 0
        %1516 = vmatprep.subr.bf16.mxu0 0
        %1517 = vmatpush1.bf16.msra.mxu0 0
        %1518 = vmatprep.subr.bf16.mxu0 0
        %1519 = vmatpush1.bf16.msra.mxu0 0
        %1520 = vmatprep.mubr.bf16.mxu0 0
        %1521 = vmatmul.mubr.bf16.gmra.mrb[0].mxu0 %v1483
        %v1522 = vpop.f32.mrb[0].mxu0
        %v1523 = vadd.f32 %v1428, %v1522
        %v1524 = vpop.f32.mrb[0].mxu0
        %v1525 = vadd.f32 %v1430, %v1524
        %v1526 = vpop.f32.mrb[0].mxu0
        %v1527 = vadd.f32 %v1432, %v1526
        %v1528 = vpop.f32.mrb[0].mxu0
        %v1529 = vadd.f32 %v1434, %v1528
        %1530 = vmatprep.mubr.bf16.mxu0 0
        %1531 = vmatmul.mubr.bf16.gmra.mrb[0].mxu0 %v1486
        %v1532 = vpop.f32.mrb[0].mxu0
        %v1533 = vadd.f32 %v1438, %v1532
        %v1534 = vpop.f32.mrb[0].mxu0
        %v1535 = vadd.f32 %v1440, %v1534
        %v1536 = vpop.f32.mrb[0].mxu0
        %v1537 = vadd.f32 %v1442, %v1536
        %v1538 = vpop.f32.mrb[0].mxu0
        %v1539 = vadd.f32 %v1444, %v1538
        %1540 = vdwg.mxu0
        %v1541 = vld [vmem:[#allocation6 + $0xc0] sm:$0xf]
        %v1542 = vld [vmem:[#allocation6 + $0xc4] sm:$0xf]
        %v1543 = vld [vmem:[#allocation6 + $0xc8] sm:$0xf]
        %v1544 = vld [vmem:[#allocation6 + $0xcc] sm:$0xf]
        %v1545 = vld [vmem:[#allocation2 + $0x8] sm:$0xff]
        %v1546 = vld [vmem:[#allocation2 + $0x10] sm:$0xff]
        %v1547 = vld [vmem:[#allocation2 + $0x18] sm:$0xff]
        %v1548 = vld [vmem:[#allocation2 + $0x28] sm:$0xff]
        %v1549 = vld [vmem:[#allocation2 + $0x30] sm:$0xff]
        %v1550 = vld [vmem:[#allocation2 + $0x38] sm:$0xff]
        %v1555 = vunpack.c.l.b16 %v1541
        %v1556 = vunpack.c.l.b16 %v1542
        %v1557 = vunpack.c.l.b16 %v1543
        %v1558 = vunpack.c.l.b16 %v1544
        %v1559 = vpack.c.b16 %v1556, %v1555
        %v1560 = vpack.c.b16 %v1558, %v1557
        %1567 = vrot.lane.b32.xlu0 %v1545, 126
        %v1568 = vpop.permute.xlu0 %1567
        %1569 = vrot.lane.b32.xlu0 %v1546, 126
        %v1570 = vpop.permute.xlu0 %1569
        %1571 = vrot.lane.b32.xlu0 %v1547, 126
        %v1572 = vpop.permute.xlu0 %1571
        %1573 = vrot.lane.b32.xlu0 %v1548, 126
        %v1574 = vpop.permute.xlu0 %1573
        %1575 = vrot.lane.b32.xlu0 %v1549, 126
        %v1576 = vpop.permute.xlu0 %1575
        %1577 = vrot.lane.b32.xlu0 %v1550, 126
        %v1578 = vpop.permute.xlu0 %1577
        %v1579 = vsel %vm1239, %v1568, %v1570
        %v1580 = vsel %vm1239, %v1570, %v1572
        %v1581 = vsel %vm1239, %v1574, %v1576
        %v1582 = vsel %vm1239, %v1576, %v1578
        %v1588 = vsel %vm581, %v1559, 0
        %v1591 = vsel %vm581, %v1560, 0
        %1593 = vmatprep.subr.bf16.mxu0 %v1580
        %1594 = vmatpush1.bf16.msra.mxu0 %v1579
        %1595 = vmatprep.subr.bf16.mxu0 %v1582
        %1596 = vmatpush1.bf16.msra.mxu0 %v1581
        %1597 = vmatprep.subr.bf16.mxu0 0
        %1598 = vmatpush1.bf16.msra.mxu0 0
        %1599 = vmatprep.subr.bf16.mxu0 0
        %1600 = vmatpush1.bf16.msra.mxu0 0
        %1601 = vmatprep.subr.bf16.mxu0 0
        %1602 = vmatpush1.bf16.msra.mxu0 0
        %1603 = vmatprep.subr.bf16.mxu0 0
        %1604 = vmatpush1.bf16.msra.mxu0 0
        %1605 = vmatprep.subr.bf16.mxu0 0
        %1606 = vmatpush1.bf16.msra.mxu0 0
        %1607 = vmatprep.subr.bf16.mxu0 0
        %1608 = vmatpush1.bf16.msra.mxu0 0
        %1609 = vmatprep.subr.bf16.mxu0 0
        %1610 = vmatpush1.bf16.msra.mxu0 0
        %1611 = vmatprep.subr.bf16.mxu0 0
        %1612 = vmatpush1.bf16.msra.mxu0 0
        %1613 = vmatprep.subr.bf16.mxu0 0
        %1614 = vmatpush1.bf16.msra.mxu0 0
        %1615 = vmatprep.subr.bf16.mxu0 0
        %1616 = vmatpush1.bf16.msra.mxu0 0
        %1617 = vmatprep.subr.bf16.mxu0 0
        %1618 = vmatpush1.bf16.msra.mxu0 0
        %1619 = vmatprep.subr.bf16.mxu0 0
        %1620 = vmatpush1.bf16.msra.mxu0 0
        %1621 = vmatprep.subr.bf16.mxu0 0
        %1622 = vmatpush1.bf16.msra.mxu0 0
        %1623 = vmatprep.subr.bf16.mxu0 0
        %1624 = vmatpush1.bf16.msra.mxu0 0
        %1625 = vmatprep.mubr.bf16.mxu0 0
        %1626 = vmatmul.mubr.bf16.gmra.mrb[0].mxu0 %v1588
        %v1627 = vpop.f32.mrb[0].mxu0
        %v1628 = vadd.f32 0.0, %v1627
        %v1629 = vpop.f32.mrb[0].mxu0
        %v1630 = vadd.f32 0.0, %v1629
        %v1631 = vpop.f32.mrb[0].mxu0
        %v1632 = vadd.f32 0.0, %v1631
        %v1633 = vpop.f32.mrb[0].mxu0
        %v1634 = vadd.f32 0.0, %v1633
        %1635 = vmatprep.mubr.bf16.mxu0 0
        %1636 = vmatmul.mubr.bf16.gmra.mrb[0].mxu0 %v1591
        %v1637 = vpop.f32.mrb[0].mxu0
        %v1638 = vadd.f32 0.0, %v1637
        %v1639 = vpop.f32.mrb[0].mxu0
        %v1640 = vadd.f32 0.0, %v1639
        %v1641 = vpop.f32.mrb[0].mxu0
        %v1642 = vadd.f32 0.0, %v1641
        %v1643 = vpop.f32.mrb[0].mxu0
        %v1644 = vadd.f32 0.0, %v1643
        %1645 = vdwg.mxu0
        %v1646 = vadd.f32 %v1523, %v1628
        %v1647 = vadd.f32 %v1525, %v1630
        %v1648 = vadd.f32 %v1527, %v1632
        %v1649 = vadd.f32 %v1529, %v1634
        %v1650 = vadd.f32 %v1533, %v1638
        %v1651 = vadd.f32 %v1535, %v1640
        %v1652 = vadd.f32 %v1537, %v1642
        %v1653 = vadd.f32 %v1539, %v1644
        %v1654 = vld [vmem:[%s2 + $0x80] sm:$0xff]
        %v1655 = vld [vmem:[%s2 + $0x88] sm:$0xff]
        %v1656 = vld [vmem:[%s2 + $0x90] sm:$0xff]
        %v1657 = vld [vmem:[%s2 + $0x98] sm:$0xff]
        %1659 = vset.pattern.permute.xlu0 0
        %1660 = vperm.xlu0 %1659, %v1654
        %v1661 = vpop.permute.xlu0 %1660
        %1664 = vset.pattern.permute.xlu0 0
        %1665 = vperm.xlu0 %1664, %v1655
        %v1666 = vpop.permute.xlu0 %1665
        %1669 = vset.pattern.permute.xlu0 0
        %1670 = vperm.xlu0 %1669, %v1656
        %v1671 = vpop.permute.xlu0 %1670
        %1674 = vset.pattern.permute.xlu0 0
        %1675 = vperm.xlu0 %1674, %v1657
        %v1676 = vpop.permute.xlu0 %1675
        %v1678 = vadd.f32 %v1646, %v1661
        %v1679 = vadd.f32 %v1647, %v1661
        %v1680 = vadd.f32 %v1648, %v1666
        %v1681 = vadd.f32 %v1649, %v1666
        %v1682 = vadd.f32 %v1650, %v1671
        %v1683 = vadd.f32 %v1651, %v1671
        %v1684 = vadd.f32 %v1652, %v1676
        %v1685 = vadd.f32 %v1653, %v1676
        %v1686 = vmax.f32 %v1678, 0.0
        %v1687 = vmax.f32 %v1679, 0.0
        %v1688 = vmax.f32 %v1680, 0.0
        %v1689 = vmax.f32 %v1681, 0.0
        %v1690 = vmax.f32 %v1682, 0.0
        %v1691 = vmax.f32 %v1683, 0.0
        %v1692 = vmax.f32 %v1684, 0.0
        %v1693 = vmax.f32 %v1685, 0.0
        %v1694 = vld [vmem:[#allocation3] sm:$0xff]
        %v1695 = vld [vmem:[#allocation3 + $0x8] sm:$0xff]
        %v1696 = vld [vmem:[#allocation3 + $0x10] sm:$0xff]
        %v1697 = vld [vmem:[#allocation3 + $0x18] sm:$0xff]
        %v1698 = vunpack.c.l.bf16 %v1694
        %v1699 = vunpack.c.l.bf16 %v1695
        %v1700 = vunpack.c.h.bf16 %v1694
        %v1701 = vunpack.c.h.bf16 %v1695
        %v1702 = vunpack.c.l.bf16 %v1696
        %v1703 = vunpack.c.l.bf16 %v1697
        %v1704 = vunpack.c.h.bf16 %v1696
        %v1705 = vunpack.c.h.bf16 %v1697
        %v1706 = vadd.f32 %v1686, %v1698
        %v1707 = vadd.f32 %v1687, %v1699
        %v1708 = vadd.f32 %v1688, %v1700
        %v1709 = vadd.f32 %v1689, %v1701
        %v1710 = vadd.f32 %v1690, %v1702
        %v1711 = vadd.f32 %v1691, %v1703
        %v1712 = vadd.f32 %v1692, %v1704
        %v1713 = vadd.f32 %v1693, %v1705
        %v1714 = vmax.f32 %v1706, 0.0
        %v1715 = vmax.f32 %v1707, 0.0
        %v1716 = vmax.f32 %v1708, 0.0
        %v1717 = vmax.f32 %v1709, 0.0
        %v1718 = vmax.f32 %v1710, 0.0
        %v1719 = vmax.f32 %v1711, 0.0
        %v1720 = vmax.f32 %v1712, 0.0
        %v1721 = vmax.f32 %v1713, 0.0
        %v1722 = vpack.c.bf16 %v1716, %v1714
        %v1723 = vpack.c.bf16 %v1717, %v1715
        %v1724 = vpack.c.bf16 %v1720, %v1718
        %v1725 = vpack.c.bf16 %v1721, %v1719
        %1726 = vst [vmem:[#allocation3] sm:$0xff] %v1722
        %1727 = vst [vmem:[#allocation3 + $0x8] sm:$0xff] %v1723
        %1728 = vst [vmem:[#allocation3 + $0x10] sm:$0xff] %v1724
        %1729 = vst [vmem:[#allocation3 + $0x18] sm:$0xff] %v1725
        %1730 = vst [vmem:[#allocation2 + $0x8] sm:$0xff] %v1722
        %1731 = vst [vmem:[#allocation2 + $0x10] sm:$0xff] %v1723
        %1732 = vst [vmem:[#allocation2 + $0x28] sm:$0xff] %v1724
        %1733 = vst [vmem:[#allocation2 + $0x30] sm:$0xff] %v1725
        %v1734 = vld [vmem:[#allocation6 + $0xd0] sm:$0xf]
        %v1735 = vld [vmem:[#allocation6 + $0xd4] sm:$0xf]
        %v1736 = vld [vmem:[#allocation6 + $0xd8] sm:$0xf]
        %v1737 = vld [vmem:[#allocation6 + $0xdc] sm:$0xf]
        %v1738 = vld [vmem:[#allocation6 + $0xe0] sm:$0xf]
        %v1739 = vld [vmem:[#allocation6 + $0xe4] sm:$0xf]
        %v1740 = vld [vmem:[#allocation6 + $0xe8] sm:$0xf]
        %v1741 = vld [vmem:[#allocation6 + $0xec] sm:$0xf]
        %v1742 = vld [vmem:[#allocation2] sm:$0xff]
        %v1743 = vld [vmem:[#allocation2 + $0x8] sm:$0xff]
        %v1744 = vld [vmem:[#allocation2 + $0x10] sm:$0xff]
        %v1745 = vld [vmem:[#allocation2 + $0x20] sm:$0xff]
        %v1746 = vld [vmem:[#allocation2 + $0x28] sm:$0xff]
        %v1747 = vld [vmem:[#allocation2 + $0x30] sm:$0xff]
        %v1748 = vld [vmem:[#allocation6 + $0xf0] sm:$0xf]
        %v1749 = vld [vmem:[#allocation6 + $0xf4] sm:$0xf]
        %v1750 = vld [vmem:[#allocation6 + $0xf8] sm:$0xf]
        %v1751 = vld [vmem:[#allocation6 + $0xfc] sm:$0xf]
        %v1752 = vld [vmem:[#allocation6 + $0x100] sm:$0xf]
        %v1753 = vld [vmem:[#allocation6 + $0x104] sm:$0xf]
        %v1754 = vld [vmem:[#allocation6 + $0x108] sm:$0xf]
        %v1755 = vld [vmem:[#allocation6 + $0x10c] sm:$0xf]
        %v1764 = vunpack.c.l.b16 %v1748
        %v1765 = vunpack.c.l.b16 %v1749
        %v1766 = vunpack.c.l.b16 %v1750
        %v1767 = vunpack.c.l.b16 %v1751
        %v1768 = vunpack.c.l.b16 %v1752
        %v1769 = vunpack.c.l.b16 %v1753
        %v1770 = vunpack.c.l.b16 %v1754
        %v1771 = vunpack.c.l.b16 %v1755
        %v1772 = vpack.c.b16 %v1765, %v1764
        %v1773 = vpack.c.b16 %v1767, %v1766
        %v1774 = vpack.c.b16 %v1769, %v1768
        %v1775 = vpack.c.b16 %v1771, %v1770
        %v1777 = vsel %vm581, %v1772, 0
        %v1780 = vsel %vm581, %v1773, 0
        %v1783 = vsel %vm581, %v1774, 0
        %v1786 = vsel %vm581, %v1775, 0
        %1788 = vmatprep.subr.bf16.mxu0 %v1744
        %1789 = vmatpush1.bf16.msra.mxu0 %v1743
        %1790 = vmatprep.subr.bf16.mxu0 %v1747
        %1791 = vmatpush1.bf16.msra.mxu0 %v1746
        %1792 = vmatprep.subr.bf16.mxu0 0
        %1793 = vmatpush1.bf16.msra.mxu0 0
        %1794 = vmatprep.subr.bf16.mxu0 0
        %1795 = vmatpush1.bf16.msra.mxu0 0
        %1796 = vmatprep.subr.bf16.mxu0 0
        %1797 = vmatpush1.bf16.msra.mxu0 0
        %1798 = vmatprep.subr.bf16.mxu0 0
        %1799 = vmatpush1.bf16.msra.mxu0 0
        %1800 = vmatprep.subr.bf16.mxu0 0
        %1801 = vmatpush1.bf16.msra.mxu0 0
        %1802 = vmatprep.subr.bf16.mxu0 0
        %1803 = vmatpush1.bf16.msra.mxu0 0
        %1804 = vmatprep.subr.bf16.mxu0 0
        %1805 = vmatpush1.bf16.msra.mxu0 0
        %1806 = vmatprep.subr.bf16.mxu0 0
        %1807 = vmatpush1.bf16.msra.mxu0 0
        %1808 = vmatprep.subr.bf16.mxu0 0
        %1809 = vmatpush1.bf16.msra.mxu0 0
        %1810 = vmatprep.subr.bf16.mxu0 0
        %1811 = vmatpush1.bf16.msra.mxu0 0
        %1812 = vmatprep.subr.bf16.mxu0 0
        %1813 = vmatpush1.bf16.msra.mxu0 0
        %1814 = vmatprep.subr.bf16.mxu0 0
        %1815 = vmatpush1.bf16.msra.mxu0 0
        %1816 = vmatprep.subr.bf16.mxu0 0
        %1817 = vmatpush1.bf16.msra.mxu0 0
        %1818 = vmatprep.subr.bf16.mxu0 0
        %1819 = vmatpush1.bf16.msra.mxu0 0
        %1820 = vmatprep.mubr.bf16.mxu0 0
        %1821 = vmatmul.mubr.bf16.gmra.mrb[0].mxu0 %v1777
        %v1822 = vpop.f32.mrb[0].mxu0
        %v1823 = vadd.f32 0.0, %v1822
        %v1824 = vpop.f32.mrb[0].mxu0
        %v1825 = vadd.f32 0.0, %v1824
        %v1826 = vpop.f32.mrb[0].mxu0
        %v1827 = vadd.f32 0.0, %v1826
        %v1828 = vpop.f32.mrb[0].mxu0
        %v1829 = vadd.f32 0.0, %v1828
        %1830 = vmatprep.mubr.bf16.mxu0 0
        %1831 = vmatmul.mubr.bf16.gmra.mrb[0].mxu0 %v1780
        %v1832 = vpop.f32.mrb[0].mxu0
        %v1833 = vadd.f32 0.0, %v1832
        %v1834 = vpop.f32.mrb[0].mxu0
        %v1835 = vadd.f32 0.0, %v1834
        %v1836 = vpop.f32.mrb[0].mxu0
        %v1837 = vadd.f32 0.0, %v1836
        %v1838 = vpop.f32.mrb[0].mxu0
        %v1839 = vadd.f32 0.0, %v1838
        %1840 = vmatprep.mubr.bf16.mxu0 0
        %1841 = vmatmul.mubr.bf16.gmra.mrb[0].mxu0 %v1783
        %v1842 = vpop.f32.mrb[0].mxu0
        %v1843 = vadd.f32 0.0, %v1842
        %v1844 = vpop.f32.mrb[0].mxu0
        %v1845 = vadd.f32 0.0, %v1844
        %v1846 = vpop.f32.mrb[0].mxu0
        %v1847 = vadd.f32 0.0, %v1846
        %v1848 = vpop.f32.mrb[0].mxu0
        %v1849 = vadd.f32 0.0, %v1848
        %1850 = vmatprep.mubr.bf16.mxu0 0
        %1851 = vmatmul.mubr.bf16.gmra.mrb[0].mxu0 %v1786
        %v1852 = vpop.f32.mrb[0].mxu0
        %v1853 = vadd.f32 0.0, %v1852
        %v1854 = vpop.f32.mrb[0].mxu0
        %v1855 = vadd.f32 0.0, %v1854
        %v1856 = vpop.f32.mrb[0].mxu0
        %v1857 = vadd.f32 0.0, %v1856
        %v1858 = vpop.f32.mrb[0].mxu0
        %v1859 = vadd.f32 0.0, %v1858
        %1860 = vdwg.mxu0
        %v1869 = vunpack.c.l.b16 %v1734
        %v1870 = vunpack.c.l.b16 %v1735
        %v1871 = vunpack.c.l.b16 %v1736
        %v1872 = vunpack.c.l.b16 %v1737
        %v1873 = vunpack.c.l.b16 %v1738
        %v1874 = vunpack.c.l.b16 %v1739
        %v1875 = vunpack.c.l.b16 %v1740
        %v1876 = vunpack.c.l.b16 %v1741
        %v1877 = vpack.c.b16 %v1870, %v1869
        %v1878 = vpack.c.b16 %v1872, %v1871
        %v1879 = vpack.c.b16 %v1874, %v1873
        %v1880 = vpack.c.b16 %v1876, %v1875
        %1887 = vrot.lane.b32.xlu0 %v1742, 4
        %v1888 = vpop.permute.xlu0 %1887
        %1889 = vrot.lane.b32.xlu0 %v1743, 4
        %v1890 = vpop.permute.xlu0 %1889
        %1891 = vrot.lane.b32.xlu0 %v1744, 4
        %v1892 = vpop.permute.xlu0 %1891
        %1893 = vrot.lane.b32.xlu0 %v1745, 4
        %v1894 = vpop.permute.xlu0 %1893
        %1895 = vrot.lane.b32.xlu0 %v1746, 4
        %v1896 = vpop.permute.xlu0 %1895
        %1897 = vrot.lane.b32.xlu0 %v1747, 4
        %v1898 = vpop.permute.xlu0 %1897
        %vm1899 = vcmask 31744
        %v1900 = vsel %vm1899, %v1888, %v1890
        %v1901 = vsel %vm1899, %v1890, %v1892
        %v1902 = vsel %vm1899, %v1894, %v1896
        %v1903 = vsel %vm1899, %v1896, %v1898
        %v1909 = vsel %vm581, %v1877, 0
        %v1912 = vsel %vm581, %v1878, 0
        %v1915 = vsel %vm581, %v1879, 0
        %v1918 = vsel %vm581, %v1880, 0
        %1920 = vmatprep.subr.bf16.mxu0 %v1901
        %1921 = vmatpush1.bf16.msra.mxu0 %v1900
        %1922 = vmatprep.subr.bf16.mxu0 %v1903
        %1923 = vmatpush1.bf16.msra.mxu0 %v1902
        %1924 = vmatprep.subr.bf16.mxu0 0
        %1925 = vmatpush1.bf16.msra.mxu0 0
        %1926 = vmatprep.subr.bf16.mxu0 0
        %1927 = vmatpush1.bf16.msra.mxu0 0
        %1928 = vmatprep.subr.bf16.mxu0 0
        %1929 = vmatpush1.bf16.msra.mxu0 0
        %1930 = vmatprep.subr.bf16.mxu0 0
        %1931 = vmatpush1.bf16.msra.mxu0 0
        %1932 = vmatprep.subr.bf16.mxu0 0
        %1933 = vmatpush1.bf16.msra.mxu0 0
        %1934 = vmatprep.subr.bf16.mxu0 0
        %1935 = vmatpush1.bf16.msra.mxu0 0
        %1936 = vmatprep.subr.bf16.mxu0 0
        %1937 = vmatpush1.bf16.msra.mxu0 0
        %1938 = vmatprep.subr.bf16.mxu0 0
        %1939 = vmatpush1.bf16.msra.mxu0 0
        %1940 = vmatprep.subr.bf16.mxu0 0
        %1941 = vmatpush1.bf16.msra.mxu0 0
        %1942 = vmatprep.subr.bf16.mxu0 0
        %1943 = vmatpush1.bf16.msra.mxu0 0
        %1944 = vmatprep.subr.bf16.mxu0 0
        %1945 = vmatpush1.bf16.msra.mxu0 0
        %1946 = vmatprep.subr.bf16.mxu0 0
        %1947 = vmatpush1.bf16.msra.mxu0 0
        %1948 = vmatprep.subr.bf16.mxu0 0
        %1949 = vmatpush1.bf16.msra.mxu0 0
        %1950 = vmatprep.subr.bf16.mxu0 0
        %1951 = vmatpush1.bf16.msra.mxu0 0
        %1952 = vmatprep.mubr.bf16.mxu0 0
        %1953 = vmatmul.mubr.bf16.gmra.mrb[0].mxu0 %v1909
        %v1954 = vpop.f32.mrb[0].mxu0
        %v1955 = vadd.f32 %v1823, %v1954
        %v1956 = vpop.f32.mrb[0].mxu0
        %v1957 = vadd.f32 %v1825, %v1956
        %v1958 = vpop.f32.mrb[0].mxu0
        %v1959 = vadd.f32 %v1827, %v1958
        %v1960 = vpop.f32.mrb[0].mxu0
        %v1961 = vadd.f32 %v1829, %v1960
        %1962 = vmatprep.mubr.bf16.mxu0 0
        %1963 = vmatmul.mubr.bf16.gmra.mrb[0].mxu0 %v1912
        %v1964 = vpop.f32.mrb[0].mxu0
        %v1965 = vadd.f32 %v1833, %v1964
        %v1966 = vpop.f32.mrb[0].mxu0
        %v1967 = vadd.f32 %v1835, %v1966
        %v1968 = vpop.f32.mrb[0].mxu0
        %v1969 = vadd.f32 %v1837, %v1968
        %v1970 = vpop.f32.mrb[0].mxu0
        %v1971 = vadd.f32 %v1839, %v1970
        %1972 = vmatprep.mubr.bf16.mxu0 0
        %1973 = vmatmul.mubr.bf16.gmra.mrb[0].mxu0 %v1915
        %v1974 = vpop.f32.mrb[0].mxu0
        %v1975 = vadd.f32 %v1843, %v1974
        %v1976 = vpop.f32.mrb[0].mxu0
        %v1977 = vadd.f32 %v1845, %v1976
        %v1978 = vpop.f32.mrb[0].mxu0
        %v1979 = vadd.f32 %v1847, %v1978
        %v1980 = vpop.f32.mrb[0].mxu0
        %v1981 = vadd.f32 %v1849, %v1980
        %1982 = vmatprep.mubr.bf16.mxu0 0
        %1983 = vmatmul.mubr.bf16.gmra.mrb[0].mxu0 %v1918
        %v1984 = vpop.f32.mrb[0].mxu0
        %v1985 = vadd.f32 %v1853, %v1984
        %v1986 = vpop.f32.mrb[0].mxu0
        %v1987 = vadd.f32 %v1855, %v1986
        %v1988 = vpop.f32.mrb[0].mxu0
        %v1989 = vadd.f32 %v1857, %v1988
        %v1990 = vpop.f32.mrb[0].mxu0
        %v1991 = vadd.f32 %v1859, %v1990
        %1992 = vdwg.mxu0
        %v1993 = vld [vmem:[#allocation6 + $0x110] sm:$0xf]
        %v1994 = vld [vmem:[#allocation6 + $0x114] sm:$0xf]
        %v1995 = vld [vmem:[#allocation6 + $0x118] sm:$0xf]
        %v1996 = vld [vmem:[#allocation6 + $0x11c] sm:$0xf]
        %v1997 = vld [vmem:[#allocation6 + $0x120] sm:$0xf]
        %v1998 = vld [vmem:[#allocation6 + $0x124] sm:$0xf]
        %v1999 = vld [vmem:[#allocation6 + $0x128] sm:$0xf]
        %v2000 = vld [vmem:[#allocation6 + $0x12c] sm:$0xf]
        %v2001 = vld [vmem:[#allocation2 + $0x8] sm:$0xff]
        %v2002 = vld [vmem:[#allocation2 + $0x10] sm:$0xff]
        %v2003 = vld [vmem:[#allocation2 + $0x18] sm:$0xff]
        %v2004 = vld [vmem:[#allocation2 + $0x28] sm:$0xff]
        %v2005 = vld [vmem:[#allocation2 + $0x30] sm:$0xff]
        %v2006 = vld [vmem:[#allocation2 + $0x38] sm:$0xff]
        %v2015 = vunpack.c.l.b16 %v1993
        %v2016 = vunpack.c.l.b16 %v1994
        %v2017 = vunpack.c.l.b16 %v1995
        %v2018 = vunpack.c.l.b16 %v1996
        %v2019 = vunpack.c.l.b16 %v1997
        %v2020 = vunpack.c.l.b16 %v1998
        %v2021 = vunpack.c.l.b16 %v1999
        %v2022 = vunpack.c.l.b16 %v2000
        %v2023 = vpack.c.b16 %v2016, %v2015
        %v2024 = vpack.c.b16 %v2018, %v2017
        %v2025 = vpack.c.b16 %v2020, %v2019
        %v2026 = vpack.c.b16 %v2022, %v2021
        %2033 = vrot.lane.b32.xlu0 %v2001, 124
        %v2034 = vpop.permute.xlu0 %2033
        %2035 = vrot.lane.b32.xlu0 %v2002, 124
        %v2036 = vpop.permute.xlu0 %2035
        %2037 = vrot.lane.b32.xlu0 %v2003, 124
        %v2038 = vpop.permute.xlu0 %2037
        %2039 = vrot.lane.b32.xlu0 %v2004, 124
        %v2040 = vpop.permute.xlu0 %2039
        %2041 = vrot.lane.b32.xlu0 %v2005, 124
        %v2042 = vpop.permute.xlu0 %2041
        %2043 = vrot.lane.b32.xlu0 %v2006, 124
        %v2044 = vpop.permute.xlu0 %2043
        %vm2045 = vcmask 1014784
        %v2046 = vsel %vm2045, %v2034, %v2036
        %v2047 = vsel %vm2045, %v2036, %v2038
        %v2048 = vsel %vm2045, %v2040, %v2042
        %v2049 = vsel %vm2045, %v2042, %v2044
        %v2055 = vsel %vm581, %v2023, 0
        %v2058 = vsel %vm581, %v2024, 0
        %v2061 = vsel %vm581, %v2025, 0
        %v2064 = vsel %vm581, %v2026, 0
        %2066 = vmatprep.subr.bf16.mxu0 %v2047
        %2067 = vmatpush1.bf16.msra.mxu0 %v2046
        %2068 = vmatprep.subr.bf16.mxu0 %v2049
        %2069 = vmatpush1.bf16.msra.mxu0 %v2048
        %2070 = vmatprep.subr.bf16.mxu0 0
        %2071 = vmatpush1.bf16.msra.mxu0 0
        %2072 = vmatprep.subr.bf16.mxu0 0
        %2073 = vmatpush1.bf16.msra.mxu0 0
        %2074 = vmatprep.subr.bf16.mxu0 0
        %2075 = vmatpush1.bf16.msra.mxu0 0
        %2076 = vmatprep.subr.bf16.mxu0 0
        %2077 = vmatpush1.bf16.msra.mxu0 0
        %2078 = vmatprep.subr.bf16.mxu0 0
        %2079 = vmatpush1.bf16.msra.mxu0 0
        %2080 = vmatprep.subr.bf16.mxu0 0
        %2081 = vmatpush1.bf16.msra.mxu0 0
        %2082 = vmatprep.subr.bf16.mxu0 0
        %2083 = vmatpush1.bf16.msra.mxu0 0
        %2084 = vmatprep.subr.bf16.mxu0 0
        %2085 = vmatpush1.bf16.msra.mxu0 0
        %2086 = vmatprep.subr.bf16.mxu0 0
        %2087 = vmatpush1.bf16.msra.mxu0 0
        %2088 = vmatprep.subr.bf16.mxu0 0
        %2089 = vmatpush1.bf16.msra.mxu0 0
        %2090 = vmatprep.subr.bf16.mxu0 0
        %2091 = vmatpush1.bf16.msra.mxu0 0
        %2092 = vmatprep.subr.bf16.mxu0 0
        %2093 = vmatpush1.bf16.msra.mxu0 0
        %2094 = vmatprep.subr.bf16.mxu0 0
        %2095 = vmatpush1.bf16.msra.mxu0 0
        %2096 = vmatprep.subr.bf16.mxu0 0
        %2097 = vmatpush1.bf16.msra.mxu0 0
        %2098 = vmatprep.mubr.bf16.mxu0 0
        %2099 = vmatmul.mubr.bf16.gmra.mrb[0].mxu0 %v2055
        %v2100 = vpop.f32.mrb[0].mxu0
        %v2101 = vadd.f32 0.0, %v2100
        %v2102 = vpop.f32.mrb[0].mxu0
        %v2103 = vadd.f32 0.0, %v2102
        %v2104 = vpop.f32.mrb[0].mxu0
        %v2105 = vadd.f32 0.0, %v2104
        %v2106 = vpop.f32.mrb[0].mxu0
        %v2107 = vadd.f32 0.0, %v2106
        %2108 = vmatprep.mubr.bf16.mxu0 0
        %2109 = vmatmul.mubr.bf16.gmra.mrb[0].mxu0 %v2058
        %v2110 = vpop.f32.mrb[0].mxu0
        %v2111 = vadd.f32 0.0, %v2110
        %v2112 = vpop.f32.mrb[0].mxu0
        %v2113 = vadd.f32 0.0, %v2112
        %v2114 = vpop.f32.mrb[0].mxu0
        %v2115 = vadd.f32 0.0, %v2114
        %v2116 = vpop.f32.mrb[0].mxu0
        %v2117 = vadd.f32 0.0, %v2116
        %2118 = vmatprep.mubr.bf16.mxu0 0
        %2119 = vmatmul.mubr.bf16.gmra.mrb[0].mxu0 %v2061
        %v2120 = vpop.f32.mrb[0].mxu0
        %v2121 = vadd.f32 0.0, %v2120
        %v2122 = vpop.f32.mrb[0].mxu0
        %v2123 = vadd.f32 0.0, %v2122
        %v2124 = vpop.f32.mrb[0].mxu0
        %v2125 = vadd.f32 0.0, %v2124
        %v2126 = vpop.f32.mrb[0].mxu0
        %v2127 = vadd.f32 0.0, %v2126
        %2128 = vmatprep.mubr.bf16.mxu0 0
        %2129 = vmatmul.mubr.bf16.gmra.mrb[0].mxu0 %v2064
        %v2130 = vpop.f32.mrb[0].mxu0
        %v2131 = vadd.f32 0.0, %v2130
        %v2132 = vpop.f32.mrb[0].mxu0
        %v2133 = vadd.f32 0.0, %v2132
        %v2134 = vpop.f32.mrb[0].mxu0
        %v2135 = vadd.f32 0.0, %v2134
        %v2136 = vpop.f32.mrb[0].mxu0
        %v2137 = vadd.f32 0.0, %v2136
        %2138 = vdwg.mxu0
        %v2139 = vadd.f32 %v1955, %v2101
        %v2140 = vadd.f32 %v1957, %v2103
        %v2141 = vadd.f32 %v1959, %v2105
        %v2142 = vadd.f32 %v1961, %v2107
        %v2143 = vadd.f32 %v1965, %v2111
        %v2144 = vadd.f32 %v1967, %v2113
        %v2145 = vadd.f32 %v1969, %v2115
        %v2146 = vadd.f32 %v1971, %v2117
        %v2147 = vadd.f32 %v1975, %v2121
        %v2148 = vadd.f32 %v1977, %v2123
        %v2149 = vadd.f32 %v1979, %v2125
        %v2150 = vadd.f32 %v1981, %v2127
        %v2151 = vadd.f32 %v1985, %v2131
        %v2152 = vadd.f32 %v1987, %v2133
        %v2153 = vadd.f32 %v1989, %v2135
        %v2154 = vadd.f32 %v1991, %v2137
        %v2155 = vld [vmem:[%s2 + $0xa0] sm:$0xff]
        %v2156 = vld [vmem:[%s2 + $0xa8] sm:$0xff]
        %v2157 = vld [vmem:[%s2 + $0xb0] sm:$0xff]
        %v2158 = vld [vmem:[%s2 + $0xb8] sm:$0xff]
        %v2159 = vld [vmem:[%s2 + $0xc0] sm:$0xff]
        %v2160 = vld [vmem:[%s2 + $0xc8] sm:$0xff]
        %v2161 = vld [vmem:[%s2 + $0xd0] sm:$0xff]
        %v2162 = vld [vmem:[%s2 + $0xd8] sm:$0xff]
        %2164 = vset.pattern.permute.xlu0 0
        %2165 = vperm.xlu0 %2164, %v2155
        %v2166 = vpop.permute.xlu0 %2165
        %2169 = vset.pattern.permute.xlu0 0
        %2170 = vperm.xlu0 %2169, %v2156
        %v2171 = vpop.permute.xlu0 %2170
        %2174 = vset.pattern.permute.xlu0 0
        %2175 = vperm.xlu0 %2174, %v2157
        %v2176 = vpop.permute.xlu0 %2175
        %2179 = vset.pattern.permute.xlu0 0
        %2180 = vperm.xlu0 %2179, %v2158
        %v2181 = vpop.permute.xlu0 %2180
        %2184 = vset.pattern.permute.xlu0 0
        %2185 = vperm.xlu0 %2184, %v2159
        %v2186 = vpop.permute.xlu0 %2185
        %2189 = vset.pattern.permute.xlu0 0
        %2190 = vperm.xlu0 %2189, %v2160
        %v2191 = vpop.permute.xlu0 %2190
        %2194 = vset.pattern.permute.xlu0 0
        %2195 = vperm.xlu0 %2194, %v2161
        %v2196 = vpop.permute.xlu0 %2195
        %2199 = vset.pattern.permute.xlu0 0
        %2200 = vperm.xlu0 %2199, %v2162
        %v2201 = vpop.permute.xlu0 %2200
        %v2203 = vadd.f32 %v2139, %v2166
        %v2204 = vadd.f32 %v2140, %v2166
        %v2205 = vadd.f32 %v2141, %v2171
        %v2206 = vadd.f32 %v2142, %v2171
        %v2207 = vadd.f32 %v2143, %v2176
        %v2208 = vadd.f32 %v2144, %v2176
        %v2209 = vadd.f32 %v2145, %v2181
        %v2210 = vadd.f32 %v2146, %v2181
        %v2211 = vadd.f32 %v2147, %v2186
        %v2212 = vadd.f32 %v2148, %v2186
        %v2213 = vadd.f32 %v2149, %v2191
        %v2214 = vadd.f32 %v2150, %v2191
        %v2215 = vadd.f32 %v2151, %v2196
        %v2216 = vadd.f32 %v2152, %v2196
        %v2217 = vadd.f32 %v2153, %v2201
        %v2218 = vadd.f32 %v2154, %v2201
        %v2219 = vmax.f32 %v2203, 0.0
        %v2220 = vmax.f32 %v2204, 0.0
        %v2221 = vmax.f32 %v2205, 0.0
        %v2222 = vmax.f32 %v2206, 0.0
        %v2223 = vmax.f32 %v2207, 0.0
        %v2224 = vmax.f32 %v2208, 0.0
        %v2225 = vmax.f32 %v2209, 0.0
        %v2226 = vmax.f32 %v2210, 0.0
        %v2227 = vmax.f32 %v2211, 0.0
        %v2228 = vmax.f32 %v2212, 0.0
        %v2229 = vmax.f32 %v2213, 0.0
        %v2230 = vmax.f32 %v2214, 0.0
        %v2231 = vmax.f32 %v2215, 0.0
        %v2232 = vmax.f32 %v2216, 0.0
        %v2233 = vmax.f32 %v2217, 0.0
        %v2234 = vmax.f32 %v2218, 0.0
        %v2235 = vpack.c.bf16 %v2221, %v2219
        %v2236 = vpack.c.bf16 %v2222, %v2220
        %v2237 = vpack.c.bf16 %v2225, %v2223
        %v2238 = vpack.c.bf16 %v2226, %v2224
        %v2239 = vpack.c.bf16 %v2229, %v2227
        %v2240 = vpack.c.bf16 %v2230, %v2228
        %v2241 = vpack.c.bf16 %v2233, %v2231
        %v2242 = vpack.c.bf16 %v2234, %v2232
        %2243 = vst [vmem:[#allocation2 + $0x8] sm:$0xff] %v2235
        %2244 = vst [vmem:[#allocation2 + $0x10] sm:$0xff] %v2236
        %2245 = vst [vmem:[#allocation2 + $0x28] sm:$0xff] %v2237
        %2246 = vst [vmem:[#allocation2 + $0x30] sm:$0xff] %v2238
        %2247 = vst [vmem:[#allocation2 + $0x48] sm:$0xff] %v2239
        %2248 = vst [vmem:[#allocation2 + $0x50] sm:$0xff] %v2240
        %2249 = vst [vmem:[#allocation2 + $0x68] sm:$0xff] %v2241
        %2250 = vst [vmem:[#allocation2 + $0x70] sm:$0xff] %v2242
        %v2251 = vld [vmem:[#allocation6 + $0x130] sm:$0xf]
        %v2252 = vld [vmem:[#allocation6 + $0x134] sm:$0xf]
        %v2253 = vld [vmem:[#allocation6 + $0x138] sm:$0xf]
        %v2254 = vld [vmem:[#allocation6 + $0x13c] sm:$0xf]
        %v2255 = vld [vmem:[#allocation6 + $0x140] sm:$0xf]
        %v2256 = vld [vmem:[#allocation6 + $0x144] sm:$0xf]
        %v2257 = vld [vmem:[#allocation6 + $0x148] sm:$0xf]
        %v2258 = vld [vmem:[#allocation6 + $0x14c] sm:$0xf]
        %v2259 = vld [vmem:[#allocation2] sm:$0xff]
        %v2260 = vld [vmem:[#allocation2 + $0x8] sm:$0xff]
        %v2261 = vld [vmem:[#allocation2 + $0x10] sm:$0xff]
        %v2262 = vld [vmem:[#allocation2 + $0x20] sm:$0xff]
        %v2263 = vld [vmem:[#allocation2 + $0x28] sm:$0xff]
        %v2264 = vld [vmem:[#allocation2 + $0x30] sm:$0xff]
        %v2265 = vld [vmem:[#allocation2 + $0x40] sm:$0xff]
        %v2266 = vld [vmem:[#allocation2 + $0x48] sm:$0xff]
        %v2267 = vld [vmem:[#allocation2 + $0x50] sm:$0xff]
        %v2268 = vld [vmem:[#allocation2 + $0x60] sm:$0xff]
        %v2269 = vld [vmem:[#allocation2 + $0x68] sm:$0xff]
        %v2270 = vld [vmem:[#allocation2 + $0x70] sm:$0xff]
        %v2271 = vld [vmem:[#allocation6 + $0x150] sm:$0xf]
        %v2272 = vld [vmem:[#allocation6 + $0x154] sm:$0xf]
        %v2273 = vld [vmem:[#allocation6 + $0x158] sm:$0xf]
        %v2274 = vld [vmem:[#allocation6 + $0x15c] sm:$0xf]
        %v2275 = vld [vmem:[#allocation6 + $0x160] sm:$0xf]
        %v2276 = vld [vmem:[#allocation6 + $0x164] sm:$0xf]
        %v2277 = vld [vmem:[#allocation6 + $0x168] sm:$0xf]
        %v2278 = vld [vmem:[#allocation6 + $0x16c] sm:$0xf]
        %v2287 = vunpack.c.l.b16 %v2271
        %v2288 = vunpack.c.l.b16 %v2272
        %v2289 = vunpack.c.l.b16 %v2273
        %v2290 = vunpack.c.l.b16 %v2274
        %v2291 = vunpack.c.l.b16 %v2275
        %v2292 = vunpack.c.l.b16 %v2276
        %v2293 = vunpack.c.l.b16 %v2277
        %v2294 = vunpack.c.l.b16 %v2278
        %v2295 = vpack.c.b16 %v2288, %v2287
        %v2296 = vpack.c.b16 %v2290, %v2289
        %v2297 = vpack.c.b16 %v2292, %v2291
        %v2298 = vpack.c.b16 %v2294, %v2293
        %vm2299 = vcmask 523264
        %v2301 = vsel %vm2299, %v2295, 0
        %v2304 = vsel %vm2299, %v2296, 0
        %v2307 = vsel %vm2299, %v2297, 0
        %v2310 = vsel %vm2299, %v2298, 0
        %2312 = vmatprep.subr.bf16.mxu0 %v2261
        %2313 = vmatpush1.bf16.msra.mxu0 %v2260
        %2314 = vmatprep.subr.bf16.mxu0 %v2264
        %2315 = vmatpush1.bf16.msra.mxu0 %v2263
        %2316 = vmatprep.subr.bf16.mxu0 %v2267
        %2317 = vmatpush1.bf16.msra.mxu0 %v2266
        %2318 = vmatprep.subr.bf16.mxu0 %v2270
        %2319 = vmatpush1.bf16.msra.mxu0 %v2269
        %2320 = vmatprep.subr.bf16.mxu0 0
        %2321 = vmatpush1.bf16.msra.mxu0 0
        %2322 = vmatprep.subr.bf16.mxu0 0
        %2323 = vmatpush1.bf16.msra.mxu0 0
        %2324 = vmatprep.subr.bf16.mxu0 0
        %2325 = vmatpush1.bf16.msra.mxu0 0
        %2326 = vmatprep.subr.bf16.mxu0 0
        %2327 = vmatpush1.bf16.msra.mxu0 0
        %2328 = vmatprep.subr.bf16.mxu0 0
        %2329 = vmatpush1.bf16.msra.mxu0 0
        %2330 = vmatprep.subr.bf16.mxu0 0
        %2331 = vmatpush1.bf16.msra.mxu0 0
        %2332 = vmatprep.subr.bf16.mxu0 0
        %2333 = vmatpush1.bf16.msra.mxu0 0
        %2334 = vmatprep.subr.bf16.mxu0 0
        %2335 = vmatpush1.bf16.msra.mxu0 0
        %2336 = vmatprep.subr.bf16.mxu0 0
        %2337 = vmatpush1.bf16.msra.mxu0 0
        %2338 = vmatprep.subr.bf16.mxu0 0
        %2339 = vmatpush1.bf16.msra.mxu0 0
        %2340 = vmatprep.subr.bf16.mxu0 0
        %2341 = vmatpush1.bf16.msra.mxu0 0
        %2342 = vmatprep.subr.bf16.mxu0 0
        %2343 = vmatpush1.bf16.msra.mxu0 0
        %2344 = vmatprep.mubr.bf16.mxu0 0
        %2345 = vmatmul.mubr.bf16.gmra.mrb[0].mxu0 %v2301
        %v2346 = vpop.f32.mrb[0].mxu0
        %v2347 = vadd.f32 0.0, %v2346
        %v2348 = vpop.f32.mrb[0].mxu0
        %v2349 = vadd.f32 0.0, %v2348
        %v2350 = vpop.f32.mrb[0].mxu0
        %v2351 = vadd.f32 0.0, %v2350
        %v2352 = vpop.f32.mrb[0].mxu0
        %v2353 = vadd.f32 0.0, %v2352
        %2354 = vmatprep.mubr.bf16.mxu0 0
        %2355 = vmatmul.mubr.bf16.gmra.mrb[0].mxu0 %v2304
        %v2356 = vpop.f32.mrb[0].mxu0
        %v2357 = vadd.f32 0.0, %v2356
        %v2358 = vpop.f32.mrb[0].mxu0
        %v2359 = vadd.f32 0.0, %v2358
        %v2360 = vpop.f32.mrb[0].mxu0
        %v2361 = vadd.f32 0.0, %v2360
        %v2362 = vpop.f32.mrb[0].mxu0
        %v2363 = vadd.f32 0.0, %v2362
        %2364 = vmatprep.mubr.bf16.mxu0 0
        %2365 = vmatmul.mubr.bf16.gmra.mrb[0].mxu0 %v2307
        %v2366 = vpop.f32.mrb[0].mxu0
        %v2367 = vadd.f32 0.0, %v2366
        %v2368 = vpop.f32.mrb[0].mxu0
        %v2369 = vadd.f32 0.0, %v2368
        %v2370 = vpop.f32.mrb[0].mxu0
        %v2371 = vadd.f32 0.0, %v2370
        %v2372 = vpop.f32.mrb[0].mxu0
        %v2373 = vadd.f32 0.0, %v2372
        %2374 = vmatprep.mubr.bf16.mxu0 0
        %2375 = vmatmul.mubr.bf16.gmra.mrb[0].mxu0 %v2310
        %v2376 = vpop.f32.mrb[0].mxu0
        %v2377 = vadd.f32 0.0, %v2376
        %v2378 = vpop.f32.mrb[0].mxu0
        %v2379 = vadd.f32 0.0, %v2378
        %v2380 = vpop.f32.mrb[0].mxu0
        %v2381 = vadd.f32 0.0, %v2380
        %v2382 = vpop.f32.mrb[0].mxu0
        %v2383 = vadd.f32 0.0, %v2382
        %2384 = vdwg.mxu0
        %v2393 = vunpack.c.l.b16 %v2251
        %v2394 = vunpack.c.l.b16 %v2252
        %v2395 = vunpack.c.l.b16 %v2253
        %v2396 = vunpack.c.l.b16 %v2254
        %v2397 = vunpack.c.l.b16 %v2255
        %v2398 = vunpack.c.l.b16 %v2256
        %v2399 = vunpack.c.l.b16 %v2257
        %v2400 = vunpack.c.l.b16 %v2258
        %v2401 = vpack.c.b16 %v2394, %v2393
        %v2402 = vpack.c.b16 %v2396, %v2395
        %v2403 = vpack.c.b16 %v2398, %v2397
        %v2404 = vpack.c.b16 %v2400, %v2399
        %2417 = vrot.lane.b32.xlu0 %v2259, 4
        %v2418 = vpop.permute.xlu0 %2417
        %2419 = vrot.lane.b32.xlu0 %v2260, 4
        %v2420 = vpop.permute.xlu0 %2419
        %2421 = vrot.lane.b32.xlu0 %v2261, 4
        %v2422 = vpop.permute.xlu0 %2421
        %2423 = vrot.lane.b32.xlu0 %v2262, 4
        %v2424 = vpop.permute.xlu0 %2423
        %2425 = vrot.lane.b32.xlu0 %v2263, 4
        %v2426 = vpop.permute.xlu0 %2425
        %2427 = vrot.lane.b32.xlu0 %v2264, 4
        %v2428 = vpop.permute.xlu0 %2427
        %2429 = vrot.lane.b32.xlu0 %v2265, 4
        %v2430 = vpop.permute.xlu0 %2429
        %2431 = vrot.lane.b32.xlu0 %v2266, 4
        %v2432 = vpop.permute.xlu0 %2431
        %2433 = vrot.lane.b32.xlu0 %v2267, 4
        %v2434 = vpop.permute.xlu0 %2433
        %2435 = vrot.lane.b32.xlu0 %v2268, 4
        %v2436 = vpop.permute.xlu0 %2435
        %2437 = vrot.lane.b32.xlu0 %v2269, 4
        %v2438 = vpop.permute.xlu0 %2437
        %2439 = vrot.lane.b32.xlu0 %v2270, 4
        %v2440 = vpop.permute.xlu0 %2439
        %v2441 = vsel %vm1899, %v2418, %v2420
        %v2442 = vsel %vm1899, %v2420, %v2422
        %v2443 = vsel %vm1899, %v2424, %v2426
        %v2444 = vsel %vm1899, %v2426, %v2428
        %v2445 = vsel %vm1899, %v2430, %v2432
        %v2446 = vsel %vm1899, %v2432, %v2434
        %v2447 = vsel %vm1899, %v2436, %v2438
        %v2448 = vsel %vm1899, %v2438, %v2440
        %v2458 = vsel %vm2299, %v2401, 0
        %v2461 = vsel %vm2299, %v2402, 0
        %v2464 = vsel %vm2299, %v2403, 0
        %v2467 = vsel %vm2299, %v2404, 0
        %2469 = vmatprep.subr.bf16.mxu0 %v2442
        %2470 = vmatpush1.bf16.msra.mxu0 %v2441
        %2471 = vmatprep.subr.bf16.mxu0 %v2444
        %2472 = vmatpush1.bf16.msra.mxu0 %v2443
        %2473 = vmatprep.subr.bf16.mxu0 %v2446
        %2474 = vmatpush1.bf16.msra.mxu0 %v2445
        %2475 = vmatprep.subr.bf16.mxu0 %v2448
        %2476 = vmatpush1.bf16.msra.mxu0 %v2447
        %2477 = vmatprep.subr.bf16.mxu0 0
        %2478 = vmatpush1.bf16.msra.mxu0 0
        %2479 = vmatprep.subr.bf16.mxu0 0
        %2480 = vmatpush1.bf16.msra.mxu0 0
        %2481 = vmatprep.subr.bf16.mxu0 0
        %2482 = vmatpush1.bf16.msra.mxu0 0
        %2483 = vmatprep.subr.bf16.mxu0 0
        %2484 = vmatpush1.bf16.msra.mxu0 0
        %2485 = vmatprep.subr.bf16.mxu0 0
        %2486 = vmatpush1.bf16.msra.mxu0 0
        %2487 = vmatprep.subr.bf16.mxu0 0
        %2488 = vmatpush1.bf16.msra.mxu0 0
        %2489 = vmatprep.subr.bf16.mxu0 0
        %2490 = vmatpush1.bf16.msra.mxu0 0
        %2491 = vmatprep.subr.bf16.mxu0 0
        %2492 = vmatpush1.bf16.msra.mxu0 0
        %2493 = vmatprep.subr.bf16.mxu0 0
        %2494 = vmatpush1.bf16.msra.mxu0 0
        %2495 = vmatprep.subr.bf16.mxu0 0
        %2496 = vmatpush1.bf16.msra.mxu0 0
        %2497 = vmatprep.subr.bf16.mxu0 0
        %2498 = vmatpush1.bf16.msra.mxu0 0
        %2499 = vmatprep.subr.bf16.mxu0 0
        %2500 = vmatpush1.bf16.msra.mxu0 0
        %2501 = vmatprep.mubr.bf16.mxu0 0
        %2502 = vmatmul.mubr.bf16.gmra.mrb[0].mxu0 %v2458
        %v2503 = vpop.f32.mrb[0].mxu0
        %v2504 = vadd.f32 %v2347, %v2503
        %v2505 = vpop.f32.mrb[0].mxu0
        %v2506 = vadd.f32 %v2349, %v2505
        %v2507 = vpop.f32.mrb[0].mxu0
        %v2508 = vadd.f32 %v2351, %v2507
        %v2509 = vpop.f32.mrb[0].mxu0
        %v2510 = vadd.f32 %v2353, %v2509
        %2511 = vmatprep.mubr.bf16.mxu0 0
        %2512 = vmatmul.mubr.bf16.gmra.mrb[0].mxu0 %v2461
        %v2513 = vpop.f32.mrb[0].mxu0
        %v2514 = vadd.f32 %v2357, %v2513
        %v2515 = vpop.f32.mrb[0].mxu0
        %v2516 = vadd.f32 %v2359, %v2515
        %v2517 = vpop.f32.mrb[0].mxu0
        %v2518 = vadd.f32 %v2361, %v2517
        %v2519 = vpop.f32.mrb[0].mxu0
        %v2520 = vadd.f32 %v2363, %v2519
        %2521 = vmatprep.mubr.bf16.mxu0 0
        %2522 = vmatmul.mubr.bf16.gmra.mrb[0].mxu0 %v2464
        %v2523 = vpop.f32.mrb[0].mxu0
        %v2524 = vadd.f32 %v2367, %v2523
        %v2525 = vpop.f32.mrb[0].mxu0
        %v2526 = vadd.f32 %v2369, %v2525
        %v2527 = vpop.f32.mrb[0].mxu0
        %v2528 = vadd.f32 %v2371, %v2527
        %v2529 = vpop.f32.mrb[0].mxu0
        %v2530 = vadd.f32 %v2373, %v2529
        %2531 = vmatprep.mubr.bf16.mxu0 0
        %2532 = vmatmul.mubr.bf16.gmra.mrb[0].mxu0 %v2467
        %v2533 = vpop.f32.mrb[0].mxu0
        %v2534 = vadd.f32 %v2377, %v2533
        %v2535 = vpop.f32.mrb[0].mxu0
        %v2536 = vadd.f32 %v2379, %v2535
        %v2537 = vpop.f32.mrb[0].mxu0
        %v2538 = vadd.f32 %v2381, %v2537
        %v2539 = vpop.f32.mrb[0].mxu0
        %v2540 = vadd.f32 %v2383, %v2539
        %2541 = vdwg.mxu0
        %v2542 = vld [vmem:[#allocation6 + $0x170] sm:$0xf]
        %v2543 = vld [vmem:[#allocation6 + $0x174] sm:$0xf]
        %v2544 = vld [vmem:[#allocation6 + $0x178] sm:$0xf]
        %v2545 = vld [vmem:[#allocation6 + $0x17c] sm:$0xf]
        %v2546 = vld [vmem:[#allocation6 + $0x180] sm:$0xf]
        %v2547 = vld [vmem:[#allocation6 + $0x184] sm:$0xf]
        %v2548 = vld [vmem:[#allocation6 + $0x188] sm:$0xf]
        %v2549 = vld [vmem:[#allocation6 + $0x18c] sm:$0xf]
        %v2550 = vld [vmem:[#allocation2 + $0x8] sm:$0xff]
        %v2551 = vld [vmem:[#allocation2 + $0x10] sm:$0xff]
        %v2552 = vld [vmem:[#allocation2 + $0x18] sm:$0xff]
        %v2553 = vld [vmem:[#allocation2 + $0x28] sm:$0xff]
        %v2554 = vld [vmem:[#allocation2 + $0x30] sm:$0xff]
        %v2555 = vld [vmem:[#allocation2 + $0x38] sm:$0xff]
        %v2556 = vld [vmem:[#allocation2 + $0x48] sm:$0xff]
        %v2557 = vld [vmem:[#allocation2 + $0x50] sm:$0xff]
        %v2558 = vld [vmem:[#allocation2 + $0x58] sm:$0xff]
        %v2559 = vld [vmem:[#allocation2 + $0x68] sm:$0xff]
        %v2560 = vld [vmem:[#allocation2 + $0x70] sm:$0xff]
        %v2561 = vld [vmem:[#allocation2 + $0x78] sm:$0xff]
        %v2570 = vunpack.c.l.b16 %v2542
        %v2571 = vunpack.c.l.b16 %v2543
        %v2572 = vunpack.c.l.b16 %v2544
        %v2573 = vunpack.c.l.b16 %v2545
        %v2574 = vunpack.c.l.b16 %v2546
        %v2575 = vunpack.c.l.b16 %v2547
        %v2576 = vunpack.c.l.b16 %v2548
        %v2577 = vunpack.c.l.b16 %v2549
        %v2578 = vpack.c.b16 %v2571, %v2570
        %v2579 = vpack.c.b16 %v2573, %v2572
        %v2580 = vpack.c.b16 %v2575, %v2574
        %v2581 = vpack.c.b16 %v2577, %v2576
        %2594 = vrot.lane.b32.xlu0 %v2550, 124
        %v2595 = vpop.permute.xlu0 %2594
        %2596 = vrot.lane.b32.xlu0 %v2551, 124
        %v2597 = vpop.permute.xlu0 %2596
        %2598 = vrot.lane.b32.xlu0 %v2552, 124
        %v2599 = vpop.permute.xlu0 %2598
        %2600 = vrot.lane.b32.xlu0 %v2553, 124
        %v2601 = vpop.permute.xlu0 %2600
        %2602 = vrot.lane.b32.xlu0 %v2554, 124
        %v2603 = vpop.permute.xlu0 %2602
        %2604 = vrot.lane.b32.xlu0 %v2555, 124
        %v2605 = vpop.permute.xlu0 %2604
        %2606 = vrot.lane.b32.xlu0 %v2556, 124
        %v2607 = vpop.permute.xlu0 %2606
        %2608 = vrot.lane.b32.xlu0 %v2557, 124
        %v2609 = vpop.permute.xlu0 %2608
        %2610 = vrot.lane.b32.xlu0 %v2558, 124
        %v2611 = vpop.permute.xlu0 %2610
        %2612 = vrot.lane.b32.xlu0 %v2559, 124
        %v2613 = vpop.permute.xlu0 %2612
        %2614 = vrot.lane.b32.xlu0 %v2560, 124
        %v2615 = vpop.permute.xlu0 %2614
        %2616 = vrot.lane.b32.xlu0 %v2561, 124
        %v2617 = vpop.permute.xlu0 %2616
        %v2618 = vsel %vm2045, %v2595, %v2597
        %v2619 = vsel %vm2045, %v2597, %v2599
        %v2620 = vsel %vm2045, %v2601, %v2603
        %v2621 = vsel %vm2045, %v2603, %v2605
        %v2622 = vsel %vm2045, %v2607, %v2609
        %v2623 = vsel %vm2045, %v2609, %v2611
        %v2624 = vsel %vm2045, %v2613, %v2615
        %v2625 = vsel %vm2045, %v2615, %v2617
        %v2635 = vsel %vm2299, %v2578, 0
        %v2638 = vsel %vm2299, %v2579, 0
        %v2641 = vsel %vm2299, %v2580, 0
        %v2644 = vsel %vm2299, %v2581, 0
        %2646 = vmatprep.subr.bf16.mxu0 %v2619
        %2647 = vmatpush1.bf16.msra.mxu0 %v2618
        %2648 = vmatprep.subr.bf16.mxu0 %v2621
        %2649 = vmatpush1.bf16.msra.mxu0 %v2620
        %2650 = vmatprep.subr.bf16.mxu0 %v2623
        %2651 = vmatpush1.bf16.msra.mxu0 %v2622
        %2652 = vmatprep.subr.bf16.mxu0 %v2625
        %2653 = vmatpush1.bf16.msra.mxu0 %v2624
        %2654 = vmatprep.subr.bf16.mxu0 0
        %2655 = vmatpush1.bf16.msra.mxu0 0
        %2656 = vmatprep.subr.bf16.mxu0 0
        %2657 = vmatpush1.bf16.msra.mxu0 0
        %2658 = vmatprep.subr.bf16.mxu0 0
        %2659 = vmatpush1.bf16.msra.mxu0 0
        %2660 = vmatprep.subr.bf16.mxu0 0
        %2661 = vmatpush1.bf16.msra.mxu0 0
        %2662 = vmatprep.subr.bf16.mxu0 0
        %2663 = vmatpush1.bf16.msra.mxu0 0
        %2664 = vmatprep.subr.bf16.mxu0 0
        %2665 = vmatpush1.bf16.msra.mxu0 0
        %2666 = vmatprep.subr.bf16.mxu0 0
        %2667 = vmatpush1.bf16.msra.mxu0 0
        %2668 = vmatprep.subr.bf16.mxu0 0
        %2669 = vmatpush1.bf16.msra.mxu0 0
        %2670 = vmatprep.subr.bf16.mxu0 0
        %2671 = vmatpush1.bf16.msra.mxu0 0
        %2672 = vmatprep.subr.bf16.mxu0 0
        %2673 = vmatpush1.bf16.msra.mxu0 0
        %2674 = vmatprep.subr.bf16.mxu0 0
        %2675 = vmatpush1.bf16.msra.mxu0 0
        %2676 = vmatprep.subr.bf16.mxu0 0
        %2677 = vmatpush1.bf16.msra.mxu0 0
        %2678 = vmatprep.mubr.bf16.mxu0 0
        %2679 = vmatmul.mubr.bf16.gmra.mrb[0].mxu0 %v2635
        %v2680 = vpop.f32.mrb[0].mxu0
        %v2681 = vadd.f32 0.0, %v2680
        %v2682 = vpop.f32.mrb[0].mxu0
        %v2683 = vadd.f32 0.0, %v2682
        %v2684 = vpop.f32.mrb[0].mxu0
        %v2685 = vadd.f32 0.0, %v2684
        %v2686 = vpop.f32.mrb[0].mxu0
        %v2687 = vadd.f32 0.0, %v2686
        %2688 = vmatprep.mubr.bf16.mxu0 0
        %2689 = vmatmul.mubr.bf16.gmra.mrb[0].mxu0 %v2638
        %v2690 = vpop.f32.mrb[0].mxu0
        %v2691 = vadd.f32 0.0, %v2690
        %v2692 = vpop.f32.mrb[0].mxu0
        %v2693 = vadd.f32 0.0, %v2692
        %v2694 = vpop.f32.mrb[0].mxu0
        %v2695 = vadd.f32 0.0, %v2694
        %v2696 = vpop.f32.mrb[0].mxu0
        %v2697 = vadd.f32 0.0, %v2696
        %2698 = vmatprep.mubr.bf16.mxu0 0
        %2699 = vmatmul.mubr.bf16.gmra.mrb[0].mxu0 %v2641
        %v2700 = vpop.f32.mrb[0].mxu0
        %v2701 = vadd.f32 0.0, %v2700
        %v2702 = vpop.f32.mrb[0].mxu0
        %v2703 = vadd.f32 0.0, %v2702
        %v2704 = vpop.f32.mrb[0].mxu0
        %v2705 = vadd.f32 0.0, %v2704
        %v2706 = vpop.f32.mrb[0].mxu0
        %v2707 = vadd.f32 0.0, %v2706
        %2708 = vmatprep.mubr.bf16.mxu0 0
        %2709 = vmatmul.mubr.bf16.gmra.mrb[0].mxu0 %v2644
        %v2710 = vpop.f32.mrb[0].mxu0
        %v2711 = vadd.f32 0.0, %v2710
        %v2712 = vpop.f32.mrb[0].mxu0
        %v2713 = vadd.f32 0.0, %v2712
        %v2714 = vpop.f32.mrb[0].mxu0
        %v2715 = vadd.f32 0.0, %v2714
        %v2716 = vpop.f32.mrb[0].mxu0
        %v2717 = vadd.f32 0.0, %v2716
        %2718 = vdwg.mxu0
        %v2719 = vadd.f32 %v2504, %v2681
        %v2720 = vadd.f32 %v2506, %v2683
        %v2721 = vadd.f32 %v2508, %v2685
        %v2722 = vadd.f32 %v2510, %v2687
        %v2723 = vadd.f32 %v2514, %v2691
        %v2724 = vadd.f32 %v2516, %v2693
        %v2725 = vadd.f32 %v2518, %v2695
        %v2726 = vadd.f32 %v2520, %v2697
        %v2727 = vadd.f32 %v2524, %v2701
        %v2728 = vadd.f32 %v2526, %v2703
        %v2729 = vadd.f32 %v2528, %v2705
        %v2730 = vadd.f32 %v2530, %v2707
        %v2731 = vadd.f32 %v2534, %v2711
        %v2732 = vadd.f32 %v2536, %v2713
        %v2733 = vadd.f32 %v2538, %v2715
        %v2734 = vadd.f32 %v2540, %v2717
        %v2735 = vld [vmem:[%s2 + $0xe0] sm:$0xff]
        %v2736 = vld [vmem:[%s2 + $0xe8] sm:$0xff]
        %v2737 = vld [vmem:[%s2 + $0xf0] sm:$0xff]
        %v2738 = vld [vmem:[%s2 + $0xf8] sm:$0xff]
        %v2739 = vld [vmem:[%s2 + $0x100] sm:$0xff]
        %v2740 = vld [vmem:[%s2 + $0x108] sm:$0xff]
        %v2741 = vld [vmem:[%s2 + $0x110] sm:$0xff]
        %v2742 = vld [vmem:[%s2 + $0x118] sm:$0xff]
        %2744 = vset.pattern.permute.xlu0 0
        %2745 = vperm.xlu0 %2744, %v2735
        %v2746 = vpop.permute.xlu0 %2745
        %2749 = vset.pattern.permute.xlu0 0
        %2750 = vperm.xlu0 %2749, %v2736
        %v2751 = vpop.permute.xlu0 %2750
        %2754 = vset.pattern.permute.xlu0 0
        %2755 = vperm.xlu0 %2754, %v2737
        %v2756 = vpop.permute.xlu0 %2755
        %2759 = vset.pattern.permute.xlu0 0
        %2760 = vperm.xlu0 %2759, %v2738
        %v2761 = vpop.permute.xlu0 %2760
        %2764 = vset.pattern.permute.xlu0 0
        %2765 = vperm.xlu0 %2764, %v2739
        %v2766 = vpop.permute.xlu0 %2765
        %2769 = vset.pattern.permute.xlu0 0
        %2770 = vperm.xlu0 %2769, %v2740
        %v2771 = vpop.permute.xlu0 %2770
        %2774 = vset.pattern.permute.xlu0 0
        %2775 = vperm.xlu0 %2774, %v2741
        %v2776 = vpop.permute.xlu0 %2775
        %2779 = vset.pattern.permute.xlu0 0
        %2780 = vperm.xlu0 %2779, %v2742
        %v2781 = vpop.permute.xlu0 %2780
        %v2783 = vadd.f32 %v2719, %v2746
        %v2784 = vadd.f32 %v2720, %v2746
        %v2785 = vadd.f32 %v2721, %v2751
        %v2786 = vadd.f32 %v2722, %v2751
        %v2787 = vadd.f32 %v2723, %v2756
        %v2788 = vadd.f32 %v2724, %v2756
        %v2789 = vadd.f32 %v2725, %v2761
        %v2790 = vadd.f32 %v2726, %v2761
        %v2791 = vadd.f32 %v2727, %v2766
        %v2792 = vadd.f32 %v2728, %v2766
        %v2793 = vadd.f32 %v2729, %v2771
        %v2794 = vadd.f32 %v2730, %v2771
        %v2795 = vadd.f32 %v2731, %v2776
        %v2796 = vadd.f32 %v2732, %v2776
        %v2797 = vadd.f32 %v2733, %v2781
        %v2798 = vadd.f32 %v2734, %v2781
        %v2799 = vmax.f32 %v2783, 0.0
        %v2800 = vmax.f32 %v2784, 0.0
        %v2801 = vmax.f32 %v2785, 0.0
        %v2802 = vmax.f32 %v2786, 0.0
        %v2803 = vmax.f32 %v2787, 0.0
        %v2804 = vmax.f32 %v2788, 0.0
        %v2805 = vmax.f32 %v2789, 0.0
        %v2806 = vmax.f32 %v2790, 0.0
        %v2807 = vmax.f32 %v2791, 0.0
        %v2808 = vmax.f32 %v2792, 0.0
        %v2809 = vmax.f32 %v2793, 0.0
        %v2810 = vmax.f32 %v2794, 0.0
        %v2811 = vmax.f32 %v2795, 0.0
        %v2812 = vmax.f32 %v2796, 0.0
        %v2813 = vmax.f32 %v2797, 0.0
        %v2814 = vmax.f32 %v2798, 0.0
        %v2815 = vld [vmem:[#allocation3] sm:$0xff]
        %v2816 = vld [vmem:[#allocation3 + $0x8] sm:$0xff]
        %v2817 = vld [vmem:[#allocation3 + $0x10] sm:$0xff]
        %v2818 = vld [vmem:[#allocation3 + $0x18] sm:$0xff]
        %v2819 = vld [vmem:[#allocation6 + $0x190] sm:$0xf]
        %v2820 = vld [vmem:[#allocation6 + $0x194] sm:$0xf]
        %v2821 = vld [vmem:[#allocation6 + $0x198] sm:$0xf]
        %v2822 = vld [vmem:[#allocation6 + $0x19c] sm:$0xf]
        %v2823 = vld [vmem:[#allocation6 + $0x1a0] sm:$0xf]
        %v2824 = vld [vmem:[#allocation6 + $0x1a4] sm:$0xf]
        %v2825 = vld [vmem:[#allocation6 + $0x1a8] sm:$0xf]
        %v2826 = vld [vmem:[#allocation6 + $0x1ac] sm:$0xf]
        %v2827 = vld [vmem:[%s2 + $0x120] sm:$0xff]
        %v2828 = vld [vmem:[%s2 + $0x128] sm:$0xff]
        %v2829 = vld [vmem:[%s2 + $0x130] sm:$0xff]
        %v2830 = vld [vmem:[%s2 + $0x138] sm:$0xff]
        %v2831 = vld [vmem:[%s2 + $0x140] sm:$0xff]
        %v2832 = vld [vmem:[%s2 + $0x148] sm:$0xff]
        %v2833 = vld [vmem:[%s2 + $0x150] sm:$0xff]
        %v2834 = vld [vmem:[%s2 + $0x158] sm:$0xff]
        %2836 = vset.pattern.permute.xlu0 0
        %2837 = vperm.xlu0 %2836, %v2827
        %v2838 = vpop.permute.xlu0 %2837
        %2841 = vset.pattern.permute.xlu0 0
        %2842 = vperm.xlu0 %2841, %v2828
        %v2843 = vpop.permute.xlu0 %2842
        %2846 = vset.pattern.permute.xlu0 0
        %2847 = vperm.xlu0 %2846, %v2829
        %v2848 = vpop.permute.xlu0 %2847
        %2851 = vset.pattern.permute.xlu0 0
        %2852 = vperm.xlu0 %2851, %v2830
        %v2853 = vpop.permute.xlu0 %2852
        %2856 = vset.pattern.permute.xlu0 0
        %2857 = vperm.xlu0 %2856, %v2831
        %v2858 = vpop.permute.xlu0 %2857
        %2861 = vset.pattern.permute.xlu0 0
        %2862 = vperm.xlu0 %2861, %v2832
        %v2863 = vpop.permute.xlu0 %2862
        %2866 = vset.pattern.permute.xlu0 0
        %2867 = vperm.xlu0 %2866, %v2833
        %v2868 = vpop.permute.xlu0 %2867
        %2871 = vset.pattern.permute.xlu0 0
        %2872 = vperm.xlu0 %2871, %v2834
        %v2873 = vpop.permute.xlu0 %2872
        %v2883 = vunpack.c.l.b16 %v2819
        %v2884 = vunpack.c.l.b16 %v2820
        %v2885 = vunpack.c.l.b16 %v2821
        %v2886 = vunpack.c.l.b16 %v2822
        %v2887 = vunpack.c.l.b16 %v2823
        %v2888 = vunpack.c.l.b16 %v2824
        %v2889 = vunpack.c.l.b16 %v2825
        %v2890 = vunpack.c.l.b16 %v2826
        %v2891 = vpack.c.b16 %v2884, %v2883
        %v2892 = vpack.c.b16 %v2886, %v2885
        %v2893 = vpack.c.b16 %v2888, %v2887
        %v2894 = vpack.c.b16 %v2890, %v2889
        %v2896 = vsel %vm581, %v2891, 0
        %v2899 = vsel %vm581, %v2892, 0
        %v2902 = vsel %vm581, %v2893, 0
        %v2905 = vsel %vm581, %v2894, 0
        %2907 = vmatprep.subr.bf16.mxu0 %v2816
        %2908 = vmatpush1.bf16.msra.mxu0 %v2815
        %2909 = vmatprep.subr.bf16.mxu0 %v2818
        %2910 = vmatpush1.bf16.msra.mxu0 %v2817
        %2911 = vmatprep.subr.bf16.mxu0 0
        %2912 = vmatpush1.bf16.msra.mxu0 0
        %2913 = vmatprep.subr.bf16.mxu0 0
        %2914 = vmatpush1.bf16.msra.mxu0 0
        %2915 = vmatprep.subr.bf16.mxu0 0
        %2916 = vmatpush1.bf16.msra.mxu0 0
        %2917 = vmatprep.subr.bf16.mxu0 0
        %2918 = vmatpush1.bf16.msra.mxu0 0
        %2919 = vmatprep.subr.bf16.mxu0 0
        %2920 = vmatpush1.bf16.msra.mxu0 0
        %2921 = vmatprep.subr.bf16.mxu0 0
        %2922 = vmatpush1.bf16.msra.mxu0 0
        %2923 = vmatprep.subr.bf16.mxu0 0
        %2924 = vmatpush1.bf16.msra.mxu0 0
        %2925 = vmatprep.subr.bf16.mxu0 0
        %2926 = vmatpush1.bf16.msra.mxu0 0
        %2927 = vmatprep.subr.bf16.mxu0 0
        %2928 = vmatpush1.bf16.msra.mxu0 0
        %2929 = vmatprep.subr.bf16.mxu0 0
        %2930 = vmatpush1.bf16.msra.mxu0 0
        %2931 = vmatprep.subr.bf16.mxu0 0
        %2932 = vmatpush1.bf16.msra.mxu0 0
        %2933 = vmatprep.subr.bf16.mxu0 0
        %2934 = vmatpush1.bf16.msra.mxu0 0
        %2935 = vmatprep.subr.bf16.mxu0 0
        %2936 = vmatpush1.bf16.msra.mxu0 0
        %2937 = vmatprep.subr.bf16.mxu0 0
        %2938 = vmatpush1.bf16.msra.mxu0 0
        %2939 = vmatprep.mubr.bf16.mxu0 0
        %2940 = vmatmul.mubr.bf16.gmra.mrb[0].mxu0 %v2896
        %v2941 = vpop.f32.mrb[0].mxu0
        %v2942 = vadd.f32 %v2838, %v2941
        %v2943 = vpop.f32.mrb[0].mxu0
        %v2944 = vadd.f32 %v2838, %v2943
        %v2945 = vpop.f32.mrb[0].mxu0
        %v2946 = vadd.f32 %v2843, %v2945
        %v2947 = vpop.f32.mrb[0].mxu0
        %v2948 = vadd.f32 %v2843, %v2947
        %2949 = vmatprep.mubr.bf16.mxu0 0
        %2950 = vmatmul.mubr.bf16.gmra.mrb[0].mxu0 %v2899
        %v2951 = vpop.f32.mrb[0].mxu0
        %v2952 = vadd.f32 %v2848, %v2951
        %v2953 = vpop.f32.mrb[0].mxu0
        %v2954 = vadd.f32 %v2848, %v2953
        %v2955 = vpop.f32.mrb[0].mxu0
        %v2956 = vadd.f32 %v2853, %v2955
        %v2957 = vpop.f32.mrb[0].mxu0
        %v2958 = vadd.f32 %v2853, %v2957
        %2959 = vmatprep.mubr.bf16.mxu0 0
        %2960 = vmatmul.mubr.bf16.gmra.mrb[0].mxu0 %v2902
        %v2961 = vpop.f32.mrb[0].mxu0
        %v2962 = vadd.f32 %v2858, %v2961
        %v2963 = vpop.f32.mrb[0].mxu0
        %v2964 = vadd.f32 %v2858, %v2963
        %v2965 = vpop.f32.mrb[0].mxu0
        %v2966 = vadd.f32 %v2863, %v2965
        %v2967 = vpop.f32.mrb[0].mxu0
        %v2968 = vadd.f32 %v2863, %v2967
        %2969 = vmatprep.mubr.bf16.mxu0 0
        %2970 = vmatmul.mubr.bf16.gmra.mrb[0].mxu0 %v2905
        %v2971 = vpop.f32.mrb[0].mxu0
        %v2972 = vadd.f32 %v2868, %v2971
        %v2973 = vpop.f32.mrb[0].mxu0
        %v2974 = vadd.f32 %v2868, %v2973
        %v2975 = vpop.f32.mrb[0].mxu0
        %v2976 = vadd.f32 %v2873, %v2975
        %v2977 = vpop.f32.mrb[0].mxu0
        %v2978 = vadd.f32 %v2873, %v2977
        %2979 = vdwg.mxu0
        %v2980 = vadd.f32 %v2799, %v2942
        %v2981 = vadd.f32 %v2800, %v2944
        %v2982 = vadd.f32 %v2801, %v2946
        %v2983 = vadd.f32 %v2802, %v2948
        %v2984 = vadd.f32 %v2803, %v2952
        %v2985 = vadd.f32 %v2804, %v2954
        %v2986 = vadd.f32 %v2805, %v2956
        %v2987 = vadd.f32 %v2806, %v2958
        %v2988 = vadd.f32 %v2807, %v2962
        %v2989 = vadd.f32 %v2808, %v2964
        %v2990 = vadd.f32 %v2809, %v2966
        %v2991 = vadd.f32 %v2810, %v2968
        %v2992 = vadd.f32 %v2811, %v2972
        %v2993 = vadd.f32 %v2812, %v2974
        %v2994 = vadd.f32 %v2813, %v2976
        %v2995 = vadd.f32 %v2814, %v2978
        %v2996 = vmax.f32 %v2980, 0.0
        %v2997 = vmax.f32 %v2981, 0.0
        %v2998 = vmax.f32 %v2982, 0.0
        %v2999 = vmax.f32 %v2983, 0.0
        %v3000 = vmax.f32 %v2984, 0.0
        %v3001 = vmax.f32 %v2985, 0.0
        %v3002 = vmax.f32 %v2986, 0.0
        %v3003 = vmax.f32 %v2987, 0.0
        %v3004 = vmax.f32 %v2988, 0.0
        %v3005 = vmax.f32 %v2989, 0.0
        %v3006 = vmax.f32 %v2990, 0.0
        %v3007 = vmax.f32 %v2991, 0.0
        %v3008 = vmax.f32 %v2992, 0.0
        %v3009 = vmax.f32 %v2993, 0.0
        %v3010 = vmax.f32 %v2994, 0.0
        %v3011 = vmax.f32 %v2995, 0.0
        %v3012 = vpack.c.bf16 %v2998, %v2996
        %v3013 = vpack.c.bf16 %v2999, %v2997
        %v3014 = vpack.c.bf16 %v3002, %v3000
        %v3015 = vpack.c.bf16 %v3003, %v3001
        %v3016 = vpack.c.bf16 %v3006, %v3004
        %v3017 = vpack.c.bf16 %v3007, %v3005
        %v3018 = vpack.c.bf16 %v3010, %v3008
        %v3019 = vpack.c.bf16 %v3011, %v3009
        %3020 = vst [vmem:[#allocation3] sm:$0xff] %v3012
        %3021 = vst [vmem:[#allocation3 + $0x8] sm:$0xff] %v3013
        %3022 = vst [vmem:[#allocation3 + $0x10] sm:$0xff] %v3014
        %3023 = vst [vmem:[#allocation3 + $0x18] sm:$0xff] %v3015
        %3024 = vst [vmem:[#allocation3 + $0x20] sm:$0xff] %v3016
        %3025 = vst [vmem:[#allocation3 + $0x28] sm:$0xff] %v3017
        %3026 = vst [vmem:[#allocation3 + $0x30] sm:$0xff] %v3018
        %3027 = vst [vmem:[#allocation3 + $0x38] sm:$0xff] %v3019
        %v3028 = vld [vmem:[#allocation6 + $0x1b0] sm:$0xf]
        %v3029 = vld [vmem:[#allocation6 + $0x1b4] sm:$0xf]
        %v3030 = vld [vmem:[#allocation6 + $0x1b8] sm:$0xf]
        %v3031 = vld [vmem:[#allocation6 + $0x1bc] sm:$0xf]
        %v3032 = vld [vmem:[#allocation6 + $0x1c0] sm:$0xf]
        %v3033 = vld [vmem:[#allocation6 + $0x1c4] sm:$0xf]
        %v3034 = vld [vmem:[#allocation6 + $0x1c8] sm:$0xf]
        %v3035 = vld [vmem:[#allocation6 + $0x1cc] sm:$0xf]
        %v3036 = vld [vmem:[#allocation6 + $0x1d0] sm:$0xf]
        %v3037 = vld [vmem:[#allocation6 + $0x1d4] sm:$0xf]
        %v3038 = vld [vmem:[#allocation6 + $0x1d8] sm:$0xf]
        %v3039 = vld [vmem:[#allocation6 + $0x1dc] sm:$0xf]
        %v3040 = vld [vmem:[#allocation6 + $0x1e0] sm:$0xf]
        %v3041 = vld [vmem:[#allocation6 + $0x1e4] sm:$0xf]
        %v3042 = vld [vmem:[#allocation6 + $0x1e8] sm:$0xf]
        %v3043 = vld [vmem:[#allocation6 + $0x1ec] sm:$0xf]
        %v3044 = vld [vmem:[#allocation6 + $0x1f0] sm:$0xf]
        %v3045 = vld [vmem:[#allocation6 + $0x1f4] sm:$0xf]
        %v3046 = vld [vmem:[#allocation6 + $0x1f8] sm:$0xf]
        %v3047 = vld [vmem:[#allocation6 + $0x1fc] sm:$0xf]
        %v3048 = vld [vmem:[#allocation6 + $0x200] sm:$0xf]
        %v3049 = vld [vmem:[#allocation6 + $0x204] sm:$0xf]
        %v3050 = vld [vmem:[#allocation6 + $0x208] sm:$0xf]
        %v3051 = vld [vmem:[#allocation6 + $0x20c] sm:$0xf]
        %v3052 = vld [vmem:[#allocation6 + $0x210] sm:$0xf]
        %v3053 = vld [vmem:[#allocation6 + $0x214] sm:$0xf]
        %v3054 = vld [vmem:[#allocation6 + $0x218] sm:$0xf]
        %v3055 = vld [vmem:[#allocation6 + $0x21c] sm:$0xf]
        %v3056 = vld [vmem:[#allocation6 + $0x220] sm:$0xf]
        %v3057 = vld [vmem:[#allocation6 + $0x224] sm:$0xf]
        %v3058 = vld [vmem:[#allocation6 + $0x228] sm:$0xf]
        %v3059 = vld [vmem:[#allocation6 + $0x22c] sm:$0xf]
        %v3060 = vld [vmem:[#allocation6 + $0x230] sm:$0x1]
        %v3061 = vld [vmem:[#allocation3] sm:$0xff]
        %v3062 = vld [vmem:[#allocation3 + $0x8] sm:$0xff]
        %v3063 = vld [vmem:[#allocation3 + $0x10] sm:$0xff]
        %v3064 = vld [vmem:[#allocation3 + $0x18] sm:$0xff]
        %v3065 = vld [vmem:[#allocation3 + $0x20] sm:$0xff]
        %v3066 = vld [vmem:[#allocation3 + $0x28] sm:$0xff]
        %v3067 = vld [vmem:[#allocation3 + $0x30] sm:$0xff]
        %v3068 = vld [vmem:[#allocation3 + $0x38] sm:$0xff]
        %v3069 = vld [vmem:[%s2 + $0x160] sm:$0xff]
        %v3070 = vld [vmem:[%s2 + $0x168] sm:$0xff]
        %v3071 = vld [vmem:[%s2 + $0x170] sm:$0xff]
        %v3072 = vld [vmem:[%s2 + $0x178] sm:$0xff]
        %v3073 = vld [vmem:[%s2 + $0x180] sm:$0xff]
        %v3074 = vld [vmem:[%s2 + $0x188] sm:$0xff]
        %v3075 = vld [vmem:[%s2 + $0x190] sm:$0xff]
        %v3076 = vld [vmem:[%s2 + $0x198] sm:$0xff]
        %v3077 = vld [vmem:[%s2 + $0x1a0] sm:$0xff]
        %v3078 = vld [vmem:[%s2 + $0x1a8] sm:$0xff]
        %v3079 = vld [vmem:[%s2 + $0x1b0] sm:$0xff]
        %v3080 = vld [vmem:[%s2 + $0x1b8] sm:$0xff]
        %v3081 = vld [vmem:[%s2 + $0x1c0] sm:$0xff]
        %v3082 = vld [vmem:[%s2 + $0x1c8] sm:$0xff]
        %v3083 = vld [vmem:[%s2 + $0x1d0] sm:$0xff]
        %v3084 = vld [vmem:[%s2 + $0x1d8] sm:$0xff]
        %v3085 = vld [vmem:[%s2 + $0x1e0] sm:$0xff]
        %v3086 = vld [vmem:[%s2 + $0x1e8] sm:$0xff]
        %v3087 = vld [vmem:[%s2 + $0x1f0] sm:$0xff]
        %v3088 = vld [vmem:[%s2 + $0x1f8] sm:$0xff]
        %v3089 = vld [vmem:[%s2 + $0x200] sm:$0xff]
        %v3090 = vld [vmem:[%s2 + $0x208] sm:$0xff]
        %v3091 = vld [vmem:[%s2 + $0x210] sm:$0xff]
        %v3092 = vld [vmem:[%s2 + $0x218] sm:$0xff]
        %v3093 = vld [vmem:[%s2 + $0x220] sm:$0xff]
        %v3094 = vld [vmem:[%s2 + $0x228] sm:$0xff]
        %v3095 = vld [vmem:[%s2 + $0x230] sm:$0xff]
        %v3096 = vld [vmem:[%s2 + $0x238] sm:$0xff]
        %v3097 = vld [vmem:[%s2 + $0x240] sm:$0xff]
        %v3098 = vld [vmem:[%s2 + $0x248] sm:$0xff]
        %v3099 = vld [vmem:[%s2 + $0x250] sm:$0xff]
        %v3100 = vld [vmem:[%s2 + $0x258] sm:$0xff]
        %v3101 = vld [vmem:[%s2 + $0x260] sm:$0x1]
        %3103 = vset.pattern.permute.xlu0 0
        %3104 = vperm.xlu0 %3103, %v3069
        %v3105 = vpop.permute.xlu0 %3104
        %3108 = vset.pattern.permute.xlu0 0
        %3109 = vperm.xlu0 %3108, %v3070
        %v3110 = vpop.permute.xlu0 %3109
        %3113 = vset.pattern.permute.xlu0 0
        %3114 = vperm.xlu0 %3113, %v3071
        %v3115 = vpop.permute.xlu0 %3114
        %3118 = vset.pattern.permute.xlu0 0
        %3119 = vperm.xlu0 %3118, %v3072
        %v3120 = vpop.permute.xlu0 %3119
        %3123 = vset.pattern.permute.xlu0 0
        %3124 = vperm.xlu0 %3123, %v3073
        %v3125 = vpop.permute.xlu0 %3124
        %3128 = vset.pattern.permute.xlu0 0
        %3129 = vperm.xlu0 %3128, %v3074
        %v3130 = vpop.permute.xlu0 %3129
        %3133 = vset.pattern.permute.xlu0 0
        %3134 = vperm.xlu0 %3133, %v3075
        %v3135 = vpop.permute.xlu0 %3134
        %3138 = vset.pattern.permute.xlu0 0
        %3139 = vperm.xlu0 %3138, %v3076
        %v3140 = vpop.permute.xlu0 %3139
        %3143 = vset.pattern.permute.xlu0 0
        %3144 = vperm.xlu0 %3143, %v3077
        %v3145 = vpop.permute.xlu0 %3144
        %3148 = vset.pattern.permute.xlu0 0
        %3149 = vperm.xlu0 %3148, %v3078
        %v3150 = vpop.permute.xlu0 %3149
        %3153 = vset.pattern.permute.xlu0 0
        %3154 = vperm.xlu0 %3153, %v3079
        %v3155 = vpop.permute.xlu0 %3154
        %3158 = vset.pattern.permute.xlu0 0
        %3159 = vperm.xlu0 %3158, %v3080
        %v3160 = vpop.permute.xlu0 %3159
        %3163 = vset.pattern.permute.xlu0 0
        %3164 = vperm.xlu0 %3163, %v3081
        %v3165 = vpop.permute.xlu0 %3164
        %3168 = vset.pattern.permute.xlu0 0
        %3169 = vperm.xlu0 %3168, %v3082
        %v3170 = vpop.permute.xlu0 %3169
        %3173 = vset.pattern.permute.xlu0 0
        %3174 = vperm.xlu0 %3173, %v3083
        %v3175 = vpop.permute.xlu0 %3174
        %3178 = vset.pattern.permute.xlu0 0
        %3179 = vperm.xlu0 %3178, %v3084
        %v3180 = vpop.permute.xlu0 %3179
        %3183 = vset.pattern.permute.xlu0 0
        %3184 = vperm.xlu0 %3183, %v3085
        %v3185 = vpop.permute.xlu0 %3184
        %3188 = vset.pattern.permute.xlu0 0
        %3189 = vperm.xlu0 %3188, %v3086
        %v3190 = vpop.permute.xlu0 %3189
        %3193 = vset.pattern.permute.xlu0 0
        %3194 = vperm.xlu0 %3193, %v3087
        %v3195 = vpop.permute.xlu0 %3194
        %3198 = vset.pattern.permute.xlu0 0
        %3199 = vperm.xlu0 %3198, %v3088
        %v3200 = vpop.permute.xlu0 %3199
        %3203 = vset.pattern.permute.xlu0 0
        %3204 = vperm.xlu0 %3203, %v3089
        %v3205 = vpop.permute.xlu0 %3204
        %3208 = vset.pattern.permute.xlu0 0
        %3209 = vperm.xlu0 %3208, %v3090
        %v3210 = vpop.permute.xlu0 %3209
        %3213 = vset.pattern.permute.xlu0 0
        %3214 = vperm.xlu0 %3213, %v3091
        %v3215 = vpop.permute.xlu0 %3214
        %3218 = vset.pattern.permute.xlu0 0
        %3219 = vperm.xlu0 %3218, %v3092
        %v3220 = vpop.permute.xlu0 %3219
        %3223 = vset.pattern.permute.xlu0 0
        %3224 = vperm.xlu0 %3223, %v3093
        %v3225 = vpop.permute.xlu0 %3224
        %3228 = vset.pattern.permute.xlu0 0
        %3229 = vperm.xlu0 %3228, %v3094
        %v3230 = vpop.permute.xlu0 %3229
        %3233 = vset.pattern.permute.xlu0 0
        %3234 = vperm.xlu0 %3233, %v3095
        %v3235 = vpop.permute.xlu0 %3234
        %3238 = vset.pattern.permute.xlu0 0
        %3239 = vperm.xlu0 %3238, %v3096
        %v3240 = vpop.permute.xlu0 %3239
        %3243 = vset.pattern.permute.xlu0 0
        %3244 = vperm.xlu0 %3243, %v3097
        %v3245 = vpop.permute.xlu0 %3244
        %3248 = vset.pattern.permute.xlu0 0
        %3249 = vperm.xlu0 %3248, %v3098
        %v3250 = vpop.permute.xlu0 %3249
        %3253 = vset.pattern.permute.xlu0 0
        %3254 = vperm.xlu0 %3253, %v3099
        %v3255 = vpop.permute.xlu0 %3254
        %3258 = vset.pattern.permute.xlu0 0
        %3259 = vperm.xlu0 %3258, %v3100
        %v3260 = vpop.permute.xlu0 %3259
        %3263 = vset.pattern.permute.xlu0 0
        %3264 = vperm.xlu0 %3263, %v3101
        %v3265 = vpop.permute.xlu0 %3264
        %v3300 = vunpack.c.l.b16 %v3028
        %v3301 = vunpack.c.l.b16 %v3029
        %v3302 = vunpack.c.l.b16 %v3030
        %v3303 = vunpack.c.l.b16 %v3031
        %v3304 = vunpack.c.l.b16 %v3032
        %v3305 = vunpack.c.l.b16 %v3033
        %v3306 = vunpack.c.l.b16 %v3034
        %v3307 = vunpack.c.l.b16 %v3035
        %v3308 = vunpack.c.l.b16 %v3036
        %v3309 = vunpack.c.l.b16 %v3037
        %v3310 = vunpack.c.l.b16 %v3038
        %v3311 = vunpack.c.l.b16 %v3039
        %v3312 = vunpack.c.l.b16 %v3040
        %v3313 = vunpack.c.l.b16 %v3041
        %v3314 = vunpack.c.l.b16 %v3042
        %v3315 = vunpack.c.l.b16 %v3043
        %v3316 = vunpack.c.l.b16 %v3044
        %v3317 = vunpack.c.l.b16 %v3045
        %v3318 = vunpack.c.l.b16 %v3046
        %v3319 = vunpack.c.l.b16 %v3047
        %v3320 = vunpack.c.l.b16 %v3048
        %v3321 = vunpack.c.l.b16 %v3049
        %v3322 = vunpack.c.l.b16 %v3050
        %v3323 = vunpack.c.l.b16 %v3051
        %v3324 = vunpack.c.l.b16 %v3052
        %v3325 = vunpack.c.l.b16 %v3053
        %v3326 = vunpack.c.l.b16 %v3054
        %v3327 = vunpack.c.l.b16 %v3055
        %v3328 = vunpack.c.l.b16 %v3056
        %v3329 = vunpack.c.l.b16 %v3057
        %v3330 = vunpack.c.l.b16 %v3058
        %v3331 = vunpack.c.l.b16 %v3059
        %v3332 = vunpack.c.l.b16 %v3060
        %v3333 = vpack.c.b16 %v3301, %v3300
        %v3334 = vpack.c.b16 %v3303, %v3302
        %v3335 = vpack.c.b16 %v3305, %v3304
        %v3336 = vpack.c.b16 %v3307, %v3306
        %v3337 = vpack.c.b16 %v3309, %v3308
        %v3338 = vpack.c.b16 %v3311, %v3310
        %v3339 = vpack.c.b16 %v3313, %v3312
        %v3340 = vpack.c.b16 %v3315, %v3314
        %v3341 = vpack.c.b16 %v3317, %v3316
        %v3342 = vpack.c.b16 %v3319, %v3318
        %v3343 = vpack.c.b16 %v3321, %v3320
        %v3344 = vpack.c.b16 %v3323, %v3322
        %v3345 = vpack.c.b16 %v3325, %v3324
        %v3346 = vpack.c.b16 %v3327, %v3326
        %v3347 = vpack.c.b16 %v3329, %v3328
        %v3348 = vpack.c.b16 %v3331, %v3330
        %v3349 = vpack.c.b16 %v3332, %v3332
        %v3351 = vsel %vm2299, %v3333, 0
        %v3354 = vsel %vm2299, %v3334, 0
        %v3357 = vsel %vm2299, %v3335, 0
        %v3360 = vsel %vm2299, %v3336, 0
        %v3363 = vsel %vm2299, %v3337, 0
        %v3366 = vsel %vm2299, %v3338, 0
        %v3369 = vsel %vm2299, %v3339, 0
        %v3372 = vsel %vm2299, %v3340, 0
        %v3375 = vsel %vm2299, %v3341, 0
        %v3378 = vsel %vm2299, %v3342, 0
        %v3381 = vsel %vm2299, %v3343, 0
        %v3384 = vsel %vm2299, %v3344, 0
        %v3387 = vsel %vm2299, %v3345, 0
        %v3390 = vsel %vm2299, %v3346, 0
        %v3393 = vsel %vm2299, %v3347, 0
        %v3396 = vsel %vm2299, %v3348, 0
        %v3399 = vsel %vm2299, %v3349, 0
        %3401 = vmatprep.subr.bf16.mxu0 %v3062
        %3402 = vmatpush1.bf16.msra.mxu0 %v3061
        %3403 = vmatprep.subr.bf16.mxu0 %v3064
        %3404 = vmatpush1.bf16.msra.mxu0 %v3063
        %3405 = vmatprep.subr.bf16.mxu0 %v3066
        %3406 = vmatpush1.bf16.msra.mxu0 %v3065
        %3407 = vmatprep.subr.bf16.mxu0 %v3068
        %3408 = vmatpush1.bf16.msra.mxu0 %v3067
        %3409 = vmatprep.subr.bf16.mxu0 0
        %3410 = vmatpush1.bf16.msra.mxu0 0
        %3411 = vmatprep.subr.bf16.mxu0 0
        %3412 = vmatpush1.bf16.msra.mxu0 0
        %3413 = vmatprep.subr.bf16.mxu0 0
        %3414 = vmatpush1.bf16.msra.mxu0 0
        %3415 = vmatprep.subr.bf16.mxu0 0
        %3416 = vmatpush1.bf16.msra.mxu0 0
        %3417 = vmatprep.subr.bf16.mxu0 0
        %3418 = vmatpush1.bf16.msra.mxu0 0
        %3419 = vmatprep.subr.bf16.mxu0 0
        %3420 = vmatpush1.bf16.msra.mxu0 0
        %3421 = vmatprep.subr.bf16.mxu0 0
        %3422 = vmatpush1.bf16.msra.mxu0 0
        %3423 = vmatprep.subr.bf16.mxu0 0
        %3424 = vmatpush1.bf16.msra.mxu0 0
        %3425 = vmatprep.subr.bf16.mxu0 0
        %3426 = vmatpush1.bf16.msra.mxu0 0
        %3427 = vmatprep.subr.bf16.mxu0 0
        %3428 = vmatpush1.bf16.msra.mxu0 0
        %3429 = vmatprep.subr.bf16.mxu0 0
        %3430 = vmatpush1.bf16.msra.mxu0 0
        %3431 = vmatprep.subr.bf16.mxu0 0
        %3432 = vmatpush1.bf16.msra.mxu0 0
        %3433 = vmatprep.mubr.bf16.mxu0 0
        %3434 = vmatmul.mubr.bf16.gmra.mrb[0].mxu0 %v3351
        %v3435 = vpop.f32.mrb[0].mxu0
        %v3436 = vadd.f32 %v3105, %v3435
        %v3437 = vpop.f32.mrb[0].mxu0
        %v3438 = vadd.f32 %v3105, %v3437
        %v3439 = vpop.f32.mrb[0].mxu0
        %v3440 = vadd.f32 %v3110, %v3439
        %v3441 = vpop.f32.mrb[0].mxu0
        %v3442 = vadd.f32 %v3110, %v3441
        %3443 = vmatprep.mubr.bf16.mxu0 0
        %3444 = vmatmul.mubr.bf16.gmra.mrb[0].mxu0 %v3354
        %v3445 = vpop.f32.mrb[0].mxu0
        %v3446 = vadd.f32 %v3115, %v3445
        %v3447 = vpop.f32.mrb[0].mxu0
        %v3448 = vadd.f32 %v3115, %v3447
        %v3449 = vpop.f32.mrb[0].mxu0
        %v3450 = vadd.f32 %v3120, %v3449
        %v3451 = vpop.f32.mrb[0].mxu0
        %v3452 = vadd.f32 %v3120, %v3451
        %3453 = vmatprep.mubr.bf16.mxu0 0
        %3454 = vmatmul.mubr.bf16.gmra.mrb[0].mxu0 %v3357
        %v3455 = vpop.f32.mrb[0].mxu0
        %v3456 = vadd.f32 %v3125, %v3455
        %v3457 = vpop.f32.mrb[0].mxu0
        %v3458 = vadd.f32 %v3125, %v3457
        %v3459 = vpop.f32.mrb[0].mxu0
        %v3460 = vadd.f32 %v3130, %v3459
        %v3461 = vpop.f32.mrb[0].mxu0
        %v3462 = vadd.f32 %v3130, %v3461
        %3463 = vmatprep.mubr.bf16.mxu0 0
        %3464 = vmatmul.mubr.bf16.gmra.mrb[0].mxu0 %v3360
        %v3465 = vpop.f32.mrb[0].mxu0
        %v3466 = vadd.f32 %v3135, %v3465
        %v3467 = vpop.f32.mrb[0].mxu0
        %v3468 = vadd.f32 %v3135, %v3467
        %v3469 = vpop.f32.mrb[0].mxu0
        %v3470 = vadd.f32 %v3140, %v3469
        %v3471 = vpop.f32.mrb[0].mxu0
        %v3472 = vadd.f32 %v3140, %v3471
        %3473 = vmatprep.mubr.bf16.mxu0 0
        %3474 = vmatmul.mubr.bf16.gmra.mrb[0].mxu0 %v3363
        %v3475 = vpop.f32.mrb[0].mxu0
        %v3476 = vadd.f32 %v3145, %v3475
        %v3477 = vpop.f32.mrb[0].mxu0
        %v3478 = vadd.f32 %v3145, %v3477
        %v3479 = vpop.f32.mrb[0].mxu0
        %v3480 = vadd.f32 %v3150, %v3479
        %v3481 = vpop.f32.mrb[0].mxu0
        %v3482 = vadd.f32 %v3150, %v3481
        %3483 = vmatprep.mubr.bf16.mxu0 0
        %3484 = vmatmul.mubr.bf16.gmra.mrb[0].mxu0 %v3366
        %v3485 = vpop.f32.mrb[0].mxu0
        %v3486 = vadd.f32 %v3155, %v3485
        %v3487 = vpop.f32.mrb[0].mxu0
        %v3488 = vadd.f32 %v3155, %v3487
        %v3489 = vpop.f32.mrb[0].mxu0
        %v3490 = vadd.f32 %v3160, %v3489
        %v3491 = vpop.f32.mrb[0].mxu0
        %v3492 = vadd.f32 %v3160, %v3491
        %3493 = vmatprep.mubr.bf16.mxu0 0
        %3494 = vmatmul.mubr.bf16.gmra.mrb[0].mxu0 %v3369
        %v3495 = vpop.f32.mrb[0].mxu0
        %v3496 = vadd.f32 %v3165, %v3495
        %v3497 = vpop.f32.mrb[0].mxu0
        %v3498 = vadd.f32 %v3165, %v3497
        %v3499 = vpop.f32.mrb[0].mxu0
        %v3500 = vadd.f32 %v3170, %v3499
        %v3501 = vpop.f32.mrb[0].mxu0
        %v3502 = vadd.f32 %v3170, %v3501
        %3503 = vmatprep.mubr.bf16.mxu0 0
        %3504 = vmatmul.mubr.bf16.gmra.mrb[0].mxu0 %v3372
        %v3505 = vpop.f32.mrb[0].mxu0
        %v3506 = vadd.f32 %v3175, %v3505
        %v3507 = vpop.f32.mrb[0].mxu0
        %v3508 = vadd.f32 %v3175, %v3507
        %v3509 = vpop.f32.mrb[0].mxu0
        %v3510 = vadd.f32 %v3180, %v3509
        %v3511 = vpop.f32.mrb[0].mxu0
        %v3512 = vadd.f32 %v3180, %v3511
        %3513 = vmatprep.mubr.bf16.mxu0 0
        %3514 = vmatmul.mubr.bf16.gmra.mrb[0].mxu0 %v3375
        %v3515 = vpop.f32.mrb[0].mxu0
        %v3516 = vadd.f32 %v3185, %v3515
        %v3517 = vpop.f32.mrb[0].mxu0
        %v3518 = vadd.f32 %v3185, %v3517
        %v3519 = vpop.f32.mrb[0].mxu0
        %v3520 = vadd.f32 %v3190, %v3519
        %v3521 = vpop.f32.mrb[0].mxu0
        %v3522 = vadd.f32 %v3190, %v3521
        %3523 = vmatprep.mubr.bf16.mxu0 0
        %3524 = vmatmul.mubr.bf16.gmra.mrb[0].mxu0 %v3378
        %v3525 = vpop.f32.mrb[0].mxu0
        %v3526 = vadd.f32 %v3195, %v3525
        %v3527 = vpop.f32.mrb[0].mxu0
        %v3528 = vadd.f32 %v3195, %v3527
        %v3529 = vpop.f32.mrb[0].mxu0
        %v3530 = vadd.f32 %v3200, %v3529
        %v3531 = vpop.f32.mrb[0].mxu0
        %v3532 = vadd.f32 %v3200, %v3531
        %3533 = vmatprep.mubr.bf16.mxu0 0
        %3534 = vmatmul.mubr.bf16.gmra.mrb[0].mxu0 %v3381
        %v3535 = vpop.f32.mrb[0].mxu0
        %v3536 = vadd.f32 %v3205, %v3535
        %v3537 = vpop.f32.mrb[0].mxu0
        %v3538 = vadd.f32 %v3205, %v3537
        %v3539 = vpop.f32.mrb[0].mxu0
        %v3540 = vadd.f32 %v3210, %v3539
        %v3541 = vpop.f32.mrb[0].mxu0
        %v3542 = vadd.f32 %v3210, %v3541
        %3543 = vmatprep.mubr.bf16.mxu0 0
        %3544 = vmatmul.mubr.bf16.gmra.mrb[0].mxu0 %v3384
        %v3545 = vpop.f32.mrb[0].mxu0
        %v3546 = vadd.f32 %v3215, %v3545
        %v3547 = vpop.f32.mrb[0].mxu0
        %v3548 = vadd.f32 %v3215, %v3547
        %v3549 = vpop.f32.mrb[0].mxu0
        %v3550 = vadd.f32 %v3220, %v3549
        %v3551 = vpop.f32.mrb[0].mxu0
        %v3552 = vadd.f32 %v3220, %v3551
        %3553 = vmatprep.mubr.bf16.mxu0 0
        %3554 = vmatmul.mubr.bf16.gmra.mrb[0].mxu0 %v3387
        %v3555 = vpop.f32.mrb[0].mxu0
        %v3556 = vadd.f32 %v3225, %v3555
        %v3557 = vpop.f32.mrb[0].mxu0
        %v3558 = vadd.f32 %v3225, %v3557
        %v3559 = vpop.f32.mrb[0].mxu0
        %v3560 = vadd.f32 %v3230, %v3559
        %v3561 = vpop.f32.mrb[0].mxu0
        %v3562 = vadd.f32 %v3230, %v3561
        %3563 = vmatprep.mubr.bf16.mxu0 0
        %3564 = vmatmul.mubr.bf16.gmra.mrb[0].mxu0 %v3390
        %v3565 = vpop.f32.mrb[0].mxu0
        %v3566 = vadd.f32 %v3235, %v3565
        %v3567 = vpop.f32.mrb[0].mxu0
        %v3568 = vadd.f32 %v3235, %v3567
        %v3569 = vpop.f32.mrb[0].mxu0
        %v3570 = vadd.f32 %v3240, %v3569
        %v3571 = vpop.f32.mrb[0].mxu0
        %v3572 = vadd.f32 %v3240, %v3571
        %3573 = vmatprep.mubr.bf16.mxu0 0
        %3574 = vmatmul.mubr.bf16.gmra.mrb[0].mxu0 %v3393
        %v3575 = vpop.f32.mrb[0].mxu0
        %v3576 = vadd.f32 %v3245, %v3575
        %v3577 = vpop.f32.mrb[0].mxu0
        %v3578 = vadd.f32 %v3245, %v3577
        %v3579 = vpop.f32.mrb[0].mxu0
        %v3580 = vadd.f32 %v3250, %v3579
        %v3581 = vpop.f32.mrb[0].mxu0
        %v3582 = vadd.f32 %v3250, %v3581
        %3583 = vmatprep.mubr.bf16.mxu0 0
        %3584 = vmatmul.mubr.bf16.gmra.mrb[0].mxu0 %v3396
        %v3585 = vpop.f32.mrb[0].mxu0
        %v3586 = vadd.f32 %v3255, %v3585
        %v3587 = vpop.f32.mrb[0].mxu0
        %v3588 = vadd.f32 %v3255, %v3587
        %v3589 = vpop.f32.mrb[0].mxu0
        %v3590 = vadd.f32 %v3260, %v3589
        %v3591 = vpop.f32.mrb[0].mxu0
        %v3592 = vadd.f32 %v3260, %v3591
        %3593 = vmatprep.mubr.bf16.mxu0 0
        %3594 = vmatmul.mubr.bf16.gmra.mrb[0].mxu0 %v3399
        %v3595 = vpop.f32.mrb[0].mxu0
        %v3596 = vadd.f32 %v3265, %v3595
        %v3597 = vpop.f32.mrb[0].mxu0
        %v3598 = vadd.f32 %v3265, %v3597
        %v3599 = vpop.f32.mrb[0].mxu0
        %v3600 = vpop.f32.mrb[0].mxu0
        %3601 = vdwg.mxu0
        %3602 = vst [vmem:[%s209] sm:$0xff] %v3436
        %3603 = vst [vmem:[%s209 + $0x8] sm:$0xff] %v3438
        %3604 = vst [vmem:[%s209 + $0x10] sm:$0xff] %v3440
        %3605 = vst [vmem:[%s209 + $0x18] sm:$0xff] %v3442
        %3606 = vst [vmem:[%s209 + $0x20] sm:$0xff] %v3446
        %3607 = vst [vmem:[%s209 + $0x28] sm:$0xff] %v3448
        %3608 = vst [vmem:[%s209 + $0x30] sm:$0xff] %v3450
        %3609 = vst [vmem:[%s209 + $0x38] sm:$0xff] %v3452
        %3610 = vst [vmem:[%s209 + $0x40] sm:$0xff] %v3456
        %3611 = vst [vmem:[%s209 + $0x48] sm:$0xff] %v3458
        %3612 = vst [vmem:[%s209 + $0x50] sm:$0xff] %v3460
        %3613 = vst [vmem:[%s209 + $0x58] sm:$0xff] %v3462
        %3614 = vst [vmem:[%s209 + $0x60] sm:$0xff] %v3466
        %3615 = vst [vmem:[%s209 + $0x68] sm:$0xff] %v3468
        %3616 = vst [vmem:[%s209 + $0x70] sm:$0xff] %v3470
        %3617 = vst [vmem:[%s209 + $0x78] sm:$0xff] %v3472
        %3618 = vst [vmem:[%s209 + $0x80] sm:$0xff] %v3476
        %3619 = vst [vmem:[%s209 + $0x88] sm:$0xff] %v3478
        %3620 = vst [vmem:[%s209 + $0x90] sm:$0xff] %v3480
        %3621 = vst [vmem:[%s209 + $0x98] sm:$0xff] %v3482
        %3622 = vst [vmem:[%s209 + $0xa0] sm:$0xff] %v3486
        %3623 = vst [vmem:[%s209 + $0xa8] sm:$0xff] %v3488
        %3624 = vst [vmem:[%s209 + $0xb0] sm:$0xff] %v3490
        %3625 = vst [vmem:[%s209 + $0xb8] sm:$0xff] %v3492
        %3626 = vst [vmem:[%s209 + $0xc0] sm:$0xff] %v3496
        %3627 = vst [vmem:[%s209 + $0xc8] sm:$0xff] %v3498
        %3628 = vst [vmem:[%s209 + $0xd0] sm:$0xff] %v3500
        %3629 = vst [vmem:[%s209 + $0xd8] sm:$0xff] %v3502
        %3630 = vst [vmem:[%s209 + $0xe0] sm:$0xff] %v3506
        %3631 = vst [vmem:[%s209 + $0xe8] sm:$0xff] %v3508
        %3632 = vst [vmem:[%s209 + $0xf0] sm:$0xff] %v3510
        %3633 = vst [vmem:[%s209 + $0xf8] sm:$0xff] %v3512
        %3634 = vst [vmem:[%s209 + $0x100] sm:$0xff] %v3516
        %3635 = vst [vmem:[%s209 + $0x108] sm:$0xff] %v3518
        %3636 = vst [vmem:[%s209 + $0x110] sm:$0xff] %v3520
        %3637 = vst [vmem:[%s209 + $0x118] sm:$0xff] %v3522
        %3638 = vst [vmem:[%s209 + $0x120] sm:$0xff] %v3526
        %3639 = vst [vmem:[%s209 + $0x128] sm:$0xff] %v3528
        %3640 = vst [vmem:[%s209 + $0x130] sm:$0xff] %v3530
        %3641 = vst [vmem:[%s209 + $0x138] sm:$0xff] %v3532
        %3642 = vst [vmem:[%s209 + $0x140] sm:$0xff] %v3536
        %3643 = vst [vmem:[%s209 + $0x148] sm:$0xff] %v3538
        %3644 = vst [vmem:[%s209 + $0x150] sm:$0xff] %v3540
        %3645 = vst [vmem:[%s209 + $0x158] sm:$0xff] %v3542
        %3646 = vst [vmem:[%s209 + $0x160] sm:$0xff] %v3546
        %3647 = vst [vmem:[%s209 + $0x168] sm:$0xff] %v3548
        %3648 = vst [vmem:[%s209 + $0x170] sm:$0xff] %v3550
        %3649 = vst [vmem:[%s209 + $0x178] sm:$0xff] %v3552
        %3650 = vst [vmem:[%s209 + $0x180] sm:$0xff] %v3556
        %3651 = vst [vmem:[%s209 + $0x188] sm:$0xff] %v3558
        %3652 = vst [vmem:[%s209 + $0x190] sm:$0xff] %v3560
        %3653 = vst [vmem:[%s209 + $0x198] sm:$0xff] %v3562
        %3654 = vst [vmem:[%s209 + $0x1a0] sm:$0xff] %v3566
        %3655 = vst [vmem:[%s209 + $0x1a8] sm:$0xff] %v3568
        %3656 = vst [vmem:[%s209 + $0x1b0] sm:$0xff] %v3570
        %3657 = vst [vmem:[%s209 + $0x1b8] sm:$0xff] %v3572
        %3658 = vst [vmem:[%s209 + $0x1c0] sm:$0xff] %v3576
        %3659 = vst [vmem:[%s209 + $0x1c8] sm:$0xff] %v3578
        %3660 = vst [vmem:[%s209 + $0x1d0] sm:$0xff] %v3580
        %3661 = vst [vmem:[%s209 + $0x1d8] sm:$0xff] %v3582
        %3662 = vst [vmem:[%s209 + $0x1e0] sm:$0xff] %v3586
        %3663 = vst [vmem:[%s209 + $0x1e8] sm:$0xff] %v3588
        %3664 = vst [vmem:[%s209 + $0x1f0] sm:$0xff] %v3590
        %3665 = vst [vmem:[%s209 + $0x1f8] sm:$0xff] %v3592
        %3666 = vst [vmem:[%s209 + $0x200] sm:$0x1] %v3596
        %3667 = vst [vmem:[%s209 + $0x208] sm:$0x1] %v3598
        %s3668 = scalar_lea.vmem %s175, 8 [#allocation4]
        %v3669 = vld [vmem:[%s3668] sm:$0xff]
        %v3671 = vunpack.c.l.b16 %v3669
        %v3672 = vunpack.c.h.b16 %v3669
        %v3673 = vpack.c.b16 %v3671, %v3671
        %v3674 = vpack.c.b16 %v3672, %v3672
        %3677 = vst [vmem:[#allocation3] sm:$0xf] %v3673
        %3678 = vst [vmem:[#allocation3 + $0x8] sm:$0xf] %v3674
        %3679 = vst [vmem:[#allocation2 + $0x8] sm:$0xf] %v3673
        %3680 = vst [vmem:[#allocation2 + $0x10] sm:$0xf] %v3674
        %v3681 = vld [vmem:[#allocation6] sm:$0xf]
        %v3682 = vld [vmem:[#allocation6 + $0x4] sm:$0xf]
        %v3683 = vld [vmem:[#allocation6 + $0x8] sm:$0xf]
        %v3684 = vld [vmem:[#allocation6 + $0xc] sm:$0xf]
        %v3685 = vld [vmem:[#allocation2] sm:$0xf]
        %v3686 = vld [vmem:[#allocation2 + $0x8] sm:$0xf]
        %v3687 = vld [vmem:[#allocation2 + $0x10] sm:$0xf]
        %v3688 = vld [vmem:[#allocation6 + $0x10] sm:$0xf]
        %v3689 = vld [vmem:[#allocation6 + $0x14] sm:$0xf]
        %v3690 = vld [vmem:[#allocation6 + $0x18] sm:$0xf]
        %v3691 = vld [vmem:[#allocation6 + $0x1c] sm:$0xf]
        %v3696 = vunpack.c.l.b16 %v3688
        %v3697 = vunpack.c.l.b16 %v3689
        %v3698 = vunpack.c.l.b16 %v3690
        %v3699 = vunpack.c.l.b16 %v3691
        %v3700 = vpack.c.b16 %v3697, %v3696
        %v3701 = vpack.c.b16 %v3699, %v3698
        %v3703 = vsel %vm253, %v3700, 0
        %v3706 = vsel %vm253, %v3701, 0
        %v3709 = vsel %vm260, %v3686, 0
        %v3712 = vsel %vm260, %v3687, 0
        %3714 = vmatprep.subr.bf16.mxu0 %v3712
        %3715 = vmatpush1.bf16.msra.mxu0 %v3709
        %3716 = vmatprep.subr.bf16.mxu0 0
        %3717 = vmatpush1.bf16.msra.mxu0 0
        %3718 = vmatprep.subr.bf16.mxu0 0
        %3719 = vmatpush1.bf16.msra.mxu0 0
        %3720 = vmatprep.subr.bf16.mxu0 0
        %3721 = vmatpush1.bf16.msra.mxu0 0
        %3722 = vmatprep.subr.bf16.mxu0 0
        %3723 = vmatpush1.bf16.msra.mxu0 0
        %3724 = vmatprep.subr.bf16.mxu0 0
        %3725 = vmatpush1.bf16.msra.mxu0 0
        %3726 = vmatprep.subr.bf16.mxu0 0
        %3727 = vmatpush1.bf16.msra.mxu0 0
        %3728 = vmatprep.subr.bf16.mxu0 0
        %3729 = vmatpush1.bf16.msra.mxu0 0
        %3730 = vmatprep.subr.bf16.mxu0 0
        %3731 = vmatpush1.bf16.msra.mxu0 0
        %3732 = vmatprep.subr.bf16.mxu0 0
        %3733 = vmatpush1.bf16.msra.mxu0 0
        %3734 = vmatprep.subr.bf16.mxu0 0
        %3735 = vmatpush1.bf16.msra.mxu0 0
        %3736 = vmatprep.subr.bf16.mxu0 0
        %3737 = vmatpush1.bf16.msra.mxu0 0
        %3738 = vmatprep.subr.bf16.mxu0 0
        %3739 = vmatpush1.bf16.msra.mxu0 0
        %3740 = vmatprep.subr.bf16.mxu0 0
        %3741 = vmatpush1.bf16.msra.mxu0 0
        %3742 = vmatprep.subr.bf16.mxu0 0
        %3743 = vmatpush1.bf16.msra.mxu0 0
        %3744 = vmatprep.subr.bf16.mxu0 0
        %3745 = vmatpush1.bf16.msra.mxu0 0
        %3746 = vmatprep.mubr.bf16.mxu0 0
        %3747 = vmatmul.mubr.bf16.gmra.mrb[0].mxu0 %v3703
        %v3748 = vpop.f32.mrb[0].mxu0
        %v3749 = vadd.f32 0.0, %v3748
        %v3750 = vpop.f32.mrb[0].mxu0
        %v3751 = vadd.f32 0.0, %v3750
        %v3752 = vpop.f32.mrb[0].mxu0
        %v3753 = vadd.f32 0.0, %v3752
        %v3754 = vpop.f32.mrb[0].mxu0
        %v3755 = vadd.f32 0.0, %v3754
        %3756 = vmatprep.mubr.bf16.mxu0 0
        %3757 = vmatmul.mubr.bf16.gmra.mrb[0].mxu0 %v3706
        %v3758 = vpop.f32.mrb[0].mxu0
        %v3759 = vadd.f32 0.0, %v3758
        %v3760 = vpop.f32.mrb[0].mxu0
        %v3761 = vadd.f32 0.0, %v3760
        %v3762 = vpop.f32.mrb[0].mxu0
        %v3763 = vadd.f32 0.0, %v3762
        %v3764 = vpop.f32.mrb[0].mxu0
        %v3765 = vadd.f32 0.0, %v3764
        %3766 = vdwg.mxu0
        %v3771 = vunpack.c.l.b16 %v3681
        %v3772 = vunpack.c.l.b16 %v3682
        %v3773 = vunpack.c.l.b16 %v3683
        %v3774 = vunpack.c.l.b16 %v3684
        %v3775 = vpack.c.b16 %v3772, %v3771
        %v3776 = vpack.c.b16 %v3774, %v3773
        %3780 = vrot.lane.b32.xlu0 %v3685, 1
        %v3781 = vpop.permute.xlu0 %3780
        %3782 = vrot.lane.b32.xlu0 %v3686, 1
        %v3783 = vpop.permute.xlu0 %3782
        %3784 = vrot.lane.b32.xlu0 %v3687, 1
        %v3785 = vpop.permute.xlu0 %3784
        %v3786 = vsel %vm339, %v3781, %v3783
        %v3787 = vsel %vm339, %v3783, %v3785
        %v3789 = vsel %vm253, %v3775, 0
        %v3792 = vsel %vm253, %v3776, 0
        %v3795 = vsel %vm260, %v3786, 0
        %v3798 = vsel %vm260, %v3787, 0
        %3800 = vmatprep.subr.bf16.mxu0 %v3798
        %3801 = vmatpush1.bf16.msra.mxu0 %v3795
        %3802 = vmatprep.subr.bf16.mxu0 0
        %3803 = vmatpush1.bf16.msra.mxu0 0
        %3804 = vmatprep.subr.bf16.mxu0 0
        %3805 = vmatpush1.bf16.msra.mxu0 0
        %3806 = vmatprep.subr.bf16.mxu0 0
        %3807 = vmatpush1.bf16.msra.mxu0 0
        %3808 = vmatprep.subr.bf16.mxu0 0
        %3809 = vmatpush1.bf16.msra.mxu0 0
        %3810 = vmatprep.subr.bf16.mxu0 0
        %3811 = vmatpush1.bf16.msra.mxu0 0
        %3812 = vmatprep.subr.bf16.mxu0 0
        %3813 = vmatpush1.bf16.msra.mxu0 0
        %3814 = vmatprep.subr.bf16.mxu0 0
        %3815 = vmatpush1.bf16.msra.mxu0 0
        %3816 = vmatprep.subr.bf16.mxu0 0
        %3817 = vmatpush1.bf16.msra.mxu0 0
        %3818 = vmatprep.subr.bf16.mxu0 0
        %3819 = vmatpush1.bf16.msra.mxu0 0
        %3820 = vmatprep.subr.bf16.mxu0 0
        %3821 = vmatpush1.bf16.msra.mxu0 0
        %3822 = vmatprep.subr.bf16.mxu0 0
        %3823 = vmatpush1.bf16.msra.mxu0 0
        %3824 = vmatprep.subr.bf16.mxu0 0
        %3825 = vmatpush1.bf16.msra.mxu0 0
        %3826 = vmatprep.subr.bf16.mxu0 0
        %3827 = vmatpush1.bf16.msra.mxu0 0
        %3828 = vmatprep.subr.bf16.mxu0 0
        %3829 = vmatpush1.bf16.msra.mxu0 0
        %3830 = vmatprep.subr.bf16.mxu0 0
        %3831 = vmatpush1.bf16.msra.mxu0 0
        %3832 = vmatprep.mubr.bf16.mxu0 0
        %3833 = vmatmul.mubr.bf16.gmra.mrb[0].mxu0 %v3789
        %v3834 = vpop.f32.mrb[0].mxu0
        %v3835 = vadd.f32 %v3749, %v3834
        %v3836 = vpop.f32.mrb[0].mxu0
        %v3837 = vadd.f32 %v3751, %v3836
        %v3838 = vpop.f32.mrb[0].mxu0
        %v3839 = vadd.f32 %v3753, %v3838
        %v3840 = vpop.f32.mrb[0].mxu0
        %v3841 = vadd.f32 %v3755, %v3840
        %3842 = vmatprep.mubr.bf16.mxu0 0
        %3843 = vmatmul.mubr.bf16.gmra.mrb[0].mxu0 %v3792
        %v3844 = vpop.f32.mrb[0].mxu0
        %v3845 = vadd.f32 %v3759, %v3844
        %v3846 = vpop.f32.mrb[0].mxu0
        %v3847 = vadd.f32 %v3761, %v3846
        %v3848 = vpop.f32.mrb[0].mxu0
        %v3849 = vadd.f32 %v3763, %v3848
        %v3850 = vpop.f32.mrb[0].mxu0
        %v3851 = vadd.f32 %v3765, %v3850
        %3852 = vdwg.mxu0
        %v3853 = vld [vmem:[#allocation6 + $0x20] sm:$0xf]
        %v3854 = vld [vmem:[#allocation6 + $0x24] sm:$0xf]
        %v3855 = vld [vmem:[#allocation6 + $0x28] sm:$0xf]
        %v3856 = vld [vmem:[#allocation6 + $0x2c] sm:$0xf]
        %v3857 = vld [vmem:[#allocation2 + $0x8] sm:$0xf]
        %v3858 = vld [vmem:[#allocation2 + $0x10] sm:$0xf]
        %v3859 = vld [vmem:[#allocation2 + $0x18] sm:$0xf]
        %v3864 = vunpack.c.l.b16 %v3853
        %v3865 = vunpack.c.l.b16 %v3854
        %v3866 = vunpack.c.l.b16 %v3855
        %v3867 = vunpack.c.l.b16 %v3856
        %v3868 = vpack.c.b16 %v3865, %v3864
        %v3869 = vpack.c.b16 %v3867, %v3866
        %3873 = vrot.lane.b32.xlu0 %v3857, 127
        %v3874 = vpop.permute.xlu0 %3873
        %3875 = vrot.lane.b32.xlu0 %v3858, 127
        %v3876 = vpop.permute.xlu0 %3875
        %3877 = vrot.lane.b32.xlu0 %v3859, 127
        %v3878 = vpop.permute.xlu0 %3877
        %v3879 = vsel %vm433, %v3874, %v3876
        %v3880 = vsel %vm433, %v3876, %v3878
        %v3882 = vsel %vm253, %v3868, 0
        %v3885 = vsel %vm253, %v3869, 0
        %v3888 = vsel %vm260, %v3879, 0
        %v3891 = vsel %vm260, %v3880, 0
        %3893 = vmatprep.subr.bf16.mxu0 %v3891
        %3894 = vmatpush1.bf16.msra.mxu0 %v3888
        %3895 = vmatprep.subr.bf16.mxu0 0
        %3896 = vmatpush1.bf16.msra.mxu0 0
        %3897 = vmatprep.subr.bf16.mxu0 0
        %3898 = vmatpush1.bf16.msra.mxu0 0
        %3899 = vmatprep.subr.bf16.mxu0 0
        %3900 = vmatpush1.bf16.msra.mxu0 0
        %3901 = vmatprep.subr.bf16.mxu0 0
        %3902 = vmatpush1.bf16.msra.mxu0 0
        %3903 = vmatprep.subr.bf16.mxu0 0
        %3904 = vmatpush1.bf16.msra.mxu0 0
        %3905 = vmatprep.subr.bf16.mxu0 0
        %3906 = vmatpush1.bf16.msra.mxu0 0
        %3907 = vmatprep.subr.bf16.mxu0 0
        %3908 = vmatpush1.bf16.msra.mxu0 0
        %3909 = vmatprep.subr.bf16.mxu0 0
        %3910 = vmatpush1.bf16.msra.mxu0 0
        %3911 = vmatprep.subr.bf16.mxu0 0
        %3912 = vmatpush1.bf16.msra.mxu0 0
        %3913 = vmatprep.subr.bf16.mxu0 0
        %3914 = vmatpush1.bf16.msra.mxu0 0
        %3915 = vmatprep.subr.bf16.mxu0 0
        %3916 = vmatpush1.bf16.msra.mxu0 0
        %3917 = vmatprep.subr.bf16.mxu0 0
        %3918 = vmatpush1.bf16.msra.mxu0 0
        %3919 = vmatprep.subr.bf16.mxu0 0
        %3920 = vmatpush1.bf16.msra.mxu0 0
        %3921 = vmatprep.subr.bf16.mxu0 0
        %3922 = vmatpush1.bf16.msra.mxu0 0
        %3923 = vmatprep.subr.bf16.mxu0 0
        %3924 = vmatpush1.bf16.msra.mxu0 0
        %3925 = vmatprep.mubr.bf16.mxu0 0
        %3926 = vmatmul.mubr.bf16.gmra.mrb[0].mxu0 %v3882
        %v3927 = vpop.f32.mrb[0].mxu0
        %v3928 = vadd.f32 0.0, %v3927
        %v3929 = vpop.f32.mrb[0].mxu0
        %v3930 = vadd.f32 0.0, %v3929
        %v3931 = vpop.f32.mrb[0].mxu0
        %v3932 = vadd.f32 0.0, %v3931
        %v3933 = vpop.f32.mrb[0].mxu0
        %v3934 = vadd.f32 0.0, %v3933
        %3935 = vmatprep.mubr.bf16.mxu0 0
        %3936 = vmatmul.mubr.bf16.gmra.mrb[0].mxu0 %v3885
        %v3937 = vpop.f32.mrb[0].mxu0
        %v3938 = vadd.f32 0.0, %v3937
        %v3939 = vpop.f32.mrb[0].mxu0
        %v3940 = vadd.f32 0.0, %v3939
        %v3941 = vpop.f32.mrb[0].mxu0
        %v3942 = vadd.f32 0.0, %v3941
        %v3943 = vpop.f32.mrb[0].mxu0
        %v3944 = vadd.f32 0.0, %v3943
        %3945 = vdwg.mxu0
        %v3946 = vadd.f32 %v3835, %v3928
        %v3947 = vadd.f32 %v3837, %v3930
        %v3948 = vadd.f32 %v3839, %v3932
        %v3949 = vadd.f32 %v3841, %v3934
        %v3950 = vadd.f32 %v3845, %v3938
        %v3951 = vadd.f32 %v3847, %v3940
        %v3952 = vadd.f32 %v3849, %v3942
        %v3953 = vadd.f32 %v3851, %v3944
        %v3954 = vld [vmem:[%s2] sm:$0xff]
        %v3955 = vld [vmem:[%s2 + $0x8] sm:$0xff]
        %v3956 = vld [vmem:[%s2 + $0x10] sm:$0xff]
        %v3957 = vld [vmem:[%s2 + $0x18] sm:$0xff]
        %3959 = vset.pattern.permute.xlu0 0
        %3960 = vperm.xlu0 %3959, %v3954
        %v3961 = vpop.permute.xlu0 %3960
        %3964 = vset.pattern.permute.xlu0 0
        %3965 = vperm.xlu0 %3964, %v3955
        %v3966 = vpop.permute.xlu0 %3965
        %3969 = vset.pattern.permute.xlu0 0
        %3970 = vperm.xlu0 %3969, %v3956
        %v3971 = vpop.permute.xlu0 %3970
        %3974 = vset.pattern.permute.xlu0 0
        %3975 = vperm.xlu0 %3974, %v3957
        %v3976 = vpop.permute.xlu0 %3975
        %v3978 = vadd.f32 %v3946, %v3961
        %v3979 = vadd.f32 %v3947, %v3961
        %v3980 = vadd.f32 %v3948, %v3966
        %v3981 = vadd.f32 %v3949, %v3966
        %v3982 = vadd.f32 %v3950, %v3971
        %v3983 = vadd.f32 %v3951, %v3971
        %v3984 = vadd.f32 %v3952, %v3976
        %v3985 = vadd.f32 %v3953, %v3976
        %v3986 = vmax.f32 %v3978, 0.0
        %v3987 = vmax.f32 %v3979, 0.0
        %v3988 = vmax.f32 %v3980, 0.0
        %v3989 = vmax.f32 %v3981, 0.0
        %v3990 = vmax.f32 %v3982, 0.0
        %v3991 = vmax.f32 %v3983, 0.0
        %v3992 = vmax.f32 %v3984, 0.0
        %v3993 = vmax.f32 %v3985, 0.0
        %v3994 = vpack.c.bf16 %v3988, %v3986
        %v3995 = vpack.c.bf16 %v3989, %v3987
        %v3996 = vpack.c.bf16 %v3992, %v3990
        %v3997 = vpack.c.bf16 %v3993, %v3991
        %3998 = vst [vmem:[#allocation2 + $0x8] sm:$0xff] %v3994
        %3999 = vst [vmem:[#allocation2 + $0x10] sm:$0xff] %v3995
        %4000 = vst [vmem:[#allocation2 + $0x28] sm:$0xff] %v3996
        %4001 = vst [vmem:[#allocation2 + $0x30] sm:$0xff] %v3997
        %v4002 = vld [vmem:[#allocation6 + $0x30] sm:$0xf]
        %v4003 = vld [vmem:[#allocation6 + $0x34] sm:$0xf]
        %v4004 = vld [vmem:[#allocation6 + $0x38] sm:$0xf]
        %v4005 = vld [vmem:[#allocation6 + $0x3c] sm:$0xf]
        %v4006 = vld [vmem:[#allocation2] sm:$0xff]
        %v4007 = vld [vmem:[#allocation2 + $0x8] sm:$0xff]
        %v4008 = vld [vmem:[#allocation2 + $0x10] sm:$0xff]
        %v4009 = vld [vmem:[#allocation2 + $0x20] sm:$0xff]
        %v4010 = vld [vmem:[#allocation2 + $0x28] sm:$0xff]
        %v4011 = vld [vmem:[#allocation2 + $0x30] sm:$0xff]
        %v4012 = vld [vmem:[#allocation6 + $0x40] sm:$0xf]
        %v4013 = vld [vmem:[#allocation6 + $0x44] sm:$0xf]
        %v4014 = vld [vmem:[#allocation6 + $0x48] sm:$0xf]
        %v4015 = vld [vmem:[#allocation6 + $0x4c] sm:$0xf]
        %v4020 = vunpack.c.l.b16 %v4012
        %v4021 = vunpack.c.l.b16 %v4013
        %v4022 = vunpack.c.l.b16 %v4014
        %v4023 = vunpack.c.l.b16 %v4015
        %v4024 = vpack.c.b16 %v4021, %v4020
        %v4025 = vpack.c.b16 %v4023, %v4022
        %v4027 = vsel %vm581, %v4024, 0
        %v4030 = vsel %vm581, %v4025, 0
        %4032 = vmatprep.subr.bf16.mxu0 %v4008
        %4033 = vmatpush1.bf16.msra.mxu0 %v4007
        %4034 = vmatprep.subr.bf16.mxu0 %v4011
        %4035 = vmatpush1.bf16.msra.mxu0 %v4010
        %4036 = vmatprep.subr.bf16.mxu0 0
        %4037 = vmatpush1.bf16.msra.mxu0 0
        %4038 = vmatprep.subr.bf16.mxu0 0
        %4039 = vmatpush1.bf16.msra.mxu0 0
        %4040 = vmatprep.subr.bf16.mxu0 0
        %4041 = vmatpush1.bf16.msra.mxu0 0
        %4042 = vmatprep.subr.bf16.mxu0 0
        %4043 = vmatpush1.bf16.msra.mxu0 0
        %4044 = vmatprep.subr.bf16.mxu0 0
        %4045 = vmatpush1.bf16.msra.mxu0 0
        %4046 = vmatprep.subr.bf16.mxu0 0
        %4047 = vmatpush1.bf16.msra.mxu0 0
        %4048 = vmatprep.subr.bf16.mxu0 0
        %4049 = vmatpush1.bf16.msra.mxu0 0
        %4050 = vmatprep.subr.bf16.mxu0 0
        %4051 = vmatpush1.bf16.msra.mxu0 0
        %4052 = vmatprep.subr.bf16.mxu0 0
        %4053 = vmatpush1.bf16.msra.mxu0 0
        %4054 = vmatprep.subr.bf16.mxu0 0
        %4055 = vmatpush1.bf16.msra.mxu0 0
        %4056 = vmatprep.subr.bf16.mxu0 0
        %4057 = vmatpush1.bf16.msra.mxu0 0
        %4058 = vmatprep.subr.bf16.mxu0 0
        %4059 = vmatpush1.bf16.msra.mxu0 0
        %4060 = vmatprep.subr.bf16.mxu0 0
        %4061 = vmatpush1.bf16.msra.mxu0 0
        %4062 = vmatprep.subr.bf16.mxu0 0
        %4063 = vmatpush1.bf16.msra.mxu0 0
        %4064 = vmatprep.mubr.bf16.mxu0 0
        %4065 = vmatmul.mubr.bf16.gmra.mrb[0].mxu0 %v4027
        %v4066 = vpop.f32.mrb[0].mxu0
        %v4067 = vadd.f32 0.0, %v4066
        %v4068 = vpop.f32.mrb[0].mxu0
        %v4069 = vadd.f32 0.0, %v4068
        %v4070 = vpop.f32.mrb[0].mxu0
        %v4071 = vadd.f32 0.0, %v4070
        %v4072 = vpop.f32.mrb[0].mxu0
        %v4073 = vadd.f32 0.0, %v4072
        %4074 = vmatprep.mubr.bf16.mxu0 0
        %4075 = vmatmul.mubr.bf16.gmra.mrb[0].mxu0 %v4030
        %v4076 = vpop.f32.mrb[0].mxu0
        %v4077 = vadd.f32 0.0, %v4076
        %v4078 = vpop.f32.mrb[0].mxu0
        %v4079 = vadd.f32 0.0, %v4078
        %v4080 = vpop.f32.mrb[0].mxu0
        %v4081 = vadd.f32 0.0, %v4080
        %v4082 = vpop.f32.mrb[0].mxu0
        %v4083 = vadd.f32 0.0, %v4082
        %4084 = vdwg.mxu0
        %v4089 = vunpack.c.l.b16 %v4002
        %v4090 = vunpack.c.l.b16 %v4003
        %v4091 = vunpack.c.l.b16 %v4004
        %v4092 = vunpack.c.l.b16 %v4005
        %v4093 = vpack.c.b16 %v4090, %v4089
        %v4094 = vpack.c.b16 %v4092, %v4091
        %4101 = vrot.lane.b32.xlu0 %v4006, 1
        %v4102 = vpop.permute.xlu0 %4101
        %4103 = vrot.lane.b32.xlu0 %v4007, 1
        %v4104 = vpop.permute.xlu0 %4103
        %4105 = vrot.lane.b32.xlu0 %v4008, 1
        %v4106 = vpop.permute.xlu0 %4105
        %4107 = vrot.lane.b32.xlu0 %v4009, 1
        %v4108 = vpop.permute.xlu0 %4107
        %4109 = vrot.lane.b32.xlu0 %v4010, 1
        %v4110 = vpop.permute.xlu0 %4109
        %4111 = vrot.lane.b32.xlu0 %v4011, 1
        %v4112 = vpop.permute.xlu0 %4111
        %v4113 = vsel %vm339, %v4102, %v4104
        %v4114 = vsel %vm339, %v4104, %v4106
        %v4115 = vsel %vm339, %v4108, %v4110
        %v4116 = vsel %vm339, %v4110, %v4112
        %v4122 = vsel %vm581, %v4093, 0
        %v4125 = vsel %vm581, %v4094, 0
        %4127 = vmatprep.subr.bf16.mxu0 %v4114
        %4128 = vmatpush1.bf16.msra.mxu0 %v4113
        %4129 = vmatprep.subr.bf16.mxu0 %v4116
        %4130 = vmatpush1.bf16.msra.mxu0 %v4115
        %4131 = vmatprep.subr.bf16.mxu0 0
        %4132 = vmatpush1.bf16.msra.mxu0 0
        %4133 = vmatprep.subr.bf16.mxu0 0
        %4134 = vmatpush1.bf16.msra.mxu0 0
        %4135 = vmatprep.subr.bf16.mxu0 0
        %4136 = vmatpush1.bf16.msra.mxu0 0
        %4137 = vmatprep.subr.bf16.mxu0 0
        %4138 = vmatpush1.bf16.msra.mxu0 0
        %4139 = vmatprep.subr.bf16.mxu0 0
        %4140 = vmatpush1.bf16.msra.mxu0 0
        %4141 = vmatprep.subr.bf16.mxu0 0
        %4142 = vmatpush1.bf16.msra.mxu0 0
        %4143 = vmatprep.subr.bf16.mxu0 0
        %4144 = vmatpush1.bf16.msra.mxu0 0
        %4145 = vmatprep.subr.bf16.mxu0 0
        %4146 = vmatpush1.bf16.msra.mxu0 0
        %4147 = vmatprep.subr.bf16.mxu0 0
        %4148 = vmatpush1.bf16.msra.mxu0 0
        %4149 = vmatprep.subr.bf16.mxu0 0
        %4150 = vmatpush1.bf16.msra.mxu0 0
        %4151 = vmatprep.subr.bf16.mxu0 0
        %4152 = vmatpush1.bf16.msra.mxu0 0
        %4153 = vmatprep.subr.bf16.mxu0 0
        %4154 = vmatpush1.bf16.msra.mxu0 0
        %4155 = vmatprep.subr.bf16.mxu0 0
        %4156 = vmatpush1.bf16.msra.mxu0 0
        %4157 = vmatprep.subr.bf16.mxu0 0
        %4158 = vmatpush1.bf16.msra.mxu0 0
        %4159 = vmatprep.mubr.bf16.mxu0 0
        %4160 = vmatmul.mubr.bf16.gmra.mrb[0].mxu0 %v4122
        %v4161 = vpop.f32.mrb[0].mxu0
        %v4162 = vadd.f32 %v4067, %v4161
        %v4163 = vpop.f32.mrb[0].mxu0
        %v4164 = vadd.f32 %v4069, %v4163
        %v4165 = vpop.f32.mrb[0].mxu0
        %v4166 = vadd.f32 %v4071, %v4165
        %v4167 = vpop.f32.mrb[0].mxu0
        %v4168 = vadd.f32 %v4073, %v4167
        %4169 = vmatprep.mubr.bf16.mxu0 0
        %4170 = vmatmul.mubr.bf16.gmra.mrb[0].mxu0 %v4125
        %v4171 = vpop.f32.mrb[0].mxu0
        %v4172 = vadd.f32 %v4077, %v4171
        %v4173 = vpop.f32.mrb[0].mxu0
        %v4174 = vadd.f32 %v4079, %v4173
        %v4175 = vpop.f32.mrb[0].mxu0
        %v4176 = vadd.f32 %v4081, %v4175
        %v4177 = vpop.f32.mrb[0].mxu0
        %v4178 = vadd.f32 %v4083, %v4177
        %4179 = vdwg.mxu0
        %v4180 = vld [vmem:[#allocation6 + $0x50] sm:$0xf]
        %v4181 = vld [vmem:[#allocation6 + $0x54] sm:$0xf]
        %v4182 = vld [vmem:[#allocation6 + $0x58] sm:$0xf]
        %v4183 = vld [vmem:[#allocation6 + $0x5c] sm:$0xf]
        %v4184 = vld [vmem:[#allocation2 + $0x8] sm:$0xff]
        %v4185 = vld [vmem:[#allocation2 + $0x10] sm:$0xff]
        %v4186 = vld [vmem:[#allocation2 + $0x18] sm:$0xff]
        %v4187 = vld [vmem:[#allocation2 + $0x28] sm:$0xff]
        %v4188 = vld [vmem:[#allocation2 + $0x30] sm:$0xff]
        %v4189 = vld [vmem:[#allocation2 + $0x38] sm:$0xff]
        %v4194 = vunpack.c.l.b16 %v4180
        %v4195 = vunpack.c.l.b16 %v4181
        %v4196 = vunpack.c.l.b16 %v4182
        %v4197 = vunpack.c.l.b16 %v4183
        %v4198 = vpack.c.b16 %v4195, %v4194
        %v4199 = vpack.c.b16 %v4197, %v4196
        %4206 = vrot.lane.b32.xlu0 %v4184, 127
        %v4207 = vpop.permute.xlu0 %4206
        %4208 = vrot.lane.b32.xlu0 %v4185, 127
        %v4209 = vpop.permute.xlu0 %4208
        %4210 = vrot.lane.b32.xlu0 %v4186, 127
        %v4211 = vpop.permute.xlu0 %4210
        %4212 = vrot.lane.b32.xlu0 %v4187, 127
        %v4213 = vpop.permute.xlu0 %4212
        %4214 = vrot.lane.b32.xlu0 %v4188, 127
        %v4215 = vpop.permute.xlu0 %4214
        %4216 = vrot.lane.b32.xlu0 %v4189, 127
        %v4217 = vpop.permute.xlu0 %4216
        %v4218 = vsel %vm433, %v4207, %v4209
        %v4219 = vsel %vm433, %v4209, %v4211
        %v4220 = vsel %vm433, %v4213, %v4215
        %v4221 = vsel %vm433, %v4215, %v4217
        %v4227 = vsel %vm581, %v4198, 0
        %v4230 = vsel %vm581, %v4199, 0
        %4232 = vmatprep.subr.bf16.mxu0 %v4219
        %4233 = vmatpush1.bf16.msra.mxu0 %v4218
        %4234 = vmatprep.subr.bf16.mxu0 %v4221
        %4235 = vmatpush1.bf16.msra.mxu0 %v4220
        %4236 = vmatprep.subr.bf16.mxu0 0
        %4237 = vmatpush1.bf16.msra.mxu0 0
        %4238 = vmatprep.subr.bf16.mxu0 0
        %4239 = vmatpush1.bf16.msra.mxu0 0
        %4240 = vmatprep.subr.bf16.mxu0 0
        %4241 = vmatpush1.bf16.msra.mxu0 0
        %4242 = vmatprep.subr.bf16.mxu0 0
        %4243 = vmatpush1.bf16.msra.mxu0 0
        %4244 = vmatprep.subr.bf16.mxu0 0
        %4245 = vmatpush1.bf16.msra.mxu0 0
        %4246 = vmatprep.subr.bf16.mxu0 0
        %4247 = vmatpush1.bf16.msra.mxu0 0
        %4248 = vmatprep.subr.bf16.mxu0 0
        %4249 = vmatpush1.bf16.msra.mxu0 0
        %4250 = vmatprep.subr.bf16.mxu0 0
        %4251 = vmatpush1.bf16.msra.mxu0 0
        %4252 = vmatprep.subr.bf16.mxu0 0
        %4253 = vmatpush1.bf16.msra.mxu0 0
        %4254 = vmatprep.subr.bf16.mxu0 0
        %4255 = vmatpush1.bf16.msra.mxu0 0
        %4256 = vmatprep.subr.bf16.mxu0 0
        %4257 = vmatpush1.bf16.msra.mxu0 0
        %4258 = vmatprep.subr.bf16.mxu0 0
        %4259 = vmatpush1.bf16.msra.mxu0 0
        %4260 = vmatprep.subr.bf16.mxu0 0
        %4261 = vmatpush1.bf16.msra.mxu0 0
        %4262 = vmatprep.subr.bf16.mxu0 0
        %4263 = vmatpush1.bf16.msra.mxu0 0
        %4264 = vmatprep.mubr.bf16.mxu0 0
        %4265 = vmatmul.mubr.bf16.gmra.mrb[0].mxu0 %v4227
        %v4266 = vpop.f32.mrb[0].mxu0
        %v4267 = vadd.f32 0.0, %v4266
        %v4268 = vpop.f32.mrb[0].mxu0
        %v4269 = vadd.f32 0.0, %v4268
        %v4270 = vpop.f32.mrb[0].mxu0
        %v4271 = vadd.f32 0.0, %v4270
        %v4272 = vpop.f32.mrb[0].mxu0
        %v4273 = vadd.f32 0.0, %v4272
        %4274 = vmatprep.mubr.bf16.mxu0 0
        %4275 = vmatmul.mubr.bf16.gmra.mrb[0].mxu0 %v4230
        %v4276 = vpop.f32.mrb[0].mxu0
        %v4277 = vadd.f32 0.0, %v4276
        %v4278 = vpop.f32.mrb[0].mxu0
        %v4279 = vadd.f32 0.0, %v4278
        %v4280 = vpop.f32.mrb[0].mxu0
        %v4281 = vadd.f32 0.0, %v4280
        %v4282 = vpop.f32.mrb[0].mxu0
        %v4283 = vadd.f32 0.0, %v4282
        %4284 = vdwg.mxu0
        %v4285 = vadd.f32 %v4162, %v4267
        %v4286 = vadd.f32 %v4164, %v4269
        %v4287 = vadd.f32 %v4166, %v4271
        %v4288 = vadd.f32 %v4168, %v4273
        %v4289 = vadd.f32 %v4172, %v4277
        %v4290 = vadd.f32 %v4174, %v4279
        %v4291 = vadd.f32 %v4176, %v4281
        %v4292 = vadd.f32 %v4178, %v4283
        %v4293 = vld [vmem:[%s2 + $0x20] sm:$0xff]
        %v4294 = vld [vmem:[%s2 + $0x28] sm:$0xff]
        %v4295 = vld [vmem:[%s2 + $0x30] sm:$0xff]
        %v4296 = vld [vmem:[%s2 + $0x38] sm:$0xff]
        %4298 = vset.pattern.permute.xlu0 0
        %4299 = vperm.xlu0 %4298, %v4293
        %v4300 = vpop.permute.xlu0 %4299
        %4303 = vset.pattern.permute.xlu0 0
        %4304 = vperm.xlu0 %4303, %v4294
        %v4305 = vpop.permute.xlu0 %4304
        %4308 = vset.pattern.permute.xlu0 0
        %4309 = vperm.xlu0 %4308, %v4295
        %v4310 = vpop.permute.xlu0 %4309
        %4313 = vset.pattern.permute.xlu0 0
        %4314 = vperm.xlu0 %4313, %v4296
        %v4315 = vpop.permute.xlu0 %4314
        %v4317 = vadd.f32 %v4285, %v4300
        %v4318 = vadd.f32 %v4286, %v4300
        %v4319 = vadd.f32 %v4287, %v4305
        %v4320 = vadd.f32 %v4288, %v4305
        %v4321 = vadd.f32 %v4289, %v4310
        %v4322 = vadd.f32 %v4290, %v4310
        %v4323 = vadd.f32 %v4291, %v4315
        %v4324 = vadd.f32 %v4292, %v4315
        %v4325 = vmax.f32 %v4317, 0.0
        %v4326 = vmax.f32 %v4318, 0.0
        %v4327 = vmax.f32 %v4319, 0.0
        %v4328 = vmax.f32 %v4320, 0.0
        %v4329 = vmax.f32 %v4321, 0.0
        %v4330 = vmax.f32 %v4322, 0.0
        %v4331 = vmax.f32 %v4323, 0.0
        %v4332 = vmax.f32 %v4324, 0.0
        %v4333 = vld [vmem:[#allocation3] sm:$0xf]
        %v4334 = vld [vmem:[#allocation3 + $0x8] sm:$0xf]
        %v4335 = vld [vmem:[#allocation6 + $0x60] sm:$0xf]
        %v4336 = vld [vmem:[#allocation6 + $0x64] sm:$0xf]
        %v4337 = vld [vmem:[#allocation6 + $0x68] sm:$0xf]
        %v4338 = vld [vmem:[#allocation6 + $0x6c] sm:$0xf]
        %v4339 = vld [vmem:[%s2 + $0x40] sm:$0xff]
        %v4340 = vld [vmem:[%s2 + $0x48] sm:$0xff]
        %v4341 = vld [vmem:[%s2 + $0x50] sm:$0xff]
        %v4342 = vld [vmem:[%s2 + $0x58] sm:$0xff]
        %4344 = vset.pattern.permute.xlu0 0
        %4345 = vperm.xlu0 %4344, %v4339
        %v4346 = vpop.permute.xlu0 %4345
        %4349 = vset.pattern.permute.xlu0 0
        %4350 = vperm.xlu0 %4349, %v4340
        %v4351 = vpop.permute.xlu0 %4350
        %4354 = vset.pattern.permute.xlu0 0
        %4355 = vperm.xlu0 %4354, %v4341
        %v4356 = vpop.permute.xlu0 %4355
        %4359 = vset.pattern.permute.xlu0 0
        %4360 = vperm.xlu0 %4359, %v4342
        %v4361 = vpop.permute.xlu0 %4360
        %v4367 = vunpack.c.l.b16 %v4335
        %v4368 = vunpack.c.l.b16 %v4336
        %v4369 = vunpack.c.l.b16 %v4337
        %v4370 = vunpack.c.l.b16 %v4338
        %v4371 = vpack.c.b16 %v4368, %v4367
        %v4372 = vpack.c.b16 %v4370, %v4369
        %v4374 = vsel %vm253, %v4371, 0
        %v4377 = vsel %vm253, %v4372, 0
        %v4380 = vsel %vm260, %v4333, 0
        %v4383 = vsel %vm260, %v4334, 0
        %4385 = vmatprep.subr.bf16.mxu0 %v4383
        %4386 = vmatpush1.bf16.msra.mxu0 %v4380
        %4387 = vmatprep.subr.bf16.mxu0 0
        %4388 = vmatpush1.bf16.msra.mxu0 0
        %4389 = vmatprep.subr.bf16.mxu0 0
        %4390 = vmatpush1.bf16.msra.mxu0 0
        %4391 = vmatprep.subr.bf16.mxu0 0
        %4392 = vmatpush1.bf16.msra.mxu0 0
        %4393 = vmatprep.subr.bf16.mxu0 0
        %4394 = vmatpush1.bf16.msra.mxu0 0
        %4395 = vmatprep.subr.bf16.mxu0 0
        %4396 = vmatpush1.bf16.msra.mxu0 0
        %4397 = vmatprep.subr.bf16.mxu0 0
        %4398 = vmatpush1.bf16.msra.mxu0 0
        %4399 = vmatprep.subr.bf16.mxu0 0
        %4400 = vmatpush1.bf16.msra.mxu0 0
        %4401 = vmatprep.subr.bf16.mxu0 0
        %4402 = vmatpush1.bf16.msra.mxu0 0
        %4403 = vmatprep.subr.bf16.mxu0 0
        %4404 = vmatpush1.bf16.msra.mxu0 0
        %4405 = vmatprep.subr.bf16.mxu0 0
        %4406 = vmatpush1.bf16.msra.mxu0 0
        %4407 = vmatprep.subr.bf16.mxu0 0
        %4408 = vmatpush1.bf16.msra.mxu0 0
        %4409 = vmatprep.subr.bf16.mxu0 0
        %4410 = vmatpush1.bf16.msra.mxu0 0
        %4411 = vmatprep.subr.bf16.mxu0 0
        %4412 = vmatpush1.bf16.msra.mxu0 0
        %4413 = vmatprep.subr.bf16.mxu0 0
        %4414 = vmatpush1.bf16.msra.mxu0 0
        %4415 = vmatprep.subr.bf16.mxu0 0
        %4416 = vmatpush1.bf16.msra.mxu0 0
        %4417 = vmatprep.mubr.bf16.mxu0 0
        %4418 = vmatmul.mubr.bf16.gmra.mrb[0].mxu0 %v4374
        %v4419 = vpop.f32.mrb[0].mxu0
        %v4420 = vadd.f32 %v4346, %v4419
        %v4421 = vpop.f32.mrb[0].mxu0
        %v4422 = vadd.f32 %v4346, %v4421
        %v4423 = vpop.f32.mrb[0].mxu0
        %v4424 = vadd.f32 %v4351, %v4423
        %v4425 = vpop.f32.mrb[0].mxu0
        %v4426 = vadd.f32 %v4351, %v4425
        %4427 = vmatprep.mubr.bf16.mxu0 0
        %4428 = vmatmul.mubr.bf16.gmra.mrb[0].mxu0 %v4377
        %v4429 = vpop.f32.mrb[0].mxu0
        %v4430 = vadd.f32 %v4356, %v4429
        %v4431 = vpop.f32.mrb[0].mxu0
        %v4432 = vadd.f32 %v4356, %v4431
        %v4433 = vpop.f32.mrb[0].mxu0
        %v4434 = vadd.f32 %v4361, %v4433
        %v4435 = vpop.f32.mrb[0].mxu0
        %v4436 = vadd.f32 %v4361, %v4435
        %4437 = vdwg.mxu0
        %v4438 = vadd.f32 %v4325, %v4420
        %v4439 = vadd.f32 %v4326, %v4422
        %v4440 = vadd.f32 %v4327, %v4424
        %v4441 = vadd.f32 %v4328, %v4426
        %v4442 = vadd.f32 %v4329, %v4430
        %v4443 = vadd.f32 %v4330, %v4432
        %v4444 = vadd.f32 %v4331, %v4434
        %v4445 = vadd.f32 %v4332, %v4436
        %v4446 = vmax.f32 %v4438, 0.0
        %v4447 = vmax.f32 %v4439, 0.0
        %v4448 = vmax.f32 %v4440, 0.0
        %v4449 = vmax.f32 %v4441, 0.0
        %v4450 = vmax.f32 %v4442, 0.0
        %v4451 = vmax.f32 %v4443, 0.0
        %v4452 = vmax.f32 %v4444, 0.0
        %v4453 = vmax.f32 %v4445, 0.0
        %v4454 = vpack.c.bf16 %v4448, %v4446
        %v4455 = vpack.c.bf16 %v4449, %v4447
        %v4456 = vpack.c.bf16 %v4452, %v4450
        %v4457 = vpack.c.bf16 %v4453, %v4451
        %4458 = vst [vmem:[#allocation3] sm:$0xff] %v4454
        %4459 = vst [vmem:[#allocation3 + $0x8] sm:$0xff] %v4455
        %4460 = vst [vmem:[#allocation3 + $0x10] sm:$0xff] %v4456
        %4461 = vst [vmem:[#allocation3 + $0x18] sm:$0xff] %v4457
        %4462 = vst [vmem:[#allocation2 + $0x8] sm:$0xff] %v4454
        %4463 = vst [vmem:[#allocation2 + $0x10] sm:$0xff] %v4455
        %4464 = vst [vmem:[#allocation2 + $0x28] sm:$0xff] %v4456
        %4465 = vst [vmem:[#allocation2 + $0x30] sm:$0xff] %v4457
        %v4466 = vld [vmem:[#allocation6 + $0x70] sm:$0xf]
        %v4467 = vld [vmem:[#allocation6 + $0x74] sm:$0xf]
        %v4468 = vld [vmem:[#allocation6 + $0x78] sm:$0xf]
        %v4469 = vld [vmem:[#allocation6 + $0x7c] sm:$0xf]
        %v4470 = vld [vmem:[#allocation2] sm:$0xff]
        %v4471 = vld [vmem:[#allocation2 + $0x8] sm:$0xff]
        %v4472 = vld [vmem:[#allocation2 + $0x10] sm:$0xff]
        %v4473 = vld [vmem:[#allocation2 + $0x20] sm:$0xff]
        %v4474 = vld [vmem:[#allocation2 + $0x28] sm:$0xff]
        %v4475 = vld [vmem:[#allocation2 + $0x30] sm:$0xff]
        %v4476 = vld [vmem:[#allocation6 + $0x80] sm:$0xf]
        %v4477 = vld [vmem:[#allocation6 + $0x84] sm:$0xf]
        %v4478 = vld [vmem:[#allocation6 + $0x88] sm:$0xf]
        %v4479 = vld [vmem:[#allocation6 + $0x8c] sm:$0xf]
        %v4484 = vunpack.c.l.b16 %v4476
        %v4485 = vunpack.c.l.b16 %v4477
        %v4486 = vunpack.c.l.b16 %v4478
        %v4487 = vunpack.c.l.b16 %v4479
        %v4488 = vpack.c.b16 %v4485, %v4484
        %v4489 = vpack.c.b16 %v4487, %v4486
        %v4491 = vsel %vm581, %v4488, 0
        %v4494 = vsel %vm581, %v4489, 0
        %4496 = vmatprep.subr.bf16.mxu0 %v4472
        %4497 = vmatpush1.bf16.msra.mxu0 %v4471
        %4498 = vmatprep.subr.bf16.mxu0 %v4475
        %4499 = vmatpush1.bf16.msra.mxu0 %v4474
        %4500 = vmatprep.subr.bf16.mxu0 0
        %4501 = vmatpush1.bf16.msra.mxu0 0
        %4502 = vmatprep.subr.bf16.mxu0 0
        %4503 = vmatpush1.bf16.msra.mxu0 0
        %4504 = vmatprep.subr.bf16.mxu0 0
        %4505 = vmatpush1.bf16.msra.mxu0 0
        %4506 = vmatprep.subr.bf16.mxu0 0
        %4507 = vmatpush1.bf16.msra.mxu0 0
        %4508 = vmatprep.subr.bf16.mxu0 0
        %4509 = vmatpush1.bf16.msra.mxu0 0
        %4510 = vmatprep.subr.bf16.mxu0 0
        %4511 = vmatpush1.bf16.msra.mxu0 0
        %4512 = vmatprep.subr.bf16.mxu0 0
        %4513 = vmatpush1.bf16.msra.mxu0 0
        %4514 = vmatprep.subr.bf16.mxu0 0
        %4515 = vmatpush1.bf16.msra.mxu0 0
        %4516 = vmatprep.subr.bf16.mxu0 0
        %4517 = vmatpush1.bf16.msra.mxu0 0
        %4518 = vmatprep.subr.bf16.mxu0 0
        %4519 = vmatpush1.bf16.msra.mxu0 0
        %4520 = vmatprep.subr.bf16.mxu0 0
        %4521 = vmatpush1.bf16.msra.mxu0 0
        %4522 = vmatprep.subr.bf16.mxu0 0
        %4523 = vmatpush1.bf16.msra.mxu0 0
        %4524 = vmatprep.subr.bf16.mxu0 0
        %4525 = vmatpush1.bf16.msra.mxu0 0
        %4526 = vmatprep.subr.bf16.mxu0 0
        %4527 = vmatpush1.bf16.msra.mxu0 0
        %4528 = vmatprep.mubr.bf16.mxu0 0
        %4529 = vmatmul.mubr.bf16.gmra.mrb[0].mxu0 %v4491
        %v4530 = vpop.f32.mrb[0].mxu0
        %v4531 = vadd.f32 0.0, %v4530
        %v4532 = vpop.f32.mrb[0].mxu0
        %v4533 = vadd.f32 0.0, %v4532
        %v4534 = vpop.f32.mrb[0].mxu0
        %v4535 = vadd.f32 0.0, %v4534
        %v4536 = vpop.f32.mrb[0].mxu0
        %v4537 = vadd.f32 0.0, %v4536
        %4538 = vmatprep.mubr.bf16.mxu0 0
        %4539 = vmatmul.mubr.bf16.gmra.mrb[0].mxu0 %v4494
        %v4540 = vpop.f32.mrb[0].mxu0
        %v4541 = vadd.f32 0.0, %v4540
        %v4542 = vpop.f32.mrb[0].mxu0
        %v4543 = vadd.f32 0.0, %v4542
        %v4544 = vpop.f32.mrb[0].mxu0
        %v4545 = vadd.f32 0.0, %v4544
        %v4546 = vpop.f32.mrb[0].mxu0
        %v4547 = vadd.f32 0.0, %v4546
        %4548 = vdwg.mxu0
        %v4553 = vunpack.c.l.b16 %v4466
        %v4554 = vunpack.c.l.b16 %v4467
        %v4555 = vunpack.c.l.b16 %v4468
        %v4556 = vunpack.c.l.b16 %v4469
        %v4557 = vpack.c.b16 %v4554, %v4553
        %v4558 = vpack.c.b16 %v4556, %v4555
        %4565 = vrot.lane.b32.xlu0 %v4470, 2
        %v4566 = vpop.permute.xlu0 %4565
        %4567 = vrot.lane.b32.xlu0 %v4471, 2
        %v4568 = vpop.permute.xlu0 %4567
        %4569 = vrot.lane.b32.xlu0 %v4472, 2
        %v4570 = vpop.permute.xlu0 %4569
        %4571 = vrot.lane.b32.xlu0 %v4473, 2
        %v4572 = vpop.permute.xlu0 %4571
        %4573 = vrot.lane.b32.xlu0 %v4474, 2
        %v4574 = vpop.permute.xlu0 %4573
        %4575 = vrot.lane.b32.xlu0 %v4475, 2
        %v4576 = vpop.permute.xlu0 %4575
        %v4577 = vsel %vm1133, %v4566, %v4568
        %v4578 = vsel %vm1133, %v4568, %v4570
        %v4579 = vsel %vm1133, %v4572, %v4574
        %v4580 = vsel %vm1133, %v4574, %v4576
        %v4586 = vsel %vm581, %v4557, 0
        %v4589 = vsel %vm581, %v4558, 0
        %4591 = vmatprep.subr.bf16.mxu0 %v4578
        %4592 = vmatpush1.bf16.msra.mxu0 %v4577
        %4593 = vmatprep.subr.bf16.mxu0 %v4580
        %4594 = vmatpush1.bf16.msra.mxu0 %v4579
        %4595 = vmatprep.subr.bf16.mxu0 0
        %4596 = vmatpush1.bf16.msra.mxu0 0
        %4597 = vmatprep.subr.bf16.mxu0 0
        %4598 = vmatpush1.bf16.msra.mxu0 0
        %4599 = vmatprep.subr.bf16.mxu0 0
        %4600 = vmatpush1.bf16.msra.mxu0 0
        %4601 = vmatprep.subr.bf16.mxu0 0
        %4602 = vmatpush1.bf16.msra.mxu0 0
        %4603 = vmatprep.subr.bf16.mxu0 0
        %4604 = vmatpush1.bf16.msra.mxu0 0
        %4605 = vmatprep.subr.bf16.mxu0 0
        %4606 = vmatpush1.bf16.msra.mxu0 0
        %4607 = vmatprep.subr.bf16.mxu0 0
        %4608 = vmatpush1.bf16.msra.mxu0 0
        %4609 = vmatprep.subr.bf16.mxu0 0
        %4610 = vmatpush1.bf16.msra.mxu0 0
        %4611 = vmatprep.subr.bf16.mxu0 0
        %4612 = vmatpush1.bf16.msra.mxu0 0
        %4613 = vmatprep.subr.bf16.mxu0 0
        %4614 = vmatpush1.bf16.msra.mxu0 0
        %4615 = vmatprep.subr.bf16.mxu0 0
        %4616 = vmatpush1.bf16.msra.mxu0 0
        %4617 = vmatprep.subr.bf16.mxu0 0
        %4618 = vmatpush1.bf16.msra.mxu0 0
        %4619 = vmatprep.subr.bf16.mxu0 0
        %4620 = vmatpush1.bf16.msra.mxu0 0
        %4621 = vmatprep.subr.bf16.mxu0 0
        %4622 = vmatpush1.bf16.msra.mxu0 0
        %4623 = vmatprep.mubr.bf16.mxu0 0
        %4624 = vmatmul.mubr.bf16.gmra.mrb[0].mxu0 %v4586
        %v4625 = vpop.f32.mrb[0].mxu0
        %v4626 = vadd.f32 %v4531, %v4625
        %v4627 = vpop.f32.mrb[0].mxu0
        %v4628 = vadd.f32 %v4533, %v4627
        %v4629 = vpop.f32.mrb[0].mxu0
        %v4630 = vadd.f32 %v4535, %v4629
        %v4631 = vpop.f32.mrb[0].mxu0
        %v4632 = vadd.f32 %v4537, %v4631
        %4633 = vmatprep.mubr.bf16.mxu0 0
        %4634 = vmatmul.mubr.bf16.gmra.mrb[0].mxu0 %v4589
        %v4635 = vpop.f32.mrb[0].mxu0
        %v4636 = vadd.f32 %v4541, %v4635
        %v4637 = vpop.f32.mrb[0].mxu0
        %v4638 = vadd.f32 %v4543, %v4637
        %v4639 = vpop.f32.mrb[0].mxu0
        %v4640 = vadd.f32 %v4545, %v4639
        %v4641 = vpop.f32.mrb[0].mxu0
        %v4642 = vadd.f32 %v4547, %v4641
        %4643 = vdwg.mxu0
        %v4644 = vld [vmem:[#allocation6 + $0x90] sm:$0xf]
        %v4645 = vld [vmem:[#allocation6 + $0x94] sm:$0xf]
        %v4646 = vld [vmem:[#allocation6 + $0x98] sm:$0xf]
        %v4647 = vld [vmem:[#allocation6 + $0x9c] sm:$0xf]
        %v4648 = vld [vmem:[#allocation2 + $0x8] sm:$0xff]
        %v4649 = vld [vmem:[#allocation2 + $0x10] sm:$0xff]
        %v4650 = vld [vmem:[#allocation2 + $0x18] sm:$0xff]
        %v4651 = vld [vmem:[#allocation2 + $0x28] sm:$0xff]
        %v4652 = vld [vmem:[#allocation2 + $0x30] sm:$0xff]
        %v4653 = vld [vmem:[#allocation2 + $0x38] sm:$0xff]
        %v4658 = vunpack.c.l.b16 %v4644
        %v4659 = vunpack.c.l.b16 %v4645
        %v4660 = vunpack.c.l.b16 %v4646
        %v4661 = vunpack.c.l.b16 %v4647
        %v4662 = vpack.c.b16 %v4659, %v4658
        %v4663 = vpack.c.b16 %v4661, %v4660
        %4670 = vrot.lane.b32.xlu0 %v4648, 126
        %v4671 = vpop.permute.xlu0 %4670
        %4672 = vrot.lane.b32.xlu0 %v4649, 126
        %v4673 = vpop.permute.xlu0 %4672
        %4674 = vrot.lane.b32.xlu0 %v4650, 126
        %v4675 = vpop.permute.xlu0 %4674
        %4676 = vrot.lane.b32.xlu0 %v4651, 126
        %v4677 = vpop.permute.xlu0 %4676
        %4678 = vrot.lane.b32.xlu0 %v4652, 126
        %v4679 = vpop.permute.xlu0 %4678
        %4680 = vrot.lane.b32.xlu0 %v4653, 126
        %v4681 = vpop.permute.xlu0 %4680
        %v4682 = vsel %vm1239, %v4671, %v4673
        %v4683 = vsel %vm1239, %v4673, %v4675
        %v4684 = vsel %vm1239, %v4677, %v4679
        %v4685 = vsel %vm1239, %v4679, %v4681
        %v4691 = vsel %vm581, %v4662, 0
        %v4694 = vsel %vm581, %v4663, 0
        %4696 = vmatprep.subr.bf16.mxu0 %v4683
        %4697 = vmatpush1.bf16.msra.mxu0 %v4682
        %4698 = vmatprep.subr.bf16.mxu0 %v4685
        %4699 = vmatpush1.bf16.msra.mxu0 %v4684
        %4700 = vmatprep.subr.bf16.mxu0 0
        %4701 = vmatpush1.bf16.msra.mxu0 0
        %4702 = vmatprep.subr.bf16.mxu0 0
        %4703 = vmatpush1.bf16.msra.mxu0 0
        %4704 = vmatprep.subr.bf16.mxu0 0
        %4705 = vmatpush1.bf16.msra.mxu0 0
        %4706 = vmatprep.subr.bf16.mxu0 0
        %4707 = vmatpush1.bf16.msra.mxu0 0
        %4708 = vmatprep.subr.bf16.mxu0 0
        %4709 = vmatpush1.bf16.msra.mxu0 0
        %4710 = vmatprep.subr.bf16.mxu0 0
        %4711 = vmatpush1.bf16.msra.mxu0 0
        %4712 = vmatprep.subr.bf16.mxu0 0
        %4713 = vmatpush1.bf16.msra.mxu0 0
        %4714 = vmatprep.subr.bf16.mxu0 0
        %4715 = vmatpush1.bf16.msra.mxu0 0
        %4716 = vmatprep.subr.bf16.mxu0 0
        %4717 = vmatpush1.bf16.msra.mxu0 0
        %4718 = vmatprep.subr.bf16.mxu0 0
        %4719 = vmatpush1.bf16.msra.mxu0 0
        %4720 = vmatprep.subr.bf16.mxu0 0
        %4721 = vmatpush1.bf16.msra.mxu0 0
        %4722 = vmatprep.subr.bf16.mxu0 0
        %4723 = vmatpush1.bf16.msra.mxu0 0
        %4724 = vmatprep.subr.bf16.mxu0 0
        %4725 = vmatpush1.bf16.msra.mxu0 0
        %4726 = vmatprep.subr.bf16.mxu0 0
        %4727 = vmatpush1.bf16.msra.mxu0 0
        %4728 = vmatprep.mubr.bf16.mxu0 0
        %4729 = vmatmul.mubr.bf16.gmra.mrb[0].mxu0 %v4691
        %v4730 = vpop.f32.mrb[0].mxu0
        %v4731 = vadd.f32 0.0, %v4730
        %v4732 = vpop.f32.mrb[0].mxu0
        %v4733 = vadd.f32 0.0, %v4732
        %v4734 = vpop.f32.mrb[0].mxu0
        %v4735 = vadd.f32 0.0, %v4734
        %v4736 = vpop.f32.mrb[0].mxu0
        %v4737 = vadd.f32 0.0, %v4736
        %4738 = vmatprep.mubr.bf16.mxu0 0
        %4739 = vmatmul.mubr.bf16.gmra.mrb[0].mxu0 %v4694
        %v4740 = vpop.f32.mrb[0].mxu0
        %v4741 = vadd.f32 0.0, %v4740
        %v4742 = vpop.f32.mrb[0].mxu0
        %v4743 = vadd.f32 0.0, %v4742
        %v4744 = vpop.f32.mrb[0].mxu0
        %v4745 = vadd.f32 0.0, %v4744
        %v4746 = vpop.f32.mrb[0].mxu0
        %v4747 = vadd.f32 0.0, %v4746
        %4748 = vdwg.mxu0
        %v4749 = vadd.f32 %v4626, %v4731
        %v4750 = vadd.f32 %v4628, %v4733
        %v4751 = vadd.f32 %v4630, %v4735
        %v4752 = vadd.f32 %v4632, %v4737
        %v4753 = vadd.f32 %v4636, %v4741
        %v4754 = vadd.f32 %v4638, %v4743
        %v4755 = vadd.f32 %v4640, %v4745
        %v4756 = vadd.f32 %v4642, %v4747
        %v4757 = vld [vmem:[%s2 + $0x60] sm:$0xff]
        %v4758 = vld [vmem:[%s2 + $0x68] sm:$0xff]
        %v4759 = vld [vmem:[%s2 + $0x70] sm:$0xff]
        %v4760 = vld [vmem:[%s2 + $0x78] sm:$0xff]
        %4762 = vset.pattern.permute.xlu0 0
        %4763 = vperm.xlu0 %4762, %v4757
        %v4764 = vpop.permute.xlu0 %4763
        %4767 = vset.pattern.permute.xlu0 0
        %4768 = vperm.xlu0 %4767, %v4758
        %v4769 = vpop.permute.xlu0 %4768
        %4772 = vset.pattern.permute.xlu0 0
        %4773 = vperm.xlu0 %4772, %v4759
        %v4774 = vpop.permute.xlu0 %4773
        %4777 = vset.pattern.permute.xlu0 0
        %4778 = vperm.xlu0 %4777, %v4760
        %v4779 = vpop.permute.xlu0 %4778
        %v4781 = vadd.f32 %v4749, %v4764
        %v4782 = vadd.f32 %v4750, %v4764
        %v4783 = vadd.f32 %v4751, %v4769
        %v4784 = vadd.f32 %v4752, %v4769
        %v4785 = vadd.f32 %v4753, %v4774
        %v4786 = vadd.f32 %v4754, %v4774
        %v4787 = vadd.f32 %v4755, %v4779
        %v4788 = vadd.f32 %v4756, %v4779
        %v4789 = vmax.f32 %v4781, 0.0
        %v4790 = vmax.f32 %v4782, 0.0
        %v4791 = vmax.f32 %v4783, 0.0
        %v4792 = vmax.f32 %v4784, 0.0
        %v4793 = vmax.f32 %v4785, 0.0
        %v4794 = vmax.f32 %v4786, 0.0
        %v4795 = vmax.f32 %v4787, 0.0
        %v4796 = vmax.f32 %v4788, 0.0
        %v4797 = vpack.c.bf16 %v4791, %v4789
        %v4798 = vpack.c.bf16 %v4792, %v4790
        %v4799 = vpack.c.bf16 %v4795, %v4793
        %v4800 = vpack.c.bf16 %v4796, %v4794
        %4801 = vst [vmem:[#allocation2 + $0x8] sm:$0xff] %v4797
        %4802 = vst [vmem:[#allocation2 + $0x10] sm:$0xff] %v4798
        %4803 = vst [vmem:[#allocation2 + $0x28] sm:$0xff] %v4799
        %4804 = vst [vmem:[#allocation2 + $0x30] sm:$0xff] %v4800
        %v4805 = vld [vmem:[#allocation6 + $0xa0] sm:$0xf]
        %v4806 = vld [vmem:[#allocation6 + $0xa4] sm:$0xf]
        %v4807 = vld [vmem:[#allocation6 + $0xa8] sm:$0xf]
        %v4808 = vld [vmem:[#allocation6 + $0xac] sm:$0xf]
        %v4809 = vld [vmem:[#allocation2] sm:$0xff]
        %v4810 = vld [vmem:[#allocation2 + $0x8] sm:$0xff]
        %v4811 = vld [vmem:[#allocation2 + $0x10] sm:$0xff]
        %v4812 = vld [vmem:[#allocation2 + $0x20] sm:$0xff]
        %v4813 = vld [vmem:[#allocation2 + $0x28] sm:$0xff]
        %v4814 = vld [vmem:[#allocation2 + $0x30] sm:$0xff]
        %v4815 = vld [vmem:[#allocation6 + $0xb0] sm:$0xf]
        %v4816 = vld [vmem:[#allocation6 + $0xb4] sm:$0xf]
        %v4817 = vld [vmem:[#allocation6 + $0xb8] sm:$0xf]
        %v4818 = vld [vmem:[#allocation6 + $0xbc] sm:$0xf]
        %v4823 = vunpack.c.l.b16 %v4815
        %v4824 = vunpack.c.l.b16 %v4816
        %v4825 = vunpack.c.l.b16 %v4817
        %v4826 = vunpack.c.l.b16 %v4818
        %v4827 = vpack.c.b16 %v4824, %v4823
        %v4828 = vpack.c.b16 %v4826, %v4825
        %v4830 = vsel %vm581, %v4827, 0
        %v4833 = vsel %vm581, %v4828, 0
        %4835 = vmatprep.subr.bf16.mxu0 %v4811
        %4836 = vmatpush1.bf16.msra.mxu0 %v4810
        %4837 = vmatprep.subr.bf16.mxu0 %v4814
        %4838 = vmatpush1.bf16.msra.mxu0 %v4813
        %4839 = vmatprep.subr.bf16.mxu0 0
        %4840 = vmatpush1.bf16.msra.mxu0 0
        %4841 = vmatprep.subr.bf16.mxu0 0
        %4842 = vmatpush1.bf16.msra.mxu0 0
        %4843 = vmatprep.subr.bf16.mxu0 0
        %4844 = vmatpush1.bf16.msra.mxu0 0
        %4845 = vmatprep.subr.bf16.mxu0 0
        %4846 = vmatpush1.bf16.msra.mxu0 0
        %4847 = vmatprep.subr.bf16.mxu0 0
        %4848 = vmatpush1.bf16.msra.mxu0 0
        %4849 = vmatprep.subr.bf16.mxu0 0
        %4850 = vmatpush1.bf16.msra.mxu0 0
        %4851 = vmatprep.subr.bf16.mxu0 0
        %4852 = vmatpush1.bf16.msra.mxu0 0
        %4853 = vmatprep.subr.bf16.mxu0 0
        %4854 = vmatpush1.bf16.msra.mxu0 0
        %4855 = vmatprep.subr.bf16.mxu0 0
        %4856 = vmatpush1.bf16.msra.mxu0 0
        %4857 = vmatprep.subr.bf16.mxu0 0
        %4858 = vmatpush1.bf16.msra.mxu0 0
        %4859 = vmatprep.subr.bf16.mxu0 0
        %4860 = vmatpush1.bf16.msra.mxu0 0
        %4861 = vmatprep.subr.bf16.mxu0 0
        %4862 = vmatpush1.bf16.msra.mxu0 0
        %4863 = vmatprep.subr.bf16.mxu0 0
        %4864 = vmatpush1.bf16.msra.mxu0 0
        %4865 = vmatprep.subr.bf16.mxu0 0
        %4866 = vmatpush1.bf16.msra.mxu0 0
        %4867 = vmatprep.mubr.bf16.mxu0 0
        %4868 = vmatmul.mubr.bf16.gmra.mrb[0].mxu0 %v4830
        %v4869 = vpop.f32.mrb[0].mxu0
        %v4870 = vadd.f32 0.0, %v4869
        %v4871 = vpop.f32.mrb[0].mxu0
        %v4872 = vadd.f32 0.0, %v4871
        %v4873 = vpop.f32.mrb[0].mxu0
        %v4874 = vadd.f32 0.0, %v4873
        %v4875 = vpop.f32.mrb[0].mxu0
        %v4876 = vadd.f32 0.0, %v4875
        %4877 = vmatprep.mubr.bf16.mxu0 0
        %4878 = vmatmul.mubr.bf16.gmra.mrb[0].mxu0 %v4833
        %v4879 = vpop.f32.mrb[0].mxu0
        %v4880 = vadd.f32 0.0, %v4879
        %v4881 = vpop.f32.mrb[0].mxu0
        %v4882 = vadd.f32 0.0, %v4881
        %v4883 = vpop.f32.mrb[0].mxu0
        %v4884 = vadd.f32 0.0, %v4883
        %v4885 = vpop.f32.mrb[0].mxu0
        %v4886 = vadd.f32 0.0, %v4885
        %4887 = vdwg.mxu0
        %v4892 = vunpack.c.l.b16 %v4805
        %v4893 = vunpack.c.l.b16 %v4806
        %v4894 = vunpack.c.l.b16 %v4807
        %v4895 = vunpack.c.l.b16 %v4808
        %v4896 = vpack.c.b16 %v4893, %v4892
        %v4897 = vpack.c.b16 %v4895, %v4894
        %4904 = vrot.lane.b32.xlu0 %v4809, 2
        %v4905 = vpop.permute.xlu0 %4904
        %4906 = vrot.lane.b32.xlu0 %v4810, 2
        %v4907 = vpop.permute.xlu0 %4906
        %4908 = vrot.lane.b32.xlu0 %v4811, 2
        %v4909 = vpop.permute.xlu0 %4908
        %4910 = vrot.lane.b32.xlu0 %v4812, 2
        %v4911 = vpop.permute.xlu0 %4910
        %4912 = vrot.lane.b32.xlu0 %v4813, 2
        %v4913 = vpop.permute.xlu0 %4912
        %4914 = vrot.lane.b32.xlu0 %v4814, 2
        %v4915 = vpop.permute.xlu0 %4914
        %v4916 = vsel %vm1133, %v4905, %v4907
        %v4917 = vsel %vm1133, %v4907, %v4909
        %v4918 = vsel %vm1133, %v4911, %v4913
        %v4919 = vsel %vm1133, %v4913, %v4915
        %v4925 = vsel %vm581, %v4896, 0
        %v4928 = vsel %vm581, %v4897, 0
        %4930 = vmatprep.subr.bf16.mxu0 %v4917
        %4931 = vmatpush1.bf16.msra.mxu0 %v4916
        %4932 = vmatprep.subr.bf16.mxu0 %v4919
        %4933 = vmatpush1.bf16.msra.mxu0 %v4918
        %4934 = vmatprep.subr.bf16.mxu0 0
        %4935 = vmatpush1.bf16.msra.mxu0 0
        %4936 = vmatprep.subr.bf16.mxu0 0
        %4937 = vmatpush1.bf16.msra.mxu0 0
        %4938 = vmatprep.subr.bf16.mxu0 0
        %4939 = vmatpush1.bf16.msra.mxu0 0
        %4940 = vmatprep.subr.bf16.mxu0 0
        %4941 = vmatpush1.bf16.msra.mxu0 0
        %4942 = vmatprep.subr.bf16.mxu0 0
        %4943 = vmatpush1.bf16.msra.mxu0 0
        %4944 = vmatprep.subr.bf16.mxu0 0
        %4945 = vmatpush1.bf16.msra.mxu0 0
        %4946 = vmatprep.subr.bf16.mxu0 0
        %4947 = vmatpush1.bf16.msra.mxu0 0
        %4948 = vmatprep.subr.bf16.mxu0 0
        %4949 = vmatpush1.bf16.msra.mxu0 0
        %4950 = vmatprep.subr.bf16.mxu0 0
        %4951 = vmatpush1.bf16.msra.mxu0 0
        %4952 = vmatprep.subr.bf16.mxu0 0
        %4953 = vmatpush1.bf16.msra.mxu0 0
        %4954 = vmatprep.subr.bf16.mxu0 0
        %4955 = vmatpush1.bf16.msra.mxu0 0
        %4956 = vmatprep.subr.bf16.mxu0 0
        %4957 = vmatpush1.bf16.msra.mxu0 0
        %4958 = vmatprep.subr.bf16.mxu0 0
        %4959 = vmatpush1.bf16.msra.mxu0 0
        %4960 = vmatprep.subr.bf16.mxu0 0
        %4961 = vmatpush1.bf16.msra.mxu0 0
        %4962 = vmatprep.mubr.bf16.mxu0 0
        %4963 = vmatmul.mubr.bf16.gmra.mrb[0].mxu0 %v4925
        %v4964 = vpop.f32.mrb[0].mxu0
        %v4965 = vadd.f32 %v4870, %v4964
        %v4966 = vpop.f32.mrb[0].mxu0
        %v4967 = vadd.f32 %v4872, %v4966
        %v4968 = vpop.f32.mrb[0].mxu0
        %v4969 = vadd.f32 %v4874, %v4968
        %v4970 = vpop.f32.mrb[0].mxu0
        %v4971 = vadd.f32 %v4876, %v4970
        %4972 = vmatprep.mubr.bf16.mxu0 0
        %4973 = vmatmul.mubr.bf16.gmra.mrb[0].mxu0 %v4928
        %v4974 = vpop.f32.mrb[0].mxu0
        %v4975 = vadd.f32 %v4880, %v4974
        %v4976 = vpop.f32.mrb[0].mxu0
        %v4977 = vadd.f32 %v4882, %v4976
        %v4978 = vpop.f32.mrb[0].mxu0
        %v4979 = vadd.f32 %v4884, %v4978
        %v4980 = vpop.f32.mrb[0].mxu0
        %v4981 = vadd.f32 %v4886, %v4980
        %4982 = vdwg.mxu0
        %v4983 = vld [vmem:[#allocation6 + $0xc0] sm:$0xf]
        %v4984 = vld [vmem:[#allocation6 + $0xc4] sm:$0xf]
        %v4985 = vld [vmem:[#allocation6 + $0xc8] sm:$0xf]
        %v4986 = vld [vmem:[#allocation6 + $0xcc] sm:$0xf]
        %v4987 = vld [vmem:[#allocation2 + $0x8] sm:$0xff]
        %v4988 = vld [vmem:[#allocation2 + $0x10] sm:$0xff]
        %v4989 = vld [vmem:[#allocation2 + $0x18] sm:$0xff]
        %v4990 = vld [vmem:[#allocation2 + $0x28] sm:$0xff]
        %v4991 = vld [vmem:[#allocation2 + $0x30] sm:$0xff]
        %v4992 = vld [vmem:[#allocation2 + $0x38] sm:$0xff]
        %v4997 = vunpack.c.l.b16 %v4983
        %v4998 = vunpack.c.l.b16 %v4984
        %v4999 = vunpack.c.l.b16 %v4985
        %v5000 = vunpack.c.l.b16 %v4986
        %v5001 = vpack.c.b16 %v4998, %v4997
        %v5002 = vpack.c.b16 %v5000, %v4999
        %5009 = vrot.lane.b32.xlu0 %v4987, 126
        %v5010 = vpop.permute.xlu0 %5009
        %5011 = vrot.lane.b32.xlu0 %v4988, 126
        %v5012 = vpop.permute.xlu0 %5011
        %5013 = vrot.lane.b32.xlu0 %v4989, 126
        %v5014 = vpop.permute.xlu0 %5013
        %5015 = vrot.lane.b32.xlu0 %v4990, 126
        %v5016 = vpop.permute.xlu0 %5015
        %5017 = vrot.lane.b32.xlu0 %v4991, 126
        %v5018 = vpop.permute.xlu0 %5017
        %5019 = vrot.lane.b32.xlu0 %v4992, 126
        %v5020 = vpop.permute.xlu0 %5019
        %v5021 = vsel %vm1239, %v5010, %v5012
        %v5022 = vsel %vm1239, %v5012, %v5014
        %v5023 = vsel %vm1239, %v5016, %v5018
        %v5024 = vsel %vm1239, %v5018, %v5020
        %v5030 = vsel %vm581, %v5001, 0
        %v5033 = vsel %vm581, %v5002, 0
        %5035 = vmatprep.subr.bf16.mxu0 %v5022
        %5036 = vmatpush1.bf16.msra.mxu0 %v5021
        %5037 = vmatprep.subr.bf16.mxu0 %v5024
        %5038 = vmatpush1.bf16.msra.mxu0 %v5023
        %5039 = vmatprep.subr.bf16.mxu0 0
        %5040 = vmatpush1.bf16.msra.mxu0 0
        %5041 = vmatprep.subr.bf16.mxu0 0
        %5042 = vmatpush1.bf16.msra.mxu0 0
        %5043 = vmatprep.subr.bf16.mxu0 0
        %5044 = vmatpush1.bf16.msra.mxu0 0
        %5045 = vmatprep.subr.bf16.mxu0 0
        %5046 = vmatpush1.bf16.msra.mxu0 0
        %5047 = vmatprep.subr.bf16.mxu0 0
        %5048 = vmatpush1.bf16.msra.mxu0 0
        %5049 = vmatprep.subr.bf16.mxu0 0
        %5050 = vmatpush1.bf16.msra.mxu0 0
        %5051 = vmatprep.subr.bf16.mxu0 0
        %5052 = vmatpush1.bf16.msra.mxu0 0
        %5053 = vmatprep.subr.bf16.mxu0 0
        %5054 = vmatpush1.bf16.msra.mxu0 0
        %5055 = vmatprep.subr.bf16.mxu0 0
        %5056 = vmatpush1.bf16.msra.mxu0 0
        %5057 = vmatprep.subr.bf16.mxu0 0
        %5058 = vmatpush1.bf16.msra.mxu0 0
        %5059 = vmatprep.subr.bf16.mxu0 0
        %5060 = vmatpush1.bf16.msra.mxu0 0
        %5061 = vmatprep.subr.bf16.mxu0 0
        %5062 = vmatpush1.bf16.msra.mxu0 0
        %5063 = vmatprep.subr.bf16.mxu0 0
        %5064 = vmatpush1.bf16.msra.mxu0 0
        %5065 = vmatprep.subr.bf16.mxu0 0
        %5066 = vmatpush1.bf16.msra.mxu0 0
        %5067 = vmatprep.mubr.bf16.mxu0 0
        %5068 = vmatmul.mubr.bf16.gmra.mrb[0].mxu0 %v5030
        %v5069 = vpop.f32.mrb[0].mxu0
        %v5070 = vadd.f32 0.0, %v5069
        %v5071 = vpop.f32.mrb[0].mxu0
        %v5072 = vadd.f32 0.0, %v5071
        %v5073 = vpop.f32.mrb[0].mxu0
        %v5074 = vadd.f32 0.0, %v5073
        %v5075 = vpop.f32.mrb[0].mxu0
        %v5076 = vadd.f32 0.0, %v5075
        %5077 = vmatprep.mubr.bf16.mxu0 0
        %5078 = vmatmul.mubr.bf16.gmra.mrb[0].mxu0 %v5033
        %v5079 = vpop.f32.mrb[0].mxu0
        %v5080 = vadd.f32 0.0, %v5079
        %v5081 = vpop.f32.mrb[0].mxu0
        %v5082 = vadd.f32 0.0, %v5081
        %v5083 = vpop.f32.mrb[0].mxu0
        %v5084 = vadd.f32 0.0, %v5083
        %v5085 = vpop.f32.mrb[0].mxu0
        %v5086 = vadd.f32 0.0, %v5085
        %5087 = vdwg.mxu0
        %v5088 = vadd.f32 %v4965, %v5070
        %v5089 = vadd.f32 %v4967, %v5072
        %v5090 = vadd.f32 %v4969, %v5074
        %v5091 = vadd.f32 %v4971, %v5076
        %v5092 = vadd.f32 %v4975, %v5080
        %v5093 = vadd.f32 %v4977, %v5082
        %v5094 = vadd.f32 %v4979, %v5084
        %v5095 = vadd.f32 %v4981, %v5086
        %v5096 = vld [vmem:[%s2 + $0x80] sm:$0xff]
        %v5097 = vld [vmem:[%s2 + $0x88] sm:$0xff]
        %v5098 = vld [vmem:[%s2 + $0x90] sm:$0xff]
        %v5099 = vld [vmem:[%s2 + $0x98] sm:$0xff]
        %5101 = vset.pattern.permute.xlu0 0
        %5102 = vperm.xlu0 %5101, %v5096
        %v5103 = vpop.permute.xlu0 %5102
        %5106 = vset.pattern.permute.xlu0 0
        %5107 = vperm.xlu0 %5106, %v5097
        %v5108 = vpop.permute.xlu0 %5107
        %5111 = vset.pattern.permute.xlu0 0
        %5112 = vperm.xlu0 %5111, %v5098
        %v5113 = vpop.permute.xlu0 %5112
        %5116 = vset.pattern.permute.xlu0 0
        %5117 = vperm.xlu0 %5116, %v5099
        %v5118 = vpop.permute.xlu0 %5117
        %v5120 = vadd.f32 %v5088, %v5103
        %v5121 = vadd.f32 %v5089, %v5103
        %v5122 = vadd.f32 %v5090, %v5108
        %v5123 = vadd.f32 %v5091, %v5108
        %v5124 = vadd.f32 %v5092, %v5113
        %v5125 = vadd.f32 %v5093, %v5113
        %v5126 = vadd.f32 %v5094, %v5118
        %v5127 = vadd.f32 %v5095, %v5118
        %v5128 = vmax.f32 %v5120, 0.0
        %v5129 = vmax.f32 %v5121, 0.0
        %v5130 = vmax.f32 %v5122, 0.0
        %v5131 = vmax.f32 %v5123, 0.0
        %v5132 = vmax.f32 %v5124, 0.0
        %v5133 = vmax.f32 %v5125, 0.0
        %v5134 = vmax.f32 %v5126, 0.0
        %v5135 = vmax.f32 %v5127, 0.0
        %v5136 = vld [vmem:[#allocation3] sm:$0xff]
        %v5137 = vld [vmem:[#allocation3 + $0x8] sm:$0xff]
        %v5138 = vld [vmem:[#allocation3 + $0x10] sm:$0xff]
        %v5139 = vld [vmem:[#allocation3 + $0x18] sm:$0xff]
        %v5140 = vunpack.c.l.bf16 %v5136
        %v5141 = vunpack.c.l.bf16 %v5137
        %v5142 = vunpack.c.h.bf16 %v5136
        %v5143 = vunpack.c.h.bf16 %v5137
        %v5144 = vunpack.c.l.bf16 %v5138
        %v5145 = vunpack.c.l.bf16 %v5139
        %v5146 = vunpack.c.h.bf16 %v5138
        %v5147 = vunpack.c.h.bf16 %v5139
        %v5148 = vadd.f32 %v5128, %v5140
        %v5149 = vadd.f32 %v5129, %v5141
        %v5150 = vadd.f32 %v5130, %v5142
        %v5151 = vadd.f32 %v5131, %v5143
        %v5152 = vadd.f32 %v5132, %v5144
        %v5153 = vadd.f32 %v5133, %v5145
        %v5154 = vadd.f32 %v5134, %v5146
        %v5155 = vadd.f32 %v5135, %v5147
        %v5156 = vmax.f32 %v5148, 0.0
        %v5157 = vmax.f32 %v5149, 0.0
        %v5158 = vmax.f32 %v5150, 0.0
        %v5159 = vmax.f32 %v5151, 0.0
        %v5160 = vmax.f32 %v5152, 0.0
        %v5161 = vmax.f32 %v5153, 0.0
        %v5162 = vmax.f32 %v5154, 0.0
        %v5163 = vmax.f32 %v5155, 0.0
        %v5164 = vpack.c.bf16 %v5158, %v5156
        %v5165 = vpack.c.bf16 %v5159, %v5157
        %v5166 = vpack.c.bf16 %v5162, %v5160
        %v5167 = vpack.c.bf16 %v5163, %v5161
        %5168 = vst [vmem:[#allocation3] sm:$0xff] %v5164
        %5169 = vst [vmem:[#allocation3 + $0x8] sm:$0xff] %v5165
        %5170 = vst [vmem:[#allocation3 + $0x10] sm:$0xff] %v5166
        %5171 = vst [vmem:[#allocation3 + $0x18] sm:$0xff] %v5167
        %5172 = vst [vmem:[#allocation2 + $0x8] sm:$0xff] %v5164
        %5173 = vst [vmem:[#allocation2 + $0x10] sm:$0xff] %v5165
        %5174 = vst [vmem:[#allocation2 + $0x28] sm:$0xff] %v5166
        %5175 = vst [vmem:[#allocation2 + $0x30] sm:$0xff] %v5167
        %v5176 = vld [vmem:[#allocation6 + $0xd0] sm:$0xf]
        %v5177 = vld [vmem:[#allocation6 + $0xd4] sm:$0xf]
        %v5178 = vld [vmem:[#allocation6 + $0xd8] sm:$0xf]
        %v5179 = vld [vmem:[#allocation6 + $0xdc] sm:$0xf]
        %v5180 = vld [vmem:[#allocation6 + $0xe0] sm:$0xf]
        %v5181 = vld [vmem:[#allocation6 + $0xe4] sm:$0xf]
        %v5182 = vld [vmem:[#allocation6 + $0xe8] sm:$0xf]
        %v5183 = vld [vmem:[#allocation6 + $0xec] sm:$0xf]
        %v5184 = vld [vmem:[#allocation2] sm:$0xff]
        %v5185 = vld [vmem:[#allocation2 + $0x8] sm:$0xff]
        %v5186 = vld [vmem:[#allocation2 + $0x10] sm:$0xff]
        %v5187 = vld [vmem:[#allocation2 + $0x20] sm:$0xff]
        %v5188 = vld [vmem:[#allocation2 + $0x28] sm:$0xff]
        %v5189 = vld [vmem:[#allocation2 + $0x30] sm:$0xff]
        %v5190 = vld [vmem:[#allocation6 + $0xf0] sm:$0xf]
        %v5191 = vld [vmem:[#allocation6 + $0xf4] sm:$0xf]
        %v5192 = vld [vmem:[#allocation6 + $0xf8] sm:$0xf]
        %v5193 = vld [vmem:[#allocation6 + $0xfc] sm:$0xf]
        %v5194 = vld [vmem:[#allocation6 + $0x100] sm:$0xf]
        %v5195 = vld [vmem:[#allocation6 + $0x104] sm:$0xf]
        %v5196 = vld [vmem:[#allocation6 + $0x108] sm:$0xf]
        %v5197 = vld [vmem:[#allocation6 + $0x10c] sm:$0xf]
        %v5206 = vunpack.c.l.b16 %v5190
        %v5207 = vunpack.c.l.b16 %v5191
        %v5208 = vunpack.c.l.b16 %v5192
        %v5209 = vunpack.c.l.b16 %v5193
        %v5210 = vunpack.c.l.b16 %v5194
        %v5211 = vunpack.c.l.b16 %v5195
        %v5212 = vunpack.c.l.b16 %v5196
        %v5213 = vunpack.c.l.b16 %v5197
        %v5214 = vpack.c.b16 %v5207, %v5206
        %v5215 = vpack.c.b16 %v5209, %v5208
        %v5216 = vpack.c.b16 %v5211, %v5210
        %v5217 = vpack.c.b16 %v5213, %v5212
        %v5219 = vsel %vm581, %v5214, 0
        %v5222 = vsel %vm581, %v5215, 0
        %v5225 = vsel %vm581, %v5216, 0
        %v5228 = vsel %vm581, %v5217, 0
        %5230 = vmatprep.subr.bf16.mxu0 %v5186
        %5231 = vmatpush1.bf16.msra.mxu0 %v5185
        %5232 = vmatprep.subr.bf16.mxu0 %v5189
        %5233 = vmatpush1.bf16.msra.mxu0 %v5188
        %5234 = vmatprep.subr.bf16.mxu0 0
        %5235 = vmatpush1.bf16.msra.mxu0 0
        %5236 = vmatprep.subr.bf16.mxu0 0
        %5237 = vmatpush1.bf16.msra.mxu0 0
        %5238 = vmatprep.subr.bf16.mxu0 0
        %5239 = vmatpush1.bf16.msra.mxu0 0
        %5240 = vmatprep.subr.bf16.mxu0 0
        %5241 = vmatpush1.bf16.msra.mxu0 0
        %5242 = vmatprep.subr.bf16.mxu0 0
        %5243 = vmatpush1.bf16.msra.mxu0 0
        %5244 = vmatprep.subr.bf16.mxu0 0
        %5245 = vmatpush1.bf16.msra.mxu0 0
        %5246 = vmatprep.subr.bf16.mxu0 0
        %5247 = vmatpush1.bf16.msra.mxu0 0
        %5248 = vmatprep.subr.bf16.mxu0 0
        %5249 = vmatpush1.bf16.msra.mxu0 0
        %5250 = vmatprep.subr.bf16.mxu0 0
        %5251 = vmatpush1.bf16.msra.mxu0 0
        %5252 = vmatprep.subr.bf16.mxu0 0
        %5253 = vmatpush1.bf16.msra.mxu0 0
        %5254 = vmatprep.subr.bf16.mxu0 0
        %5255 = vmatpush1.bf16.msra.mxu0 0
        %5256 = vmatprep.subr.bf16.mxu0 0
        %5257 = vmatpush1.bf16.msra.mxu0 0
        %5258 = vmatprep.subr.bf16.mxu0 0
        %5259 = vmatpush1.bf16.msra.mxu0 0
        %5260 = vmatprep.subr.bf16.mxu0 0
        %5261 = vmatpush1.bf16.msra.mxu0 0
        %5262 = vmatprep.mubr.bf16.mxu0 0
        %5263 = vmatmul.mubr.bf16.gmra.mrb[0].mxu0 %v5219
        %v5264 = vpop.f32.mrb[0].mxu0
        %v5265 = vadd.f32 0.0, %v5264
        %v5266 = vpop.f32.mrb[0].mxu0
        %v5267 = vadd.f32 0.0, %v5266
        %v5268 = vpop.f32.mrb[0].mxu0
        %v5269 = vadd.f32 0.0, %v5268
        %v5270 = vpop.f32.mrb[0].mxu0
        %v5271 = vadd.f32 0.0, %v5270
        %5272 = vmatprep.mubr.bf16.mxu0 0
        %5273 = vmatmul.mubr.bf16.gmra.mrb[0].mxu0 %v5222
        %v5274 = vpop.f32.mrb[0].mxu0
        %v5275 = vadd.f32 0.0, %v5274
        %v5276 = vpop.f32.mrb[0].mxu0
        %v5277 = vadd.f32 0.0, %v5276
        %v5278 = vpop.f32.mrb[0].mxu0
        %v5279 = vadd.f32 0.0, %v5278
        %v5280 = vpop.f32.mrb[0].mxu0
        %v5281 = vadd.f32 0.0, %v5280
        %5282 = vmatprep.mubr.bf16.mxu0 0
        %5283 = vmatmul.mubr.bf16.gmra.mrb[0].mxu0 %v5225
        %v5284 = vpop.f32.mrb[0].mxu0
        %v5285 = vadd.f32 0.0, %v5284
        %v5286 = vpop.f32.mrb[0].mxu0
        %v5287 = vadd.f32 0.0, %v5286
        %v5288 = vpop.f32.mrb[0].mxu0
        %v5289 = vadd.f32 0.0, %v5288
        %v5290 = vpop.f32.mrb[0].mxu0
        %v5291 = vadd.f32 0.0, %v5290
        %5292 = vmatprep.mubr.bf16.mxu0 0
        %5293 = vmatmul.mubr.bf16.gmra.mrb[0].mxu0 %v5228
        %v5294 = vpop.f32.mrb[0].mxu0
        %v5295 = vadd.f32 0.0, %v5294
        %v5296 = vpop.f32.mrb[0].mxu0
        %v5297 = vadd.f32 0.0, %v5296
        %v5298 = vpop.f32.mrb[0].mxu0
        %v5299 = vadd.f32 0.0, %v5298
        %v5300 = vpop.f32.mrb[0].mxu0
        %v5301 = vadd.f32 0.0, %v5300
        %5302 = vdwg.mxu0
        %v5311 = vunpack.c.l.b16 %v5176
        %v5312 = vunpack.c.l.b16 %v5177
        %v5313 = vunpack.c.l.b16 %v5178
        %v5314 = vunpack.c.l.b16 %v5179
        %v5315 = vunpack.c.l.b16 %v5180
        %v5316 = vunpack.c.l.b16 %v5181
        %v5317 = vunpack.c.l.b16 %v5182
        %v5318 = vunpack.c.l.b16 %v5183
        %v5319 = vpack.c.b16 %v5312, %v5311
        %v5320 = vpack.c.b16 %v5314, %v5313
        %v5321 = vpack.c.b16 %v5316, %v5315
        %v5322 = vpack.c.b16 %v5318, %v5317
        %5329 = vrot.lane.b32.xlu0 %v5184, 4
        %v5330 = vpop.permute.xlu0 %5329
        %5331 = vrot.lane.b32.xlu0 %v5185, 4
        %v5332 = vpop.permute.xlu0 %5331
        %5333 = vrot.lane.b32.xlu0 %v5186, 4
        %v5334 = vpop.permute.xlu0 %5333
        %5335 = vrot.lane.b32.xlu0 %v5187, 4
        %v5336 = vpop.permute.xlu0 %5335
        %5337 = vrot.lane.b32.xlu0 %v5188, 4
        %v5338 = vpop.permute.xlu0 %5337
        %5339 = vrot.lane.b32.xlu0 %v5189, 4
        %v5340 = vpop.permute.xlu0 %5339
        %v5341 = vsel %vm1899, %v5330, %v5332
        %v5342 = vsel %vm1899, %v5332, %v5334
        %v5343 = vsel %vm1899, %v5336, %v5338
        %v5344 = vsel %vm1899, %v5338, %v5340
        %v5350 = vsel %vm581, %v5319, 0
        %v5353 = vsel %vm581, %v5320, 0
        %v5356 = vsel %vm581, %v5321, 0
        %v5359 = vsel %vm581, %v5322, 0
        %5361 = vmatprep.subr.bf16.mxu0 %v5342
        %5362 = vmatpush1.bf16.msra.mxu0 %v5341
        %5363 = vmatprep.subr.bf16.mxu0 %v5344
        %5364 = vmatpush1.bf16.msra.mxu0 %v5343
        %5365 = vmatprep.subr.bf16.mxu0 0
        %5366 = vmatpush1.bf16.msra.mxu0 0
        %5367 = vmatprep.subr.bf16.mxu0 0
        %5368 = vmatpush1.bf16.msra.mxu0 0
        %5369 = vmatprep.subr.bf16.mxu0 0
        %5370 = vmatpush1.bf16.msra.mxu0 0
        %5371 = vmatprep.subr.bf16.mxu0 0
        %5372 = vmatpush1.bf16.msra.mxu0 0
        %5373 = vmatprep.subr.bf16.mxu0 0
        %5374 = vmatpush1.bf16.msra.mxu0 0
        %5375 = vmatprep.subr.bf16.mxu0 0
        %5376 = vmatpush1.bf16.msra.mxu0 0
        %5377 = vmatprep.subr.bf16.mxu0 0
        %5378 = vmatpush1.bf16.msra.mxu0 0
        %5379 = vmatprep.subr.bf16.mxu0 0
        %5380 = vmatpush1.bf16.msra.mxu0 0
        %5381 = vmatprep.subr.bf16.mxu0 0
        %5382 = vmatpush1.bf16.msra.mxu0 0
        %5383 = vmatprep.subr.bf16.mxu0 0
        %5384 = vmatpush1.bf16.msra.mxu0 0
        %5385 = vmatprep.subr.bf16.mxu0 0
        %5386 = vmatpush1.bf16.msra.mxu0 0
        %5387 = vmatprep.subr.bf16.mxu0 0
        %5388 = vmatpush1.bf16.msra.mxu0 0
        %5389 = vmatprep.subr.bf16.mxu0 0
        %5390 = vmatpush1.bf16.msra.mxu0 0
        %5391 = vmatprep.subr.bf16.mxu0 0
        %5392 = vmatpush1.bf16.msra.mxu0 0
        %5393 = vmatprep.mubr.bf16.mxu0 0
        %5394 = vmatmul.mubr.bf16.gmra.mrb[0].mxu0 %v5350
        %v5395 = vpop.f32.mrb[0].mxu0
        %v5396 = vadd.f32 %v5265, %v5395
        %v5397 = vpop.f32.mrb[0].mxu0
        %v5398 = vadd.f32 %v5267, %v5397
        %v5399 = vpop.f32.mrb[0].mxu0
        %v5400 = vadd.f32 %v5269, %v5399
        %v5401 = vpop.f32.mrb[0].mxu0
        %v5402 = vadd.f32 %v5271, %v5401
        %5403 = vmatprep.mubr.bf16.mxu0 0
        %5404 = vmatmul.mubr.bf16.gmra.mrb[0].mxu0 %v5353
        %v5405 = vpop.f32.mrb[0].mxu0
        %v5406 = vadd.f32 %v5275, %v5405
        %v5407 = vpop.f32.mrb[0].mxu0
        %v5408 = vadd.f32 %v5277, %v5407
        %v5409 = vpop.f32.mrb[0].mxu0
        %v5410 = vadd.f32 %v5279, %v5409
        %v5411 = vpop.f32.mrb[0].mxu0
        %v5412 = vadd.f32 %v5281, %v5411
        %5413 = vmatprep.mubr.bf16.mxu0 0
        %5414 = vmatmul.mubr.bf16.gmra.mrb[0].mxu0 %v5356
        %v5415 = vpop.f32.mrb[0].mxu0
        %v5416 = vadd.f32 %v5285, %v5415
        %v5417 = vpop.f32.mrb[0].mxu0
        %v5418 = vadd.f32 %v5287, %v5417
        %v5419 = vpop.f32.mrb[0].mxu0
        %v5420 = vadd.f32 %v5289, %v5419
        %v5421 = vpop.f32.mrb[0].mxu0
        %v5422 = vadd.f32 %v5291, %v5421
        %5423 = vmatprep.mubr.bf16.mxu0 0
        %5424 = vmatmul.mubr.bf16.gmra.mrb[0].mxu0 %v5359
        %v5425 = vpop.f32.mrb[0].mxu0
        %v5426 = vadd.f32 %v5295, %v5425
        %v5427 = vpop.f32.mrb[0].mxu0
        %v5428 = vadd.f32 %v5297, %v5427
        %v5429 = vpop.f32.mrb[0].mxu0
        %v5430 = vadd.f32 %v5299, %v5429
        %v5431 = vpop.f32.mrb[0].mxu0
        %v5432 = vadd.f32 %v5301, %v5431
        %5433 = vdwg.mxu0
        %v5434 = vld [vmem:[#allocation6 + $0x110] sm:$0xf]
        %v5435 = vld [vmem:[#allocation6 + $0x114] sm:$0xf]
        %v5436 = vld [vmem:[#allocation6 + $0x118] sm:$0xf]
        %v5437 = vld [vmem:[#allocation6 + $0x11c] sm:$0xf]
        %v5438 = vld [vmem:[#allocation6 + $0x120] sm:$0xf]
        %v5439 = vld [vmem:[#allocation6 + $0x124] sm:$0xf]
        %v5440 = vld [vmem:[#allocation6 + $0x128] sm:$0xf]
        %v5441 = vld [vmem:[#allocation6 + $0x12c] sm:$0xf]
        %v5442 = vld [vmem:[#allocation2 + $0x8] sm:$0xff]
        %v5443 = vld [vmem:[#allocation2 + $0x10] sm:$0xff]
        %v5444 = vld [vmem:[#allocation2 + $0x18] sm:$0xff]
        %v5445 = vld [vmem:[#allocation2 + $0x28] sm:$0xff]
        %v5446 = vld [vmem:[#allocation2 + $0x30] sm:$0xff]
        %v5447 = vld [vmem:[#allocation2 + $0x38] sm:$0xff]
        %v5456 = vunpack.c.l.b16 %v5434
        %v5457 = vunpack.c.l.b16 %v5435
        %v5458 = vunpack.c.l.b16 %v5436
        %v5459 = vunpack.c.l.b16 %v5437
        %v5460 = vunpack.c.l.b16 %v5438
        %v5461 = vunpack.c.l.b16 %v5439
        %v5462 = vunpack.c.l.b16 %v5440
        %v5463 = vunpack.c.l.b16 %v5441
        %v5464 = vpack.c.b16 %v5457, %v5456
        %v5465 = vpack.c.b16 %v5459, %v5458
        %v5466 = vpack.c.b16 %v5461, %v5460
        %v5467 = vpack.c.b16 %v5463, %v5462
        %5474 = vrot.lane.b32.xlu0 %v5442, 124
        %v5475 = vpop.permute.xlu0 %5474
        %5476 = vrot.lane.b32.xlu0 %v5443, 124
        %v5477 = vpop.permute.xlu0 %5476
        %5478 = vrot.lane.b32.xlu0 %v5444, 124
        %v5479 = vpop.permute.xlu0 %5478
        %5480 = vrot.lane.b32.xlu0 %v5445, 124
        %v5481 = vpop.permute.xlu0 %5480
        %5482 = vrot.lane.b32.xlu0 %v5446, 124
        %v5483 = vpop.permute.xlu0 %5482
        %5484 = vrot.lane.b32.xlu0 %v5447, 124
        %v5485 = vpop.permute.xlu0 %5484
        %v5486 = vsel %vm2045, %v5475, %v5477
        %v5487 = vsel %vm2045, %v5477, %v5479
        %v5488 = vsel %vm2045, %v5481, %v5483
        %v5489 = vsel %vm2045, %v5483, %v5485
        %v5495 = vsel %vm581, %v5464, 0
        %v5498 = vsel %vm581, %v5465, 0
        %v5501 = vsel %vm581, %v5466, 0
        %v5504 = vsel %vm581, %v5467, 0
        %5506 = vmatprep.subr.bf16.mxu0 %v5487
        %5507 = vmatpush1.bf16.msra.mxu0 %v5486
        %5508 = vmatprep.subr.bf16.mxu0 %v5489
        %5509 = vmatpush1.bf16.msra.mxu0 %v5488
        %5510 = vmatprep.subr.bf16.mxu0 0
        %5511 = vmatpush1.bf16.msra.mxu0 0
        %5512 = vmatprep.subr.bf16.mxu0 0
        %5513 = vmatpush1.bf16.msra.mxu0 0
        %5514 = vmatprep.subr.bf16.mxu0 0
        %5515 = vmatpush1.bf16.msra.mxu0 0
        %5516 = vmatprep.subr.bf16.mxu0 0
        %5517 = vmatpush1.bf16.msra.mxu0 0
        %5518 = vmatprep.subr.bf16.mxu0 0
        %5519 = vmatpush1.bf16.msra.mxu0 0
        %5520 = vmatprep.subr.bf16.mxu0 0
        %5521 = vmatpush1.bf16.msra.mxu0 0
        %5522 = vmatprep.subr.bf16.mxu0 0
        %5523 = vmatpush1.bf16.msra.mxu0 0
        %5524 = vmatprep.subr.bf16.mxu0 0
        %5525 = vmatpush1.bf16.msra.mxu0 0
        %5526 = vmatprep.subr.bf16.mxu0 0
        %5527 = vmatpush1.bf16.msra.mxu0 0
        %5528 = vmatprep.subr.bf16.mxu0 0
        %5529 = vmatpush1.bf16.msra.mxu0 0
        %5530 = vmatprep.subr.bf16.mxu0 0
        %5531 = vmatpush1.bf16.msra.mxu0 0
        %5532 = vmatprep.subr.bf16.mxu0 0
        %5533 = vmatpush1.bf16.msra.mxu0 0
        %5534 = vmatprep.subr.bf16.mxu0 0
        %5535 = vmatpush1.bf16.msra.mxu0 0
        %5536 = vmatprep.subr.bf16.mxu0 0
        %5537 = vmatpush1.bf16.msra.mxu0 0
        %5538 = vmatprep.mubr.bf16.mxu0 0
        %5539 = vmatmul.mubr.bf16.gmra.mrb[0].mxu0 %v5495
        %v5540 = vpop.f32.mrb[0].mxu0
        %v5541 = vadd.f32 0.0, %v5540
        %v5542 = vpop.f32.mrb[0].mxu0
        %v5543 = vadd.f32 0.0, %v5542
        %v5544 = vpop.f32.mrb[0].mxu0
        %v5545 = vadd.f32 0.0, %v5544
        %v5546 = vpop.f32.mrb[0].mxu0
        %v5547 = vadd.f32 0.0, %v5546
        %5548 = vmatprep.mubr.bf16.mxu0 0
        %5549 = vmatmul.mubr.bf16.gmra.mrb[0].mxu0 %v5498
        %v5550 = vpop.f32.mrb[0].mxu0
        %v5551 = vadd.f32 0.0, %v5550
        %v5552 = vpop.f32.mrb[0].mxu0
        %v5553 = vadd.f32 0.0, %v5552
        %v5554 = vpop.f32.mrb[0].mxu0
        %v5555 = vadd.f32 0.0, %v5554
        %v5556 = vpop.f32.mrb[0].mxu0
        %v5557 = vadd.f32 0.0, %v5556
        %5558 = vmatprep.mubr.bf16.mxu0 0
        %5559 = vmatmul.mubr.bf16.gmra.mrb[0].mxu0 %v5501
        %v5560 = vpop.f32.mrb[0].mxu0
        %v5561 = vadd.f32 0.0, %v5560
        %v5562 = vpop.f32.mrb[0].mxu0
        %v5563 = vadd.f32 0.0, %v5562
        %v5564 = vpop.f32.mrb[0].mxu0
        %v5565 = vadd.f32 0.0, %v5564
        %v5566 = vpop.f32.mrb[0].mxu0
        %v5567 = vadd.f32 0.0, %v5566
        %5568 = vmatprep.mubr.bf16.mxu0 0
        %5569 = vmatmul.mubr.bf16.gmra.mrb[0].mxu0 %v5504
        %v5570 = vpop.f32.mrb[0].mxu0
        %v5571 = vadd.f32 0.0, %v5570
        %v5572 = vpop.f32.mrb[0].mxu0
        %v5573 = vadd.f32 0.0, %v5572
        %v5574 = vpop.f32.mrb[0].mxu0
        %v5575 = vadd.f32 0.0, %v5574
        %v5576 = vpop.f32.mrb[0].mxu0
        %v5577 = vadd.f32 0.0, %v5576
        %5578 = vdwg.mxu0
        %v5579 = vadd.f32 %v5396, %v5541
        %v5580 = vadd.f32 %v5398, %v5543
        %v5581 = vadd.f32 %v5400, %v5545
        %v5582 = vadd.f32 %v5402, %v5547
        %v5583 = vadd.f32 %v5406, %v5551
        %v5584 = vadd.f32 %v5408, %v5553
        %v5585 = vadd.f32 %v5410, %v5555
        %v5586 = vadd.f32 %v5412, %v5557
        %v5587 = vadd.f32 %v5416, %v5561
        %v5588 = vadd.f32 %v5418, %v5563
        %v5589 = vadd.f32 %v5420, %v5565
        %v5590 = vadd.f32 %v5422, %v5567
        %v5591 = vadd.f32 %v5426, %v5571
        %v5592 = vadd.f32 %v5428, %v5573
        %v5593 = vadd.f32 %v5430, %v5575
        %v5594 = vadd.f32 %v5432, %v5577
        %v5595 = vld [vmem:[%s2 + $0xa0] sm:$0xff]
        %v5596 = vld [vmem:[%s2 + $0xa8] sm:$0xff]
        %v5597 = vld [vmem:[%s2 + $0xb0] sm:$0xff]
        %v5598 = vld [vmem:[%s2 + $0xb8] sm:$0xff]
        %v5599 = vld [vmem:[%s2 + $0xc0] sm:$0xff]
        %v5600 = vld [vmem:[%s2 + $0xc8] sm:$0xff]
        %v5601 = vld [vmem:[%s2 + $0xd0] sm:$0xff]
        %v5602 = vld [vmem:[%s2 + $0xd8] sm:$0xff]
        %5604 = vset.pattern.permute.xlu0 0
        %5605 = vperm.xlu0 %5604, %v5595
        %v5606 = vpop.permute.xlu0 %5605
        %5609 = vset.pattern.permute.xlu0 0
        %5610 = vperm.xlu0 %5609, %v5596
        %v5611 = vpop.permute.xlu0 %5610
        %5614 = vset.pattern.permute.xlu0 0
        %5615 = vperm.xlu0 %5614, %v5597
        %v5616 = vpop.permute.xlu0 %5615
        %5619 = vset.pattern.permute.xlu0 0
        %5620 = vperm.xlu0 %5619, %v5598
        %v5621 = vpop.permute.xlu0 %5620
        %5624 = vset.pattern.permute.xlu0 0
        %5625 = vperm.xlu0 %5624, %v5599
        %v5626 = vpop.permute.xlu0 %5625
        %5629 = vset.pattern.permute.xlu0 0
        %5630 = vperm.xlu0 %5629, %v5600
        %v5631 = vpop.permute.xlu0 %5630
        %5634 = vset.pattern.permute.xlu0 0
        %5635 = vperm.xlu0 %5634, %v5601
        %v5636 = vpop.permute.xlu0 %5635
        %5639 = vset.pattern.permute.xlu0 0
        %5640 = vperm.xlu0 %5639, %v5602
        %v5641 = vpop.permute.xlu0 %5640
        %v5643 = vadd.f32 %v5579, %v5606
        %v5644 = vadd.f32 %v5580, %v5606
        %v5645 = vadd.f32 %v5581, %v5611
        %v5646 = vadd.f32 %v5582, %v5611
        %v5647 = vadd.f32 %v5583, %v5616
        %v5648 = vadd.f32 %v5584, %v5616
        %v5649 = vadd.f32 %v5585, %v5621
        %v5650 = vadd.f32 %v5586, %v5621
        %v5651 = vadd.f32 %v5587, %v5626
        %v5652 = vadd.f32 %v5588, %v5626
        %v5653 = vadd.f32 %v5589, %v5631
        %v5654 = vadd.f32 %v5590, %v5631
        %v5655 = vadd.f32 %v5591, %v5636
        %v5656 = vadd.f32 %v5592, %v5636
        %v5657 = vadd.f32 %v5593, %v5641
        %v5658 = vadd.f32 %v5594, %v5641
        %v5659 = vmax.f32 %v5643, 0.0
        %v5660 = vmax.f32 %v5644, 0.0
        %v5661 = vmax.f32 %v5645, 0.0
        %v5662 = vmax.f32 %v5646, 0.0
        %v5663 = vmax.f32 %v5647, 0.0
        %v5664 = vmax.f32 %v5648, 0.0
        %v5665 = vmax.f32 %v5649, 0.0
        %v5666 = vmax.f32 %v5650, 0.0
        %v5667 = vmax.f32 %v5651, 0.0
        %v5668 = vmax.f32 %v5652, 0.0
        %v5669 = vmax.f32 %v5653, 0.0
        %v5670 = vmax.f32 %v5654, 0.0
        %v5671 = vmax.f32 %v5655, 0.0
        %v5672 = vmax.f32 %v5656, 0.0
        %v5673 = vmax.f32 %v5657, 0.0
        %v5674 = vmax.f32 %v5658, 0.0
        %v5675 = vpack.c.bf16 %v5661, %v5659
        %v5676 = vpack.c.bf16 %v5662, %v5660
        %v5677 = vpack.c.bf16 %v5665, %v5663
        %v5678 = vpack.c.bf16 %v5666, %v5664
        %v5679 = vpack.c.bf16 %v5669, %v5667
        %v5680 = vpack.c.bf16 %v5670, %v5668
        %v5681 = vpack.c.bf16 %v5673, %v5671
        %v5682 = vpack.c.bf16 %v5674, %v5672
        %5683 = vst [vmem:[#allocation2 + $0x8] sm:$0xff] %v5675
        %5684 = vst [vmem:[#allocation2 + $0x10] sm:$0xff] %v5676
        %5685 = vst [vmem:[#allocation2 + $0x28] sm:$0xff] %v5677
        %5686 = vst [vmem:[#allocation2 + $0x30] sm:$0xff] %v5678
        %5687 = vst [vmem:[#allocation2 + $0x48] sm:$0xff] %v5679
        %5688 = vst [vmem:[#allocation2 + $0x50] sm:$0xff] %v5680
        %5689 = vst [vmem:[#allocation2 + $0x68] sm:$0xff] %v5681
        %5690 = vst [vmem:[#allocation2 + $0x70] sm:$0xff] %v5682
        %v5691 = vld [vmem:[#allocation6 + $0x130] sm:$0xf]
        %v5692 = vld [vmem:[#allocation6 + $0x134] sm:$0xf]
        %v5693 = vld [vmem:[#allocation6 + $0x138] sm:$0xf]
        %v5694 = vld [vmem:[#allocation6 + $0x13c] sm:$0xf]
        %v5695 = vld [vmem:[#allocation6 + $0x140] sm:$0xf]
        %v5696 = vld [vmem:[#allocation6 + $0x144] sm:$0xf]
        %v5697 = vld [vmem:[#allocation6 + $0x148] sm:$0xf]
        %v5698 = vld [vmem:[#allocation6 + $0x14c] sm:$0xf]
        %v5699 = vld [vmem:[#allocation2] sm:$0xff]
        %v5700 = vld [vmem:[#allocation2 + $0x8] sm:$0xff]
        %v5701 = vld [vmem:[#allocation2 + $0x10] sm:$0xff]
        %v5702 = vld [vmem:[#allocation2 + $0x20] sm:$0xff]
        %v5703 = vld [vmem:[#allocation2 + $0x28] sm:$0xff]
        %v5704 = vld [vmem:[#allocation2 + $0x30] sm:$0xff]
        %v5705 = vld [vmem:[#allocation2 + $0x40] sm:$0xff]
        %v5706 = vld [vmem:[#allocation2 + $0x48] sm:$0xff]
        %v5707 = vld [vmem:[#allocation2 + $0x50] sm:$0xff]
        %v5708 = vld [vmem:[#allocation2 + $0x60] sm:$0xff]
        %v5709 = vld [vmem:[#allocation2 + $0x68] sm:$0xff]
        %v5710 = vld [vmem:[#allocation2 + $0x70] sm:$0xff]
        %v5711 = vld [vmem:[#allocation6 + $0x150] sm:$0xf]
        %v5712 = vld [vmem:[#allocation6 + $0x154] sm:$0xf]
        %v5713 = vld [vmem:[#allocation6 + $0x158] sm:$0xf]
        %v5714 = vld [vmem:[#allocation6 + $0x15c] sm:$0xf]
        %v5715 = vld [vmem:[#allocation6 + $0x160] sm:$0xf]
        %v5716 = vld [vmem:[#allocation6 + $0x164] sm:$0xf]
        %v5717 = vld [vmem:[#allocation6 + $0x168] sm:$0xf]
        %v5718 = vld [vmem:[#allocation6 + $0x16c] sm:$0xf]
        %v5727 = vunpack.c.l.b16 %v5711
        %v5728 = vunpack.c.l.b16 %v5712
        %v5729 = vunpack.c.l.b16 %v5713
        %v5730 = vunpack.c.l.b16 %v5714
        %v5731 = vunpack.c.l.b16 %v5715
        %v5732 = vunpack.c.l.b16 %v5716
        %v5733 = vunpack.c.l.b16 %v5717
        %v5734 = vunpack.c.l.b16 %v5718
        %v5735 = vpack.c.b16 %v5728, %v5727
        %v5736 = vpack.c.b16 %v5730, %v5729
        %v5737 = vpack.c.b16 %v5732, %v5731
        %v5738 = vpack.c.b16 %v5734, %v5733
        %v5740 = vsel %vm2299, %v5735, 0
        %v5743 = vsel %vm2299, %v5736, 0
        %v5746 = vsel %vm2299, %v5737, 0
        %v5749 = vsel %vm2299, %v5738, 0
        %5751 = vmatprep.subr.bf16.mxu0 %v5701
        %5752 = vmatpush1.bf16.msra.mxu0 %v5700
        %5753 = vmatprep.subr.bf16.mxu0 %v5704
        %5754 = vmatpush1.bf16.msra.mxu0 %v5703
        %5755 = vmatprep.subr.bf16.mxu0 %v5707
        %5756 = vmatpush1.bf16.msra.mxu0 %v5706
        %5757 = vmatprep.subr.bf16.mxu0 %v5710
        %5758 = vmatpush1.bf16.msra.mxu0 %v5709
        %5759 = vmatprep.subr.bf16.mxu0 0
        %5760 = vmatpush1.bf16.msra.mxu0 0
        %5761 = vmatprep.subr.bf16.mxu0 0
        %5762 = vmatpush1.bf16.msra.mxu0 0
        %5763 = vmatprep.subr.bf16.mxu0 0
        %5764 = vmatpush1.bf16.msra.mxu0 0
        %5765 = vmatprep.subr.bf16.mxu0 0
        %5766 = vmatpush1.bf16.msra.mxu0 0
        %5767 = vmatprep.subr.bf16.mxu0 0
        %5768 = vmatpush1.bf16.msra.mxu0 0
        %5769 = vmatprep.subr.bf16.mxu0 0
        %5770 = vmatpush1.bf16.msra.mxu0 0
        %5771 = vmatprep.subr.bf16.mxu0 0
        %5772 = vmatpush1.bf16.msra.mxu0 0
        %5773 = vmatprep.subr.bf16.mxu0 0
        %5774 = vmatpush1.bf16.msra.mxu0 0
        %5775 = vmatprep.subr.bf16.mxu0 0
        %5776 = vmatpush1.bf16.msra.mxu0 0
        %5777 = vmatprep.subr.bf16.mxu0 0
        %5778 = vmatpush1.bf16.msra.mxu0 0
        %5779 = vmatprep.subr.bf16.mxu0 0
        %5780 = vmatpush1.bf16.msra.mxu0 0
        %5781 = vmatprep.subr.bf16.mxu0 0
        %5782 = vmatpush1.bf16.msra.mxu0 0
        %5783 = vmatprep.mubr.bf16.mxu0 0
        %5784 = vmatmul.mubr.bf16.gmra.mrb[0].mxu0 %v5740
        %v5785 = vpop.f32.mrb[0].mxu0
        %v5786 = vadd.f32 0.0, %v5785
        %v5787 = vpop.f32.mrb[0].mxu0
        %v5788 = vadd.f32 0.0, %v5787
        %v5789 = vpop.f32.mrb[0].mxu0
        %v5790 = vadd.f32 0.0, %v5789
        %v5791 = vpop.f32.mrb[0].mxu0
        %v5792 = vadd.f32 0.0, %v5791
        %5793 = vmatprep.mubr.bf16.mxu0 0
        %5794 = vmatmul.mubr.bf16.gmra.mrb[0].mxu0 %v5743
        %v5795 = vpop.f32.mrb[0].mxu0
        %v5796 = vadd.f32 0.0, %v5795
        %v5797 = vpop.f32.mrb[0].mxu0
        %v5798 = vadd.f32 0.0, %v5797
        %v5799 = vpop.f32.mrb[0].mxu0
        %v5800 = vadd.f32 0.0, %v5799
        %v5801 = vpop.f32.mrb[0].mxu0
        %v5802 = vadd.f32 0.0, %v5801
        %5803 = vmatprep.mubr.bf16.mxu0 0
        %5804 = vmatmul.mubr.bf16.gmra.mrb[0].mxu0 %v5746
        %v5805 = vpop.f32.mrb[0].mxu0
        %v5806 = vadd.f32 0.0, %v5805
        %v5807 = vpop.f32.mrb[0].mxu0
        %v5808 = vadd.f32 0.0, %v5807
        %v5809 = vpop.f32.mrb[0].mxu0
        %v5810 = vadd.f32 0.0, %v5809
        %v5811 = vpop.f32.mrb[0].mxu0
        %v5812 = vadd.f32 0.0, %v5811
        %5813 = vmatprep.mubr.bf16.mxu0 0
        %5814 = vmatmul.mubr.bf16.gmra.mrb[0].mxu0 %v5749
        %v5815 = vpop.f32.mrb[0].mxu0
        %v5816 = vadd.f32 0.0, %v5815
        %v5817 = vpop.f32.mrb[0].mxu0
        %v5818 = vadd.f32 0.0, %v5817
        %v5819 = vpop.f32.mrb[0].mxu0
        %v5820 = vadd.f32 0.0, %v5819
        %v5821 = vpop.f32.mrb[0].mxu0
        %v5822 = vadd.f32 0.0, %v5821
        %5823 = vdwg.mxu0
        %v5832 = vunpack.c.l.b16 %v5691
        %v5833 = vunpack.c.l.b16 %v5692
        %v5834 = vunpack.c.l.b16 %v5693
        %v5835 = vunpack.c.l.b16 %v5694
        %v5836 = vunpack.c.l.b16 %v5695
        %v5837 = vunpack.c.l.b16 %v5696
        %v5838 = vunpack.c.l.b16 %v5697
        %v5839 = vunpack.c.l.b16 %v5698
        %v5840 = vpack.c.b16 %v5833, %v5832
        %v5841 = vpack.c.b16 %v5835, %v5834
        %v5842 = vpack.c.b16 %v5837, %v5836
        %v5843 = vpack.c.b16 %v5839, %v5838
        %5856 = vrot.lane.b32.xlu0 %v5699, 4
        %v5857 = vpop.permute.xlu0 %5856
        %5858 = vrot.lane.b32.xlu0 %v5700, 4
        %v5859 = vpop.permute.xlu0 %5858
        %5860 = vrot.lane.b32.xlu0 %v5701, 4
        %v5861 = vpop.permute.xlu0 %5860
        %5862 = vrot.lane.b32.xlu0 %v5702, 4
        %v5863 = vpop.permute.xlu0 %5862
        %5864 = vrot.lane.b32.xlu0 %v5703, 4
        %v5865 = vpop.permute.xlu0 %5864
        %5866 = vrot.lane.b32.xlu0 %v5704, 4
        %v5867 = vpop.permute.xlu0 %5866
        %5868 = vrot.lane.b32.xlu0 %v5705, 4
        %v5869 = vpop.permute.xlu0 %5868
        %5870 = vrot.lane.b32.xlu0 %v5706, 4
        %v5871 = vpop.permute.xlu0 %5870
        %5872 = vrot.lane.b32.xlu0 %v5707, 4
        %v5873 = vpop.permute.xlu0 %5872
        %5874 = vrot.lane.b32.xlu0 %v5708, 4
        %v5875 = vpop.permute.xlu0 %5874
        %5876 = vrot.lane.b32.xlu0 %v5709, 4
        %v5877 = vpop.permute.xlu0 %5876
        %5878 = vrot.lane.b32.xlu0 %v5710, 4
        %v5879 = vpop.permute.xlu0 %5878
        %v5880 = vsel %vm1899, %v5857, %v5859
        %v5881 = vsel %vm1899, %v5859, %v5861
        %v5882 = vsel %vm1899, %v5863, %v5865
        %v5883 = vsel %vm1899, %v5865, %v5867
        %v5884 = vsel %vm1899, %v5869, %v5871
        %v5885 = vsel %vm1899, %v5871, %v5873
        %v5886 = vsel %vm1899, %v5875, %v5877
        %v5887 = vsel %vm1899, %v5877, %v5879
        %v5897 = vsel %vm2299, %v5840, 0
        %v5900 = vsel %vm2299, %v5841, 0
        %v5903 = vsel %vm2299, %v5842, 0
        %v5906 = vsel %vm2299, %v5843, 0
        %5908 = vmatprep.subr.bf16.mxu0 %v5881
        %5909 = vmatpush1.bf16.msra.mxu0 %v5880
        %5910 = vmatprep.subr.bf16.mxu0 %v5883
        %5911 = vmatpush1.bf16.msra.mxu0 %v5882
        %5912 = vmatprep.subr.bf16.mxu0 %v5885
        %5913 = vmatpush1.bf16.msra.mxu0 %v5884
        %5914 = vmatprep.subr.bf16.mxu0 %v5887
        %5915 = vmatpush1.bf16.msra.mxu0 %v5886
        %5916 = vmatprep.subr.bf16.mxu0 0
        %5917 = vmatpush1.bf16.msra.mxu0 0
        %5918 = vmatprep.subr.bf16.mxu0 0
        %5919 = vmatpush1.bf16.msra.mxu0 0
        %5920 = vmatprep.subr.bf16.mxu0 0
        %5921 = vmatpush1.bf16.msra.mxu0 0
        %5922 = vmatprep.subr.bf16.mxu0 0
        %5923 = vmatpush1.bf16.msra.mxu0 0
        %5924 = vmatprep.subr.bf16.mxu0 0
        %5925 = vmatpush1.bf16.msra.mxu0 0
        %5926 = vmatprep.subr.bf16.mxu0 0
        %5927 = vmatpush1.bf16.msra.mxu0 0
        %5928 = vmatprep.subr.bf16.mxu0 0
        %5929 = vmatpush1.bf16.msra.mxu0 0
        %5930 = vmatprep.subr.bf16.mxu0 0
        %5931 = vmatpush1.bf16.msra.mxu0 0
        %5932 = vmatprep.subr.bf16.mxu0 0
        %5933 = vmatpush1.bf16.msra.mxu0 0
        %5934 = vmatprep.subr.bf16.mxu0 0
        %5935 = vmatpush1.bf16.msra.mxu0 0
        %5936 = vmatprep.subr.bf16.mxu0 0
        %5937 = vmatpush1.bf16.msra.mxu0 0
        %5938 = vmatprep.subr.bf16.mxu0 0
        %5939 = vmatpush1.bf16.msra.mxu0 0
        %5940 = vmatprep.mubr.bf16.mxu0 0
        %5941 = vmatmul.mubr.bf16.gmra.mrb[0].mxu0 %v5897
        %v5942 = vpop.f32.mrb[0].mxu0
        %v5943 = vadd.f32 %v5786, %v5942
        %v5944 = vpop.f32.mrb[0].mxu0
        %v5945 = vadd.f32 %v5788, %v5944
        %v5946 = vpop.f32.mrb[0].mxu0
        %v5947 = vadd.f32 %v5790, %v5946
        %v5948 = vpop.f32.mrb[0].mxu0
        %v5949 = vadd.f32 %v5792, %v5948
        %5950 = vmatprep.mubr.bf16.mxu0 0
        %5951 = vmatmul.mubr.bf16.gmra.mrb[0].mxu0 %v5900
        %v5952 = vpop.f32.mrb[0].mxu0
        %v5953 = vadd.f32 %v5796, %v5952
        %v5954 = vpop.f32.mrb[0].mxu0
        %v5955 = vadd.f32 %v5798, %v5954
        %v5956 = vpop.f32.mrb[0].mxu0
        %v5957 = vadd.f32 %v5800, %v5956
        %v5958 = vpop.f32.mrb[0].mxu0
        %v5959 = vadd.f32 %v5802, %v5958
        %5960 = vmatprep.mubr.bf16.mxu0 0
        %5961 = vmatmul.mubr.bf16.gmra.mrb[0].mxu0 %v5903
        %v5962 = vpop.f32.mrb[0].mxu0
        %v5963 = vadd.f32 %v5806, %v5962
        %v5964 = vpop.f32.mrb[0].mxu0
        %v5965 = vadd.f32 %v5808, %v5964
        %v5966 = vpop.f32.mrb[0].mxu0
        %v5967 = vadd.f32 %v5810, %v5966
        %v5968 = vpop.f32.mrb[0].mxu0
        %v5969 = vadd.f32 %v5812, %v5968
        %5970 = vmatprep.mubr.bf16.mxu0 0
        %5971 = vmatmul.mubr.bf16.gmra.mrb[0].mxu0 %v5906
        %v5972 = vpop.f32.mrb[0].mxu0
        %v5973 = vadd.f32 %v5816, %v5972
        %v5974 = vpop.f32.mrb[0].mxu0
        %v5975 = vadd.f32 %v5818, %v5974
        %v5976 = vpop.f32.mrb[0].mxu0
        %v5977 = vadd.f32 %v5820, %v5976
        %v5978 = vpop.f32.mrb[0].mxu0
        %v5979 = vadd.f32 %v5822, %v5978
        %5980 = vdwg.mxu0
        %v5981 = vld [vmem:[#allocation6 + $0x170] sm:$0xf]
        %v5982 = vld [vmem:[#allocation6 + $0x174] sm:$0xf]
        %v5983 = vld [vmem:[#allocation6 + $0x178] sm:$0xf]
        %v5984 = vld [vmem:[#allocation6 + $0x17c] sm:$0xf]
        %v5985 = vld [vmem:[#allocation6 + $0x180] sm:$0xf]
        %v5986 = vld [vmem:[#allocation6 + $0x184] sm:$0xf]
        %v5987 = vld [vmem:[#allocation6 + $0x188] sm:$0xf]
        %v5988 = vld [vmem:[#allocation6 + $0x18c] sm:$0xf]
        %v5989 = vld [vmem:[#allocation2 + $0x8] sm:$0xff]
        %v5990 = vld [vmem:[#allocation2 + $0x10] sm:$0xff]
        %v5991 = vld [vmem:[#allocation2 + $0x18] sm:$0xff]
        %v5992 = vld [vmem:[#allocation2 + $0x28] sm:$0xff]
        %v5993 = vld [vmem:[#allocation2 + $0x30] sm:$0xff]
        %v5994 = vld [vmem:[#allocation2 + $0x38] sm:$0xff]
        %v5995 = vld [vmem:[#allocation2 + $0x48] sm:$0xff]
        %v5996 = vld [vmem:[#allocation2 + $0x50] sm:$0xff]
        %v5997 = vld [vmem:[#allocation2 + $0x58] sm:$0xff]
        %v5998 = vld [vmem:[#allocation2 + $0x68] sm:$0xff]
        %v5999 = vld [vmem:[#allocation2 + $0x70] sm:$0xff]
        %v6000 = vld [vmem:[#allocation2 + $0x78] sm:$0xff]
        %v6009 = vunpack.c.l.b16 %v5981
        %v6010 = vunpack.c.l.b16 %v5982
        %v6011 = vunpack.c.l.b16 %v5983
        %v6012 = vunpack.c.l.b16 %v5984
        %v6013 = vunpack.c.l.b16 %v5985
        %v6014 = vunpack.c.l.b16 %v5986
        %v6015 = vunpack.c.l.b16 %v5987
        %v6016 = vunpack.c.l.b16 %v5988
        %v6017 = vpack.c.b16 %v6010, %v6009
        %v6018 = vpack.c.b16 %v6012, %v6011
        %v6019 = vpack.c.b16 %v6014, %v6013
        %v6020 = vpack.c.b16 %v6016, %v6015
        %6033 = vrot.lane.b32.xlu0 %v5989, 124
        %v6034 = vpop.permute.xlu0 %6033
        %6035 = vrot.lane.b32.xlu0 %v5990, 124
        %v6036 = vpop.permute.xlu0 %6035
        %6037 = vrot.lane.b32.xlu0 %v5991, 124
        %v6038 = vpop.permute.xlu0 %6037
        %6039 = vrot.lane.b32.xlu0 %v5992, 124
        %v6040 = vpop.permute.xlu0 %6039
        %6041 = vrot.lane.b32.xlu0 %v5993, 124
        %v6042 = vpop.permute.xlu0 %6041
        %6043 = vrot.lane.b32.xlu0 %v5994, 124
        %v6044 = vpop.permute.xlu0 %6043
        %6045 = vrot.lane.b32.xlu0 %v5995, 124
        %v6046 = vpop.permute.xlu0 %6045
        %6047 = vrot.lane.b32.xlu0 %v5996, 124
        %v6048 = vpop.permute.xlu0 %6047
        %6049 = vrot.lane.b32.xlu0 %v5997, 124
        %v6050 = vpop.permute.xlu0 %6049
        %6051 = vrot.lane.b32.xlu0 %v5998, 124
        %v6052 = vpop.permute.xlu0 %6051
        %6053 = vrot.lane.b32.xlu0 %v5999, 124
        %v6054 = vpop.permute.xlu0 %6053
        %6055 = vrot.lane.b32.xlu0 %v6000, 124
        %v6056 = vpop.permute.xlu0 %6055
        %v6057 = vsel %vm2045, %v6034, %v6036
        %v6058 = vsel %vm2045, %v6036, %v6038
        %v6059 = vsel %vm2045, %v6040, %v6042
        %v6060 = vsel %vm2045, %v6042, %v6044
        %v6061 = vsel %vm2045, %v6046, %v6048
        %v6062 = vsel %vm2045, %v6048, %v6050
        %v6063 = vsel %vm2045, %v6052, %v6054
        %v6064 = vsel %vm2045, %v6054, %v6056
        %v6074 = vsel %vm2299, %v6017, 0
        %v6077 = vsel %vm2299, %v6018, 0
        %v6080 = vsel %vm2299, %v6019, 0
        %v6083 = vsel %vm2299, %v6020, 0
        %6085 = vmatprep.subr.bf16.mxu0 %v6058
        %6086 = vmatpush1.bf16.msra.mxu0 %v6057
        %6087 = vmatprep.subr.bf16.mxu0 %v6060
        %6088 = vmatpush1.bf16.msra.mxu0 %v6059
        %6089 = vmatprep.subr.bf16.mxu0 %v6062
        %6090 = vmatpush1.bf16.msra.mxu0 %v6061
        %6091 = vmatprep.subr.bf16.mxu0 %v6064
        %6092 = vmatpush1.bf16.msra.mxu0 %v6063
        %6093 = vmatprep.subr.bf16.mxu0 0
        %6094 = vmatpush1.bf16.msra.mxu0 0
        %6095 = vmatprep.subr.bf16.mxu0 0
        %6096 = vmatpush1.bf16.msra.mxu0 0
        %6097 = vmatprep.subr.bf16.mxu0 0
        %6098 = vmatpush1.bf16.msra.mxu0 0
        %6099 = vmatprep.subr.bf16.mxu0 0
        %6100 = vmatpush1.bf16.msra.mxu0 0
        %6101 = vmatprep.subr.bf16.mxu0 0
        %6102 = vmatpush1.bf16.msra.mxu0 0
        %6103 = vmatprep.subr.bf16.mxu0 0
        %6104 = vmatpush1.bf16.msra.mxu0 0
        %6105 = vmatprep.subr.bf16.mxu0 0
        %6106 = vmatpush1.bf16.msra.mxu0 0
        %6107 = vmatprep.subr.bf16.mxu0 0
        %6108 = vmatpush1.bf16.msra.mxu0 0
        %6109 = vmatprep.subr.bf16.mxu0 0
        %6110 = vmatpush1.bf16.msra.mxu0 0
        %6111 = vmatprep.subr.bf16.mxu0 0
        %6112 = vmatpush1.bf16.msra.mxu0 0
        %6113 = vmatprep.subr.bf16.mxu0 0
        %6114 = vmatpush1.bf16.msra.mxu0 0
        %6115 = vmatprep.subr.bf16.mxu0 0
        %6116 = vmatpush1.bf16.msra.mxu0 0
        %6117 = vmatprep.mubr.bf16.mxu0 0
        %6118 = vmatmul.mubr.bf16.gmra.mrb[0].mxu0 %v6074
        %v6119 = vpop.f32.mrb[0].mxu0
        %v6120 = vadd.f32 0.0, %v6119
        %v6121 = vpop.f32.mrb[0].mxu0
        %v6122 = vadd.f32 0.0, %v6121
        %v6123 = vpop.f32.mrb[0].mxu0
        %v6124 = vadd.f32 0.0, %v6123
        %v6125 = vpop.f32.mrb[0].mxu0
        %v6126 = vadd.f32 0.0, %v6125
        %6127 = vmatprep.mubr.bf16.mxu0 0
        %6128 = vmatmul.mubr.bf16.gmra.mrb[0].mxu0 %v6077
        %v6129 = vpop.f32.mrb[0].mxu0
        %v6130 = vadd.f32 0.0, %v6129
        %v6131 = vpop.f32.mrb[0].mxu0
        %v6132 = vadd.f32 0.0, %v6131
        %v6133 = vpop.f32.mrb[0].mxu0
        %v6134 = vadd.f32 0.0, %v6133
        %v6135 = vpop.f32.mrb[0].mxu0
        %v6136 = vadd.f32 0.0, %v6135
        %6137 = vmatprep.mubr.bf16.mxu0 0
        %6138 = vmatmul.mubr.bf16.gmra.mrb[0].mxu0 %v6080
        %v6139 = vpop.f32.mrb[0].mxu0
        %v6140 = vadd.f32 0.0, %v6139
        %v6141 = vpop.f32.mrb[0].mxu0
        %v6142 = vadd.f32 0.0, %v6141
        %v6143 = vpop.f32.mrb[0].mxu0
        %v6144 = vadd.f32 0.0, %v6143
        %v6145 = vpop.f32.mrb[0].mxu0
        %v6146 = vadd.f32 0.0, %v6145
        %6147 = vmatprep.mubr.bf16.mxu0 0
        %6148 = vmatmul.mubr.bf16.gmra.mrb[0].mxu0 %v6083
        %v6149 = vpop.f32.mrb[0].mxu0
        %v6150 = vadd.f32 0.0, %v6149
        %v6151 = vpop.f32.mrb[0].mxu0
        %v6152 = vadd.f32 0.0, %v6151
        %v6153 = vpop.f32.mrb[0].mxu0
        %v6154 = vadd.f32 0.0, %v6153
        %v6155 = vpop.f32.mrb[0].mxu0
        %v6156 = vadd.f32 0.0, %v6155
        %6157 = vdwg.mxu0
        %v6158 = vadd.f32 %v5943, %v6120
        %v6159 = vadd.f32 %v5945, %v6122
        %v6160 = vadd.f32 %v5947, %v6124
        %v6161 = vadd.f32 %v5949, %v6126
        %v6162 = vadd.f32 %v5953, %v6130
        %v6163 = vadd.f32 %v5955, %v6132
        %v6164 = vadd.f32 %v5957, %v6134
        %v6165 = vadd.f32 %v5959, %v6136
        %v6166 = vadd.f32 %v5963, %v6140
        %v6167 = vadd.f32 %v5965, %v6142
        %v6168 = vadd.f32 %v5967, %v6144
        %v6169 = vadd.f32 %v5969, %v6146
        %v6170 = vadd.f32 %v5973, %v6150
        %v6171 = vadd.f32 %v5975, %v6152
        %v6172 = vadd.f32 %v5977, %v6154
        %v6173 = vadd.f32 %v5979, %v6156
        %v6174 = vld [vmem:[%s2 + $0xe0] sm:$0xff]
        %v6175 = vld [vmem:[%s2 + $0xe8] sm:$0xff]
        %v6176 = vld [vmem:[%s2 + $0xf0] sm:$0xff]
        %v6177 = vld [vmem:[%s2 + $0xf8] sm:$0xff]
        %v6178 = vld [vmem:[%s2 + $0x100] sm:$0xff]
        %v6179 = vld [vmem:[%s2 + $0x108] sm:$0xff]
        %v6180 = vld [vmem:[%s2 + $0x110] sm:$0xff]
        %v6181 = vld [vmem:[%s2 + $0x118] sm:$0xff]
        %6183 = vset.pattern.permute.xlu0 0
        %6184 = vperm.xlu0 %6183, %v6174
        %v6185 = vpop.permute.xlu0 %6184
        %6188 = vset.pattern.permute.xlu0 0
        %6189 = vperm.xlu0 %6188, %v6175
        %v6190 = vpop.permute.xlu0 %6189
        %6193 = vset.pattern.permute.xlu0 0
        %6194 = vperm.xlu0 %6193, %v6176
        %v6195 = vpop.permute.xlu0 %6194
        %6198 = vset.pattern.permute.xlu0 0
        %6199 = vperm.xlu0 %6198, %v6177
        %v6200 = vpop.permute.xlu0 %6199
        %6203 = vset.pattern.permute.xlu0 0
        %6204 = vperm.xlu0 %6203, %v6178
        %v6205 = vpop.permute.xlu0 %6204
        %6208 = vset.pattern.permute.xlu0 0
        %6209 = vperm.xlu0 %6208, %v6179
        %v6210 = vpop.permute.xlu0 %6209
        %6213 = vset.pattern.permute.xlu0 0
        %6214 = vperm.xlu0 %6213, %v6180
        %v6215 = vpop.permute.xlu0 %6214
        %6218 = vset.pattern.permute.xlu0 0
        %6219 = vperm.xlu0 %6218, %v6181
        %v6220 = vpop.permute.xlu0 %6219
        %v6222 = vadd.f32 %v6158, %v6185
        %v6223 = vadd.f32 %v6159, %v6185
        %v6224 = vadd.f32 %v6160, %v6190
        %v6225 = vadd.f32 %v6161, %v6190
        %v6226 = vadd.f32 %v6162, %v6195
        %v6227 = vadd.f32 %v6163, %v6195
        %v6228 = vadd.f32 %v6164, %v6200
        %v6229 = vadd.f32 %v6165, %v6200
        %v6230 = vadd.f32 %v6166, %v6205
        %v6231 = vadd.f32 %v6167, %v6205
        %v6232 = vadd.f32 %v6168, %v6210
        %v6233 = vadd.f32 %v6169, %v6210
        %v6234 = vadd.f32 %v6170, %v6215
        %v6235 = vadd.f32 %v6171, %v6215
        %v6236 = vadd.f32 %v6172, %v6220
        %v6237 = vadd.f32 %v6173, %v6220
        %v6238 = vmax.f32 %v6222, 0.0
        %v6239 = vmax.f32 %v6223, 0.0
        %v6240 = vmax.f32 %v6224, 0.0
        %v6241 = vmax.f32 %v6225, 0.0
        %v6242 = vmax.f32 %v6226, 0.0
        %v6243 = vmax.f32 %v6227, 0.0
        %v6244 = vmax.f32 %v6228, 0.0
        %v6245 = vmax.f32 %v6229, 0.0
        %v6246 = vmax.f32 %v6230, 0.0
        %v6247 = vmax.f32 %v6231, 0.0
        %v6248 = vmax.f32 %v6232, 0.0
        %v6249 = vmax.f32 %v6233, 0.0
        %v6250 = vmax.f32 %v6234, 0.0
        %v6251 = vmax.f32 %v6235, 0.0
        %v6252 = vmax.f32 %v6236, 0.0
        %v6253 = vmax.f32 %v6237, 0.0
        %v6254 = vld [vmem:[#allocation3] sm:$0xff]
        %v6255 = vld [vmem:[#allocation3 + $0x8] sm:$0xff]
        %v6256 = vld [vmem:[#allocation3 + $0x10] sm:$0xff]
        %v6257 = vld [vmem:[#allocation3 + $0x18] sm:$0xff]
        %v6258 = vld [vmem:[#allocation6 + $0x190] sm:$0xf]
        %v6259 = vld [vmem:[#allocation6 + $0x194] sm:$0xf]
        %v6260 = vld [vmem:[#allocation6 + $0x198] sm:$0xf]
        %v6261 = vld [vmem:[#allocation6 + $0x19c] sm:$0xf]
        %v6262 = vld [vmem:[#allocation6 + $0x1a0] sm:$0xf]
        %v6263 = vld [vmem:[#allocation6 + $0x1a4] sm:$0xf]
        %v6264 = vld [vmem:[#allocation6 + $0x1a8] sm:$0xf]
        %v6265 = vld [vmem:[#allocation6 + $0x1ac] sm:$0xf]
        %v6266 = vld [vmem:[%s2 + $0x120] sm:$0xff]
        %v6267 = vld [vmem:[%s2 + $0x128] sm:$0xff]
        %v6268 = vld [vmem:[%s2 + $0x130] sm:$0xff]
        %v6269 = vld [vmem:[%s2 + $0x138] sm:$0xff]
        %v6270 = vld [vmem:[%s2 + $0x140] sm:$0xff]
        %v6271 = vld [vmem:[%s2 + $0x148] sm:$0xff]
        %v6272 = vld [vmem:[%s2 + $0x150] sm:$0xff]
        %v6273 = vld [vmem:[%s2 + $0x158] sm:$0xff]
        %6275 = vset.pattern.permute.xlu0 0
        %6276 = vperm.xlu0 %6275, %v6266
        %v6277 = vpop.permute.xlu0 %6276
        %6280 = vset.pattern.permute.xlu0 0
        %6281 = vperm.xlu0 %6280, %v6267
        %v6282 = vpop.permute.xlu0 %6281
        %6285 = vset.pattern.permute.xlu0 0
        %6286 = vperm.xlu0 %6285, %v6268
        %v6287 = vpop.permute.xlu0 %6286
        %6290 = vset.pattern.permute.xlu0 0
        %6291 = vperm.xlu0 %6290, %v6269
        %v6292 = vpop.permute.xlu0 %6291
        %6295 = vset.pattern.permute.xlu0 0
        %6296 = vperm.xlu0 %6295, %v6270
        %v6297 = vpop.permute.xlu0 %6296
        %6300 = vset.pattern.permute.xlu0 0
        %6301 = vperm.xlu0 %6300, %v6271
        %v6302 = vpop.permute.xlu0 %6301
        %6305 = vset.pattern.permute.xlu0 0
        %6306 = vperm.xlu0 %6305, %v6272
        %v6307 = vpop.permute.xlu0 %6306
        %6310 = vset.pattern.permute.xlu0 0
        %6311 = vperm.xlu0 %6310, %v6273
        %v6312 = vpop.permute.xlu0 %6311
        %v6322 = vunpack.c.l.b16 %v6258
        %v6323 = vunpack.c.l.b16 %v6259
        %v6324 = vunpack.c.l.b16 %v6260
        %v6325 = vunpack.c.l.b16 %v6261
        %v6326 = vunpack.c.l.b16 %v6262
        %v6327 = vunpack.c.l.b16 %v6263
        %v6328 = vunpack.c.l.b16 %v6264
        %v6329 = vunpack.c.l.b16 %v6265
        %v6330 = vpack.c.b16 %v6323, %v6322
        %v6331 = vpack.c.b16 %v6325, %v6324
        %v6332 = vpack.c.b16 %v6327, %v6326
        %v6333 = vpack.c.b16 %v6329, %v6328
        %v6335 = vsel %vm581, %v6330, 0
        %v6338 = vsel %vm581, %v6331, 0
        %v6341 = vsel %vm581, %v6332, 0
        %v6344 = vsel %vm581, %v6333, 0
        %6346 = vmatprep.subr.bf16.mxu0 %v6255
        %6347 = vmatpush1.bf16.msra.mxu0 %v6254
        %6348 = vmatprep.subr.bf16.mxu0 %v6257
        %6349 = vmatpush1.bf16.msra.mxu0 %v6256
        %6350 = vmatprep.subr.bf16.mxu0 0
        %6351 = vmatpush1.bf16.msra.mxu0 0
        %6352 = vmatprep.subr.bf16.mxu0 0
        %6353 = vmatpush1.bf16.msra.mxu0 0
        %6354 = vmatprep.subr.bf16.mxu0 0
        %6355 = vmatpush1.bf16.msra.mxu0 0
        %6356 = vmatprep.subr.bf16.mxu0 0
        %6357 = vmatpush1.bf16.msra.mxu0 0
        %6358 = vmatprep.subr.bf16.mxu0 0
        %6359 = vmatpush1.bf16.msra.mxu0 0
        %6360 = vmatprep.subr.bf16.mxu0 0
        %6361 = vmatpush1.bf16.msra.mxu0 0
        %6362 = vmatprep.subr.bf16.mxu0 0
        %6363 = vmatpush1.bf16.msra.mxu0 0
        %6364 = vmatprep.subr.bf16.mxu0 0
        %6365 = vmatpush1.bf16.msra.mxu0 0
        %6366 = vmatprep.subr.bf16.mxu0 0
        %6367 = vmatpush1.bf16.msra.mxu0 0
        %6368 = vmatprep.subr.bf16.mxu0 0
        %6369 = vmatpush1.bf16.msra.mxu0 0
        %6370 = vmatprep.subr.bf16.mxu0 0
        %6371 = vmatpush1.bf16.msra.mxu0 0
        %6372 = vmatprep.subr.bf16.mxu0 0
        %6373 = vmatpush1.bf16.msra.mxu0 0
        %6374 = vmatprep.subr.bf16.mxu0 0
        %6375 = vmatpush1.bf16.msra.mxu0 0
        %6376 = vmatprep.subr.bf16.mxu0 0
        %6377 = vmatpush1.bf16.msra.mxu0 0
        %6378 = vmatprep.mubr.bf16.mxu0 0
        %6379 = vmatmul.mubr.bf16.gmra.mrb[0].mxu0 %v6335
        %v6380 = vpop.f32.mrb[0].mxu0
        %v6381 = vadd.f32 %v6277, %v6380
        %v6382 = vpop.f32.mrb[0].mxu0
        %v6383 = vadd.f32 %v6277, %v6382
        %v6384 = vpop.f32.mrb[0].mxu0
        %v6385 = vadd.f32 %v6282, %v6384
        %v6386 = vpop.f32.mrb[0].mxu0
        %v6387 = vadd.f32 %v6282, %v6386
        %6388 = vmatprep.mubr.bf16.mxu0 0
        %6389 = vmatmul.mubr.bf16.gmra.mrb[0].mxu0 %v6338
        %v6390 = vpop.f32.mrb[0].mxu0
        %v6391 = vadd.f32 %v6287, %v6390
        %v6392 = vpop.f32.mrb[0].mxu0
        %v6393 = vadd.f32 %v6287, %v6392
        %v6394 = vpop.f32.mrb[0].mxu0
        %v6395 = vadd.f32 %v6292, %v6394
        %v6396 = vpop.f32.mrb[0].mxu0
        %v6397 = vadd.f32 %v6292, %v6396
        %6398 = vmatprep.mubr.bf16.mxu0 0
        %6399 = vmatmul.mubr.bf16.gmra.mrb[0].mxu0 %v6341
        %v6400 = vpop.f32.mrb[0].mxu0
        %v6401 = vadd.f32 %v6297, %v6400
        %v6402 = vpop.f32.mrb[0].mxu0
        %v6403 = vadd.f32 %v6297, %v6402
        %v6404 = vpop.f32.mrb[0].mxu0
        %v6405 = vadd.f32 %v6302, %v6404
        %v6406 = vpop.f32.mrb[0].mxu0
        %v6407 = vadd.f32 %v6302, %v6406
        %6408 = vmatprep.mubr.bf16.mxu0 0
        %6409 = vmatmul.mubr.bf16.gmra.mrb[0].mxu0 %v6344
        %v6410 = vpop.f32.mrb[0].mxu0
        %v6411 = vadd.f32 %v6307, %v6410
        %v6412 = vpop.f32.mrb[0].mxu0
        %v6413 = vadd.f32 %v6307, %v6412
        %v6414 = vpop.f32.mrb[0].mxu0
        %v6415 = vadd.f32 %v6312, %v6414
        %v6416 = vpop.f32.mrb[0].mxu0
        %v6417 = vadd.f32 %v6312, %v6416
        %6418 = vdwg.mxu0
        %v6419 = vadd.f32 %v6238, %v6381
        %v6420 = vadd.f32 %v6239, %v6383
        %v6421 = vadd.f32 %v6240, %v6385
        %v6422 = vadd.f32 %v6241, %v6387
        %v6423 = vadd.f32 %v6242, %v6391
        %v6424 = vadd.f32 %v6243, %v6393
        %v6425 = vadd.f32 %v6244, %v6395
        %v6426 = vadd.f32 %v6245, %v6397
        %v6427 = vadd.f32 %v6246, %v6401
        %v6428 = vadd.f32 %v6247, %v6403
        %v6429 = vadd.f32 %v6248, %v6405
        %v6430 = vadd.f32 %v6249, %v6407
        %v6431 = vadd.f32 %v6250, %v6411
        %v6432 = vadd.f32 %v6251, %v6413
        %v6433 = vadd.f32 %v6252, %v6415
        %v6434 = vadd.f32 %v6253, %v6417
        %v6435 = vmax.f32 %v6419, 0.0
        %v6436 = vmax.f32 %v6420, 0.0
        %v6437 = vmax.f32 %v6421, 0.0
        %v6438 = vmax.f32 %v6422, 0.0
        %v6439 = vmax.f32 %v6423, 0.0
        %v6440 = vmax.f32 %v6424, 0.0
        %v6441 = vmax.f32 %v6425, 0.0
        %v6442 = vmax.f32 %v6426, 0.0
        %v6443 = vmax.f32 %v6427, 0.0
        %v6444 = vmax.f32 %v6428, 0.0
        %v6445 = vmax.f32 %v6429, 0.0
        %v6446 = vmax.f32 %v6430, 0.0
        %v6447 = vmax.f32 %v6431, 0.0
        %v6448 = vmax.f32 %v6432, 0.0
        %v6449 = vmax.f32 %v6433, 0.0
        %v6450 = vmax.f32 %v6434, 0.0
        %v6451 = vpack.c.bf16 %v6437, %v6435
        %v6452 = vpack.c.bf16 %v6438, %v6436
        %v6453 = vpack.c.bf16 %v6441, %v6439
        %v6454 = vpack.c.bf16 %v6442, %v6440
        %v6455 = vpack.c.bf16 %v6445, %v6443
        %v6456 = vpack.c.bf16 %v6446, %v6444
        %v6457 = vpack.c.bf16 %v6449, %v6447
        %v6458 = vpack.c.bf16 %v6450, %v6448
        %6459 = vst [vmem:[#allocation3] sm:$0xff] %v6451
        %6460 = vst [vmem:[#allocation3 + $0x8] sm:$0xff] %v6452
        %6461 = vst [vmem:[#allocation3 + $0x10] sm:$0xff] %v6453
        %6462 = vst [vmem:[#allocation3 + $0x18] sm:$0xff] %v6454
        %6463 = vst [vmem:[#allocation3 + $0x20] sm:$0xff] %v6455
        %6464 = vst [vmem:[#allocation3 + $0x28] sm:$0xff] %v6456
        %6465 = vst [vmem:[#allocation3 + $0x30] sm:$0xff] %v6457
        %6466 = vst [vmem:[#allocation3 + $0x38] sm:$0xff] %v6458
        %v6467 = vld [vmem:[#allocation6 + $0x1b0] sm:$0xf]
        %v6468 = vld [vmem:[#allocation6 + $0x1b4] sm:$0xf]
        %v6469 = vld [vmem:[#allocation6 + $0x1b8] sm:$0xf]
        %v6470 = vld [vmem:[#allocation6 + $0x1bc] sm:$0xf]
        %v6471 = vld [vmem:[#allocation6 + $0x1c0] sm:$0xf]
        %v6472 = vld [vmem:[#allocation6 + $0x1c4] sm:$0xf]
        %v6473 = vld [vmem:[#allocation6 + $0x1c8] sm:$0xf]
        %v6474 = vld [vmem:[#allocation6 + $0x1cc] sm:$0xf]
        %v6475 = vld [vmem:[#allocation6 + $0x1d0] sm:$0xf]
        %v6476 = vld [vmem:[#allocation6 + $0x1d4] sm:$0xf]
        %v6477 = vld [vmem:[#allocation6 + $0x1d8] sm:$0xf]
        %v6478 = vld [vmem:[#allocation6 + $0x1dc] sm:$0xf]
        %v6479 = vld [vmem:[#allocation6 + $0x1e0] sm:$0xf]
        %v6480 = vld [vmem:[#allocation6 + $0x1e4] sm:$0xf]
        %v6481 = vld [vmem:[#allocation6 + $0x1e8] sm:$0xf]
        %v6482 = vld [vmem:[#allocation6 + $0x1ec] sm:$0xf]
        %v6483 = vld [vmem:[#allocation6 + $0x1f0] sm:$0xf]
        %v6484 = vld [vmem:[#allocation6 + $0x1f4] sm:$0xf]
        %v6485 = vld [vmem:[#allocation6 + $0x1f8] sm:$0xf]
        %v6486 = vld [vmem:[#allocation6 + $0x1fc] sm:$0xf]
        %v6487 = vld [vmem:[#allocation6 + $0x200] sm:$0xf]
        %v6488 = vld [vmem:[#allocation6 + $0x204] sm:$0xf]
        %v6489 = vld [vmem:[#allocation6 + $0x208] sm:$0xf]
        %v6490 = vld [vmem:[#allocation6 + $0x20c] sm:$0xf]
        %v6491 = vld [vmem:[#allocation6 + $0x210] sm:$0xf]
        %v6492 = vld [vmem:[#allocation6 + $0x214] sm:$0xf]
        %v6493 = vld [vmem:[#allocation6 + $0x218] sm:$0xf]
        %v6494 = vld [vmem:[#allocation6 + $0x21c] sm:$0xf]
        %v6495 = vld [vmem:[#allocation6 + $0x220] sm:$0xf]
        %v6496 = vld [vmem:[#allocation6 + $0x224] sm:$0xf]
        %v6497 = vld [vmem:[#allocation6 + $0x228] sm:$0xf]
        %v6498 = vld [vmem:[#allocation6 + $0x22c] sm:$0xf]
        %v6499 = vld [vmem:[#allocation6 + $0x230] sm:$0x1]
        %v6500 = vld [vmem:[#allocation3] sm:$0xff]
        %v6501 = vld [vmem:[#allocation3 + $0x8] sm:$0xff]
        %v6502 = vld [vmem:[#allocation3 + $0x10] sm:$0xff]
        %v6503 = vld [vmem:[#allocation3 + $0x18] sm:$0xff]
        %v6504 = vld [vmem:[#allocation3 + $0x20] sm:$0xff]
        %v6505 = vld [vmem:[#allocation3 + $0x28] sm:$0xff]
        %v6506 = vld [vmem:[#allocation3 + $0x30] sm:$0xff]
        %v6507 = vld [vmem:[#allocation3 + $0x38] sm:$0xff]
        %v6508 = vld [vmem:[%s2 + $0x160] sm:$0xff]
        %v6509 = vld [vmem:[%s2 + $0x168] sm:$0xff]
        %v6510 = vld [vmem:[%s2 + $0x170] sm:$0xff]
        %v6511 = vld [vmem:[%s2 + $0x178] sm:$0xff]
        %v6512 = vld [vmem:[%s2 + $0x180] sm:$0xff]
        %v6513 = vld [vmem:[%s2 + $0x188] sm:$0xff]
        %v6514 = vld [vmem:[%s2 + $0x190] sm:$0xff]
        %v6515 = vld [vmem:[%s2 + $0x198] sm:$0xff]
        %v6516 = vld [vmem:[%s2 + $0x1a0] sm:$0xff]
        %v6517 = vld [vmem:[%s2 + $0x1a8] sm:$0xff]
        %v6518 = vld [vmem:[%s2 + $0x1b0] sm:$0xff]
        %v6519 = vld [vmem:[%s2 + $0x1b8] sm:$0xff]
        %v6520 = vld [vmem:[%s2 + $0x1c0] sm:$0xff]
        %v6521 = vld [vmem:[%s2 + $0x1c8] sm:$0xff]
        %v6522 = vld [vmem:[%s2 + $0x1d0] sm:$0xff]
        %v6523 = vld [vmem:[%s2 + $0x1d8] sm:$0xff]
        %v6524 = vld [vmem:[%s2 + $0x1e0] sm:$0xff]
        %v6525 = vld [vmem:[%s2 + $0x1e8] sm:$0xff]
        %v6526 = vld [vmem:[%s2 + $0x1f0] sm:$0xff]
        %v6527 = vld [vmem:[%s2 + $0x1f8] sm:$0xff]
        %v6528 = vld [vmem:[%s2 + $0x200] sm:$0xff]
        %v6529 = vld [vmem:[%s2 + $0x208] sm:$0xff]
        %v6530 = vld [vmem:[%s2 + $0x210] sm:$0xff]
        %v6531 = vld [vmem:[%s2 + $0x218] sm:$0xff]
        %v6532 = vld [vmem:[%s2 + $0x220] sm:$0xff]
        %v6533 = vld [vmem:[%s2 + $0x228] sm:$0xff]
        %v6534 = vld [vmem:[%s2 + $0x230] sm:$0xff]
        %v6535 = vld [vmem:[%s2 + $0x238] sm:$0xff]
        %v6536 = vld [vmem:[%s2 + $0x240] sm:$0xff]
        %v6537 = vld [vmem:[%s2 + $0x248] sm:$0xff]
        %v6538 = vld [vmem:[%s2 + $0x250] sm:$0xff]
        %v6539 = vld [vmem:[%s2 + $0x258] sm:$0xff]
        %v6540 = vld [vmem:[%s2 + $0x260] sm:$0x1]
        %6542 = vset.pattern.permute.xlu0 0
        %6543 = vperm.xlu0 %6542, %v6508
        %v6544 = vpop.permute.xlu0 %6543
        %6547 = vset.pattern.permute.xlu0 0
        %6548 = vperm.xlu0 %6547, %v6509
        %v6549 = vpop.permute.xlu0 %6548
        %6552 = vset.pattern.permute.xlu0 0
        %6553 = vperm.xlu0 %6552, %v6510
        %v6554 = vpop.permute.xlu0 %6553
        %6557 = vset.pattern.permute.xlu0 0
        %6558 = vperm.xlu0 %6557, %v6511
        %v6559 = vpop.permute.xlu0 %6558
        %6562 = vset.pattern.permute.xlu0 0
        %6563 = vperm.xlu0 %6562, %v6512
        %v6564 = vpop.permute.xlu0 %6563
        %6567 = vset.pattern.permute.xlu0 0
        %6568 = vperm.xlu0 %6567, %v6513
        %v6569 = vpop.permute.xlu0 %6568
        %6572 = vset.pattern.permute.xlu0 0
        %6573 = vperm.xlu0 %6572, %v6514
        %v6574 = vpop.permute.xlu0 %6573
        %6577 = vset.pattern.permute.xlu0 0
        %6578 = vperm.xlu0 %6577, %v6515
        %v6579 = vpop.permute.xlu0 %6578
        %6582 = vset.pattern.permute.xlu0 0
        %6583 = vperm.xlu0 %6582, %v6516
        %v6584 = vpop.permute.xlu0 %6583
        %6587 = vset.pattern.permute.xlu0 0
        %6588 = vperm.xlu0 %6587, %v6517
        %v6589 = vpop.permute.xlu0 %6588
        %6592 = vset.pattern.permute.xlu0 0
        %6593 = vperm.xlu0 %6592, %v6518
        %v6594 = vpop.permute.xlu0 %6593
        %6597 = vset.pattern.permute.xlu0 0
        %6598 = vperm.xlu0 %6597, %v6519
        %v6599 = vpop.permute.xlu0 %6598
        %6602 = vset.pattern.permute.xlu0 0
        %6603 = vperm.xlu0 %6602, %v6520
        %v6604 = vpop.permute.xlu0 %6603
        %6607 = vset.pattern.permute.xlu0 0
        %6608 = vperm.xlu0 %6607, %v6521
        %v6609 = vpop.permute.xlu0 %6608
        %6612 = vset.pattern.permute.xlu0 0
        %6613 = vperm.xlu0 %6612, %v6522
        %v6614 = vpop.permute.xlu0 %6613
        %6617 = vset.pattern.permute.xlu0 0
        %6618 = vperm.xlu0 %6617, %v6523
        %v6619 = vpop.permute.xlu0 %6618
        %6622 = vset.pattern.permute.xlu0 0
        %6623 = vperm.xlu0 %6622, %v6524
        %v6624 = vpop.permute.xlu0 %6623
        %6627 = vset.pattern.permute.xlu0 0
        %6628 = vperm.xlu0 %6627, %v6525
        %v6629 = vpop.permute.xlu0 %6628
        %6632 = vset.pattern.permute.xlu0 0
        %6633 = vperm.xlu0 %6632, %v6526
        %v6634 = vpop.permute.xlu0 %6633
        %6637 = vset.pattern.permute.xlu0 0
        %6638 = vperm.xlu0 %6637, %v6527
        %v6639 = vpop.permute.xlu0 %6638
        %6642 = vset.pattern.permute.xlu0 0
        %6643 = vperm.xlu0 %6642, %v6528
        %v6644 = vpop.permute.xlu0 %6643
        %6647 = vset.pattern.permute.xlu0 0
        %6648 = vperm.xlu0 %6647, %v6529
        %v6649 = vpop.permute.xlu0 %6648
        %6652 = vset.pattern.permute.xlu0 0
        %6653 = vperm.xlu0 %6652, %v6530
        %v6654 = vpop.permute.xlu0 %6653
        %6657 = vset.pattern.permute.xlu0 0
        %6658 = vperm.xlu0 %6657, %v6531
        %v6659 = vpop.permute.xlu0 %6658
        %6662 = vset.pattern.permute.xlu0 0
        %6663 = vperm.xlu0 %6662, %v6532
        %v6664 = vpop.permute.xlu0 %6663
        %6667 = vset.pattern.permute.xlu0 0
        %6668 = vperm.xlu0 %6667, %v6533
        %v6669 = vpop.permute.xlu0 %6668
        %6672 = vset.pattern.permute.xlu0 0
        %6673 = vperm.xlu0 %6672, %v6534
        %v6674 = vpop.permute.xlu0 %6673
        %6677 = vset.pattern.permute.xlu0 0
        %6678 = vperm.xlu0 %6677, %v6535
        %v6679 = vpop.permute.xlu0 %6678
        %6682 = vset.pattern.permute.xlu0 0
        %6683 = vperm.xlu0 %6682, %v6536
        %v6684 = vpop.permute.xlu0 %6683
        %6687 = vset.pattern.permute.xlu0 0
        %6688 = vperm.xlu0 %6687, %v6537
        %v6689 = vpop.permute.xlu0 %6688
        %6692 = vset.pattern.permute.xlu0 0
        %6693 = vperm.xlu0 %6692, %v6538
        %v6694 = vpop.permute.xlu0 %6693
        %6697 = vset.pattern.permute.xlu0 0
        %6698 = vperm.xlu0 %6697, %v6539
        %v6699 = vpop.permute.xlu0 %6698
        %6702 = vset.pattern.permute.xlu0 0
        %6703 = vperm.xlu0 %6702, %v6540
        %v6704 = vpop.permute.xlu0 %6703
        %v6739 = vunpack.c.l.b16 %v6467
        %v6740 = vunpack.c.l.b16 %v6468
        %v6741 = vunpack.c.l.b16 %v6469
        %v6742 = vunpack.c.l.b16 %v6470
        %v6743 = vunpack.c.l.b16 %v6471
        %v6744 = vunpack.c.l.b16 %v6472
        %v6745 = vunpack.c.l.b16 %v6473
        %v6746 = vunpack.c.l.b16 %v6474
        %v6747 = vunpack.c.l.b16 %v6475
        %v6748 = vunpack.c.l.b16 %v6476
        %v6749 = vunpack.c.l.b16 %v6477
        %v6750 = vunpack.c.l.b16 %v6478
        %v6751 = vunpack.c.l.b16 %v6479
        %v6752 = vunpack.c.l.b16 %v6480
        %v6753 = vunpack.c.l.b16 %v6481
        %v6754 = vunpack.c.l.b16 %v6482
        %v6755 = vunpack.c.l.b16 %v6483
        %v6756 = vunpack.c.l.b16 %v6484
        %v6757 = vunpack.c.l.b16 %v6485
        %v6758 = vunpack.c.l.b16 %v6486
        %v6759 = vunpack.c.l.b16 %v6487
        %v6760 = vunpack.c.l.b16 %v6488
        %v6761 = vunpack.c.l.b16 %v6489
        %v6762 = vunpack.c.l.b16 %v6490
        %v6763 = vunpack.c.l.b16 %v6491
        %v6764 = vunpack.c.l.b16 %v6492
        %v6765 = vunpack.c.l.b16 %v6493
        %v6766 = vunpack.c.l.b16 %v6494
        %v6767 = vunpack.c.l.b16 %v6495
        %v6768 = vunpack.c.l.b16 %v6496
        %v6769 = vunpack.c.l.b16 %v6497
        %v6770 = vunpack.c.l.b16 %v6498
        %v6771 = vunpack.c.l.b16 %v6499
        %v6772 = vpack.c.b16 %v6740, %v6739
        %v6773 = vpack.c.b16 %v6742, %v6741
        %v6774 = vpack.c.b16 %v6744, %v6743
        %v6775 = vpack.c.b16 %v6746, %v6745
        %v6776 = vpack.c.b16 %v6748, %v6747
        %v6777 = vpack.c.b16 %v6750, %v6749
        %v6778 = vpack.c.b16 %v6752, %v6751
        %v6779 = vpack.c.b16 %v6754, %v6753
        %v6780 = vpack.c.b16 %v6756, %v6755
        %v6781 = vpack.c.b16 %v6758, %v6757
        %v6782 = vpack.c.b16 %v6760, %v6759
        %v6783 = vpack.c.b16 %v6762, %v6761
        %v6784 = vpack.c.b16 %v6764, %v6763
        %v6785 = vpack.c.b16 %v6766, %v6765
        %v6786 = vpack.c.b16 %v6768, %v6767
        %v6787 = vpack.c.b16 %v6770, %v6769
        %v6788 = vpack.c.b16 %v6771, %v6771
        %v6790 = vsel %vm2299, %v6772, 0
        %v6793 = vsel %vm2299, %v6773, 0
        %v6796 = vsel %vm2299, %v6774, 0
        %v6799 = vsel %vm2299, %v6775, 0
        %v6802 = vsel %vm2299, %v6776, 0
        %v6805 = vsel %vm2299, %v6777, 0
        %v6808 = vsel %vm2299, %v6778, 0
        %v6811 = vsel %vm2299, %v6779, 0
        %v6814 = vsel %vm2299, %v6780, 0
        %v6817 = vsel %vm2299, %v6781, 0
        %v6820 = vsel %vm2299, %v6782, 0
        %v6823 = vsel %vm2299, %v6783, 0
        %v6826 = vsel %vm2299, %v6784, 0
        %v6829 = vsel %vm2299, %v6785, 0
        %v6832 = vsel %vm2299, %v6786, 0
        %v6835 = vsel %vm2299, %v6787, 0
        %v6838 = vsel %vm2299, %v6788, 0
        %6840 = vmatprep.subr.bf16.mxu0 %v6501
        %6841 = vmatpush1.bf16.msra.mxu0 %v6500
        %6842 = vmatprep.subr.bf16.mxu0 %v6503
        %6843 = vmatpush1.bf16.msra.mxu0 %v6502
        %6844 = vmatprep.subr.bf16.mxu0 %v6505
        %6845 = vmatpush1.bf16.msra.mxu0 %v6504
        %6846 = vmatprep.subr.bf16.mxu0 %v6507
        %6847 = vmatpush1.bf16.msra.mxu0 %v6506
        %6848 = vmatprep.subr.bf16.mxu0 0
        %6849 = vmatpush1.bf16.msra.mxu0 0
        %6850 = vmatprep.subr.bf16.mxu0 0
        %6851 = vmatpush1.bf16.msra.mxu0 0
        %6852 = vmatprep.subr.bf16.mxu0 0
        %6853 = vmatpush1.bf16.msra.mxu0 0
        %6854 = vmatprep.subr.bf16.mxu0 0
        %6855 = vmatpush1.bf16.msra.mxu0 0
        %6856 = vmatprep.subr.bf16.mxu0 0
        %6857 = vmatpush1.bf16.msra.mxu0 0
        %6858 = vmatprep.subr.bf16.mxu0 0
        %6859 = vmatpush1.bf16.msra.mxu0 0
        %6860 = vmatprep.subr.bf16.mxu0 0
        %6861 = vmatpush1.bf16.msra.mxu0 0
        %6862 = vmatprep.subr.bf16.mxu0 0
        %6863 = vmatpush1.bf16.msra.mxu0 0
        %6864 = vmatprep.subr.bf16.mxu0 0
        %6865 = vmatpush1.bf16.msra.mxu0 0
        %6866 = vmatprep.subr.bf16.mxu0 0
        %6867 = vmatpush1.bf16.msra.mxu0 0
        %6868 = vmatprep.subr.bf16.mxu0 0
        %6869 = vmatpush1.bf16.msra.mxu0 0
        %6870 = vmatprep.subr.bf16.mxu0 0
        %6871 = vmatpush1.bf16.msra.mxu0 0
        %6872 = vmatprep.mubr.bf16.mxu0 0
        %6873 = vmatmul.mubr.bf16.gmra.mrb[0].mxu0 %v6790
        %v6874 = vpop.f32.mrb[0].mxu0
        %v6875 = vadd.f32 %v6544, %v6874
        %v6876 = vpop.f32.mrb[0].mxu0
        %v6877 = vadd.f32 %v6544, %v6876
        %v6878 = vpop.f32.mrb[0].mxu0
        %v6879 = vadd.f32 %v6549, %v6878
        %v6880 = vpop.f32.mrb[0].mxu0
        %v6881 = vadd.f32 %v6549, %v6880
        %6882 = vmatprep.mubr.bf16.mxu0 0
        %6883 = vmatmul.mubr.bf16.gmra.mrb[0].mxu0 %v6793
        %v6884 = vpop.f32.mrb[0].mxu0
        %v6885 = vadd.f32 %v6554, %v6884
        %v6886 = vpop.f32.mrb[0].mxu0
        %v6887 = vadd.f32 %v6554, %v6886
        %v6888 = vpop.f32.mrb[0].mxu0
        %v6889 = vadd.f32 %v6559, %v6888
        %v6890 = vpop.f32.mrb[0].mxu0
        %v6891 = vadd.f32 %v6559, %v6890
        %6892 = vmatprep.mubr.bf16.mxu0 0
        %6893 = vmatmul.mubr.bf16.gmra.mrb[0].mxu0 %v6796
        %v6894 = vpop.f32.mrb[0].mxu0
        %v6895 = vadd.f32 %v6564, %v6894
        %v6896 = vpop.f32.mrb[0].mxu0
        %v6897 = vadd.f32 %v6564, %v6896
        %v6898 = vpop.f32.mrb[0].mxu0
        %v6899 = vadd.f32 %v6569, %v6898
        %v6900 = vpop.f32.mrb[0].mxu0
        %v6901 = vadd.f32 %v6569, %v6900
        %6902 = vmatprep.mubr.bf16.mxu0 0
        %6903 = vmatmul.mubr.bf16.gmra.mrb[0].mxu0 %v6799
        %v6904 = vpop.f32.mrb[0].mxu0
        %v6905 = vadd.f32 %v6574, %v6904
        %v6906 = vpop.f32.mrb[0].mxu0
        %v6907 = vadd.f32 %v6574, %v6906
        %v6908 = vpop.f32.mrb[0].mxu0
        %v6909 = vadd.f32 %v6579, %v6908
        %v6910 = vpop.f32.mrb[0].mxu0
        %v6911 = vadd.f32 %v6579, %v6910
        %6912 = vmatprep.mubr.bf16.mxu0 0
        %6913 = vmatmul.mubr.bf16.gmra.mrb[0].mxu0 %v6802
        %v6914 = vpop.f32.mrb[0].mxu0
        %v6915 = vadd.f32 %v6584, %v6914
        %v6916 = vpop.f32.mrb[0].mxu0
        %v6917 = vadd.f32 %v6584, %v6916
        %v6918 = vpop.f32.mrb[0].mxu0
        %v6919 = vadd.f32 %v6589, %v6918
        %v6920 = vpop.f32.mrb[0].mxu0
        %v6921 = vadd.f32 %v6589, %v6920
        %6922 = vmatprep.mubr.bf16.mxu0 0
        %6923 = vmatmul.mubr.bf16.gmra.mrb[0].mxu0 %v6805
        %v6924 = vpop.f32.mrb[0].mxu0
        %v6925 = vadd.f32 %v6594, %v6924
        %v6926 = vpop.f32.mrb[0].mxu0
        %v6927 = vadd.f32 %v6594, %v6926
        %v6928 = vpop.f32.mrb[0].mxu0
        %v6929 = vadd.f32 %v6599, %v6928
        %v6930 = vpop.f32.mrb[0].mxu0
        %v6931 = vadd.f32 %v6599, %v6930
        %6932 = vmatprep.mubr.bf16.mxu0 0
        %6933 = vmatmul.mubr.bf16.gmra.mrb[0].mxu0 %v6808
        %v6934 = vpop.f32.mrb[0].mxu0
        %v6935 = vadd.f32 %v6604, %v6934
        %v6936 = vpop.f32.mrb[0].mxu0
        %v6937 = vadd.f32 %v6604, %v6936
        %v6938 = vpop.f32.mrb[0].mxu0
        %v6939 = vadd.f32 %v6609, %v6938
        %v6940 = vpop.f32.mrb[0].mxu0
        %v6941 = vadd.f32 %v6609, %v6940
        %6942 = vmatprep.mubr.bf16.mxu0 0
        %6943 = vmatmul.mubr.bf16.gmra.mrb[0].mxu0 %v6811
        %v6944 = vpop.f32.mrb[0].mxu0
        %v6945 = vadd.f32 %v6614, %v6944
        %v6946 = vpop.f32.mrb[0].mxu0
        %v6947 = vadd.f32 %v6614, %v6946
        %v6948 = vpop.f32.mrb[0].mxu0
        %v6949 = vadd.f32 %v6619, %v6948
        %v6950 = vpop.f32.mrb[0].mxu0
        %v6951 = vadd.f32 %v6619, %v6950
        %6952 = vmatprep.mubr.bf16.mxu0 0
        %6953 = vmatmul.mubr.bf16.gmra.mrb[0].mxu0 %v6814
        %v6954 = vpop.f32.mrb[0].mxu0
        %v6955 = vadd.f32 %v6624, %v6954
        %v6956 = vpop.f32.mrb[0].mxu0
        %v6957 = vadd.f32 %v6624, %v6956
        %v6958 = vpop.f32.mrb[0].mxu0
        %v6959 = vadd.f32 %v6629, %v6958
        %v6960 = vpop.f32.mrb[0].mxu0
        %v6961 = vadd.f32 %v6629, %v6960
        %6962 = vmatprep.mubr.bf16.mxu0 0
        %6963 = vmatmul.mubr.bf16.gmra.mrb[0].mxu0 %v6817
        %v6964 = vpop.f32.mrb[0].mxu0
        %v6965 = vadd.f32 %v6634, %v6964
        %v6966 = vpop.f32.mrb[0].mxu0
        %v6967 = vadd.f32 %v6634, %v6966
        %v6968 = vpop.f32.mrb[0].mxu0
        %v6969 = vadd.f32 %v6639, %v6968
        %v6970 = vpop.f32.mrb[0].mxu0
        %v6971 = vadd.f32 %v6639, %v6970
        %6972 = vmatprep.mubr.bf16.mxu0 0
        %6973 = vmatmul.mubr.bf16.gmra.mrb[0].mxu0 %v6820
        %v6974 = vpop.f32.mrb[0].mxu0
        %v6975 = vadd.f32 %v6644, %v6974
        %v6976 = vpop.f32.mrb[0].mxu0
        %v6977 = vadd.f32 %v6644, %v6976
        %v6978 = vpop.f32.mrb[0].mxu0
        %v6979 = vadd.f32 %v6649, %v6978
        %v6980 = vpop.f32.mrb[0].mxu0
        %v6981 = vadd.f32 %v6649, %v6980
        %6982 = vmatprep.mubr.bf16.mxu0 0
        %6983 = vmatmul.mubr.bf16.gmra.mrb[0].mxu0 %v6823
        %v6984 = vpop.f32.mrb[0].mxu0
        %v6985 = vadd.f32 %v6654, %v6984
        %v6986 = vpop.f32.mrb[0].mxu0
        %v6987 = vadd.f32 %v6654, %v6986
        %v6988 = vpop.f32.mrb[0].mxu0
        %v6989 = vadd.f32 %v6659, %v6988
        %v6990 = vpop.f32.mrb[0].mxu0
        %v6991 = vadd.f32 %v6659, %v6990
        %6992 = vmatprep.mubr.bf16.mxu0 0
        %6993 = vmatmul.mubr.bf16.gmra.mrb[0].mxu0 %v6826
        %v6994 = vpop.f32.mrb[0].mxu0
        %v6995 = vadd.f32 %v6664, %v6994
        %v6996 = vpop.f32.mrb[0].mxu0
        %v6997 = vadd.f32 %v6664, %v6996
        %v6998 = vpop.f32.mrb[0].mxu0
        %v6999 = vadd.f32 %v6669, %v6998
        %v7000 = vpop.f32.mrb[0].mxu0
        %v7001 = vadd.f32 %v6669, %v7000
        %7002 = vmatprep.mubr.bf16.mxu0 0
        %7003 = vmatmul.mubr.bf16.gmra.mrb[0].mxu0 %v6829
        %v7004 = vpop.f32.mrb[0].mxu0
        %v7005 = vadd.f32 %v6674, %v7004
        %v7006 = vpop.f32.mrb[0].mxu0
        %v7007 = vadd.f32 %v6674, %v7006
        %v7008 = vpop.f32.mrb[0].mxu0
        %v7009 = vadd.f32 %v6679, %v7008
        %v7010 = vpop.f32.mrb[0].mxu0
        %v7011 = vadd.f32 %v6679, %v7010
        %7012 = vmatprep.mubr.bf16.mxu0 0
        %7013 = vmatmul.mubr.bf16.gmra.mrb[0].mxu0 %v6832
        %v7014 = vpop.f32.mrb[0].mxu0
        %v7015 = vadd.f32 %v6684, %v7014
        %v7016 = vpop.f32.mrb[0].mxu0
        %v7017 = vadd.f32 %v6684, %v7016
        %v7018 = vpop.f32.mrb[0].mxu0
        %v7019 = vadd.f32 %v6689, %v7018
        %v7020 = vpop.f32.mrb[0].mxu0
        %v7021 = vadd.f32 %v6689, %v7020
        %7022 = vmatprep.mubr.bf16.mxu0 0
        %7023 = vmatmul.mubr.bf16.gmra.mrb[0].mxu0 %v6835
        %v7024 = vpop.f32.mrb[0].mxu0
        %v7025 = vadd.f32 %v6694, %v7024
        %v7026 = vpop.f32.mrb[0].mxu0
        %v7027 = vadd.f32 %v6694, %v7026
        %v7028 = vpop.f32.mrb[0].mxu0
        %v7029 = vadd.f32 %v6699, %v7028
        %v7030 = vpop.f32.mrb[0].mxu0
        %v7031 = vadd.f32 %v6699, %v7030
        %7032 = vmatprep.mubr.bf16.mxu0 0
        %7033 = vmatmul.mubr.bf16.gmra.mrb[0].mxu0 %v6838
        %v7034 = vpop.f32.mrb[0].mxu0
        %v7035 = vadd.f32 %v6704, %v7034
        %v7036 = vpop.f32.mrb[0].mxu0
        %v7037 = vadd.f32 %v6704, %v7036
        %v7038 = vpop.f32.mrb[0].mxu0
        %v7039 = vpop.f32.mrb[0].mxu0
        %7040 = vdwg.mxu0
        %s7041 = scalar_lea.vmem %s209, 528
        %7042 = vst [vmem:[%s7041] sm:$0xff] %v6875
        %7043 = vst [vmem:[%s7041 + $0x8] sm:$0xff] %v6877
        %7044 = vst [vmem:[%s7041 + $0x10] sm:$0xff] %v6879
        %7045 = vst [vmem:[%s7041 + $0x18] sm:$0xff] %v6881
        %7046 = vst [vmem:[%s7041 + $0x20] sm:$0xff] %v6885
        %7047 = vst [vmem:[%s7041 + $0x28] sm:$0xff] %v6887
        %7048 = vst [vmem:[%s7041 + $0x30] sm:$0xff] %v6889
        %7049 = vst [vmem:[%s7041 + $0x38] sm:$0xff] %v6891
        %7050 = vst [vmem:[%s7041 + $0x40] sm:$0xff] %v6895
        %7051 = vst [vmem:[%s7041 + $0x48] sm:$0xff] %v6897
        %7052 = vst [vmem:[%s7041 + $0x50] sm:$0xff] %v6899
        %7053 = vst [vmem:[%s7041 + $0x58] sm:$0xff] %v6901
        %7054 = vst [vmem:[%s7041 + $0x60] sm:$0xff] %v6905
        %7055 = vst [vmem:[%s7041 + $0x68] sm:$0xff] %v6907
        %7056 = vst [vmem:[%s7041 + $0x70] sm:$0xff] %v6909
        %7057 = vst [vmem:[%s7041 + $0x78] sm:$0xff] %v6911
        %7058 = vst [vmem:[%s7041 + $0x80] sm:$0xff] %v6915
        %7059 = vst [vmem:[%s7041 + $0x88] sm:$0xff] %v6917
        %7060 = vst [vmem:[%s7041 + $0x90] sm:$0xff] %v6919
        %7061 = vst [vmem:[%s7041 + $0x98] sm:$0xff] %v6921
        %7062 = vst [vmem:[%s7041 + $0xa0] sm:$0xff] %v6925
        %7063 = vst [vmem:[%s7041 + $0xa8] sm:$0xff] %v6927
        %7064 = vst [vmem:[%s7041 + $0xb0] sm:$0xff] %v6929
        %7065 = vst [vmem:[%s7041 + $0xb8] sm:$0xff] %v6931
        %7066 = vst [vmem:[%s7041 + $0xc0] sm:$0xff] %v6935
        %7067 = vst [vmem:[%s7041 + $0xc8] sm:$0xff] %v6937
        %7068 = vst [vmem:[%s7041 + $0xd0] sm:$0xff] %v6939
        %7069 = vst [vmem:[%s7041 + $0xd8] sm:$0xff] %v6941
        %7070 = vst [vmem:[%s7041 + $0xe0] sm:$0xff] %v6945
        %7071 = vst [vmem:[%s7041 + $0xe8] sm:$0xff] %v6947
        %7072 = vst [vmem:[%s7041 + $0xf0] sm:$0xff] %v6949
        %7073 = vst [vmem:[%s7041 + $0xf8] sm:$0xff] %v6951
        %7074 = vst [vmem:[%s7041 + $0x100] sm:$0xff] %v6955
        %7075 = vst [vmem:[%s7041 + $0x108] sm:$0xff] %v6957
        %7076 = vst [vmem:[%s7041 + $0x110] sm:$0xff] %v6959
        %7077 = vst [vmem:[%s7041 + $0x118] sm:$0xff] %v6961
        %7078 = vst [vmem:[%s7041 + $0x120] sm:$0xff] %v6965
        %7079 = vst [vmem:[%s7041 + $0x128] sm:$0xff] %v6967
        %7080 = vst [vmem:[%s7041 + $0x130] sm:$0xff] %v6969
        %7081 = vst [vmem:[%s7041 + $0x138] sm:$0xff] %v6971
        %7082 = vst [vmem:[%s7041 + $0x140] sm:$0xff] %v6975
        %7083 = vst [vmem:[%s7041 + $0x148] sm:$0xff] %v6977
        %7084 = vst [vmem:[%s7041 + $0x150] sm:$0xff] %v6979
        %7085 = vst [vmem:[%s7041 + $0x158] sm:$0xff] %v6981
        %7086 = vst [vmem:[%s7041 + $0x160] sm:$0xff] %v6985
        %7087 = vst [vmem:[%s7041 + $0x168] sm:$0xff] %v6987
        %7088 = vst [vmem:[%s7041 + $0x170] sm:$0xff] %v6989
        %7089 = vst [vmem:[%s7041 + $0x178] sm:$0xff] %v6991
        %7090 = vst [vmem:[%s7041 + $0x180] sm:$0xff] %v6995
        %7091 = vst [vmem:[%s7041 + $0x188] sm:$0xff] %v6997
        %7092 = vst [vmem:[%s7041 + $0x190] sm:$0xff] %v6999
        %7093 = vst [vmem:[%s7041 + $0x198] sm:$0xff] %v7001
        %7094 = vst [vmem:[%s7041 + $0x1a0] sm:$0xff] %v7005
        %7095 = vst [vmem:[%s7041 + $0x1a8] sm:$0xff] %v7007
        %7096 = vst [vmem:[%s7041 + $0x1b0] sm:$0xff] %v7009
        %7097 = vst [vmem:[%s7041 + $0x1b8] sm:$0xff] %v7011
        %7098 = vst [vmem:[%s7041 + $0x1c0] sm:$0xff] %v7015
        %7099 = vst [vmem:[%s7041 + $0x1c8] sm:$0xff] %v7017
        %7100 = vst [vmem:[%s7041 + $0x1d0] sm:$0xff] %v7019
        %7101 = vst [vmem:[%s7041 + $0x1d8] sm:$0xff] %v7021
        %7102 = vst [vmem:[%s7041 + $0x1e0] sm:$0xff] %v7025
        %7103 = vst [vmem:[%s7041 + $0x1e8] sm:$0xff] %v7027
        %7104 = vst [vmem:[%s7041 + $0x1f0] sm:$0xff] %v7029
        %7105 = vst [vmem:[%s7041 + $0x1f8] sm:$0xff] %v7031
        %7106 = vst [vmem:[%s7041 + $0x200] sm:$0x1] %v7035
        %7107 = vst [vmem:[%s7041 + $0x208] sm:$0x1] %v7037
        %s7108 = smul.u32 2, %s18
        %p7109 = scmp.lt.s32.totalorder %s7108, 3
        %s7110 = scalar_select %p7109, %s7108, 3
        %s7111 = smul.addr %s7110, 66
        %s7112 = smul.addr %s7111, 8
        %s7113 = scalar_lea.vmem %s3, %s7112
        // Predicated region
        $region41: #{tpu_custom_call.1} parent=31 // pred_check
          %p7114 = pneg %p104
        $region42: #{tpu_custom_call.1} parent=31 // pred_check_branch
          %7116 = sbr.rel (%p7114) target = $region44
        $region43: #{tpu_custom_call.1} parent=31 // pred_region
          %s7117 = smul.u32 2, %s18
        $region44: #{tpu_custom_call.1} parent=31 // pred_fallthru
          _
      $region32: #{tpu_custom_call.1} parent=5 // pred_fallthru
        _
      %p7118 = scmp.le.s32.totalorder 2, %s13
      // Predicated region
      $region45: #{tpu_custom_call.1} parent=5 // pred_check
        %p7119 = pneg %p7118
      $region46: #{tpu_custom_call.1} parent=5 // pred_check_branch
        %7121 = sbr.rel (%p7119) target = $region48
      $region47: #{tpu_custom_call.1} parent=5 // pred_region
        %s7122 = ssub.s32 %s13, 2
        // Predicated region
        $region49: #{tpu_custom_call.1} parent=47 // pred_check
          %p7123 = pneg %p110
        $region50: #{tpu_custom_call.1} parent=47 // pred_check_branch
          %7125 = sbr.rel (%p7123) target = $region52
        $region51: #{tpu_custom_call.1} parent=47 // pred_region
          %s7126 = smul.u32 2, %s19
          %p7127 = scmp.lt.s32.totalorder %s7126, 3
          %s7128 = scalar_select %p7127, %s7126, 3
          %s7129 = smul.addr %s7128, 66
          %s7130 = smul.addr %s7129, 8
          %s7131 = scalar_lea.vmem %s3, %s7130
        $region52: #{tpu_custom_call.1} parent=47 // pred_fallthru
          _
      $region48: #{tpu_custom_call.1} parent=5 // pred_fallthru
        _
    $region6: #{tpu_custom_call.1} parent=1 // loop_footer
      %s17 = sadd.s32 1, %s13
    $region7: #{tpu_custom_call.1} parent=1 // loop_footer_branch
      %12 = sbr.rel target = $region3
    $region8: #{tpu_custom_call.1} parent=1 // loop_exit
      _
    %7132 = vsyncpa [#allocation5], 1
    %s7133 = scalar_lea.sflag [#allocation5], 1
    %7134 = vsyncpa %s7133, 1
    %7135 = vsyncpa [#allocation7], 1

</llo_original>
